<compile_context>
chip_gen: v7x
topology: tpu7x:2x2x1
jax: 0.10.0
libtpu: 0.0.40
codegen_flags: <defaults>
</compile_context>

<pallas_src>
import jax
import jax.numpy as jnp
from jax.experimental import pallas as pl
from jax.experimental.pallas import tpu as pltpu


# --------------------------- Pallas recurrent kernel ---------------------------
def _make_kernel(T, tc, B, H, needs_mask):
    """Build the fused bidirectional LSTM chunk kernel (static shapes closed over)."""

    def sigmoid(x):
        # 1 EUP op (tanh) + cheap VPU, instead of exp + reciprocal.
        return 0.5 * jnp.tanh(0.5 * x) + 0.5

    def cell(gates, c_prev):
        # PyTorch gate order: i, f, g, o.  H is a multiple of 128 -> lane-dense slices.
        i_g = sigmoid(gates[:, 0 * H:1 * H])
        f_g = sigmoid(gates[:, 1 * H:2 * H])
        g_g = jnp.tanh(gates[:, 2 * H:3 * H])
        o_g = sigmoid(gates[:, 3 * H:4 * H])
        c_new = f_g * c_prev + i_g * g_g
        h_new = o_g * jnp.tanh(c_new)
        return h_new, c_new

    def kernel(xf_ref, xb_ref, wihf_ref, wihb_ref, bf_ref, bb_ref,
               whhf_ref, whhb_ref, of_ref, ob_ref,
               gxf_scr, gxb_scr, hf_scr, cf_scr, hb_scr, cb_scr):
        chunk = pl.program_id(0)
        n_chunks = pl.num_programs(0)

        @pl.when(chunk == 0)  # start of the sequence -> reset both recurrent states
        def _():
            hf_scr[...] = jnp.zeros_like(hf_scr)
            cf_scr[...] = jnp.zeros_like(cf_scr)
            hb_scr[...] = jnp.zeros_like(hb_scr)
            cb_scr[...] = jnp.zeros_like(cb_scr)

        # ---- Per-chunk input projection (parallel over tc*B rows, f32 accumulate,
        #      bias added in f32).  Off the serial per-timestep chain. ----
        gxf_scr[...] = jnp.dot(xf_ref[...], wihf_ref[...],
                               preferred_element_type=jnp.float32) + bf_ref[...]
        gxb_scr[...] = jnp.dot(xb_ref[...], wihb_ref[...],
                               preferred_element_type=jnp.float32) + bb_ref[...]

        mm_dtype = whhf_ref.dtype  # recurrent-matmul operand dtype (f32 or bf16)

        def step(i, carry):
            rf = pl.multiple_of(i * B, B)               # fwd rows inside the chunk
            rb = pl.multiple_of((tc - 1 - i) * B, B)    # bwd rows (reverse time order)

            # Two independent MXU->EUP->VPU chains; they interleave on one core.
            g_f = gxf_scr[pl.ds(rf, B), :] + jnp.dot(
                hf_scr[...].astype(mm_dtype), whhf_ref[...],
                preferred_element_type=jnp.float32)
            g_b = gxb_scr[pl.ds(rb, B), :] + jnp.dot(
                hb_scr[...].astype(mm_dtype), whhb_ref[...],
                preferred_element_type=jnp.float32)

            h_f, c_f = cell(g_f, cf_scr[...])
            h_b, c_b = cell(g_b, cb_scr[...])

            # Forward: padded steps (if any) are at the very end of the sequence,
            # so no masking is needed (garbage rows are sliced off outside).
            hf_scr[...] = h_f
            cf_scr[...] = c_f
            of_ref[i] = h_f.astype(of_ref.dtype)

            ob_ref[tc - 1 - i] = h_b.astype(ob_ref.dtype)
            if needs_mask:
                # Backward direction meets the zero-padded tail FIRST; keep its
                # carries at the initial value until the first real timestep.
                t_b = (n_chunks - 1 - chunk) * tc + (tc - 1 - i)

                @pl.when(t_b < T)
                def _():
                    hb_scr[...] = h_b
                    cb_scr[...] = c_b
            else:
                hb_scr[...] = h_b
                cb_scr[...] = c_b
            return carry

        jax.lax.fori_loop(0, tc, step, 0, unroll=min(8, tc))

    return kernel


# --------------------------------- wrapper -------------------------------------
def bidirectional_lstm(x, params, *, time_chunk=32, compute_dtype=jnp.bfloat16):
    """x: (T, B, D) time-major.  Returns (out_f, out_b), each (T, B, H) float32."""
    T, B, D = x.shape
    H = params["w_hh_f"].shape[0]
    G = 4 * H

    tc = int(max(1, min(int(time_chunk), T)))
    n_chunks = pl.cdiv(T, tc)
    T_pad = n_chunks * tc
    needs_mask = (T_pad != T)

    x = x.astype(jnp.float32)
    if needs_mask:
        x = jnp.concatenate(
            [x, jnp.zeros((T_pad - T, B, D), jnp.float32)], axis=0)
    x2 = x.reshape(T_pad * B, D)                                  # (T_pad*B, D)

    # Input projection stays f32 (accuracy of the dominant gate term);
    # only the recurrent matmul operands use compute_dtype.
    wih_f = params["w_ih_f"].astype(jnp.float32)                  # (D, G)
    wih_b = params["w_ih_b"].astype(jnp.float32)
    whh_f = params["w_hh_f"].astype(compute_dtype)                # (H, G)
    whh_b = params["w_hh_b"].astype(compute_dtype)
    b_f = params["b_f"].astype(jnp.float32).reshape(1, G)
    b_b = params["b_b"].astype(jnp.float32).reshape(1, G)

    kernel = _make_kernel(T, tc, B, H, needs_mask)

    out_f, out_b = pl.pallas_call(
        kernel,
        out_shape=(jax.ShapeDtypeStruct((T_pad, B, H), jnp.float32),
                   jax.ShapeDtypeStruct((T_pad, B, H), jnp.float32)),
        grid=(n_chunks,),
        in_specs=[
            # x chunk for the forward direction (natural time order).
            pl.BlockSpec((tc * B, D), lambda c: (c, 0)),
            # x chunk for the backward direction (chunks walked in reverse).
            pl.BlockSpec((tc * B, D), lambda c: (n_chunks - 1 - c, 0)),
            pl.BlockSpec((D, G), lambda c: (0, 0)),   # W_ih fwd
            pl.BlockSpec((D, G), lambda c: (0, 0)),   # W_ih bwd
            pl.BlockSpec((1, G), lambda c: (0, 0)),   # bias fwd (b_ih + b_hh)
            pl.BlockSpec((1, G), lambda c: (0, 0)),   # bias bwd
            pl.BlockSpec((H, G), lambda c: (0, 0)),   # W_hh fwd
            pl.BlockSpec((H, G), lambda c: (0, 0)),   # W_hh bwd
        ],
        out_specs=(
            pl.BlockSpec((tc, B, H), lambda c: (c, 0, 0)),                 # out fwd
            pl.BlockSpec((tc, B, H), lambda c: (n_chunks - 1 - c, 0, 0)),  # out bwd
        ),
        scratch_shapes=[
            pltpu.VMEM((tc * B, G), jnp.float32),   # fwd input-projection chunk
            pltpu.VMEM((tc * B, G), jnp.float32),   # bwd input-projection chunk
            pltpu.VMEM((B, H), jnp.float32),        # h fwd carry
            pltpu.VMEM((B, H), jnp.float32),        # c fwd carry
            pltpu.VMEM((B, H), jnp.float32),        # h bwd carry
            pltpu.VMEM((B, H), jnp.float32),        # c bwd carry
        ],
        compiler_params=pltpu.CompilerParams(
            dimension_semantics=("arbitrary",),     # serial recurrence over chunks
        ),
    )(x2, x2, wih_f, wih_b, b_f, b_b, whh_f, whh_b)

    if needs_mask:
        out_f = out_f[:T]
        out_b = out_b[:T]
    return out_f, out_b


def block_rnn_forward(x, params, add_output=False, *, time_chunk=32,
                      compute_dtype=jnp.bfloat16):
    """blockRNN.forward: bidirectional LSTM, (T, B, 2H) outputs (or (T, B, H) sum)."""
    out_f, out_b = bidirectional_lstm(x, params, time_chunk=time_chunk,
                                      compute_dtype=compute_dtype)
    if add_output:
        return out_f + out_b
    return jnp.concatenate([out_f, out_b], axis=-1)


# ---------------- pure-JAX reference (for correctness check) ----------------
def lstm_direction_ref(x, w_ih_t, w_hh_t, b):
    H = w_hh_t.shape[0]
    hi = jax.lax.Precision.HIGHEST

    def step(carry, x_t):
        h, c = carry
        gates = (jnp.dot(x_t, w_ih_t, precision=hi)
                 + jnp.dot(h, w_hh_t, precision=hi) + b)
        i = jax.nn.sigmoid(gates[:, :H])
        f = jax.nn.sigmoid(gates[:, H:2 * H])
        g = jnp.tanh(gates[:, 2 * H:3 * H])
        o = jax.nn.sigmoid(gates[:, 3 * H:])
        c = f * c + i * g
        h = o * jnp.tanh(c)
        return (h, c), h

    B = x.shape[1]
    init = (jnp.zeros((B, H), jnp.float32), jnp.zeros((B, H), jnp.float32))
    _, hs = jax.lax.scan(step, init, x)
    return hs


def block_rnn_ref(x, params):
    out_f = lstm_direction_ref(x, params["w_ih_f"], params["w_hh_f"], params["b_f"])
    out_b = lstm_direction_ref(x[::-1], params["w_ih_b"], params["w_hh_b"],
                               params["b_b"])[::-1]
    return jnp.concatenate([out_f, out_b], axis=-1)


# ------------- deterministic parameter init (PyTorch-style shapes) -------------
def init_params(key, in_size, hidden_size):
    k = 1.0 / jnp.sqrt(hidden_size)
    keys = jax.random.split(key, 8)

    def u(kk, shape):
        return jax.random.uniform(kk, shape, jnp.float32, minval=-k, maxval=k)

    # PyTorch: weight_ih (4H, D), weight_hh (4H, H), biases (4H,) — gate order i,f,g,o.
    # Stored transposed, with the two biases combined.
    w_ih_f = u(keys[0], (4 * hidden_size, in_size))
    w_hh_f = u(keys[1], (4 * hidden_size, hidden_size))
    b_f = u(keys[2], (4 * hidden_size,)) + u(keys[3], (4 * hidden_size,))
    w_ih_b = u(keys[4], (4 * hidden_size, in_size))
    w_hh_b = u(keys[5], (4 * hidden_size, hidden_size))
    b_b = u(keys[6], (4 * hidden_size,)) + u(keys[7], (4 * hidden_size,))
    return {
        "w_ih_f": w_ih_f.T, "w_hh_f": w_hh_f.T, "b_f": b_f[None, :],
        "w_ih_b": w_ih_b.T, "w_hh_b": w_hh_b.T, "b_b": b_b[None, :],
    }


if __name__ == "__main__":
    # Small but lane/sublane-aligned shapes: B=8 (sublane), H=128 (lane-dense),
    # gates last dim 4H = 512.
    T, B, IN_SIZE, HIDDEN = 16, 8, 64, 128

    key = jax.random.PRNGKey(0)
    k_x, k_p = jax.random.split(key)
    x = jax.random.normal(k_x, (T, B, IN_SIZE), jnp.float32)
    params = init_params(k_p, IN_SIZE, HIDDEN)

    # f32 recurrent operands: faithful check against the pure-JAX reference.
    out = jax.block_until_ready(
        block_rnn_forward(x, params, time_chunk=8, compute_dtype=jnp.float32))
    ref = jax.block_until_ready(block_rnn_ref(x, params))
    assert out.shape == (T, B, 2 * HIDDEN), out.shape
    err = float(jnp.max(jnp.abs(out - ref)))
    assert err < 2e-4, err

    # Ragged T (not a multiple of the chunk) exercises the padded/masked path.
    T2 = 11
    x_r = jax.random.normal(jax.random.PRNGKey(1), (T2, B, IN_SIZE), jnp.float32)
    out_r = jax.block_until_ready(
        block_rnn_forward(x_r, params, time_chunk=8, compute_dtype=jnp.float32))
    ref_r = jax.block_until_ready(block_rnn_ref(x_r, params))
    assert out_r.shape == (T2, B, 2 * HIDDEN), out_r.shape
    err_r = float(jnp.max(jnp.abs(out_r - ref_r)))
    assert err_r < 2e-4, err_r

    # bf16 recurrent-matmul operands (v6e/v7x MXU default): runs, stays close.
    out_bf16 = jax.block_until_ready(block_rnn_forward(x, params, time_chunk=8))
    assert out_bf16.shape == out.shape
    assert bool(jnp.all(jnp.isfinite(out_bf16)))
    assert float(jnp.max(jnp.abs(out_bf16 - ref))) < 1e-1

    # add_output branch of the module (sums the two directions).
    out_sum = jax.block_until_ready(
        block_rnn_forward(x, params, add_output=True, time_chunk=8))
    assert out_sum.shape == (T, B, HIDDEN)

    print("KERNEL_OK")
</pallas_src>

<mosaic_0001>
module attributes {stable_mosaic.version = 11 : i64} {
  func.func @kernel(%arg0: i32, %arg1: memref<64x64xf32, #tpu.memory_space<vmem>>, %arg2: memref<64x64xf32, #tpu.memory_space<vmem>>, %arg3: memref<64x512xf32, #tpu.memory_space<vmem>>, %arg4: memref<64x512xf32, #tpu.memory_space<vmem>>, %arg5: memref<1x512xf32, #tpu.memory_space<vmem>>, %arg6: memref<1x512xf32, #tpu.memory_space<vmem>>, %arg7: memref<128x512xf32, #tpu.memory_space<vmem>>, %arg8: memref<128x512xf32, #tpu.memory_space<vmem>>, %arg9: memref<8x8x128xf32, #tpu.memory_space<vmem>>, %arg10: memref<8x8x128xf32, #tpu.memory_space<vmem>>, %arg11: memref<64x512xf32, #tpu.memory_space<vmem>>, %arg12: memref<64x512xf32, #tpu.memory_space<vmem>>, %arg13: memref<8x128xf32, #tpu.memory_space<vmem>>, %arg14: memref<8x128xf32, #tpu.memory_space<vmem>>, %arg15: memref<8x128xf32, #tpu.memory_space<vmem>>, %arg16: memref<8x128xf32, #tpu.memory_space<vmem>>) attributes {dimension_semantics = [#tpu.dimension_semantics<arbitrary>], iteration_bounds = array<i64: 2>, scalar_prefetch = 0 : i64, scratch_operands = 6 : i64, tpu.core_type = #tpu.core_type<tc>, window_params = [{transform_indices = @transform_0, window_bounds = array<i64: 64, 64>}, {transform_indices = @transform_1, window_bounds = array<i64: 64, 64>}, {pipeline_mode = #tpu.pipeline_mode<synchronous>, transform_indices = @transform_2, window_bounds = array<i64: 64, 512>}, {pipeline_mode = #tpu.pipeline_mode<synchronous>, transform_indices = @transform_3, window_bounds = array<i64: 64, 512>}, {pipeline_mode = #tpu.pipeline_mode<synchronous>, transform_indices = @transform_4, window_bounds = array<i64: 1, 512>}, {pipeline_mode = #tpu.pipeline_mode<synchronous>, transform_indices = @transform_5, window_bounds = array<i64: 1, 512>}, {pipeline_mode = #tpu.pipeline_mode<synchronous>, transform_indices = @transform_6, window_bounds = array<i64: 128, 512>}, {pipeline_mode = #tpu.pipeline_mode<synchronous>, transform_indices = @transform_7, window_bounds = array<i64: 128, 512>}, {transform_indices = @transform_8, window_bounds = array<i64: 8, 8, 128>}, {transform_indices = @transform_9, window_bounds = array<i64: 8, 8, 128>}]} {
    %c0_i32 = arith.constant 0 : i32
    %0 = arith.cmpi eq, %arg0, %c0_i32 : i32
    %1 = arith.extui %0 : i1 to i32
    %c0_i32_0 = arith.constant 0 : i32
    %2 = arith.cmpi ne, %1, %c0_i32_0 : i32
    scf.if %2 {
      %cst_418 = arith.constant 0.000000e+00 : f32
      %769 = vector.broadcast %cst_418 : f32 to vector<8x128xf32>
      %c0_419 = arith.constant 0 : index
      %c0_420 = arith.constant 0 : index
      %770 = vector.load %arg13[%c0_419, %c0_420] : memref<8x128xf32, #tpu.memory_space<vmem>>, vector<8x128xf32>
      tpu.vector_store %arg13[%c0_419, %c0_420], %769 {strides = array<i32>} : memref<8x128xf32, #tpu.memory_space<vmem>>, vector<8x128xf32>,
      %cst_421 = arith.constant 0.000000e+00 : f32
      %771 = vector.broadcast %cst_421 : f32 to vector<8x128xf32>
      %c0_422 = arith.constant 0 : index
      %c0_423 = arith.constant 0 : index
      %772 = vector.load %arg14[%c0_422, %c0_423] : memref<8x128xf32, #tpu.memory_space<vmem>>, vector<8x128xf32>
      tpu.vector_store %arg14[%c0_422, %c0_423], %771 {strides = array<i32>} : memref<8x128xf32, #tpu.memory_space<vmem>>, vector<8x128xf32>,
      %cst_424 = arith.constant 0.000000e+00 : f32
      %773 = vector.broadcast %cst_424 : f32 to vector<8x128xf32>
      %c0_425 = arith.constant 0 : index
      %c0_426 = arith.constant 0 : index
      %774 = vector.load %arg15[%c0_425, %c0_426] : memref<8x128xf32, #tpu.memory_space<vmem>>, vector<8x128xf32>
      tpu.vector_store %arg15[%c0_425, %c0_426], %773 {strides = array<i32>} : memref<8x128xf32, #tpu.memory_space<vmem>>, vector<8x128xf32>,
      %cst_427 = arith.constant 0.000000e+00 : f32
      %775 = vector.broadcast %cst_427 : f32 to vector<8x128xf32>
      %c0_428 = arith.constant 0 : index
      %c0_429 = arith.constant 0 : index
      %776 = vector.load %arg16[%c0_428, %c0_429] : memref<8x128xf32, #tpu.memory_space<vmem>>, vector<8x128xf32>
      tpu.vector_store %arg16[%c0_428, %c0_429], %775 {strides = array<i32>} : memref<8x128xf32, #tpu.memory_space<vmem>>, vector<8x128xf32>,
    } else {
    }
    %c0 = arith.constant 0 : index
    %c0_1 = arith.constant 0 : index
    %3 = vector.load %arg1[%c0, %c0_1] : memref<64x64xf32, #tpu.memory_space<vmem>>, vector<64x64xf32>
    %c0_2 = arith.constant 0 : index
    %c0_3 = arith.constant 0 : index
    %4 = vector.load %arg3[%c0_2, %c0_3] : memref<64x512xf32, #tpu.memory_space<vmem>>, vector<64x512xf32>
    %cst = arith.constant dense<0.000000e+00> : vector<64x512xf32>
    %5 = tpu.matmul %3, %4, %cst {dimension_numbers = #tpu.dot_dimension_numbers<[1], [0], [0], [1], [0, 0, 1, 1], [], []>} : vector<64x64xf32>, vector<64x512xf32>, vector<64x512xf32> -> vector<64x512xf32>
    %c0_4 = arith.constant 0 : index
    %c0_5 = arith.constant 0 : index
    %6 = vector.load %arg5[%c0_4, %c0_5] : memref<1x512xf32, #tpu.memory_space<vmem>>, vector<1x512xf32>
    %7 = vector.broadcast %6 : vector<1x512xf32> to vector<64x512xf32>
    %8 = arith.addf %5, %7 : vector<64x512xf32>
    %c0_6 = arith.constant 0 : index
    %c0_7 = arith.constant 0 : index
    %9 = vector.load %arg11[%c0_6, %c0_7] : memref<64x512xf32, #tpu.memory_space<vmem>>, vector<64x512xf32>
    tpu.vector_store %arg11[%c0_6, %c0_7], %8 {strides = array<i32>} : memref<64x512xf32, #tpu.memory_space<vmem>>, vector<64x512xf32>,
    %c0_8 = arith.constant 0 : index
    %c0_9 = arith.constant 0 : index
    %10 = vector.load %arg2[%c0_8, %c0_9] : memref<64x64xf32, #tpu.memory_space<vmem>>, vector<64x64xf32>
    %c0_10 = arith.constant 0 : index
    %c0_11 = arith.constant 0 : index
    %11 = vector.load %arg4[%c0_10, %c0_11] : memref<64x512xf32, #tpu.memory_space<vmem>>, vector<64x512xf32>
    %cst_12 = arith.constant dense<0.000000e+00> : vector<64x512xf32>
    %12 = tpu.matmul %10, %11, %cst_12 {dimension_numbers = #tpu.dot_dimension_numbers<[1], [0], [0], [1], [0, 0, 1, 1], [], []>} : vector<64x64xf32>, vector<64x512xf32>, vector<64x512xf32> -> vector<64x512xf32>
    %c0_13 = arith.constant 0 : index
    %c0_14 = arith.constant 0 : index
    %13 = vector.load %arg6[%c0_13, %c0_14] : memref<1x512xf32, #tpu.memory_space<vmem>>, vector<1x512xf32>
    %14 = vector.broadcast %13 : vector<1x512xf32> to vector<64x512xf32>
    %15 = arith.addf %12, %14 : vector<64x512xf32>
    %c0_15 = arith.constant 0 : index
    %c0_16 = arith.constant 0 : index
    %16 = vector.load %arg12[%c0_15, %c0_16] : memref<64x512xf32, #tpu.memory_space<vmem>>, vector<64x512xf32>
    tpu.vector_store %arg12[%c0_15, %c0_16], %15 {strides = array<i32>} : memref<64x512xf32, #tpu.memory_space<vmem>>, vector<64x512xf32>,
    %c0_i32_17 = arith.constant 0 : i32
    %c8_i32 = arith.constant 8 : i32
    %17 = arith.muli %c0_i32_17, %c8_i32 : i32
    %18 = tpu.assume_multiple %17, 8 : i32
    %c7_i32 = arith.constant 7 : i32
    %19 = arith.subi %c7_i32, %c0_i32_17 : i32
    %c8_i32_18 = arith.constant 8 : i32
    %20 = arith.muli %19, %c8_i32_18 : i32
    %21 = tpu.assume_multiple %20, 8 : i32
    %22 = arith.index_cast %18 : i32 to index
    %c0_19 = arith.constant 0 : index
    %23 = vector.load %arg11[%22, %c0_19] : memref<64x512xf32, #tpu.memory_space<vmem>>, vector<8x512xf32>
    %c0_20 = arith.constant 0 : index
    %c0_21 = arith.constant 0 : index
    %24 = vector.load %arg13[%c0_20, %c0_21] : memref<8x128xf32, #tpu.memory_space<vmem>>, vector<8x128xf32>
    %c0_22 = arith.constant 0 : index
    %c0_23 = arith.constant 0 : index
    %25 = vector.load %arg7[%c0_22, %c0_23] : memref<128x512xf32, #tpu.memory_space<vmem>>, vector<128x512xf32>
    %cst_24 = arith.constant dense<0.000000e+00> : vector<8x512xf32>
    %26 = tpu.matmul %24, %25, %cst_24 {dimension_numbers = #tpu.dot_dimension_numbers<[1], [0], [0], [1], [0, 0, 1, 1], [], []>} : vector<8x128xf32>, vector<128x512xf32>, vector<8x512xf32> -> vector<8x512xf32>
    %27 = arith.addf %23, %26 : vector<8x512xf32>
    %28 = arith.index_cast %21 : i32 to index
    %c0_25 = arith.constant 0 : index
    %29 = vector.load %arg12[%28, %c0_25] : memref<64x512xf32, #tpu.memory_space<vmem>>, vector<8x512xf32>
    %c0_26 = arith.constant 0 : index
    %c0_27 = arith.constant 0 : index
    %30 = vector.load %arg15[%c0_26, %c0_27] : memref<8x128xf32, #tpu.memory_space<vmem>>, vector<8x128xf32>
    %c0_28 = arith.constant 0 : index
    %c0_29 = arith.constant 0 : index
    %31 = vector.load %arg8[%c0_28, %c0_29] : memref<128x512xf32, #tpu.memory_space<vmem>>, vector<128x512xf32>
    %cst_30 = arith.constant dense<0.000000e+00> : vector<8x512xf32>
    %32 = tpu.matmul %30, %31, %cst_30 {dimension_numbers = #tpu.dot_dimension_numbers<[1], [0], [0], [1], [0, 0, 1, 1], [], []>} : vector<8x128xf32>, vector<128x512xf32>, vector<8x512xf32> -> vector<8x512xf32>
    %33 = arith.addf %29, %32 : vector<8x512xf32>
    %c0_31 = arith.constant 0 : index
    %c0_32 = arith.constant 0 : index
    %34 = vector.load %arg14[%c0_31, %c0_32] : memref<8x128xf32, #tpu.memory_space<vmem>>, vector<8x128xf32>
    %35 = vector.extract_strided_slice %27 {offsets = [0, 0], sizes = [8, 128], strides = [1, 1]} : vector<8x512xf32> to vector<8x128xf32>
    %cst_33 = arith.constant 5.000000e-01 : f32
    %36 = vector.broadcast %cst_33 : f32 to vector<8x128xf32>
    %37 = arith.mulf %36, %35 : vector<8x128xf32>
    %38 = math.tanh %37 : vector<8x128xf32>
    %cst_34 = arith.constant 5.000000e-01 : f32
    %39 = vector.broadcast %cst_34 : f32 to vector<8x128xf32>
    %40 = arith.mulf %39, %38 : vector<8x128xf32>
    %cst_35 = arith.constant 5.000000e-01 : f32
    %41 = vector.broadcast %cst_35 : f32 to vector<8x128xf32>
    %42 = arith.addf %40, %41 : vector<8x128xf32>
    %43 = vector.extract_strided_slice %27 {offsets = [0, 128], sizes = [8, 128], strides = [1, 1]} : vector<8x512xf32> to vector<8x128xf32>
    %cst_36 = arith.constant 5.000000e-01 : f32
    %44 = vector.broadcast %cst_36 : f32 to vector<8x128xf32>
    %45 = arith.mulf %44, %43 : vector<8x128xf32>
    %46 = math.tanh %45 : vector<8x128xf32>
    %cst_37 = arith.constant 5.000000e-01 : f32
    %47 = vector.broadcast %cst_37 : f32 to vector<8x128xf32>
    %48 = arith.mulf %47, %46 : vector<8x128xf32>
    %cst_38 = arith.constant 5.000000e-01 : f32
    %49 = vector.broadcast %cst_38 : f32 to vector<8x128xf32>
    %50 = arith.addf %48, %49 : vector<8x128xf32>
    %51 = vector.extract_strided_slice %27 {offsets = [0, 256], sizes = [8, 128], strides = [1, 1]} : vector<8x512xf32> to vector<8x128xf32>
    %52 = math.tanh %51 : vector<8x128xf32>
    %53 = vector.extract_strided_slice %27 {offsets = [0, 384], sizes = [8, 128], strides = [1, 1]} : vector<8x512xf32> to vector<8x128xf32>
    %cst_39 = arith.constant 5.000000e-01 : f32
    %54 = vector.broadcast %cst_39 : f32 to vector<8x128xf32>
    %55 = arith.mulf %54, %53 : vector<8x128xf32>
    %56 = math.tanh %55 : vector<8x128xf32>
    %cst_40 = arith.constant 5.000000e-01 : f32
    %57 = vector.broadcast %cst_40 : f32 to vector<8x128xf32>
    %58 = arith.mulf %57, %56 : vector<8x128xf32>
    %cst_41 = arith.constant 5.000000e-01 : f32
    %59 = vector.broadcast %cst_41 : f32 to vector<8x128xf32>
    %60 = arith.addf %58, %59 : vector<8x128xf32>
    %61 = arith.mulf %50, %34 : vector<8x128xf32>
    %62 = arith.mulf %42, %52 : vector<8x128xf32>
    %63 = arith.addf %61, %62 : vector<8x128xf32>
    %64 = math.tanh %63 : vector<8x128xf32>
    %65 = arith.mulf %60, %64 : vector<8x128xf32>
    %c0_42 = arith.constant 0 : index
    %c0_43 = arith.constant 0 : index
    %66 = vector.load %arg16[%c0_42, %c0_43] : memref<8x128xf32, #tpu.memory_space<vmem>>, vector<8x128xf32>
    %67 = vector.extract_strided_slice %33 {offsets = [0, 0], sizes = [8, 128], strides = [1, 1]} : vector<8x512xf32> to vector<8x128xf32>
    %cst_44 = arith.constant 5.000000e-01 : f32
    %68 = vector.broadcast %cst_44 : f32 to vector<8x128xf32>
    %69 = arith.mulf %68, %67 : vector<8x128xf32>
    %70 = math.tanh %69 : vector<8x128xf32>
    %cst_45 = arith.constant 5.000000e-01 : f32
    %71 = vector.broadcast %cst_45 : f32 to vector<8x128xf32>
    %72 = arith.mulf %71, %70 : vector<8x128xf32>
    %cst_46 = arith.constant 5.000000e-01 : f32
    %73 = vector.broadcast %cst_46 : f32 to vector<8x128xf32>
    %74 = arith.addf %72, %73 : vector<8x128xf32>
    %75 = vector.extract_strided_slice %33 {offsets = [0, 128], sizes = [8, 128], strides = [1, 1]} : vector<8x512xf32> to vector<8x128xf32>
    %cst_47 = arith.constant 5.000000e-01 : f32
    %76 = vector.broadcast %cst_47 : f32 to vector<8x128xf32>
    %77 = arith.mulf %76, %75 : vector<8x128xf32>
    %78 = math.tanh %77 : vector<8x128xf32>
    %cst_48 = arith.constant 5.000000e-01 : f32
    %79 = vector.broadcast %cst_48 : f32 to vector<8x128xf32>
    %80 = arith.mulf %79, %78 : vector<8x128xf32>
    %cst_49 = arith.constant 5.000000e-01 : f32
    %81 = vector.broadcast %cst_49 : f32 to vector<8x128xf32>
    %82 = arith.addf %80, %81 : vector<8x128xf32>
    %83 = vector.extract_strided_slice %33 {offsets = [0, 256], sizes = [8, 128], strides = [1, 1]} : vector<8x512xf32> to vector<8x128xf32>
    %84 = math.tanh %83 : vector<8x128xf32>
    %85 = vector.extract_strided_slice %33 {offsets = [0, 384], sizes = [8, 128], strides = [1, 1]} : vector<8x512xf32> to vector<8x128xf32>
    %cst_50 = arith.constant 5.000000e-01 : f32
    %86 = vector.broadcast %cst_50 : f32 to vector<8x128xf32>
    %87 = arith.mulf %86, %85 : vector<8x128xf32>
    %88 = math.tanh %87 : vector<8x128xf32>
    %cst_51 = arith.constant 5.000000e-01 : f32
    %89 = vector.broadcast %cst_51 : f32 to vector<8x128xf32>
    %90 = arith.mulf %89, %88 : vector<8x128xf32>
    %cst_52 = arith.constant 5.000000e-01 : f32
    %91 = vector.broadcast %cst_52 : f32 to vector<8x128xf32>
    %92 = arith.addf %90, %91 : vector<8x128xf32>
    %93 = arith.mulf %82, %66 : vector<8x128xf32>
    %94 = arith.mulf %74, %84 : vector<8x128xf32>
    %95 = arith.addf %93, %94 : vector<8x128xf32>
    %96 = math.tanh %95 : vector<8x128xf32>
    %97 = arith.mulf %92, %96 : vector<8x128xf32>
    %c0_53 = arith.constant 0 : index
    %c0_54 = arith.constant 0 : index
    %98 = vector.load %arg13[%c0_53, %c0_54] : memref<8x128xf32, #tpu.memory_space<vmem>>, vector<8x128xf32>
    tpu.vector_store %arg13[%c0_53, %c0_54], %65 {strides = array<i32>} : memref<8x128xf32, #tpu.memory_space<vmem>>, vector<8x128xf32>,
    %c0_55 = arith.constant 0 : index
    %c0_56 = arith.constant 0 : index
    %99 = vector.load %arg14[%c0_55, %c0_56] : memref<8x128xf32, #tpu.memory_space<vmem>>, vector<8x128xf32>
    tpu.vector_store %arg14[%c0_55, %c0_56], %63 {strides = array<i32>} : memref<8x128xf32, #tpu.memory_space<vmem>>, vector<8x128xf32>,
    %100 = arith.index_cast %c0_i32_17 : i32 to index
    %c0_57 = arith.constant 0 : index
    %c0_58 = arith.constant 0 : index
    %101 = vector.load %arg9[%100, %c0_57, %c0_58] : memref<8x8x128xf32, #tpu.memory_space<vmem>>, vector<1x8x128xf32>
    %102 = vector.shape_cast %101 : vector<1x8x128xf32> to vector<8x128xf32>
    %103 = vector.shape_cast %65 : vector<8x128xf32> to vector<1x8x128xf32>
    tpu.vector_store %arg9[%100, %c0_57, %c0_58], %103 {strides = array<i32>} : memref<8x8x128xf32, #tpu.memory_space<vmem>>, vector<1x8x128xf32>,
    %c7_i32_59 = arith.constant 7 : i32
    %104 = arith.subi %c7_i32_59, %c0_i32_17 : i32
    %105 = arith.index_cast %104 : i32 to index
    %c0_60 = arith.constant 0 : index
    %c0_61 = arith.constant 0 : index
    %106 = vector.load %arg10[%105, %c0_60, %c0_61] : memref<8x8x128xf32, #tpu.memory_space<vmem>>, vector<1x8x128xf32>
    %107 = vector.shape_cast %106 : vector<1x8x128xf32> to vector<8x128xf32>
    %108 = vector.shape_cast %97 : vector<8x128xf32> to vector<1x8x128xf32>
    tpu.vector_store %arg10[%105, %c0_60, %c0_61], %108 {strides = array<i32>} : memref<8x8x128xf32, #tpu.memory_space<vmem>>, vector<1x8x128xf32>,
    %c0_62 = arith.constant 0 : index
    %c0_63 = arith.constant 0 : index
    %109 = vector.load %arg15[%c0_62, %c0_63] : memref<8x128xf32, #tpu.memory_space<vmem>>, vector<8x128xf32>
    tpu.vector_store %arg15[%c0_62, %c0_63], %97 {strides = array<i32>} : memref<8x128xf32, #tpu.memory_space<vmem>>, vector<8x128xf32>,
    %c0_64 = arith.constant 0 : index
    %c0_65 = arith.constant 0 : index
    %110 = vector.load %arg16[%c0_64, %c0_65] : memref<8x128xf32, #tpu.memory_space<vmem>>, vector<8x128xf32>
    tpu.vector_store %arg16[%c0_64, %c0_65], %95 {strides = array<i32>} : memref<8x128xf32, #tpu.memory_space<vmem>>, vector<8x128xf32>,
    %c1_i32 = arith.constant 1 : i32
    %c8_i32_66 = arith.constant 8 : i32
    %111 = arith.muli %c1_i32, %c8_i32_66 : i32
    %112 = tpu.assume_multiple %111, 8 : i32
    %c7_i32_67 = arith.constant 7 : i32
    %113 = arith.subi %c7_i32_67, %c1_i32 : i32
    %c8_i32_68 = arith.constant 8 : i32
    %114 = arith.muli %113, %c8_i32_68 : i32
    %115 = tpu.assume_multiple %114, 8 : i32
    %116 = arith.index_cast %112 : i32 to index
    %c0_69 = arith.constant 0 : index
    %117 = vector.load %arg11[%116, %c0_69] : memref<64x512xf32, #tpu.memory_space<vmem>>, vector<8x512xf32>
    %c0_70 = arith.constant 0 : index
    %c0_71 = arith.constant 0 : index
    %118 = vector.load %arg13[%c0_70, %c0_71] : memref<8x128xf32, #tpu.memory_space<vmem>>, vector<8x128xf32>
    %c0_72 = arith.constant 0 : index
    %c0_73 = arith.constant 0 : index
    %119 = vector.load %arg7[%c0_72, %c0_73] : memref<128x512xf32, #tpu.memory_space<vmem>>, vector<128x512xf32>
    %cst_74 = arith.constant dense<0.000000e+00> : vector<8x512xf32>
    %120 = tpu.matmul %118, %119, %cst_74 {dimension_numbers = #tpu.dot_dimension_numbers<[1], [0], [0], [1], [0, 0, 1, 1], [], []>} : vector<8x128xf32>, vector<128x512xf32>, vector<8x512xf32> -> vector<8x512xf32>
    %121 = arith.addf %117, %120 : vector<8x512xf32>
    %122 = arith.index_cast %115 : i32 to index
    %c0_75 = arith.constant 0 : index
    %123 = vector.load %arg12[%122, %c0_75] : memref<64x512xf32, #tpu.memory_space<vmem>>, vector<8x512xf32>
    %c0_76 = arith.constant 0 : index
    %c0_77 = arith.constant 0 : index
    %124 = vector.load %arg15[%c0_76, %c0_77] : memref<8x128xf32, #tpu.memory_space<vmem>>, vector<8x128xf32>
    %c0_78 = arith.constant 0 : index
    %c0_79 = arith.constant 0 : index
    %125 = vector.load %arg8[%c0_78, %c0_79] : memref<128x512xf32, #tpu.memory_space<vmem>>, vector<128x512xf32>
    %cst_80 = arith.constant dense<0.000000e+00> : vector<8x512xf32>
    %126 = tpu.matmul %124, %125, %cst_80 {dimension_numbers = #tpu.dot_dimension_numbers<[1], [0], [0], [1], [0, 0, 1, 1], [], []>} : vector<8x128xf32>, vector<128x512xf32>, vector<8x512xf32> -> vector<8x512xf32>
    %127 = arith.addf %123, %126 : vector<8x512xf32>
    %c0_81 = arith.constant 0 : index
    %c0_82 = arith.constant 0 : index
    %128 = vector.load %arg14[%c0_81, %c0_82] : memref<8x128xf32, #tpu.memory_space<vmem>>, vector<8x128xf32>
    %129 = vector.extract_strided_slice %121 {offsets = [0, 0], sizes = [8, 128], strides = [1, 1]} : vector<8x512xf32> to vector<8x128xf32>
    %cst_83 = arith.constant 5.000000e-01 : f32
    %130 = vector.broadcast %cst_83 : f32 to vector<8x128xf32>
    %131 = arith.mulf %130, %129 : vector<8x128xf32>
    %132 = math.tanh %131 : vector<8x128xf32>
    %cst_84 = arith.constant 5.000000e-01 : f32
    %133 = vector.broadcast %cst_84 : f32 to vector<8x128xf32>
    %134 = arith.mulf %133, %132 : vector<8x128xf32>
    %cst_85 = arith.constant 5.000000e-01 : f32
    %135 = vector.broadcast %cst_85 : f32 to vector<8x128xf32>
    %136 = arith.addf %134, %135 : vector<8x128xf32>
    %137 = vector.extract_strided_slice %121 {offsets = [0, 128], sizes = [8, 128], strides = [1, 1]} : vector<8x512xf32> to vector<8x128xf32>
    %cst_86 = arith.constant 5.000000e-01 : f32
    %138 = vector.broadcast %cst_86 : f32 to vector<8x128xf32>
    %139 = arith.mulf %138, %137 : vector<8x128xf32>
    %140 = math.tanh %139 : vector<8x128xf32>
    %cst_87 = arith.constant 5.000000e-01 : f32
    %141 = vector.broadcast %cst_87 : f32 to vector<8x128xf32>
    %142 = arith.mulf %141, %140 : vector<8x128xf32>
    %cst_88 = arith.constant 5.000000e-01 : f32
    %143 = vector.broadcast %cst_88 : f32 to vector<8x128xf32>
    %144 = arith.addf %142, %143 : vector<8x128xf32>
    %145 = vector.extract_strided_slice %121 {offsets = [0, 256], sizes = [8, 128], strides = [1, 1]} : vector<8x512xf32> to vector<8x128xf32>
    %146 = math.tanh %145 : vector<8x128xf32>
    %147 = vector.extract_strided_slice %121 {offsets = [0, 384], sizes = [8, 128], strides = [1, 1]} : vector<8x512xf32> to vector<8x128xf32>
    %cst_89 = arith.constant 5.000000e-01 : f32
    %148 = vector.broadcast %cst_89 : f32 to vector<8x128xf32>
    %149 = arith.mulf %148, %147 : vector<8x128xf32>
    %150 = math.tanh %149 : vector<8x128xf32>
    %cst_90 = arith.constant 5.000000e-01 : f32
    %151 = vector.broadcast %cst_90 : f32 to vector<8x128xf32>
    %152 = arith.mulf %151, %150 : vector<8x128xf32>
    %cst_91 = arith.constant 5.000000e-01 : f32
    %153 = vector.broadcast %cst_91 : f32 to vector<8x128xf32>
    %154 = arith.addf %152, %153 : vector<8x128xf32>
    %155 = arith.mulf %144, %128 : vector<8x128xf32>
    %156 = arith.mulf %136, %146 : vector<8x128xf32>
    %157 = arith.addf %155, %156 : vector<8x128xf32>
    %158 = math.tanh %157 : vector<8x128xf32>
    %159 = arith.mulf %154, %158 : vector<8x128xf32>
    %c0_92 = arith.constant 0 : index
    %c0_93 = arith.constant 0 : index
    %160 = vector.load %arg16[%c0_92, %c0_93] : memref<8x128xf32, #tpu.memory_space<vmem>>, vector<8x128xf32>
    %161 = vector.extract_strided_slice %127 {offsets = [0, 0], sizes = [8, 128], strides = [1, 1]} : vector<8x512xf32> to vector<8x128xf32>
    %cst_94 = arith.constant 5.000000e-01 : f32
    %162 = vector.broadcast %cst_94 : f32 to vector<8x128xf32>
    %163 = arith.mulf %162, %161 : vector<8x128xf32>
    %164 = math.tanh %163 : vector<8x128xf32>
    %cst_95 = arith.constant 5.000000e-01 : f32
    %165 = vector.broadcast %cst_95 : f32 to vector<8x128xf32>
    %166 = arith.mulf %165, %164 : vector<8x128xf32>
    %cst_96 = arith.constant 5.000000e-01 : f32
    %167 = vector.broadcast %cst_96 : f32 to vector<8x128xf32>
    %168 = arith.addf %166, %167 : vector<8x128xf32>
    %169 = vector.extract_strided_slice %127 {offsets = [0, 128], sizes = [8, 128], strides = [1, 1]} : vector<8x512xf32> to vector<8x128xf32>
    %cst_97 = arith.constant 5.000000e-01 : f32
    %170 = vector.broadcast %cst_97 : f32 to vector<8x128xf32>
    %171 = arith.mulf %170, %169 : vector<8x128xf32>
    %172 = math.tanh %171 : vector<8x128xf32>
    %cst_98 = arith.constant 5.000000e-01 : f32
    %173 = vector.broadcast %cst_98 : f32 to vector<8x128xf32>
    %174 = arith.mulf %173, %172 : vector<8x128xf32>
    %cst_99 = arith.constant 5.000000e-01 : f32
    %175 = vector.broadcast %cst_99 : f32 to vector<8x128xf32>
    %176 = arith.addf %174, %175 : vector<8x128xf32>
    %177 = vector.extract_strided_slice %127 {offsets = [0, 256], sizes = [8, 128], strides = [1, 1]} : vector<8x512xf32> to vector<8x128xf32>
    %178 = math.tanh %177 : vector<8x128xf32>
    %179 = vector.extract_strided_slice %127 {offsets = [0, 384], sizes = [8, 128], strides = [1, 1]} : vector<8x512xf32> to vector<8x128xf32>
    %cst_100 = arith.constant 5.000000e-01 : f32
    %180 = vector.broadcast %cst_100 : f32 to vector<8x128xf32>
    %181 = arith.mulf %180, %179 : vector<8x128xf32>
    %182 = math.tanh %181 : vector<8x128xf32>
    %cst_101 = arith.constant 5.000000e-01 : f32
    %183 = vector.broadcast %cst_101 : f32 to vector<8x128xf32>
    %184 = arith.mulf %183, %182 : vector<8x128xf32>
    %cst_102 = arith.constant 5.000000e-01 : f32
    %185 = vector.broadcast %cst_102 : f32 to vector<8x128xf32>
    %186 = arith.addf %184, %185 : vector<8x128xf32>
    %187 = arith.mulf %176, %160 : vector<8x128xf32>
    %188 = arith.mulf %168, %178 : vector<8x128xf32>
    %189 = arith.addf %187, %188 : vector<8x128xf32>
    %190 = math.tanh %189 : vector<8x128xf32>
    %191 = arith.mulf %186, %190 : vector<8x128xf32>
    %c0_103 = arith.constant 0 : index
    %c0_104 = arith.constant 0 : index
    %192 = vector.load %arg13[%c0_103, %c0_104] : memref<8x128xf32, #tpu.memory_space<vmem>>, vector<8x128xf32>
    tpu.vector_store %arg13[%c0_103, %c0_104], %159 {strides = array<i32>} : memref<8x128xf32, #tpu.memory_space<vmem>>, vector<8x128xf32>,
    %c0_105 = arith.constant 0 : index
    %c0_106 = arith.constant 0 : index
    %193 = vector.load %arg14[%c0_105, %c0_106] : memref<8x128xf32, #tpu.memory_space<vmem>>, vector<8x128xf32>
    tpu.vector_store %arg14[%c0_105, %c0_106], %157 {strides = array<i32>} : memref<8x128xf32, #tpu.memory_space<vmem>>, vector<8x128xf32>,
    %194 = arith.index_cast %c1_i32 : i32 to index
    %c0_107 = arith.constant 0 : index
    %c0_108 = arith.constant 0 : index
    %195 = vector.load %arg9[%194, %c0_107, %c0_108] : memref<8x8x128xf32, #tpu.memory_space<vmem>>, vector<1x8x128xf32>
    %196 = vector.shape_cast %195 : vector<1x8x128xf32> to vector<8x128xf32>
    %197 = vector.shape_cast %159 : vector<8x128xf32> to vector<1x8x128xf32>
    tpu.vector_store %arg9[%194, %c0_107, %c0_108], %197 {strides = array<i32>} : memref<8x8x128xf32, #tpu.memory_space<vmem>>, vector<1x8x128xf32>,
    %c7_i32_109 = arith.constant 7 : i32
    %198 = arith.subi %c7_i32_109, %c1_i32 : i32
    %199 = arith.index_cast %198 : i32 to index
    %c0_110 = arith.constant 0 : index
    %c0_111 = arith.constant 0 : index
    %200 = vector.load %arg10[%199, %c0_110, %c0_111] : memref<8x8x128xf32, #tpu.memory_space<vmem>>, vector<1x8x128xf32>
    %201 = vector.shape_cast %200 : vector<1x8x128xf32> to vector<8x128xf32>
    %202 = vector.shape_cast %191 : vector<8x128xf32> to vector<1x8x128xf32>
    tpu.vector_store %arg10[%199, %c0_110, %c0_111], %202 {strides = array<i32>} : memref<8x8x128xf32, #tpu.memory_space<vmem>>, vector<1x8x128xf32>,
    %c0_112 = arith.constant 0 : index
    %c0_113 = arith.constant 0 : index
    %203 = vector.load %arg15[%c0_112, %c0_113] : memref<8x128xf32, #tpu.memory_space<vmem>>, vector<8x128xf32>
    tpu.vector_store %arg15[%c0_112, %c0_113], %191 {strides = array<i32>} : memref<8x128xf32, #tpu.memory_space<vmem>>, vector<8x128xf32>,
    %c0_114 = arith.constant 0 : index
    %c0_115 = arith.constant 0 : index
    %204 = vector.load %arg16[%c0_114, %c0_115] : memref<8x128xf32, #tpu.memory_space<vmem>>, vector<8x128xf32>
    tpu.vector_store %arg16[%c0_114, %c0_115], %189 {strides = array<i32>} : memref<8x128xf32, #tpu.memory_space<vmem>>, vector<8x128xf32>,
    %c2_i32 = arith.constant 2 : i32
    %c8_i32_116 = arith.constant 8 : i32
    %205 = arith.muli %c2_i32, %c8_i32_116 : i32
    %206 = tpu.assume_multiple %205, 8 : i32
    %c7_i32_117 = arith.constant 7 : i32
    %207 = arith.subi %c7_i32_117, %c2_i32 : i32
    %c8_i32_118 = arith.constant 8 : i32
    %208 = arith.muli %207, %c8_i32_118 : i32
    %209 = tpu.assume_multiple %208, 8 : i32
    %210 = arith.index_cast %206 : i32 to index
    %c0_119 = arith.constant 0 : index
    %211 = vector.load %arg11[%210, %c0_119] : memref<64x512xf32, #tpu.memory_space<vmem>>, vector<8x512xf32>
    %c0_120 = arith.constant 0 : index
    %c0_121 = arith.constant 0 : index
    %212 = vector.load %arg13[%c0_120, %c0_121] : memref<8x128xf32, #tpu.memory_space<vmem>>, vector<8x128xf32>
    %c0_122 = arith.constant 0 : index
    %c0_123 = arith.constant 0 : index
    %213 = vector.load %arg7[%c0_122, %c0_123] : memref<128x512xf32, #tpu.memory_space<vmem>>, vector<128x512xf32>
    %cst_124 = arith.constant dense<0.000000e+00> : vector<8x512xf32>
    %214 = tpu.matmul %212, %213, %cst_124 {dimension_numbers = #tpu.dot_dimension_numbers<[1], [0], [0], [1], [0, 0, 1, 1], [], []>} : vector<8x128xf32>, vector<128x512xf32>, vector<8x512xf32> -> vector<8x512xf32>
    %215 = arith.addf %211, %214 : vector<8x512xf32>
    %216 = arith.index_cast %209 : i32 to index
    %c0_125 = arith.constant 0 : index
    %217 = vector.load %arg12[%216, %c0_125] : memref<64x512xf32, #tpu.memory_space<vmem>>, vector<8x512xf32>
    %c0_126 = arith.constant 0 : index
    %c0_127 = arith.constant 0 : index
    %218 = vector.load %arg15[%c0_126, %c0_127] : memref<8x128xf32, #tpu.memory_space<vmem>>, vector<8x128xf32>
    %c0_128 = arith.constant 0 : index
    %c0_129 = arith.constant 0 : index
    %219 = vector.load %arg8[%c0_128, %c0_129] : memref<128x512xf32, #tpu.memory_space<vmem>>, vector<128x512xf32>
    %cst_130 = arith.constant dense<0.000000e+00> : vector<8x512xf32>
    %220 = tpu.matmul %218, %219, %cst_130 {dimension_numbers = #tpu.dot_dimension_numbers<[1], [0], [0], [1], [0, 0, 1, 1], [], []>} : vector<8x128xf32>, vector<128x512xf32>, vector<8x512xf32> -> vector<8x512xf32>
    %221 = arith.addf %217, %220 : vector<8x512xf32>
    %c0_131 = arith.constant 0 : index
    %c0_132 = arith.constant 0 : index
    %222 = vector.load %arg14[%c0_131, %c0_132] : memref<8x128xf32, #tpu.memory_space<vmem>>, vector<8x128xf32>
    %223 = vector.extract_strided_slice %215 {offsets = [0, 0], sizes = [8, 128], strides = [1, 1]} : vector<8x512xf32> to vector<8x128xf32>
    %cst_133 = arith.constant 5.000000e-01 : f32
    %224 = vector.broadcast %cst_133 : f32 to vector<8x128xf32>
    %225 = arith.mulf %224, %223 : vector<8x128xf32>
    %226 = math.tanh %225 : vector<8x128xf32>
    %cst_134 = arith.constant 5.000000e-01 : f32
    %227 = vector.broadcast %cst_134 : f32 to vector<8x128xf32>
    %228 = arith.mulf %227, %226 : vector<8x128xf32>
    %cst_135 = arith.constant 5.000000e-01 : f32
    %229 = vector.broadcast %cst_135 : f32 to vector<8x128xf32>
    %230 = arith.addf %228, %229 : vector<8x128xf32>
    %231 = vector.extract_strided_slice %215 {offsets = [0, 128], sizes = [8, 128], strides = [1, 1]} : vector<8x512xf32> to vector<8x128xf32>
    %cst_136 = arith.constant 5.000000e-01 : f32
    %232 = vector.broadcast %cst_136 : f32 to vector<8x128xf32>
    %233 = arith.mulf %232, %231 : vector<8x128xf32>
    %234 = math.tanh %233 : vector<8x128xf32>
    %cst_137 = arith.constant 5.000000e-01 : f32
    %235 = vector.broadcast %cst_137 : f32 to vector<8x128xf32>
    %236 = arith.mulf %235, %234 : vector<8x128xf32>
    %cst_138 = arith.constant 5.000000e-01 : f32
    %237 = vector.broadcast %cst_138 : f32 to vector<8x128xf32>
    %238 = arith.addf %236, %237 : vector<8x128xf32>
    %239 = vector.extract_strided_slice %215 {offsets = [0, 256], sizes = [8, 128], strides = [1, 1]} : vector<8x512xf32> to vector<8x128xf32>
    %240 = math.tanh %239 : vector<8x128xf32>
    %241 = vector.extract_strided_slice %215 {offsets = [0, 384], sizes = [8, 128], strides = [1, 1]} : vector<8x512xf32> to vector<8x128xf32>
    %cst_139 = arith.constant 5.000000e-01 : f32
    %242 = vector.broadcast %cst_139 : f32 to vector<8x128xf32>
    %243 = arith.mulf %242, %241 : vector<8x128xf32>
    %244 = math.tanh %243 : vector<8x128xf32>
    %cst_140 = arith.constant 5.000000e-01 : f32
    %245 = vector.broadcast %cst_140 : f32 to vector<8x128xf32>
    %246 = arith.mulf %245, %244 : vector<8x128xf32>
    %cst_141 = arith.constant 5.000000e-01 : f32
    %247 = vector.broadcast %cst_141 : f32 to vector<8x128xf32>
    %248 = arith.addf %246, %247 : vector<8x128xf32>
    %249 = arith.mulf %238, %222 : vector<8x128xf32>
    %250 = arith.mulf %230, %240 : vector<8x128xf32>
    %251 = arith.addf %249, %250 : vector<8x128xf32>
    %252 = math.tanh %251 : vector<8x128xf32>
    %253 = arith.mulf %248, %252 : vector<8x128xf32>
    %c0_142 = arith.constant 0 : index
    %c0_143 = arith.constant 0 : index
    %254 = vector.load %arg16[%c0_142, %c0_143] : memref<8x128xf32, #tpu.memory_space<vmem>>, vector<8x128xf32>
    %255 = vector.extract_strided_slice %221 {offsets = [0, 0], sizes = [8, 128], strides = [1, 1]} : vector<8x512xf32> to vector<8x128xf32>
    %cst_144 = arith.constant 5.000000e-01 : f32
    %256 = vector.broadcast %cst_144 : f32 to vector<8x128xf32>
    %257 = arith.mulf %256, %255 : vector<8x128xf32>
    %258 = math.tanh %257 : vector<8x128xf32>
    %cst_145 = arith.constant 5.000000e-01 : f32
    %259 = vector.broadcast %cst_145 : f32 to vector<8x128xf32>
    %260 = arith.mulf %259, %258 : vector<8x128xf32>
    %cst_146 = arith.constant 5.000000e-01 : f32
    %261 = vector.broadcast %cst_146 : f32 to vector<8x128xf32>
    %262 = arith.addf %260, %261 : vector<8x128xf32>
    %263 = vector.extract_strided_slice %221 {offsets = [0, 128], sizes = [8, 128], strides = [1, 1]} : vector<8x512xf32> to vector<8x128xf32>
    %cst_147 = arith.constant 5.000000e-01 : f32
    %264 = vector.broadcast %cst_147 : f32 to vector<8x128xf32>
    %265 = arith.mulf %264, %263 : vector<8x128xf32>
    %266 = math.tanh %265 : vector<8x128xf32>
    %cst_148 = arith.constant 5.000000e-01 : f32
    %267 = vector.broadcast %cst_148 : f32 to vector<8x128xf32>
    %268 = arith.mulf %267, %266 : vector<8x128xf32>
    %cst_149 = arith.constant 5.000000e-01 : f32
    %269 = vector.broadcast %cst_149 : f32 to vector<8x128xf32>
    %270 = arith.addf %268, %269 : vector<8x128xf32>
    %271 = vector.extract_strided_slice %221 {offsets = [0, 256], sizes = [8, 128], strides = [1, 1]} : vector<8x512xf32> to vector<8x128xf32>
    %272 = math.tanh %271 : vector<8x128xf32>
    %273 = vector.extract_strided_slice %221 {offsets = [0, 384], sizes = [8, 128], strides = [1, 1]} : vector<8x512xf32> to vector<8x128xf32>
    %cst_150 = arith.constant 5.000000e-01 : f32
    %274 = vector.broadcast %cst_150 : f32 to vector<8x128xf32>
    %275 = arith.mulf %274, %273 : vector<8x128xf32>
    %276 = math.tanh %275 : vector<8x128xf32>
    %cst_151 = arith.constant 5.000000e-01 : f32
    %277 = vector.broadcast %cst_151 : f32 to vector<8x128xf32>
    %278 = arith.mulf %277, %276 : vector<8x128xf32>
    %cst_152 = arith.constant 5.000000e-01 : f32
    %279 = vector.broadcast %cst_152 : f32 to vector<8x128xf32>
    %280 = arith.addf %278, %279 : vector<8x128xf32>
    %281 = arith.mulf %270, %254 : vector<8x128xf32>
    %282 = arith.mulf %262, %272 : vector<8x128xf32>
    %283 = arith.addf %281, %282 : vector<8x128xf32>
    %284 = math.tanh %283 : vector<8x128xf32>
    %285 = arith.mulf %280, %284 : vector<8x128xf32>
    %c0_153 = arith.constant 0 : index
    %c0_154 = arith.constant 0 : index
    %286 = vector.load %arg13[%c0_153, %c0_154] : memref<8x128xf32, #tpu.memory_space<vmem>>, vector<8x128xf32>
    tpu.vector_store %arg13[%c0_153, %c0_154], %253 {strides = array<i32>} : memref<8x128xf32, #tpu.memory_space<vmem>>, vector<8x128xf32>,
    %c0_155 = arith.constant 0 : index
    %c0_156 = arith.constant 0 : index
    %287 = vector.load %arg14[%c0_155, %c0_156] : memref<8x128xf32, #tpu.memory_space<vmem>>, vector<8x128xf32>
    tpu.vector_store %arg14[%c0_155, %c0_156], %251 {strides = array<i32>} : memref<8x128xf32, #tpu.memory_space<vmem>>, vector<8x128xf32>,
    %288 = arith.index_cast %c2_i32 : i32 to index
    %c0_157 = arith.constant 0 : index
    %c0_158 = arith.constant 0 : index
    %289 = vector.load %arg9[%288, %c0_157, %c0_158] : memref<8x8x128xf32, #tpu.memory_space<vmem>>, vector<1x8x128xf32>
    %290 = vector.shape_cast %289 : vector<1x8x128xf32> to vector<8x128xf32>
    %291 = vector.shape_cast %253 : vector<8x128xf32> to vector<1x8x128xf32>
    tpu.vector_store %arg9[%288, %c0_157, %c0_158], %291 {strides = array<i32>} : memref<8x8x128xf32, #tpu.memory_space<vmem>>, vector<1x8x128xf32>,
    %c7_i32_159 = arith.constant 7 : i32
    %292 = arith.subi %c7_i32_159, %c2_i32 : i32
    %293 = arith.index_cast %292 : i32 to index
    %c0_160 = arith.constant 0 : index
    %c0_161 = arith.constant 0 : index
    %294 = vector.load %arg10[%293, %c0_160, %c0_161] : memref<8x8x128xf32, #tpu.memory_space<vmem>>, vector<1x8x128xf32>
    %295 = vector.shape_cast %294 : vector<1x8x128xf32> to vector<8x128xf32>
    %296 = vector.shape_cast %285 : vector<8x128xf32> to vector<1x8x128xf32>
    tpu.vector_store %arg10[%293, %c0_160, %c0_161], %296 {strides = array<i32>} : memref<8x8x128xf32, #tpu.memory_space<vmem>>, vector<1x8x128xf32>,
    %c0_162 = arith.constant 0 : index
    %c0_163 = arith.constant 0 : index
    %297 = vector.load %arg15[%c0_162, %c0_163] : memref<8x128xf32, #tpu.memory_space<vmem>>, vector<8x128xf32>
    tpu.vector_store %arg15[%c0_162, %c0_163], %285 {strides = array<i32>} : memref<8x128xf32, #tpu.memory_space<vmem>>, vector<8x128xf32>,
    %c0_164 = arith.constant 0 : index
    %c0_165 = arith.constant 0 : index
    %298 = vector.load %arg16[%c0_164, %c0_165] : memref<8x128xf32, #tpu.memory_space<vmem>>, vector<8x128xf32>
    tpu.vector_store %arg16[%c0_164, %c0_165], %283 {strides = array<i32>} : memref<8x128xf32, #tpu.memory_space<vmem>>, vector<8x128xf32>,
    %c3_i32 = arith.constant 3 : i32
    %c8_i32_166 = arith.constant 8 : i32
    %299 = arith.muli %c3_i32, %c8_i32_166 : i32
    %300 = tpu.assume_multiple %299, 8 : i32
    %c7_i32_167 = arith.constant 7 : i32
    %301 = arith.subi %c7_i32_167, %c3_i32 : i32
    %c8_i32_168 = arith.constant 8 : i32
    %302 = arith.muli %301, %c8_i32_168 : i32
    %303 = tpu.assume_multiple %302, 8 : i32
    %304 = arith.index_cast %300 : i32 to index
    %c0_169 = arith.constant 0 : index
    %305 = vector.load %arg11[%304, %c0_169] : memref<64x512xf32, #tpu.memory_space<vmem>>, vector<8x512xf32>
    %c0_170 = arith.constant 0 : index
    %c0_171 = arith.constant 0 : index
    %306 = vector.load %arg13[%c0_170, %c0_171] : memref<8x128xf32, #tpu.memory_space<vmem>>, vector<8x128xf32>
    %c0_172 = arith.constant 0 : index
    %c0_173 = arith.constant 0 : index
    %307 = vector.load %arg7[%c0_172, %c0_173] : memref<128x512xf32, #tpu.memory_space<vmem>>, vector<128x512xf32>
    %cst_174 = arith.constant dense<0.000000e+00> : vector<8x512xf32>
    %308 = tpu.matmul %306, %307, %cst_174 {dimension_numbers = #tpu.dot_dimension_numbers<[1], [0], [0], [1], [0, 0, 1, 1], [], []>} : vector<8x128xf32>, vector<128x512xf32>, vector<8x512xf32> -> vector<8x512xf32>
    %309 = arith.addf %305, %308 : vector<8x512xf32>
    %310 = arith.index_cast %303 : i32 to index
    %c0_175 = arith.constant 0 : index
    %311 = vector.load %arg12[%310, %c0_175] : memref<64x512xf32, #tpu.memory_space<vmem>>, vector<8x512xf32>
    %c0_176 = arith.constant 0 : index
    %c0_177 = arith.constant 0 : index
    %312 = vector.load %arg15[%c0_176, %c0_177] : memref<8x128xf32, #tpu.memory_space<vmem>>, vector<8x128xf32>
    %c0_178 = arith.constant 0 : index
    %c0_179 = arith.constant 0 : index
    %313 = vector.load %arg8[%c0_178, %c0_179] : memref<128x512xf32, #tpu.memory_space<vmem>>, vector<128x512xf32>
    %cst_180 = arith.constant dense<0.000000e+00> : vector<8x512xf32>
    %314 = tpu.matmul %312, %313, %cst_180 {dimension_numbers = #tpu.dot_dimension_numbers<[1], [0], [0], [1], [0, 0, 1, 1], [], []>} : vector<8x128xf32>, vector<128x512xf32>, vector<8x512xf32> -> vector<8x512xf32>
    %315 = arith.addf %311, %314 : vector<8x512xf32>
    %c0_181 = arith.constant 0 : index
    %c0_182 = arith.constant 0 : index
    %316 = vector.load %arg14[%c0_181, %c0_182] : memref<8x128xf32, #tpu.memory_space<vmem>>, vector<8x128xf32>
    %317 = vector.extract_strided_slice %309 {offsets = [0, 0], sizes = [8, 128], strides = [1, 1]} : vector<8x512xf32> to vector<8x128xf32>
    %cst_183 = arith.constant 5.000000e-01 : f32
    %318 = vector.broadcast %cst_183 : f32 to vector<8x128xf32>
    %319 = arith.mulf %318, %317 : vector<8x128xf32>
    %320 = math.tanh %319 : vector<8x128xf32>
    %cst_184 = arith.constant 5.000000e-01 : f32
    %321 = vector.broadcast %cst_184 : f32 to vector<8x128xf32>
    %322 = arith.mulf %321, %320 : vector<8x128xf32>
    %cst_185 = arith.constant 5.000000e-01 : f32
    %323 = vector.broadcast %cst_185 : f32 to vector<8x128xf32>
    %324 = arith.addf %322, %323 : vector<8x128xf32>
    %325 = vector.extract_strided_slice %309 {offsets = [0, 128], sizes = [8, 128], strides = [1, 1]} : vector<8x512xf32> to vector<8x128xf32>
    %cst_186 = arith.constant 5.000000e-01 : f32
    %326 = vector.broadcast %cst_186 : f32 to vector<8x128xf32>
    %327 = arith.mulf %326, %325 : vector<8x128xf32>
    %328 = math.tanh %327 : vector<8x128xf32>
    %cst_187 = arith.constant 5.000000e-01 : f32
    %329 = vector.broadcast %cst_187 : f32 to vector<8x128xf32>
    %330 = arith.mulf %329, %328 : vector<8x128xf32>
    %cst_188 = arith.constant 5.000000e-01 : f32
    %331 = vector.broadcast %cst_188 : f32 to vector<8x128xf32>
    %332 = arith.addf %330, %331 : vector<8x128xf32>
    %333 = vector.extract_strided_slice %309 {offsets = [0, 256], sizes = [8, 128], strides = [1, 1]} : vector<8x512xf32> to vector<8x128xf32>
    %334 = math.tanh %333 : vector<8x128xf32>
    %335 = vector.extract_strided_slice %309 {offsets = [0, 384], sizes = [8, 128], strides = [1, 1]} : vector<8x512xf32> to vector<8x128xf32>
    %cst_189 = arith.constant 5.000000e-01 : f32
    %336 = vector.broadcast %cst_189 : f32 to vector<8x128xf32>
    %337 = arith.mulf %336, %335 : vector<8x128xf32>
    %338 = math.tanh %337 : vector<8x128xf32>
    %cst_190 = arith.constant 5.000000e-01 : f32
    %339 = vector.broadcast %cst_190 : f32 to vector<8x128xf32>
    %340 = arith.mulf %339, %338 : vector<8x128xf32>
    %cst_191 = arith.constant 5.000000e-01 : f32
    %341 = vector.broadcast %cst_191 : f32 to vector<8x128xf32>
    %342 = arith.addf %340, %341 : vector<8x128xf32>
    %343 = arith.mulf %332, %316 : vector<8x128xf32>
    %344 = arith.mulf %324, %334 : vector<8x128xf32>
    %345 = arith.addf %343, %344 : vector<8x128xf32>
    %346 = math.tanh %345 : vector<8x128xf32>
    %347 = arith.mulf %342, %346 : vector<8x128xf32>
    %c0_192 = arith.constant 0 : index
    %c0_193 = arith.constant 0 : index
    %348 = vector.load %arg16[%c0_192, %c0_193] : memref<8x128xf32, #tpu.memory_space<vmem>>, vector<8x128xf32>
    %349 = vector.extract_strided_slice %315 {offsets = [0, 0], sizes = [8, 128], strides = [1, 1]} : vector<8x512xf32> to vector<8x128xf32>
    %cst_194 = arith.constant 5.000000e-01 : f32
    %350 = vector.broadcast %cst_194 : f32 to vector<8x128xf32>
    %351 = arith.mulf %350, %349 : vector<8x128xf32>
    %352 = math.tanh %351 : vector<8x128xf32>
    %cst_195 = arith.constant 5.000000e-01 : f32
    %353 = vector.broadcast %cst_195 : f32 to vector<8x128xf32>
    %354 = arith.mulf %353, %352 : vector<8x128xf32>
    %cst_196 = arith.constant 5.000000e-01 : f32
    %355 = vector.broadcast %cst_196 : f32 to vector<8x128xf32>
    %356 = arith.addf %354, %355 : vector<8x128xf32>
    %357 = vector.extract_strided_slice %315 {offsets = [0, 128], sizes = [8, 128], strides = [1, 1]} : vector<8x512xf32> to vector<8x128xf32>
    %cst_197 = arith.constant 5.000000e-01 : f32
    %358 = vector.broadcast %cst_197 : f32 to vector<8x128xf32>
    %359 = arith.mulf %358, %357 : vector<8x128xf32>
    %360 = math.tanh %359 : vector<8x128xf32>
    %cst_198 = arith.constant 5.000000e-01 : f32
    %361 = vector.broadcast %cst_198 : f32 to vector<8x128xf32>
    %362 = arith.mulf %361, %360 : vector<8x128xf32>
    %cst_199 = arith.constant 5.000000e-01 : f32
    %363 = vector.broadcast %cst_199 : f32 to vector<8x128xf32>
    %364 = arith.addf %362, %363 : vector<8x128xf32>
    %365 = vector.extract_strided_slice %315 {offsets = [0, 256], sizes = [8, 128], strides = [1, 1]} : vector<8x512xf32> to vector<8x128xf32>
    %366 = math.tanh %365 : vector<8x128xf32>
    %367 = vector.extract_strided_slice %315 {offsets = [0, 384], sizes = [8, 128], strides = [1, 1]} : vector<8x512xf32> to vector<8x128xf32>
    %cst_200 = arith.constant 5.000000e-01 : f32
    %368 = vector.broadcast %cst_200 : f32 to vector<8x128xf32>
    %369 = arith.mulf %368, %367 : vector<8x128xf32>
    %370 = math.tanh %369 : vector<8x128xf32>
    %cst_201 = arith.constant 5.000000e-01 : f32
    %371 = vector.broadcast %cst_201 : f32 to vector<8x128xf32>
    %372 = arith.mulf %371, %370 : vector<8x128xf32>
    %cst_202 = arith.constant 5.000000e-01 : f32
    %373 = vector.broadcast %cst_202 : f32 to vector<8x128xf32>
    %374 = arith.addf %372, %373 : vector<8x128xf32>
    %375 = arith.mulf %364, %348 : vector<8x128xf32>
    %376 = arith.mulf %356, %366 : vector<8x128xf32>
    %377 = arith.addf %375, %376 : vector<8x128xf32>
    %378 = math.tanh %377 : vector<8x128xf32>
    %379 = arith.mulf %374, %378 : vector<8x128xf32>
    %c0_203 = arith.constant 0 : index
    %c0_204 = arith.constant 0 : index
    %380 = vector.load %arg13[%c0_203, %c0_204] : memref<8x128xf32, #tpu.memory_space<vmem>>, vector<8x128xf32>
    tpu.vector_store %arg13[%c0_203, %c0_204], %347 {strides = array<i32>} : memref<8x128xf32, #tpu.memory_space<vmem>>, vector<8x128xf32>,
    %c0_205 = arith.constant 0 : index
    %c0_206 = arith.constant 0 : index
    %381 = vector.load %arg14[%c0_205, %c0_206] : memref<8x128xf32, #tpu.memory_space<vmem>>, vector<8x128xf32>
    tpu.vector_store %arg14[%c0_205, %c0_206], %345 {strides = array<i32>} : memref<8x128xf32, #tpu.memory_space<vmem>>, vector<8x128xf32>,
    %382 = arith.index_cast %c3_i32 : i32 to index
    %c0_207 = arith.constant 0 : index
    %c0_208 = arith.constant 0 : index
    %383 = vector.load %arg9[%382, %c0_207, %c0_208] : memref<8x8x128xf32, #tpu.memory_space<vmem>>, vector<1x8x128xf32>
    %384 = vector.shape_cast %383 : vector<1x8x128xf32> to vector<8x128xf32>
    %385 = vector.shape_cast %347 : vector<8x128xf32> to vector<1x8x128xf32>
    tpu.vector_store %arg9[%382, %c0_207, %c0_208], %385 {strides = array<i32>} : memref<8x8x128xf32, #tpu.memory_space<vmem>>, vector<1x8x128xf32>,
    %c7_i32_209 = arith.constant 7 : i32
    %386 = arith.subi %c7_i32_209, %c3_i32 : i32
    %387 = arith.index_cast %386 : i32 to index
    %c0_210 = arith.constant 0 : index
    %c0_211 = arith.constant 0 : index
    %388 = vector.load %arg10[%387, %c0_210, %c0_211] : memref<8x8x128xf32, #tpu.memory_space<vmem>>, vector<1x8x128xf32>
    %389 = vector.shape_cast %388 : vector<1x8x128xf32> to vector<8x128xf32>
    %390 = vector.shape_cast %379 : vector<8x128xf32> to vector<1x8x128xf32>
    tpu.vector_store %arg10[%387, %c0_210, %c0_211], %390 {strides = array<i32>} : memref<8x8x128xf32, #tpu.memory_space<vmem>>, vector<1x8x128xf32>,
    %c0_212 = arith.constant 0 : index
    %c0_213 = arith.constant 0 : index
    %391 = vector.load %arg15[%c0_212, %c0_213] : memref<8x128xf32, #tpu.memory_space<vmem>>, vector<8x128xf32>
    tpu.vector_store %arg15[%c0_212, %c0_213], %379 {strides = array<i32>} : memref<8x128xf32, #tpu.memory_space<vmem>>, vector<8x128xf32>,
    %c0_214 = arith.constant 0 : index
    %c0_215 = arith.constant 0 : index
    %392 = vector.load %arg16[%c0_214, %c0_215] : memref<8x128xf32, #tpu.memory_space<vmem>>, vector<8x128xf32>
    tpu.vector_store %arg16[%c0_214, %c0_215], %377 {strides = array<i32>} : memref<8x128xf32, #tpu.memory_space<vmem>>, vector<8x128xf32>,
    %c4_i32 = arith.constant 4 : i32
    %c8_i32_216 = arith.constant 8 : i32
    %393 = arith.muli %c4_i32, %c8_i32_216 : i32
    %394 = tpu.assume_multiple %393, 8 : i32
    %c7_i32_217 = arith.constant 7 : i32
    %395 = arith.subi %c7_i32_217, %c4_i32 : i32
    %c8_i32_218 = arith.constant 8 : i32
    %396 = arith.muli %395, %c8_i32_218 : i32
    %397 = tpu.assume_multiple %396, 8 : i32
    %398 = arith.index_cast %394 : i32 to index
    %c0_219 = arith.constant 0 : index
    %399 = vector.load %arg11[%398, %c0_219] : memref<64x512xf32, #tpu.memory_space<vmem>>, vector<8x512xf32>
    %c0_220 = arith.constant 0 : index
    %c0_221 = arith.constant 0 : index
    %400 = vector.load %arg13[%c0_220, %c0_221] : memref<8x128xf32, #tpu.memory_space<vmem>>, vector<8x128xf32>
    %c0_222 = arith.constant 0 : index
    %c0_223 = arith.constant 0 : index
    %401 = vector.load %arg7[%c0_222, %c0_223] : memref<128x512xf32, #tpu.memory_space<vmem>>, vector<128x512xf32>
    %cst_224 = arith.constant dense<0.000000e+00> : vector<8x512xf32>
    %402 = tpu.matmul %400, %401, %cst_224 {dimension_numbers = #tpu.dot_dimension_numbers<[1], [0], [0], [1], [0, 0, 1, 1], [], []>} : vector<8x128xf32>, vector<128x512xf32>, vector<8x512xf32> -> vector<8x512xf32>
    %403 = arith.addf %399, %402 : vector<8x512xf32>
    %404 = arith.index_cast %397 : i32 to index
    %c0_225 = arith.constant 0 : index
    %405 = vector.load %arg12[%404, %c0_225] : memref<64x512xf32, #tpu.memory_space<vmem>>, vector<8x512xf32>
    %c0_226 = arith.constant 0 : index
    %c0_227 = arith.constant 0 : index
    %406 = vector.load %arg15[%c0_226, %c0_227] : memref<8x128xf32, #tpu.memory_space<vmem>>, vector<8x128xf32>
    %c0_228 = arith.constant 0 : index
    %c0_229 = arith.constant 0 : index
    %407 = vector.load %arg8[%c0_228, %c0_229] : memref<128x512xf32, #tpu.memory_space<vmem>>, vector<128x512xf32>
    %cst_230 = arith.constant dense<0.000000e+00> : vector<8x512xf32>
    %408 = tpu.matmul %406, %407, %cst_230 {dimension_numbers = #tpu.dot_dimension_numbers<[1], [0], [0], [1], [0, 0, 1, 1], [], []>} : vector<8x128xf32>, vector<128x512xf32>, vector<8x512xf32> -> vector<8x512xf32>
    %409 = arith.addf %405, %408 : vector<8x512xf32>
    %c0_231 = arith.constant 0 : index
    %c0_232 = arith.constant 0 : index
    %410 = vector.load %arg14[%c0_231, %c0_232] : memref<8x128xf32, #tpu.memory_space<vmem>>, vector<8x128xf32>
    %411 = vector.extract_strided_slice %403 {offsets = [0, 0], sizes = [8, 128], strides = [1, 1]} : vector<8x512xf32> to vector<8x128xf32>
    %cst_233 = arith.constant 5.000000e-01 : f32
    %412 = vector.broadcast %cst_233 : f32 to vector<8x128xf32>
    %413 = arith.mulf %412, %411 : vector<8x128xf32>
    %414 = math.tanh %413 : vector<8x128xf32>
    %cst_234 = arith.constant 5.000000e-01 : f32
    %415 = vector.broadcast %cst_234 : f32 to vector<8x128xf32>
    %416 = arith.mulf %415, %414 : vector<8x128xf32>
    %cst_235 = arith.constant 5.000000e-01 : f32
    %417 = vector.broadcast %cst_235 : f32 to vector<8x128xf32>
    %418 = arith.addf %416, %417 : vector<8x128xf32>
    %419 = vector.extract_strided_slice %403 {offsets = [0, 128], sizes = [8, 128], strides = [1, 1]} : vector<8x512xf32> to vector<8x128xf32>
    %cst_236 = arith.constant 5.000000e-01 : f32
    %420 = vector.broadcast %cst_236 : f32 to vector<8x128xf32>
    %421 = arith.mulf %420, %419 : vector<8x128xf32>
    %422 = math.tanh %421 : vector<8x128xf32>
    %cst_237 = arith.constant 5.000000e-01 : f32
    %423 = vector.broadcast %cst_237 : f32 to vector<8x128xf32>
    %424 = arith.mulf %423, %422 : vector<8x128xf32>
    %cst_238 = arith.constant 5.000000e-01 : f32
    %425 = vector.broadcast %cst_238 : f32 to vector<8x128xf32>
    %426 = arith.addf %424, %425 : vector<8x128xf32>
    %427 = vector.extract_strided_slice %403 {offsets = [0, 256], sizes = [8, 128], strides = [1, 1]} : vector<8x512xf32> to vector<8x128xf32>
    %428 = math.tanh %427 : vector<8x128xf32>
    %429 = vector.extract_strided_slice %403 {offsets = [0, 384], sizes = [8, 128], strides = [1, 1]} : vector<8x512xf32> to vector<8x128xf32>
    %cst_239 = arith.constant 5.000000e-01 : f32
    %430 = vector.broadcast %cst_239 : f32 to vector<8x128xf32>
    %431 = arith.mulf %430, %429 : vector<8x128xf32>
    %432 = math.tanh %431 : vector<8x128xf32>
    %cst_240 = arith.constant 5.000000e-01 : f32
    %433 = vector.broadcast %cst_240 : f32 to vector<8x128xf32>
    %434 = arith.mulf %433, %432 : vector<8x128xf32>
    %cst_241 = arith.constant 5.000000e-01 : f32
    %435 = vector.broadcast %cst_241 : f32 to vector<8x128xf32>
    %436 = arith.addf %434, %435 : vector<8x128xf32>
    %437 = arith.mulf %426, %410 : vector<8x128xf32>
    %438 = arith.mulf %418, %428 : vector<8x128xf32>
    %439 = arith.addf %437, %438 : vector<8x128xf32>
    %440 = math.tanh %439 : vector<8x128xf32>
    %441 = arith.mulf %436, %440 : vector<8x128xf32>
    %c0_242 = arith.constant 0 : index
    %c0_243 = arith.constant 0 : index
    %442 = vector.load %arg16[%c0_242, %c0_243] : memref<8x128xf32, #tpu.memory_space<vmem>>, vector<8x128xf32>
    %443 = vector.extract_strided_slice %409 {offsets = [0, 0], sizes = [8, 128], strides = [1, 1]} : vector<8x512xf32> to vector<8x128xf32>
    %cst_244 = arith.constant 5.000000e-01 : f32
    %444 = vector.broadcast %cst_244 : f32 to vector<8x128xf32>
    %445 = arith.mulf %444, %443 : vector<8x128xf32>
    %446 = math.tanh %445 : vector<8x128xf32>
    %cst_245 = arith.constant 5.000000e-01 : f32
    %447 = vector.broadcast %cst_245 : f32 to vector<8x128xf32>
    %448 = arith.mulf %447, %446 : vector<8x128xf32>
    %cst_246 = arith.constant 5.000000e-01 : f32
    %449 = vector.broadcast %cst_246 : f32 to vector<8x128xf32>
    %450 = arith.addf %448, %449 : vector<8x128xf32>
    %451 = vector.extract_strided_slice %409 {offsets = [0, 128], sizes = [8, 128], strides = [1, 1]} : vector<8x512xf32> to vector<8x128xf32>
    %cst_247 = arith.constant 5.000000e-01 : f32
    %452 = vector.broadcast %cst_247 : f32 to vector<8x128xf32>
    %453 = arith.mulf %452, %451 : vector<8x128xf32>
    %454 = math.tanh %453 : vector<8x128xf32>
    %cst_248 = arith.constant 5.000000e-01 : f32
    %455 = vector.broadcast %cst_248 : f32 to vector<8x128xf32>
    %456 = arith.mulf %455, %454 : vector<8x128xf32>
    %cst_249 = arith.constant 5.000000e-01 : f32
    %457 = vector.broadcast %cst_249 : f32 to vector<8x128xf32>
    %458 = arith.addf %456, %457 : vector<8x128xf32>
    %459 = vector.extract_strided_slice %409 {offsets = [0, 256], sizes = [8, 128], strides = [1, 1]} : vector<8x512xf32> to vector<8x128xf32>
    %460 = math.tanh %459 : vector<8x128xf32>
    %461 = vector.extract_strided_slice %409 {offsets = [0, 384], sizes = [8, 128], strides = [1, 1]} : vector<8x512xf32> to vector<8x128xf32>
    %cst_250 = arith.constant 5.000000e-01 : f32
    %462 = vector.broadcast %cst_250 : f32 to vector<8x128xf32>
    %463 = arith.mulf %462, %461 : vector<8x128xf32>
    %464 = math.tanh %463 : vector<8x128xf32>
    %cst_251 = arith.constant 5.000000e-01 : f32
    %465 = vector.broadcast %cst_251 : f32 to vector<8x128xf32>
    %466 = arith.mulf %465, %464 : vector<8x128xf32>
    %cst_252 = arith.constant 5.000000e-01 : f32
    %467 = vector.broadcast %cst_252 : f32 to vector<8x128xf32>
    %468 = arith.addf %466, %467 : vector<8x128xf32>
    %469 = arith.mulf %458, %442 : vector<8x128xf32>
    %470 = arith.mulf %450, %460 : vector<8x128xf32>
    %471 = arith.addf %469, %470 : vector<8x128xf32>
    %472 = math.tanh %471 : vector<8x128xf32>
    %473 = arith.mulf %468, %472 : vector<8x128xf32>
    %c0_253 = arith.constant 0 : index
    %c0_254 = arith.constant 0 : index
    %474 = vector.load %arg13[%c0_253, %c0_254] : memref<8x128xf32, #tpu.memory_space<vmem>>, vector<8x128xf32>
    tpu.vector_store %arg13[%c0_253, %c0_254], %441 {strides = array<i32>} : memref<8x128xf32, #tpu.memory_space<vmem>>, vector<8x128xf32>,
    %c0_255 = arith.constant 0 : index
    %c0_256 = arith.constant 0 : index
    %475 = vector.load %arg14[%c0_255, %c0_256] : memref<8x128xf32, #tpu.memory_space<vmem>>, vector<8x128xf32>
    tpu.vector_store %arg14[%c0_255, %c0_256], %439 {strides = array<i32>} : memref<8x128xf32, #tpu.memory_space<vmem>>, vector<8x128xf32>,
    %476 = arith.index_cast %c4_i32 : i32 to index
    %c0_257 = arith.constant 0 : index
    %c0_258 = arith.constant 0 : index
    %477 = vector.load %arg9[%476, %c0_257, %c0_258] : memref<8x8x128xf32, #tpu.memory_space<vmem>>, vector<1x8x128xf32>
    %478 = vector.shape_cast %477 : vector<1x8x128xf32> to vector<8x128xf32>
    %479 = vector.shape_cast %441 : vector<8x128xf32> to vector<1x8x128xf32>
    tpu.vector_store %arg9[%476, %c0_257, %c0_258], %479 {strides = array<i32>} : memref<8x8x128xf32, #tpu.memory_space<vmem>>, vector<1x8x128xf32>,
    %c7_i32_259 = arith.constant 7 : i32
    %480 = arith.subi %c7_i32_259, %c4_i32 : i32
    %481 = arith.index_cast %480 : i32 to index
    %c0_260 = arith.constant 0 : index
    %c0_261 = arith.constant 0 : index
    %482 = vector.load %arg10[%481, %c0_260, %c0_261] : memref<8x8x128xf32, #tpu.memory_space<vmem>>, vector<1x8x128xf32>
    %483 = vector.shape_cast %482 : vector<1x8x128xf32> to vector<8x128xf32>
    %484 = vector.shape_cast %473 : vector<8x128xf32> to vector<1x8x128xf32>
    tpu.vector_store %arg10[%481, %c0_260, %c0_261], %484 {strides = array<i32>} : memref<8x8x128xf32, #tpu.memory_space<vmem>>, vector<1x8x128xf32>,
    %c0_262 = arith.constant 0 : index
    %c0_263 = arith.constant 0 : index
    %485 = vector.load %arg15[%c0_262, %c0_263] : memref<8x128xf32, #tpu.memory_space<vmem>>, vector<8x128xf32>
    tpu.vector_store %arg15[%c0_262, %c0_263], %473 {strides = array<i32>} : memref<8x128xf32, #tpu.memory_space<vmem>>, vector<8x128xf32>,
    %c0_264 = arith.constant 0 : index
    %c0_265 = arith.constant 0 : index
    %486 = vector.load %arg16[%c0_264, %c0_265] : memref<8x128xf32, #tpu.memory_space<vmem>>, vector<8x128xf32>
    tpu.vector_store %arg16[%c0_264, %c0_265], %471 {strides = array<i32>} : memref<8x128xf32, #tpu.memory_space<vmem>>, vector<8x128xf32>,
    %c5_i32 = arith.constant 5 : i32
    %c8_i32_266 = arith.constant 8 : i32
    %487 = arith.muli %c5_i32, %c8_i32_266 : i32
    %488 = tpu.assume_multiple %487, 8 : i32
    %c7_i32_267 = arith.constant 7 : i32
    %489 = arith.subi %c7_i32_267, %c5_i32 : i32
    %c8_i32_268 = arith.constant 8 : i32
    %490 = arith.muli %489, %c8_i32_268 : i32
    %491 = tpu.assume_multiple %490, 8 : i32
    %492 = arith.index_cast %488 : i32 to index
    %c0_269 = arith.constant 0 : index
    %493 = vector.load %arg11[%492, %c0_269] : memref<64x512xf32, #tpu.memory_space<vmem>>, vector<8x512xf32>
    %c0_270 = arith.constant 0 : index
    %c0_271 = arith.constant 0 : index
    %494 = vector.load %arg13[%c0_270, %c0_271] : memref<8x128xf32, #tpu.memory_space<vmem>>, vector<8x128xf32>
    %c0_272 = arith.constant 0 : index
    %c0_273 = arith.constant 0 : index
    %495 = vector.load %arg7[%c0_272, %c0_273] : memref<128x512xf32, #tpu.memory_space<vmem>>, vector<128x512xf32>
    %cst_274 = arith.constant dense<0.000000e+00> : vector<8x512xf32>
    %496 = tpu.matmul %494, %495, %cst_274 {dimension_numbers = #tpu.dot_dimension_numbers<[1], [0], [0], [1], [0, 0, 1, 1], [], []>} : vector<8x128xf32>, vector<128x512xf32>, vector<8x512xf32> -> vector<8x512xf32>
    %497 = arith.addf %493, %496 : vector<8x512xf32>
    %498 = arith.index_cast %491 : i32 to index
    %c0_275 = arith.constant 0 : index
    %499 = vector.load %arg12[%498, %c0_275] : memref<64x512xf32, #tpu.memory_space<vmem>>, vector<8x512xf32>
    %c0_276 = arith.constant 0 : index
    %c0_277 = arith.constant 0 : index
    %500 = vector.load %arg15[%c0_276, %c0_277] : memref<8x128xf32, #tpu.memory_space<vmem>>, vector<8x128xf32>
    %c0_278 = arith.constant 0 : index
    %c0_279 = arith.constant 0 : index
    %501 = vector.load %arg8[%c0_278, %c0_279] : memref<128x512xf32, #tpu.memory_space<vmem>>, vector<128x512xf32>
    %cst_280 = arith.constant dense<0.000000e+00> : vector<8x512xf32>
    %502 = tpu.matmul %500, %501, %cst_280 {dimension_numbers = #tpu.dot_dimension_numbers<[1], [0], [0], [1], [0, 0, 1, 1], [], []>} : vector<8x128xf32>, vector<128x512xf32>, vector<8x512xf32> -> vector<8x512xf32>
    %503 = arith.addf %499, %502 : vector<8x512xf32>
    %c0_281 = arith.constant 0 : index
    %c0_282 = arith.constant 0 : index
    %504 = vector.load %arg14[%c0_281, %c0_282] : memref<8x128xf32, #tpu.memory_space<vmem>>, vector<8x128xf32>
    %505 = vector.extract_strided_slice %497 {offsets = [0, 0], sizes = [8, 128], strides = [1, 1]} : vector<8x512xf32> to vector<8x128xf32>
    %cst_283 = arith.constant 5.000000e-01 : f32
    %506 = vector.broadcast %cst_283 : f32 to vector<8x128xf32>
    %507 = arith.mulf %506, %505 : vector<8x128xf32>
    %508 = math.tanh %507 : vector<8x128xf32>
    %cst_284 = arith.constant 5.000000e-01 : f32
    %509 = vector.broadcast %cst_284 : f32 to vector<8x128xf32>
    %510 = arith.mulf %509, %508 : vector<8x128xf32>
    %cst_285 = arith.constant 5.000000e-01 : f32
    %511 = vector.broadcast %cst_285 : f32 to vector<8x128xf32>
    %512 = arith.addf %510, %511 : vector<8x128xf32>
    %513 = vector.extract_strided_slice %497 {offsets = [0, 128], sizes = [8, 128], strides = [1, 1]} : vector<8x512xf32> to vector<8x128xf32>
    %cst_286 = arith.constant 5.000000e-01 : f32
    %514 = vector.broadcast %cst_286 : f32 to vector<8x128xf32>
    %515 = arith.mulf %514, %513 : vector<8x128xf32>
    %516 = math.tanh %515 : vector<8x128xf32>
    %cst_287 = arith.constant 5.000000e-01 : f32
    %517 = vector.broadcast %cst_287 : f32 to vector<8x128xf32>
    %518 = arith.mulf %517, %516 : vector<8x128xf32>
    %cst_288 = arith.constant 5.000000e-01 : f32
    %519 = vector.broadcast %cst_288 : f32 to vector<8x128xf32>
    %520 = arith.addf %518, %519 : vector<8x128xf32>
    %521 = vector.extract_strided_slice %497 {offsets = [0, 256], sizes = [8, 128], strides = [1, 1]} : vector<8x512xf32> to vector<8x128xf32>
    %522 = math.tanh %521 : vector<8x128xf32>
    %523 = vector.extract_strided_slice %497 {offsets = [0, 384], sizes = [8, 128], strides = [1, 1]} : vector<8x512xf32> to vector<8x128xf32>
    %cst_289 = arith.constant 5.000000e-01 : f32
    %524 = vector.broadcast %cst_289 : f32 to vector<8x128xf32>
    %525 = arith.mulf %524, %523 : vector<8x128xf32>
    %526 = math.tanh %525 : vector<8x128xf32>
    %cst_290 = arith.constant 5.000000e-01 : f32
    %527 = vector.broadcast %cst_290 : f32 to vector<8x128xf32>
    %528 = arith.mulf %527, %526 : vector<8x128xf32>
    %cst_291 = arith.constant 5.000000e-01 : f32
    %529 = vector.broadcast %cst_291 : f32 to vector<8x128xf32>
    %530 = arith.addf %528, %529 : vector<8x128xf32>
    %531 = arith.mulf %520, %504 : vector<8x128xf32>
    %532 = arith.mulf %512, %522 : vector<8x128xf32>
    %533 = arith.addf %531, %532 : vector<8x128xf32>
    %534 = math.tanh %533 : vector<8x128xf32>
    %535 = arith.mulf %530, %534 : vector<8x128xf32>
    %c0_292 = arith.constant 0 : index
    %c0_293 = arith.constant 0 : index
    %536 = vector.load %arg16[%c0_292, %c0_293] : memref<8x128xf32, #tpu.memory_space<vmem>>, vector<8x128xf32>
    %537 = vector.extract_strided_slice %503 {offsets = [0, 0], sizes = [8, 128], strides = [1, 1]} : vector<8x512xf32> to vector<8x128xf32>
    %cst_294 = arith.constant 5.000000e-01 : f32
    %538 = vector.broadcast %cst_294 : f32 to vector<8x128xf32>
    %539 = arith.mulf %538, %537 : vector<8x128xf32>
    %540 = math.tanh %539 : vector<8x128xf32>
    %cst_295 = arith.constant 5.000000e-01 : f32
    %541 = vector.broadcast %cst_295 : f32 to vector<8x128xf32>
    %542 = arith.mulf %541, %540 : vector<8x128xf32>
    %cst_296 = arith.constant 5.000000e-01 : f32
    %543 = vector.broadcast %cst_296 : f32 to vector<8x128xf32>
    %544 = arith.addf %542, %543 : vector<8x128xf32>
    %545 = vector.extract_strided_slice %503 {offsets = [0, 128], sizes = [8, 128], strides = [1, 1]} : vector<8x512xf32> to vector<8x128xf32>
    %cst_297 = arith.constant 5.000000e-01 : f32
    %546 = vector.broadcast %cst_297 : f32 to vector<8x128xf32>
    %547 = arith.mulf %546, %545 : vector<8x128xf32>
    %548 = math.tanh %547 : vector<8x128xf32>
    %cst_298 = arith.constant 5.000000e-01 : f32
    %549 = vector.broadcast %cst_298 : f32 to vector<8x128xf32>
    %550 = arith.mulf %549, %548 : vector<8x128xf32>
    %cst_299 = arith.constant 5.000000e-01 : f32
    %551 = vector.broadcast %cst_299 : f32 to vector<8x128xf32>
    %552 = arith.addf %550, %551 : vector<8x128xf32>
    %553 = vector.extract_strided_slice %503 {offsets = [0, 256], sizes = [8, 128], strides = [1, 1]} : vector<8x512xf32> to vector<8x128xf32>
    %554 = math.tanh %553 : vector<8x128xf32>
    %555 = vector.extract_strided_slice %503 {offsets = [0, 384], sizes = [8, 128], strides = [1, 1]} : vector<8x512xf32> to vector<8x128xf32>
    %cst_300 = arith.constant 5.000000e-01 : f32
    %556 = vector.broadcast %cst_300 : f32 to vector<8x128xf32>
    %557 = arith.mulf %556, %555 : vector<8x128xf32>
    %558 = math.tanh %557 : vector<8x128xf32>
    %cst_301 = arith.constant 5.000000e-01 : f32
    %559 = vector.broadcast %cst_301 : f32 to vector<8x128xf32>
    %560 = arith.mulf %559, %558 : vector<8x128xf32>
    %cst_302 = arith.constant 5.000000e-01 : f32
    %561 = vector.broadcast %cst_302 : f32 to vector<8x128xf32>
    %562 = arith.addf %560, %561 : vector<8x128xf32>
    %563 = arith.mulf %552, %536 : vector<8x128xf32>
    %564 = arith.mulf %544, %554 : vector<8x128xf32>
    %565 = arith.addf %563, %564 : vector<8x128xf32>
    %566 = math.tanh %565 : vector<8x128xf32>
    %567 = arith.mulf %562, %566 : vector<8x128xf32>
    %c0_303 = arith.constant 0 : index
    %c0_304 = arith.constant 0 : index
    %568 = vector.load %arg13[%c0_303, %c0_304] : memref<8x128xf32, #tpu.memory_space<vmem>>, vector<8x128xf32>
    tpu.vector_store %arg13[%c0_303, %c0_304], %535 {strides = array<i32>} : memref<8x128xf32, #tpu.memory_space<vmem>>, vector<8x128xf32>,
    %c0_305 = arith.constant 0 : index
    %c0_306 = arith.constant 0 : index
    %569 = vector.load %arg14[%c0_305, %c0_306] : memref<8x128xf32, #tpu.memory_space<vmem>>, vector<8x128xf32>
    tpu.vector_store %arg14[%c0_305, %c0_306], %533 {strides = array<i32>} : memref<8x128xf32, #tpu.memory_space<vmem>>, vector<8x128xf32>,
    %570 = arith.index_cast %c5_i32 : i32 to index
    %c0_307 = arith.constant 0 : index
    %c0_308 = arith.constant 0 : index
    %571 = vector.load %arg9[%570, %c0_307, %c0_308] : memref<8x8x128xf32, #tpu.memory_space<vmem>>, vector<1x8x128xf32>
    %572 = vector.shape_cast %571 : vector<1x8x128xf32> to vector<8x128xf32>
    %573 = vector.shape_cast %535 : vector<8x128xf32> to vector<1x8x128xf32>
    tpu.vector_store %arg9[%570, %c0_307, %c0_308], %573 {strides = array<i32>} : memref<8x8x128xf32, #tpu.memory_space<vmem>>, vector<1x8x128xf32>,
    %c7_i32_309 = arith.constant 7 : i32
    %574 = arith.subi %c7_i32_309, %c5_i32 : i32
    %575 = arith.index_cast %574 : i32 to index
    %c0_310 = arith.constant 0 : index
    %c0_311 = arith.constant 0 : index
    %576 = vector.load %arg10[%575, %c0_310, %c0_311] : memref<8x8x128xf32, #tpu.memory_space<vmem>>, vector<1x8x128xf32>
    %577 = vector.shape_cast %576 : vector<1x8x128xf32> to vector<8x128xf32>
    %578 = vector.shape_cast %567 : vector<8x128xf32> to vector<1x8x128xf32>
    tpu.vector_store %arg10[%575, %c0_310, %c0_311], %578 {strides = array<i32>} : memref<8x8x128xf32, #tpu.memory_space<vmem>>, vector<1x8x128xf32>,
    %c0_312 = arith.constant 0 : index
    %c0_313 = arith.constant 0 : index
    %579 = vector.load %arg15[%c0_312, %c0_313] : memref<8x128xf32, #tpu.memory_space<vmem>>, vector<8x128xf32>
    tpu.vector_store %arg15[%c0_312, %c0_313], %567 {strides = array<i32>} : memref<8x128xf32, #tpu.memory_space<vmem>>, vector<8x128xf32>,
    %c0_314 = arith.constant 0 : index
    %c0_315 = arith.constant 0 : index
    %580 = vector.load %arg16[%c0_314, %c0_315] : memref<8x128xf32, #tpu.memory_space<vmem>>, vector<8x128xf32>
    tpu.vector_store %arg16[%c0_314, %c0_315], %565 {strides = array<i32>} : memref<8x128xf32, #tpu.memory_space<vmem>>, vector<8x128xf32>,
    %c6_i32 = arith.constant 6 : i32
    %c8_i32_316 = arith.constant 8 : i32
    %581 = arith.muli %c6_i32, %c8_i32_316 : i32
    %582 = tpu.assume_multiple %581, 8 : i32
    %c7_i32_317 = arith.constant 7 : i32
    %583 = arith.subi %c7_i32_317, %c6_i32 : i32
    %c8_i32_318 = arith.constant 8 : i32
    %584 = arith.muli %583, %c8_i32_318 : i32
    %585 = tpu.assume_multiple %584, 8 : i32
    %586 = arith.index_cast %582 : i32 to index
    %c0_319 = arith.constant 0 : index
    %587 = vector.load %arg11[%586, %c0_319] : memref<64x512xf32, #tpu.memory_space<vmem>>, vector<8x512xf32>
    %c0_320 = arith.constant 0 : index
    %c0_321 = arith.constant 0 : index
    %588 = vector.load %arg13[%c0_320, %c0_321] : memref<8x128xf32, #tpu.memory_space<vmem>>, vector<8x128xf32>
    %c0_322 = arith.constant 0 : index
    %c0_323 = arith.constant 0 : index
    %589 = vector.load %arg7[%c0_322, %c0_323] : memref<128x512xf32, #tpu.memory_space<vmem>>, vector<128x512xf32>
    %cst_324 = arith.constant dense<0.000000e+00> : vector<8x512xf32>
    %590 = tpu.matmul %588, %589, %cst_324 {dimension_numbers = #tpu.dot_dimension_numbers<[1], [0], [0], [1], [0, 0, 1, 1], [], []>} : vector<8x128xf32>, vector<128x512xf32>, vector<8x512xf32> -> vector<8x512xf32>
    %591 = arith.addf %587, %590 : vector<8x512xf32>
    %592 = arith.index_cast %585 : i32 to index
    %c0_325 = arith.constant 0 : index
    %593 = vector.load %arg12[%592, %c0_325] : memref<64x512xf32, #tpu.memory_space<vmem>>, vector<8x512xf32>
    %c0_326 = arith.constant 0 : index
    %c0_327 = arith.constant 0 : index
    %594 = vector.load %arg15[%c0_326, %c0_327] : memref<8x128xf32, #tpu.memory_space<vmem>>, vector<8x128xf32>
    %c0_328 = arith.constant 0 : index
    %c0_329 = arith.constant 0 : index
    %595 = vector.load %arg8[%c0_328, %c0_329] : memref<128x512xf32, #tpu.memory_space<vmem>>, vector<128x512xf32>
    %cst_330 = arith.constant dense<0.000000e+00> : vector<8x512xf32>
    %596 = tpu.matmul %594, %595, %cst_330 {dimension_numbers = #tpu.dot_dimension_numbers<[1], [0], [0], [1], [0, 0, 1, 1], [], []>} : vector<8x128xf32>, vector<128x512xf32>, vector<8x512xf32> -> vector<8x512xf32>
    %597 = arith.addf %593, %596 : vector<8x512xf32>
    %c0_331 = arith.constant 0 : index
    %c0_332 = arith.constant 0 : index
    %598 = vector.load %arg14[%c0_331, %c0_332] : memref<8x128xf32, #tpu.memory_space<vmem>>, vector<8x128xf32>
    %599 = vector.extract_strided_slice %591 {offsets = [0, 0], sizes = [8, 128], strides = [1, 1]} : vector<8x512xf32> to vector<8x128xf32>
    %cst_333 = arith.constant 5.000000e-01 : f32
    %600 = vector.broadcast %cst_333 : f32 to vector<8x128xf32>
    %601 = arith.mulf %600, %599 : vector<8x128xf32>
    %602 = math.tanh %601 : vector<8x128xf32>
    %cst_334 = arith.constant 5.000000e-01 : f32
    %603 = vector.broadcast %cst_334 : f32 to vector<8x128xf32>
    %604 = arith.mulf %603, %602 : vector<8x128xf32>
    %cst_335 = arith.constant 5.000000e-01 : f32
    %605 = vector.broadcast %cst_335 : f32 to vector<8x128xf32>
    %606 = arith.addf %604, %605 : vector<8x128xf32>
    %607 = vector.extract_strided_slice %591 {offsets = [0, 128], sizes = [8, 128], strides = [1, 1]} : vector<8x512xf32> to vector<8x128xf32>
    %cst_336 = arith.constant 5.000000e-01 : f32
    %608 = vector.broadcast %cst_336 : f32 to vector<8x128xf32>
    %609 = arith.mulf %608, %607 : vector<8x128xf32>
    %610 = math.tanh %609 : vector<8x128xf32>
    %cst_337 = arith.constant 5.000000e-01 : f32
    %611 = vector.broadcast %cst_337 : f32 to vector<8x128xf32>
    %612 = arith.mulf %611, %610 : vector<8x128xf32>
    %cst_338 = arith.constant 5.000000e-01 : f32
    %613 = vector.broadcast %cst_338 : f32 to vector<8x128xf32>
    %614 = arith.addf %612, %613 : vector<8x128xf32>
    %615 = vector.extract_strided_slice %591 {offsets = [0, 256], sizes = [8, 128], strides = [1, 1]} : vector<8x512xf32> to vector<8x128xf32>
    %616 = math.tanh %615 : vector<8x128xf32>
    %617 = vector.extract_strided_slice %591 {offsets = [0, 384], sizes = [8, 128], strides = [1, 1]} : vector<8x512xf32> to vector<8x128xf32>
    %cst_339 = arith.constant 5.000000e-01 : f32
    %618 = vector.broadcast %cst_339 : f32 to vector<8x128xf32>
    %619 = arith.mulf %618, %617 : vector<8x128xf32>
    %620 = math.tanh %619 : vector<8x128xf32>
    %cst_340 = arith.constant 5.000000e-01 : f32
    %621 = vector.broadcast %cst_340 : f32 to vector<8x128xf32>
    %622 = arith.mulf %621, %620 : vector<8x128xf32>
    %cst_341 = arith.constant 5.000000e-01 : f32
    %623 = vector.broadcast %cst_341 : f32 to vector<8x128xf32>
    %624 = arith.addf %622, %623 : vector<8x128xf32>
    %625 = arith.mulf %614, %598 : vector<8x128xf32>
    %626 = arith.mulf %606, %616 : vector<8x128xf32>
    %627 = arith.addf %625, %626 : vector<8x128xf32>
    %628 = math.tanh %627 : vector<8x128xf32>
    %629 = arith.mulf %624, %628 : vector<8x128xf32>
    %c0_342 = arith.constant 0 : index
    %c0_343 = arith.constant 0 : index
    %630 = vector.load %arg16[%c0_342, %c0_343] : memref<8x128xf32, #tpu.memory_space<vmem>>, vector<8x128xf32>
    %631 = vector.extract_strided_slice %597 {offsets = [0, 0], sizes = [8, 128], strides = [1, 1]} : vector<8x512xf32> to vector<8x128xf32>
    %cst_344 = arith.constant 5.000000e-01 : f32
    %632 = vector.broadcast %cst_344 : f32 to vector<8x128xf32>
    %633 = arith.mulf %632, %631 : vector<8x128xf32>
    %634 = math.tanh %633 : vector<8x128xf32>
    %cst_345 = arith.constant 5.000000e-01 : f32
    %635 = vector.broadcast %cst_345 : f32 to vector<8x128xf32>
    %636 = arith.mulf %635, %634 : vector<8x128xf32>
    %cst_346 = arith.constant 5.000000e-01 : f32
    %637 = vector.broadcast %cst_346 : f32 to vector<8x128xf32>
    %638 = arith.addf %636, %637 : vector<8x128xf32>
    %639 = vector.extract_strided_slice %597 {offsets = [0, 128], sizes = [8, 128], strides = [1, 1]} : vector<8x512xf32> to vector<8x128xf32>
    %cst_347 = arith.constant 5.000000e-01 : f32
    %640 = vector.broadcast %cst_347 : f32 to vector<8x128xf32>
    %641 = arith.mulf %640, %639 : vector<8x128xf32>
    %642 = math.tanh %641 : vector<8x128xf32>
    %cst_348 = arith.constant 5.000000e-01 : f32
    %643 = vector.broadcast %cst_348 : f32 to vector<8x128xf32>
    %644 = arith.mulf %643, %642 : vector<8x128xf32>
    %cst_349 = arith.constant 5.000000e-01 : f32
    %645 = vector.broadcast %cst_349 : f32 to vector<8x128xf32>
    %646 = arith.addf %644, %645 : vector<8x128xf32>
    %647 = vector.extract_strided_slice %597 {offsets = [0, 256], sizes = [8, 128], strides = [1, 1]} : vector<8x512xf32> to vector<8x128xf32>
    %648 = math.tanh %647 : vector<8x128xf32>
    %649 = vector.extract_strided_slice %597 {offsets = [0, 384], sizes = [8, 128], strides = [1, 1]} : vector<8x512xf32> to vector<8x128xf32>
    %cst_350 = arith.constant 5.000000e-01 : f32
    %650 = vector.broadcast %cst_350 : f32 to vector<8x128xf32>
    %651 = arith.mulf %650, %649 : vector<8x128xf32>
    %652 = math.tanh %651 : vector<8x128xf32>
    %cst_351 = arith.constant 5.000000e-01 : f32
    %653 = vector.broadcast %cst_351 : f32 to vector<8x128xf32>
    %654 = arith.mulf %653, %652 : vector<8x128xf32>
    %cst_352 = arith.constant 5.000000e-01 : f32
    %655 = vector.broadcast %cst_352 : f32 to vector<8x128xf32>
    %656 = arith.addf %654, %655 : vector<8x128xf32>
    %657 = arith.mulf %646, %630 : vector<8x128xf32>
    %658 = arith.mulf %638, %648 : vector<8x128xf32>
    %659 = arith.addf %657, %658 : vector<8x128xf32>
    %660 = math.tanh %659 : vector<8x128xf32>
    %661 = arith.mulf %656, %660 : vector<8x128xf32>
    %c0_353 = arith.constant 0 : index
    %c0_354 = arith.constant 0 : index
    %662 = vector.load %arg13[%c0_353, %c0_354] : memref<8x128xf32, #tpu.memory_space<vmem>>, vector<8x128xf32>
    tpu.vector_store %arg13[%c0_353, %c0_354], %629 {strides = array<i32>} : memref<8x128xf32, #tpu.memory_space<vmem>>, vector<8x128xf32>,
    %c0_355 = arith.constant 0 : index
    %c0_356 = arith.constant 0 : index
    %663 = vector.load %arg14[%c0_355, %c0_356] : memref<8x128xf32, #tpu.memory_space<vmem>>, vector<8x128xf32>
    tpu.vector_store %arg14[%c0_355, %c0_356], %627 {strides = array<i32>} : memref<8x128xf32, #tpu.memory_space<vmem>>, vector<8x128xf32>,
    %664 = arith.index_cast %c6_i32 : i32 to index
    %c0_357 = arith.constant 0 : index
    %c0_358 = arith.constant 0 : index
    %665 = vector.load %arg9[%664, %c0_357, %c0_358] : memref<8x8x128xf32, #tpu.memory_space<vmem>>, vector<1x8x128xf32>
    %666 = vector.shape_cast %665 : vector<1x8x128xf32> to vector<8x128xf32>
    %667 = vector.shape_cast %629 : vector<8x128xf32> to vector<1x8x128xf32>
    tpu.vector_store %arg9[%664, %c0_357, %c0_358], %667 {strides = array<i32>} : memref<8x8x128xf32, #tpu.memory_space<vmem>>, vector<1x8x128xf32>,
    %c7_i32_359 = arith.constant 7 : i32
    %668 = arith.subi %c7_i32_359, %c6_i32 : i32
    %669 = arith.index_cast %668 : i32 to index
    %c0_360 = arith.constant 0 : index
    %c0_361 = arith.constant 0 : index
    %670 = vector.load %arg10[%669, %c0_360, %c0_361] : memref<8x8x128xf32, #tpu.memory_space<vmem>>, vector<1x8x128xf32>
    %671 = vector.shape_cast %670 : vector<1x8x128xf32> to vector<8x128xf32>
    %672 = vector.shape_cast %661 : vector<8x128xf32> to vector<1x8x128xf32>
    tpu.vector_store %arg10[%669, %c0_360, %c0_361], %672 {strides = array<i32>} : memref<8x8x128xf32, #tpu.memory_space<vmem>>, vector<1x8x128xf32>,
    %c0_362 = arith.constant 0 : index
    %c0_363 = arith.constant 0 : index
    %673 = vector.load %arg15[%c0_362, %c0_363] : memref<8x128xf32, #tpu.memory_space<vmem>>, vector<8x128xf32>
    tpu.vector_store %arg15[%c0_362, %c0_363], %661 {strides = array<i32>} : memref<8x128xf32, #tpu.memory_space<vmem>>, vector<8x128xf32>,
    %c0_364 = arith.constant 0 : index
    %c0_365 = arith.constant 0 : index
    %674 = vector.load %arg16[%c0_364, %c0_365] : memref<8x128xf32, #tpu.memory_space<vmem>>, vector<8x128xf32>
    tpu.vector_store %arg16[%c0_364, %c0_365], %659 {strides = array<i32>} : memref<8x128xf32, #tpu.memory_space<vmem>>, vector<8x128xf32>,
    %c7_i32_366 = arith.constant 7 : i32
    %c8_i32_367 = arith.constant 8 : i32
    %675 = arith.muli %c7_i32_366, %c8_i32_367 : i32
    %676 = tpu.assume_multiple %675, 8 : i32
    %c7_i32_368 = arith.constant 7 : i32
    %677 = arith.subi %c7_i32_368, %c7_i32_366 : i32
    %c8_i32_369 = arith.constant 8 : i32
    %678 = arith.muli %677, %c8_i32_369 : i32
    %679 = tpu.assume_multiple %678, 8 : i32
    %680 = arith.index_cast %676 : i32 to index
    %c0_370 = arith.constant 0 : index
    %681 = vector.load %arg11[%680, %c0_370] : memref<64x512xf32, #tpu.memory_space<vmem>>, vector<8x512xf32>
    %c0_371 = arith.constant 0 : index
    %c0_372 = arith.constant 0 : index
    %682 = vector.load %arg13[%c0_371, %c0_372] : memref<8x128xf32, #tpu.memory_space<vmem>>, vector<8x128xf32>
    %c0_373 = arith.constant 0 : index
    %c0_374 = arith.constant 0 : index
    %683 = vector.load %arg7[%c0_373, %c0_374] : memref<128x512xf32, #tpu.memory_space<vmem>>, vector<128x512xf32>
    %cst_375 = arith.constant dense<0.000000e+00> : vector<8x512xf32>
    %684 = tpu.matmul %682, %683, %cst_375 {dimension_numbers = #tpu.dot_dimension_numbers<[1], [0], [0], [1], [0, 0, 1, 1], [], []>} : vector<8x128xf32>, vector<128x512xf32>, vector<8x512xf32> -> vector<8x512xf32>
    %685 = arith.addf %681, %684 : vector<8x512xf32>
    %686 = arith.index_cast %679 : i32 to index
    %c0_376 = arith.constant 0 : index
    %687 = vector.load %arg12[%686, %c0_376] : memref<64x512xf32, #tpu.memory_space<vmem>>, vector<8x512xf32>
    %c0_377 = arith.constant 0 : index
    %c0_378 = arith.constant 0 : index
    %688 = vector.load %arg15[%c0_377, %c0_378] : memref<8x128xf32, #tpu.memory_space<vmem>>, vector<8x128xf32>
    %c0_379 = arith.constant 0 : index
    %c0_380 = arith.constant 0 : index
    %689 = vector.load %arg8[%c0_379, %c0_380] : memref<128x512xf32, #tpu.memory_space<vmem>>, vector<128x512xf32>
    %cst_381 = arith.constant dense<0.000000e+00> : vector<8x512xf32>
    %690 = tpu.matmul %688, %689, %cst_381 {dimension_numbers = #tpu.dot_dimension_numbers<[1], [0], [0], [1], [0, 0, 1, 1], [], []>} : vector<8x128xf32>, vector<128x512xf32>, vector<8x512xf32> -> vector<8x512xf32>
    %691 = arith.addf %687, %690 : vector<8x512xf32>
    %c0_382 = arith.constant 0 : index
    %c0_383 = arith.constant 0 : index
    %692 = vector.load %arg14[%c0_382, %c0_383] : memref<8x128xf32, #tpu.memory_space<vmem>>, vector<8x128xf32>
    %693 = vector.extract_strided_slice %685 {offsets = [0, 0], sizes = [8, 128], strides = [1, 1]} : vector<8x512xf32> to vector<8x128xf32>
    %cst_384 = arith.constant 5.000000e-01 : f32
    %694 = vector.broadcast %cst_384 : f32 to vector<8x128xf32>
    %695 = arith.mulf %694, %693 : vector<8x128xf32>
    %696 = math.tanh %695 : vector<8x128xf32>
    %cst_385 = arith.constant 5.000000e-01 : f32
    %697 = vector.broadcast %cst_385 : f32 to vector<8x128xf32>
    %698 = arith.mulf %697, %696 : vector<8x128xf32>
    %cst_386 = arith.constant 5.000000e-01 : f32
    %699 = vector.broadcast %cst_386 : f32 to vector<8x128xf32>
    %700 = arith.addf %698, %699 : vector<8x128xf32>
    %701 = vector.extract_strided_slice %685 {offsets = [0, 128], sizes = [8, 128], strides = [1, 1]} : vector<8x512xf32> to vector<8x128xf32>
    %cst_387 = arith.constant 5.000000e-01 : f32
    %702 = vector.broadcast %cst_387 : f32 to vector<8x128xf32>
    %703 = arith.mulf %702, %701 : vector<8x128xf32>
    %704 = math.tanh %703 : vector<8x128xf32>
    %cst_388 = arith.constant 5.000000e-01 : f32
    %705 = vector.broadcast %cst_388 : f32 to vector<8x128xf32>
    %706 = arith.mulf %705, %704 : vector<8x128xf32>
    %cst_389 = arith.constant 5.000000e-01 : f32
    %707 = vector.broadcast %cst_389 : f32 to vector<8x128xf32>
    %708 = arith.addf %706, %707 : vector<8x128xf32>
    %709 = vector.extract_strided_slice %685 {offsets = [0, 256], sizes = [8, 128], strides = [1, 1]} : vector<8x512xf32> to vector<8x128xf32>
    %710 = math.tanh %709 : vector<8x128xf32>
    %711 = vector.extract_strided_slice %685 {offsets = [0, 384], sizes = [8, 128], strides = [1, 1]} : vector<8x512xf32> to vector<8x128xf32>
    %cst_390 = arith.constant 5.000000e-01 : f32
    %712 = vector.broadcast %cst_390 : f32 to vector<8x128xf32>
    %713 = arith.mulf %712, %711 : vector<8x128xf32>
    %714 = math.tanh %713 : vector<8x128xf32>
    %cst_391 = arith.constant 5.000000e-01 : f32
    %715 = vector.broadcast %cst_391 : f32 to vector<8x128xf32>
    %716 = arith.mulf %715, %714 : vector<8x128xf32>
    %cst_392 = arith.constant 5.000000e-01 : f32
    %717 = vector.broadcast %cst_392 : f32 to vector<8x128xf32>
    %718 = arith.addf %716, %717 : vector<8x128xf32>
    %719 = arith.mulf %708, %692 : vector<8x128xf32>
    %720 = arith.mulf %700, %710 : vector<8x128xf32>
    %721 = arith.addf %719, %720 : vector<8x128xf32>
    %722 = math.tanh %721 : vector<8x128xf32>
    %723 = arith.mulf %718, %722 : vector<8x128xf32>
    %c0_393 = arith.constant 0 : index
    %c0_394 = arith.constant 0 : index
    %724 = vector.load %arg16[%c0_393, %c0_394] : memref<8x128xf32, #tpu.memory_space<vmem>>, vector<8x128xf32>
    %725 = vector.extract_strided_slice %691 {offsets = [0, 0], sizes = [8, 128], strides = [1, 1]} : vector<8x512xf32> to vector<8x128xf32>
    %cst_395 = arith.constant 5.000000e-01 : f32
    %726 = vector.broadcast %cst_395 : f32 to vector<8x128xf32>
    %727 = arith.mulf %726, %725 : vector<8x128xf32>
    %728 = math.tanh %727 : vector<8x128xf32>
    %cst_396 = arith.constant 5.000000e-01 : f32
    %729 = vector.broadcast %cst_396 : f32 to vector<8x128xf32>
    %730 = arith.mulf %729, %728 : vector<8x128xf32>
    %cst_397 = arith.constant 5.000000e-01 : f32
    %731 = vector.broadcast %cst_397 : f32 to vector<8x128xf32>
    %732 = arith.addf %730, %731 : vector<8x128xf32>
    %733 = vector.extract_strided_slice %691 {offsets = [0, 128], sizes = [8, 128], strides = [1, 1]} : vector<8x512xf32> to vector<8x128xf32>
    %cst_398 = arith.constant 5.000000e-01 : f32
    %734 = vector.broadcast %cst_398 : f32 to vector<8x128xf32>
    %735 = arith.mulf %734, %733 : vector<8x128xf32>
    %736 = math.tanh %735 : vector<8x128xf32>
    %cst_399 = arith.constant 5.000000e-01 : f32
    %737 = vector.broadcast %cst_399 : f32 to vector<8x128xf32>
    %738 = arith.mulf %737, %736 : vector<8x128xf32>
    %cst_400 = arith.constant 5.000000e-01 : f32
    %739 = vector.broadcast %cst_400 : f32 to vector<8x128xf32>
    %740 = arith.addf %738, %739 : vector<8x128xf32>
    %741 = vector.extract_strided_slice %691 {offsets = [0, 256], sizes = [8, 128], strides = [1, 1]} : vector<8x512xf32> to vector<8x128xf32>
    %742 = math.tanh %741 : vector<8x128xf32>
    %743 = vector.extract_strided_slice %691 {offsets = [0, 384], sizes = [8, 128], strides = [1, 1]} : vector<8x512xf32> to vector<8x128xf32>
    %cst_401 = arith.constant 5.000000e-01 : f32
    %744 = vector.broadcast %cst_401 : f32 to vector<8x128xf32>
    %745 = arith.mulf %744, %743 : vector<8x128xf32>
    %746 = math.tanh %745 : vector<8x128xf32>
    %cst_402 = arith.constant 5.000000e-01 : f32
    %747 = vector.broadcast %cst_402 : f32 to vector<8x128xf32>
    %748 = arith.mulf %747, %746 : vector<8x128xf32>
    %cst_403 = arith.constant 5.000000e-01 : f32
    %749 = vector.broadcast %cst_403 : f32 to vector<8x128xf32>
    %750 = arith.addf %748, %749 : vector<8x128xf32>
    %751 = arith.mulf %740, %724 : vector<8x128xf32>
    %752 = arith.mulf %732, %742 : vector<8x128xf32>
    %753 = arith.addf %751, %752 : vector<8x128xf32>
    %754 = math.tanh %753 : vector<8x128xf32>
    %755 = arith.mulf %750, %754 : vector<8x128xf32>
    %c0_404 = arith.constant 0 : index
    %c0_405 = arith.constant 0 : index
    %756 = vector.load %arg13[%c0_404, %c0_405] : memref<8x128xf32, #tpu.memory_space<vmem>>, vector<8x128xf32>
    tpu.vector_store %arg13[%c0_404, %c0_405], %723 {strides = array<i32>} : memref<8x128xf32, #tpu.memory_space<vmem>>, vector<8x128xf32>,
    %c0_406 = arith.constant 0 : index
    %c0_407 = arith.constant 0 : index
    %757 = vector.load %arg14[%c0_406, %c0_407] : memref<8x128xf32, #tpu.memory_space<vmem>>, vector<8x128xf32>
    tpu.vector_store %arg14[%c0_406, %c0_407], %721 {strides = array<i32>} : memref<8x128xf32, #tpu.memory_space<vmem>>, vector<8x128xf32>,
    %758 = arith.index_cast %c7_i32_366 : i32 to index
    %c0_408 = arith.constant 0 : index
    %c0_409 = arith.constant 0 : index
    %759 = vector.load %arg9[%758, %c0_408, %c0_409] : memref<8x8x128xf32, #tpu.memory_space<vmem>>, vector<1x8x128xf32>
    %760 = vector.shape_cast %759 : vector<1x8x128xf32> to vector<8x128xf32>
    %761 = vector.shape_cast %723 : vector<8x128xf32> to vector<1x8x128xf32>
    tpu.vector_store %arg9[%758, %c0_408, %c0_409], %761 {strides = array<i32>} : memref<8x8x128xf32, #tpu.memory_space<vmem>>, vector<1x8x128xf32>,
    %c7_i32_410 = arith.constant 7 : i32
    %762 = arith.subi %c7_i32_410, %c7_i32_366 : i32
    %763 = arith.index_cast %762 : i32 to index
    %c0_411 = arith.constant 0 : index
    %c0_412 = arith.constant 0 : index
    %764 = vector.load %arg10[%763, %c0_411, %c0_412] : memref<8x8x128xf32, #tpu.memory_space<vmem>>, vector<1x8x128xf32>
    %765 = vector.shape_cast %764 : vector<1x8x128xf32> to vector<8x128xf32>
    %766 = vector.shape_cast %755 : vector<8x128xf32> to vector<1x8x128xf32>
    tpu.vector_store %arg10[%763, %c0_411, %c0_412], %766 {strides = array<i32>} : memref<8x8x128xf32, #tpu.memory_space<vmem>>, vector<1x8x128xf32>,
    %c0_413 = arith.constant 0 : index
    %c0_414 = arith.constant 0 : index
    %767 = vector.load %arg15[%c0_413, %c0_414] : memref<8x128xf32, #tpu.memory_space<vmem>>, vector<8x128xf32>
    tpu.vector_store %arg15[%c0_413, %c0_414], %755 {strides = array<i32>} : memref<8x128xf32, #tpu.memory_space<vmem>>, vector<8x128xf32>,
    %c0_415 = arith.constant 0 : index
    %c0_416 = arith.constant 0 : index
    %768 = vector.load %arg16[%c0_415, %c0_416] : memref<8x128xf32, #tpu.memory_space<vmem>>, vector<8x128xf32>
    tpu.vector_store %arg16[%c0_415, %c0_416], %753 {strides = array<i32>} : memref<8x128xf32, #tpu.memory_space<vmem>>, vector<8x128xf32>,
    %c8_i32_417 = arith.constant 8 : i32
    return
  }
  func.func @transform_0(%arg0: i32) -> (i32, i32) {
    %c0_i32 = arith.constant 0 : i32
    %c0_i32_0 = arith.constant 0 : i32
    return %arg0, %c0_i32 : i32, i32
  }
  func.func @transform_1(%arg0: i32) -> (i32, i32) {
    %c1_i32 = arith.constant 1 : i32
    %0 = arith.subi %c1_i32, %arg0 : i32
    %c0_i32 = arith.constant 0 : i32
    %c0_i32_0 = arith.constant 0 : i32
    return %0, %c0_i32 : i32, i32
  }
  func.func @transform_2(%arg0: i32) -> (i32, i32) {
    %c0_i32 = arith.constant 0 : i32
    %c0_i32_0 = arith.constant 0 : i32
    %c0_i32_1 = arith.constant 0 : i32
    return %c0_i32, %c0_i32_0 : i32, i32
  }
  func.func @transform_3(%arg0: i32) -> (i32, i32) {
    %c0_i32 = arith.constant 0 : i32
    %c0_i32_0 = arith.constant 0 : i32
    %c0_i32_1 = arith.constant 0 : i32
    return %c0_i32, %c0_i32_0 : i32, i32
  }
  func.func @transform_4(%arg0: i32) -> (i32, i32) {
    %c0_i32 = arith.constant 0 : i32
    %c0_i32_0 = arith.constant 0 : i32
    %c0_i32_1 = arith.constant 0 : i32
    return %c0_i32, %c0_i32_0 : i32, i32
  }
  func.func @transform_5(%arg0: i32) -> (i32, i32) {
    %c0_i32 = arith.constant 0 : i32
    %c0_i32_0 = arith.constant 0 : i32
    %c0_i32_1 = arith.constant 0 : i32
    return %c0_i32, %c0_i32_0 : i32, i32
  }
  func.func @transform_6(%arg0: i32) -> (i32, i32) {
    %c0_i32 = arith.constant 0 : i32
    %c0_i32_0 = arith.constant 0 : i32
    %c0_i32_1 = arith.constant 0 : i32
    return %c0_i32, %c0_i32_0 : i32, i32
  }
  func.func @transform_7(%arg0: i32) -> (i32, i32) {
    %c0_i32 = arith.constant 0 : i32
    %c0_i32_0 = arith.constant 0 : i32
    %c0_i32_1 = arith.constant 0 : i32
    return %c0_i32, %c0_i32_0 : i32, i32
  }
  func.func @transform_8(%arg0: i32) -> (i32, i32, i32) {
    %c0_i32 = arith.constant 0 : i32
    %c0_i32_0 = arith.constant 0 : i32
    %c0_i32_1 = arith.constant 0 : i32
    return %arg0, %c0_i32, %c0_i32_0 : i32, i32, i32
  }
  func.func @transform_9(%arg0: i32) -> (i32, i32, i32) {
    %c1_i32 = arith.constant 1 : i32
    %0 = arith.subi %c1_i32, %arg0 : i32
    %c0_i32 = arith.constant 0 : i32
    %c0_i32_0 = arith.constant 0 : i32
    %c0_i32_1 = arith.constant 0 : i32
    return %0, %c0_i32, %c0_i32_0 : i32, i32, i32
  }
}

</mosaic_0001>

<llo_original>
// kernel: tpu_custom_call.1
$region0: #{tpu_custom_call.1}
  #allocation0 [shape = 'u32[]', space=smem, size = 0x4, offset = 0x4, fixed_abs, tag = 'smem constant byte address 0x4 - core index']
  #allocation1 [shape = 'u32[144,128]{1,0:T(1,128)}', space=vmem, size = 0x12000, scoped, tag = 'internal scratch']
  #allocation2 [shape = 'f32[64,512]{1,0:T(8,128)}', space=vmem, size = 0x20000, scoped, tag = 'scratch operand']
  #allocation3 [shape = 'f32[64,512]{1,0:T(8,128)}', space=vmem, size = 0x20000, scoped, tag = 'scratch operand']
  #allocation4 [shape = 'f32[8,128]{1,0:T(8,128)}', space=vmem, size = 0x1000, scoped, tag = 'scratch operand']
  #allocation5 [shape = 'f32[8,128]{1,0:T(8,128)}', space=vmem, size = 0x1000, scoped, tag = 'scratch operand']
  #allocation6 [shape = 'f32[8,128]{1,0:T(8,128)}', space=vmem, size = 0x1000, scoped, tag = 'scratch operand']
  #allocation7 [shape = 'f32[8,128]{1,0:T(8,128)}', space=vmem, size = 0x1000, scoped, tag = 'scratch operand']
  %s0 = inlined_call_operand.vmem [shape: f32[128,64], index: 0, kind: input, shape index: {}]
  %s1 = inlined_call_operand.vmem [shape: f32[128,64], index: 1, kind: input, shape index: {}]
  %s2 = inlined_call_operand.vmem [shape: f32[64,512], index: 2, kind: input, shape index: {}]
  %s3 = inlined_call_operand.hbm [shape: f32[64,512], index: 3, kind: input, shape index: {}]
  %s4 = inlined_call_operand.vmem [shape: f32[1,512], index: 4, kind: input, shape index: {}]
  %s5 = inlined_call_operand.vmem [shape: f32[1,512], index: 5, kind: input, shape index: {}]
  %s6 = inlined_call_operand.hbm [shape: f32[128,512], index: 6, kind: input, shape index: {}]
  %s7 = inlined_call_operand.hbm [shape: f32[128,512], index: 7, kind: input, shape index: {}]
  %s8 = inlined_call_operand.hbm [shape: f32[16,8,128], index: 8, kind: output, shape index: {0}]
  %s9 = inlined_call_operand.hbm [shape: f32[16,8,128], index: 9, kind: output, shape index: {1}]
  %10 = xla_tuple %s8, %s9
  %s11 = sld [smem:[#allocation0]]
  $region89: #{tpu_custom_call.1} parent=0
    _
  %s13 = ssub.s32 1, %s11
  %s14 = scalar_select 0, %s13, %s11
  $region1: #{tpu_custom_call.1} parent=0
    #allocation8 [shape = 'u8[131072]{0}', space=vmem, size = 0x20000, scoped, tag = 'input window, operand 3, single buffered']
    #allocation9 [shape = 's32[2]{0}', space=sflag, size = 0x8, scoped, tag = 'scoped memory for tpu_custom_call.1']
    #allocation10 [shape = 's32[2]{0}', space=sflag, size = 0x8, scoped, tag = 'scoped memory for tpu_custom_call.1']
    #allocation11 [shape = 'u8[262144]{0}', space=vmem, size = 0x40000, scoped, tag = 'input window, operand 6, single buffered']
    #allocation12 [shape = 's32[1]{0}', space=sflag, size = 0x4, scoped, tag = 'scoped memory for tpu_custom_call.1']
    #allocation13 [shape = 'u8[262144]{0}', space=vmem, size = 0x40000, scoped, tag = 'input window, operand 7, single buffered']
    #allocation14 [shape = 'u8[65536]{0}', space=vmem, size = 0x10000, scoped, tag = 'output window, operand 0']
    #allocation15 [shape = 'u8[65536]{0}', space=vmem, size = 0x10000, scoped, tag = 'output window, operand 1']
    #allocation16 [shape = 's32[2]{0}', space=sflag, size = 0x8, scoped, tag = 'scoped memory for tpu_custom_call.1']
    %15 = vsyncpa [#allocation9], 0
    %16 = vsyncpa [#allocation12], 0
    %17 = vsyncpa [#allocation10], 0
    %s18 = scalar_lea.sflag [#allocation10], 1
    %19 = vsyncpa %s18, 0
    %20 = vsyncpa [#allocation16], 0
    %s21 = scalar_lea.sflag [#allocation16], 1
    %22 = vsyncpa %s21, 0
    loop: start=0, step=1, limit=4
    $region2: #{tpu_custom_call.1} parent=1 // loop_pre_header
      _
    $region3: #{tpu_custom_call.1} parent=1 // loop_header
      %s24 = sphi 0, %s28
      %p25 = scmp.ge.s32.totalorder %s24, 4
      %s34 = sphi 0, %s36
      %s37 = sphi 0, %s34
      %s38 = sphi 0, %s37
      %s54 = sphi 0, %s38
      %s62 = sphi 0, %s64
      %s65 = sphi 0, %s62
      %s66 = sphi 0, %s65
      %s82 = sphi 0, %s66
      %s86 = sphi 0, %s86
      %s88 = sphi 0, %s86
      %s89 = sphi 0, %s88
      %s103 = sphi 0, %s89
      %s107 = sphi 0, %s107
      %s109 = sphi 0, %s107
      %s110 = sphi 0, %s109
      %s124 = sphi 0, %s110
      %s128 = sphi 0, %s128
      %s130 = sphi 0, %s128
      %s131 = sphi 0, %s130
      %s145 = sphi 0, %s131
      %s149 = sphi 0, %s149
      %s151 = sphi 0, %s149
      %s152 = sphi 0, %s151
      %s166 = sphi 0, %s152
      %s170 = sphi 0, %s170
      %s172 = sphi 0, %s170
      %s173 = sphi 0, %s172
      %s187 = sphi 0, %s173
      %s191 = sphi 0, %s191
      %s193 = sphi 0, %s191
      %s194 = sphi 0, %s193
      %s208 = sphi 0, %s194
      %s214 = sphi 0, %s216
      %s217 = sphi 0, %s214
      %s218 = sphi 0, %s217
      %s234 = sphi 0, %s218
      %s242 = sphi 0, %s244
      %s245 = sphi 0, %s242
      %s246 = sphi 0, %s245
      %s262 = sphi 0, %s246
    $region4: #{tpu_custom_call.1} parent=1 // loop_header_branch
      %27 = sbr.rel (%p25) target = $region8
    $region5: #{tpu_custom_call.1} parent=1 // loop_body
      %s29 = ssub.s32 %s24, 1
      %s30 = ssub.s32 %s24, 2
      %s31 = sadd.s32 %s24, 1
      %s32 = ssub.s32 %s24, %s31
      %p33 = scmp.eq.s32.totalorder %s32, 0
      %s35 = sadd.s32 %s34, 1
      %s36 = scalar_select %p33, %s34, %s35
      %p39 = pneg %p33
      %p40 = scmp.eq.s32.totalorder %s24, 1
      %p41 = por %p39, %p40
      %p42 = scmp.ne.s32.totalorder %s34, %s37
      %p43 = scmp.eq.s32.totalorder %s24, 0
      %p44 = por %p42, %p43
      %p45 = scmp.ne.s32.totalorder %s34, %s37
      %p46 = scmp.eq.s32.totalorder %s29, 1
      %p47 = por %p45, %p46
      %p48 = scmp.ne.s32.totalorder %s37, %s38
      %p49 = scmp.eq.s32.totalorder %s29, 0
      %p50 = por %p48, %p49
      %p51 = scmp.ne.s32.totalorder %s37, %s38
      %p52 = scmp.eq.s32.totalorder %s30, 1
      %p53 = por %p51, %p52
      %p55 = scmp.ne.s32.totalorder %s38, %s54
      %p56 = scmp.eq.s32.totalorder %s30, 0
      %p57 = por %p55, %p56
      %s58 = ssub.s32 1, %s24
      %s59 = ssub.s32 1, %s31
      %s60 = ssub.s32 %s58, %s59
      %p61 = scmp.eq.s32.totalorder %s60, 0
      %s63 = sadd.s32 %s62, 1
      %s64 = scalar_select %p61, %s62, %s63
      %p67 = pneg %p61
      %p68 = scmp.eq.s32.totalorder %s24, 1
      %p69 = por %p67, %p68
      %p70 = scmp.ne.s32.totalorder %s62, %s65
      %p71 = scmp.eq.s32.totalorder %s24, 0
      %p72 = por %p70, %p71
      %p73 = scmp.ne.s32.totalorder %s62, %s65
      %p74 = scmp.eq.s32.totalorder %s29, 1
      %p75 = por %p73, %p74
      %p76 = scmp.ne.s32.totalorder %s65, %s66
      %p77 = scmp.eq.s32.totalorder %s29, 0
      %p78 = por %p76, %p77
      %p79 = scmp.ne.s32.totalorder %s65, %s66
      %p80 = scmp.eq.s32.totalorder %s30, 1
      %p81 = por %p79, %p80
      %p83 = scmp.ne.s32.totalorder %s66, %s82
      %p84 = scmp.eq.s32.totalorder %s30, 0
      %p85 = por %p83, %p84
      %s87 = sadd.s32 %s86, 1
      %p90 = scmp.eq.s32.totalorder %s24, 1
      %p91 = scmp.ne.s32.totalorder %s86, %s88
      %p92 = scmp.eq.s32.totalorder %s24, 0
      %p93 = por %p91, %p92
      %p94 = scmp.ne.s32.totalorder %s86, %s88
      %p95 = scmp.eq.s32.totalorder %s29, 1
      %p96 = por %p94, %p95
      %p97 = scmp.ne.s32.totalorder %s88, %s89
      %p98 = scmp.eq.s32.totalorder %s29, 0
      %p99 = por %p97, %p98
      %p100 = scmp.ne.s32.totalorder %s88, %s89
      %p101 = scmp.eq.s32.totalorder %s30, 1
      %p102 = por %p100, %p101
      %p104 = scmp.ne.s32.totalorder %s89, %s103
      %p105 = scmp.eq.s32.totalorder %s30, 0
      %p106 = por %p104, %p105
      %s108 = sadd.s32 %s107, 1
      %p111 = scmp.eq.s32.totalorder %s24, 1
      %p112 = scmp.ne.s32.totalorder %s107, %s109
      %p113 = scmp.eq.s32.totalorder %s24, 0
      %p114 = por %p112, %p113
      %p115 = scmp.ne.s32.totalorder %s107, %s109
      %p116 = scmp.eq.s32.totalorder %s29, 1
      %p117 = por %p115, %p116
      %p118 = scmp.ne.s32.totalorder %s109, %s110
      %p119 = scmp.eq.s32.totalorder %s29, 0
      %p120 = por %p118, %p119
      %p121 = scmp.ne.s32.totalorder %s109, %s110
      %p122 = scmp.eq.s32.totalorder %s30, 1
      %p123 = por %p121, %p122
      %p125 = scmp.ne.s32.totalorder %s110, %s124
      %p126 = scmp.eq.s32.totalorder %s30, 0
      %p127 = por %p125, %p126
      %s129 = sadd.s32 %s128, 1
      %p132 = scmp.eq.s32.totalorder %s24, 1
      %p133 = scmp.ne.s32.totalorder %s128, %s130
      %p134 = scmp.eq.s32.totalorder %s24, 0
      %p135 = por %p133, %p134
      %p136 = scmp.ne.s32.totalorder %s128, %s130
      %p137 = scmp.eq.s32.totalorder %s29, 1
      %p138 = por %p136, %p137
      %p139 = scmp.ne.s32.totalorder %s130, %s131
      %p140 = scmp.eq.s32.totalorder %s29, 0
      %p141 = por %p139, %p140
      %p142 = scmp.ne.s32.totalorder %s130, %s131
      %p143 = scmp.eq.s32.totalorder %s30, 1
      %p144 = por %p142, %p143
      %p146 = scmp.ne.s32.totalorder %s131, %s145
      %p147 = scmp.eq.s32.totalorder %s30, 0
      %p148 = por %p146, %p147
      %s150 = sadd.s32 %s149, 1
      %p153 = scmp.eq.s32.totalorder %s24, 1
      %p154 = scmp.ne.s32.totalorder %s149, %s151
      %p155 = scmp.eq.s32.totalorder %s24, 0
      %p156 = por %p154, %p155
      %p157 = scmp.ne.s32.totalorder %s149, %s151
      %p158 = scmp.eq.s32.totalorder %s29, 1
      %p159 = por %p157, %p158
      %p160 = scmp.ne.s32.totalorder %s151, %s152
      %p161 = scmp.eq.s32.totalorder %s29, 0
      %p162 = por %p160, %p161
      %p163 = scmp.ne.s32.totalorder %s151, %s152
      %p164 = scmp.eq.s32.totalorder %s30, 1
      %p165 = por %p163, %p164
      %p167 = scmp.ne.s32.totalorder %s152, %s166
      %p168 = scmp.eq.s32.totalorder %s30, 0
      %p169 = por %p167, %p168
      %s171 = sadd.s32 %s170, 1
      %p174 = scmp.eq.s32.totalorder %s24, 1
      %p175 = scmp.ne.s32.totalorder %s170, %s172
      %p176 = scmp.eq.s32.totalorder %s24, 0
      %p177 = por %p175, %p176
      %p178 = scmp.ne.s32.totalorder %s170, %s172
      %p179 = scmp.eq.s32.totalorder %s29, 1
      %p180 = por %p178, %p179
      %p181 = scmp.ne.s32.totalorder %s172, %s173
      %p182 = scmp.eq.s32.totalorder %s29, 0
      %p183 = por %p181, %p182
      %p184 = scmp.ne.s32.totalorder %s172, %s173
      %p185 = scmp.eq.s32.totalorder %s30, 1
      %p186 = por %p184, %p185
      %p188 = scmp.ne.s32.totalorder %s173, %s187
      %p189 = scmp.eq.s32.totalorder %s30, 0
      %p190 = por %p188, %p189
      %s192 = sadd.s32 %s191, 1
      %p195 = scmp.eq.s32.totalorder %s24, 1
      %p196 = scmp.ne.s32.totalorder %s191, %s193
      %p197 = scmp.eq.s32.totalorder %s24, 0
      %p198 = por %p196, %p197
      %p199 = scmp.ne.s32.totalorder %s191, %s193
      %p200 = scmp.eq.s32.totalorder %s29, 1
      %p201 = por %p199, %p200
      %p202 = scmp.ne.s32.totalorder %s193, %s194
      %p203 = scmp.eq.s32.totalorder %s29, 0
      %p204 = por %p202, %p203
      %p205 = scmp.ne.s32.totalorder %s193, %s194
      %p206 = scmp.eq.s32.totalorder %s30, 1
      %p207 = por %p205, %p206
      %p209 = scmp.ne.s32.totalorder %s194, %s208
      %p210 = scmp.eq.s32.totalorder %s30, 0
      %p211 = por %p209, %p210
      %s212 = ssub.s32 %s24, %s31
      %p213 = scmp.eq.s32.totalorder %s212, 0
      %s215 = sadd.s32 %s214, 1
      %s216 = scalar_select %p213, %s214, %s215
      %p219 = pneg %p213
      %p220 = scmp.eq.s32.totalorder %s24, 1
      %p221 = por %p219, %p220
      %p222 = scmp.ne.s32.totalorder %s214, %s217
      %p223 = scmp.eq.s32.totalorder %s24, 0
      %p224 = por %p222, %p223
      %p225 = scmp.ne.s32.totalorder %s214, %s217
      %p226 = scmp.eq.s32.totalorder %s29, 1
      %p227 = por %p225, %p226
      %p228 = scmp.ne.s32.totalorder %s217, %s218
      %p229 = scmp.eq.s32.totalorder %s29, 0
      %p230 = por %p228, %p229
      %p231 = scmp.ne.s32.totalorder %s217, %s218
      %p232 = scmp.eq.s32.totalorder %s30, 1
      %p233 = por %p231, %p232
      %p235 = scmp.ne.s32.totalorder %s218, %s234
      %p236 = scmp.eq.s32.totalorder %s30, 0
      %p237 = por %p235, %p236
      %s238 = ssub.s32 1, %s24
      %s239 = ssub.s32 1, %s31
      %s240 = ssub.s32 %s238, %s239
      %p241 = scmp.eq.s32.totalorder %s240, 0
      %s243 = sadd.s32 %s242, 1
      %s244 = scalar_select %p241, %s242, %s243
      %p247 = pneg %p241
      %p248 = scmp.eq.s32.totalorder %s24, 1
      %p249 = por %p247, %p248
      %p250 = scmp.ne.s32.totalorder %s242, %s245
      %p251 = scmp.eq.s32.totalorder %s24, 0
      %p252 = por %p250, %p251
      %p253 = scmp.ne.s32.totalorder %s242, %s245
      %p254 = scmp.eq.s32.totalorder %s29, 1
      %p255 = por %p253, %p254
      %p256 = scmp.ne.s32.totalorder %s245, %s246
      %p257 = scmp.eq.s32.totalorder %s29, 0
      %p258 = por %p256, %p257
      %p259 = scmp.ne.s32.totalorder %s245, %s246
      %p260 = scmp.eq.s32.totalorder %s30, 1
      %p261 = por %p259, %p260
      %p263 = scmp.ne.s32.totalorder %s246, %s262
      %p264 = scmp.eq.s32.totalorder %s30, 0
      %p265 = por %p263, %p264
      %p266 = scmp.le.s32.totalorder 1, %s24
      %p267 = scmp.lt.s32.totalorder %s24, 3
      %p268 = pnand %p266, %p267
      %p269 = pneg %p268
      // Predicated region
      $region9: #{tpu_custom_call.1} parent=5 // pred_check
        _
      $region10: #{tpu_custom_call.1} parent=5 // pred_check_branch
        %271 = sbr.rel (%p268) target = $region12
      $region11: #{tpu_custom_call.1} parent=5 // pred_region
        %s272 = ssub.s32 %s24, 1
        // Predicated region
        $region13: #{tpu_custom_call.1} parent=11 // pred_check
          %p273 = pneg %p99
        $region14: #{tpu_custom_call.1} parent=11 // pred_check_branch
          %275 = sbr.rel (%p273) target = $region16
        $region15: #{tpu_custom_call.1} parent=11 // pred_region
          _
        $region16: #{tpu_custom_call.1} parent=11 // pred_fallthru
          _
        // Predicated region
        $region17: #{tpu_custom_call.1} parent=11 // pred_check
          %p276 = pneg %p120
        $region18: #{tpu_custom_call.1} parent=11 // pred_check_branch
          %278 = sbr.rel (%p276) target = $region20
        $region19: #{tpu_custom_call.1} parent=11 // pred_region
          %s280 = ssub.s32 4096, 4096
          %281 = vsyncadd [#allocation9], %s280
          %s282 = sshll.u32 [#allocation8], 4
          %s283 = int_to_ptr.vmem [resolvable:$true] %s282
          %288 = dma.hbm_to_vmem [thread:$0]  %s3, 4096, %s283, [#allocation9], 512, 512, 32
        $region20: #{tpu_custom_call.1} parent=11 // pred_fallthru
          _
        // Predicated region
        $region21: #{tpu_custom_call.1} parent=11 // pred_check
          %p289 = pneg %p141
        $region22: #{tpu_custom_call.1} parent=11 // pred_check_branch
          %291 = sbr.rel (%p289) target = $region24
        $region23: #{tpu_custom_call.1} parent=11 // pred_region
          _
        $region24: #{tpu_custom_call.1} parent=11 // pred_fallthru
          _
        // Predicated region
        $region25: #{tpu_custom_call.1} parent=11 // pred_check
          %p292 = pneg %p162
        $region26: #{tpu_custom_call.1} parent=11 // pred_check_branch
          %294 = sbr.rel (%p292) target = $region28
        $region27: #{tpu_custom_call.1} parent=11 // pred_region
          _
        $region28: #{tpu_custom_call.1} parent=11 // pred_fallthru
          _
        // Predicated region
        $region29: #{tpu_custom_call.1} parent=11 // pred_check
          %p295 = pneg %p183
        $region30: #{tpu_custom_call.1} parent=11 // pred_check_branch
          %297 = sbr.rel (%p295) target = $region32
        $region31: #{tpu_custom_call.1} parent=11 // pred_region
          %s299 = ssub.s32 8192, 8192
          %300 = vsyncadd [#allocation12], %s299
          %s301 = sshll.u32 [#allocation11], 4
          %s302 = int_to_ptr.vmem [resolvable:$true] %s301
          %307 = dma.hbm_to_vmem [thread:$0]  %s6, 8192, %s302, [#allocation12], 512, 512, 32
        $region32: #{tpu_custom_call.1} parent=11 // pred_fallthru
          _
        // Predicated region
        $region33: #{tpu_custom_call.1} parent=11 // pred_check
          %p308 = pneg %p204
        $region34: #{tpu_custom_call.1} parent=11 // pred_check_branch
          %310 = sbr.rel (%p308) target = $region36
        $region35: #{tpu_custom_call.1} parent=11 // pred_region
          %s312 = ssub.s32 8192, 8192
          %313 = vsyncadd [#allocation12], %s312
          %s314 = sshll.u32 [#allocation13], 4
          %s315 = int_to_ptr.vmem [resolvable:$true] %s314
          %320 = dma.hbm_to_vmem [thread:$0]  %s7, 8192, %s315, [#allocation12], 512, 512, 32
        $region36: #{tpu_custom_call.1} parent=11 // pred_fallthru
          _
      $region12: #{tpu_custom_call.1} parent=5 // pred_fallthru
        _
      %p321 = scmp.lt.s32.totalorder %s24, 2
      // Predicated region
      $region37: #{tpu_custom_call.1} parent=5 // pred_check
        %p322 = pneg %p321
      $region38: #{tpu_custom_call.1} parent=5 // pred_check_branch
        %324 = sbr.rel (%p322) target = $region40
      $region39: #{tpu_custom_call.1} parent=5 // pred_region
        // Predicated region
        $region41: #{tpu_custom_call.1} parent=39 // pred_check
          %p325 = pneg %p44
        $region42: #{tpu_custom_call.1} parent=39 // pred_check_branch
          %327 = sbr.rel (%p325) target = $region44
        $region43: #{tpu_custom_call.1} parent=39 // pred_region
          %s328 = smul.u32 8, %s24
          %p329 = scmp.lt.s32.totalorder %s328, 15
          %s330 = scalar_select %p329, %s328, 15
          %s331 = smul.addr %s330, 8
          %s332 = scalar_lea.vmem %s0, %s331
          %s333 = smul.u32 8, %s24
        $region44: #{tpu_custom_call.1} parent=39 // pred_fallthru
          _
        // Predicated region
        $region45: #{tpu_custom_call.1} parent=39 // pred_check
          %p334 = pneg %p72
        $region46: #{tpu_custom_call.1} parent=39 // pred_check_branch
          %336 = sbr.rel (%p334) target = $region48
        $region47: #{tpu_custom_call.1} parent=39 // pred_region
          %s337 = ssub.s32 1, %s24
          %s338 = smul.u32 8, %s337
          %p339 = scmp.lt.s32.totalorder %s338, 15
          %s340 = scalar_select %p339, %s338, 15
          %s341 = smul.addr %s340, 8
          %s342 = scalar_lea.vmem %s1, %s341
          %s343 = ssub.s32 1, %s24
          %s344 = smul.u32 8, %s343
        $region48: #{tpu_custom_call.1} parent=39 // pred_fallthru
          _
      $region40: #{tpu_custom_call.1} parent=5 // pred_fallthru
        _
      %p345 = scmp.le.s32.totalorder 1, %s24
      %p346 = scmp.lt.s32.totalorder %s24, 3
      %p347 = pnand %p345, %p346
      %p348 = pneg %p347
      // Predicated region
      $region49: #{tpu_custom_call.1} parent=5 // pred_check
        _
      $region50: #{tpu_custom_call.1} parent=5 // pred_check_branch
        %350 = sbr.rel (%p347) target = $region52
      $region51: #{tpu_custom_call.1} parent=5 // pred_region
        %s351 = ssub.s32 %s24, 1
        // Predicated region
        $region53: #{tpu_custom_call.1} parent=51 // pred_check
          %p352 = pneg %p120
        $region54: #{tpu_custom_call.1} parent=51 // pred_check_branch
          %354 = sbr.rel (%p352) target = $region56
        $region55: #{tpu_custom_call.1} parent=51 // pred_region
          %355 = dma.done [#allocation9], 4096
        $region56: #{tpu_custom_call.1} parent=51 // pred_fallthru
          _
        // Predicated region
        $region57: #{tpu_custom_call.1} parent=51 // pred_check
          %p356 = pneg %p183
        $region58: #{tpu_custom_call.1} parent=51 // pred_check_branch
          %358 = sbr.rel (%p356) target = $region60
        $region59: #{tpu_custom_call.1} parent=51 // pred_region
          %359 = dma.done [#allocation12], 8192
        $region60: #{tpu_custom_call.1} parent=51 // pred_fallthru
          _
        // Predicated region
        $region61: #{tpu_custom_call.1} parent=51 // pred_check
          %p360 = pneg %p204
        $region62: #{tpu_custom_call.1} parent=51 // pred_check_branch
          %362 = sbr.rel (%p360) target = $region64
        $region63: #{tpu_custom_call.1} parent=51 // pred_region
          %363 = dma.done [#allocation12], 8192
        $region64: #{tpu_custom_call.1} parent=51 // pred_fallthru
          _
        %s364 = smul.u32 8, %s29
        %p365 = scmp.lt.s32.totalorder %s364, 15
        %s366 = scalar_select %p365, %s364, 15
        %s367 = smul.addr %s366, 8
        %s368 = scalar_lea.vmem %s0, %s367
        %p369 = pneg %p50
        %p370 = pneg %p47
        %s371 = ssub.s32 1, %s29
        %s372 = smul.u32 8, %s371
        %p373 = scmp.lt.s32.totalorder %s372, 15
        %s374 = scalar_select %p373, %s372, 15
        %s375 = smul.addr %s374, 8
        %s376 = scalar_lea.vmem %s1, %s375
        %p377 = pneg %p78
        %p378 = pneg %p75
        %p379 = pneg %p99
        %p380 = pneg %p96
        %p381 = pneg %p120
        %p382 = pneg %p117
        %p383 = pneg %p141
        %p384 = pneg %p138
        %p385 = pneg %p162
        %p386 = pneg %p159
        %p387 = pneg %p183
        %p388 = pneg %p180
        %p389 = pneg %p204
        %p390 = pneg %p201
        %p391 = pneg %p230
        %p392 = pneg %p227
        %s393 = sand.u32 %s217, 1
        %s394 = scalar_lea.sflag [#allocation10], %s393
        %s395 = sand.u32 %s217, 1
        %s396 = smul.addr %s395, 64
        %s397 = scalar_lea.vmem [#allocation14], %s396
        %p398 = pneg %p258
        %p399 = pneg %p255
        %s400 = sand.u32 %s245, 1
        %s401 = scalar_lea.sflag [#allocation16], %s400
        %s402 = sand.u32 %s245, 1
        %s403 = smul.addr %s402, 64
        %s404 = scalar_lea.vmem [#allocation15], %s403
        %s405 = smul.u32 8, %s29
        %p406 = scmp.lt.s32.totalorder %s405, 15
        %s407 = scalar_select %p406, %s405, 15
        %s408 = smul.addr %s407, 8
        %s409 = scalar_lea.vmem %s0, %s408
        %s410 = smul.u32 8, %s29
        %s411 = ssub.s32 1, %s29
        %s412 = smul.u32 8, %s411
        %p413 = scmp.lt.s32.totalorder %s412, 15
        %s414 = scalar_select %p413, %s412, 15
        %s415 = smul.addr %s414, 8
        %s416 = scalar_lea.vmem %s1, %s415
        %s417 = ssub.s32 1, %s29
        %s418 = smul.u32 8, %s417
        %s419 = smul.u32 8, %s29
        %s420 = ssub.s32 1, %s29
        %s421 = smul.u32 8, %s420
        %p422 = scmp.eq.s32.totalorder %s29, 0
        // Predicated region
        $region65: #{tpu_custom_call.1} parent=51 // pred_check
          %p423 = pneg %p422
        $region66: #{tpu_custom_call.1} parent=51 // pred_check_branch
          %425 = sbr.rel (%p423) target = $region68
        $region67: #{tpu_custom_call.1} parent=51 // pred_region
          %426 = vst [vmem:[#allocation4] sm:$0xff] 0.0
          %427 = vst [vmem:[#allocation5] sm:$0xff] 0.0
          %428 = vst [vmem:[#allocation6] sm:$0xff] 0.0
          %429 = vst [vmem:[#allocation7] sm:$0xff] 0.0
        $region68: #{tpu_custom_call.1} parent=51 // pred_fallthru
          _
        %v430 = vld [vmem:[%s409] sm:$0xff]
        %v431 = vld [vmem:[%s409 + $0x8] sm:$0xff]
        %v432 = vld [vmem:[%s409 + $0x10] sm:$0xff]
        %v433 = vld [vmem:[%s409 + $0x18] sm:$0xff]
        %v434 = vld [vmem:[%s409 + $0x20] sm:$0xff]
        %v435 = vld [vmem:[%s409 + $0x28] sm:$0xff]
        %v436 = vld [vmem:[%s409 + $0x30] sm:$0xff]
        %v437 = vld [vmem:[%s409 + $0x38] sm:$0xff]
        %v438 = vld [vmem:[%s2] sm:$0xff]
        %v439 = vld [vmem:[%s2 + $0x8] sm:$0xff]
        %v440 = vld [vmem:[%s2 + $0x10] sm:$0xff]
        %v441 = vld [vmem:[%s2 + $0x18] sm:$0xff]
        %v442 = vld [vmem:[%s2 + $0x20] sm:$0xff]
        %v443 = vld [vmem:[%s2 + $0x28] sm:$0xff]
        %v444 = vld [vmem:[%s2 + $0x30] sm:$0xff]
        %v445 = vld [vmem:[%s2 + $0x38] sm:$0xff]
        %v446 = vld [vmem:[%s2 + $0x40] sm:$0xff]
        %v447 = vld [vmem:[%s2 + $0x48] sm:$0xff]
        %v448 = vld [vmem:[%s2 + $0x50] sm:$0xff]
        %v449 = vld [vmem:[%s2 + $0x58] sm:$0xff]
        %v450 = vld [vmem:[%s2 + $0x60] sm:$0xff]
        %v451 = vld [vmem:[%s2 + $0x68] sm:$0xff]
        %v452 = vld [vmem:[%s2 + $0x70] sm:$0xff]
        %v453 = vld [vmem:[%s2 + $0x78] sm:$0xff]
        %v454 = vld [vmem:[%s2 + $0x80] sm:$0xff]
        %v455 = vld [vmem:[%s2 + $0x88] sm:$0xff]
        %v456 = vld [vmem:[%s2 + $0x90] sm:$0xff]
        %v457 = vld [vmem:[%s2 + $0x98] sm:$0xff]
        %v458 = vld [vmem:[%s2 + $0xa0] sm:$0xff]
        %v459 = vld [vmem:[%s2 + $0xa8] sm:$0xff]
        %v460 = vld [vmem:[%s2 + $0xb0] sm:$0xff]
        %v461 = vld [vmem:[%s2 + $0xb8] sm:$0xff]
        %v462 = vld [vmem:[%s2 + $0xc0] sm:$0xff]
        %v463 = vld [vmem:[%s2 + $0xc8] sm:$0xff]
        %v464 = vld [vmem:[%s2 + $0xd0] sm:$0xff]
        %v465 = vld [vmem:[%s2 + $0xd8] sm:$0xff]
        %v466 = vld [vmem:[%s2 + $0xe0] sm:$0xff]
        %v467 = vld [vmem:[%s2 + $0xe8] sm:$0xff]
        %v468 = vld [vmem:[%s2 + $0xf0] sm:$0xff]
        %v469 = vld [vmem:[%s2 + $0xf8] sm:$0xff]
        %v470 = vld [vmem:[%s4] sm:$0xf]
        %v472 = vlaneseq
        %v473 = vshrl.u32 %v472, 7
        %v474 = vsub.s32 0, %v473
        %v475 = vrot.slane %v470, %v474
        %v476 = vlaneseq
        %v477 = vshrl.u32 %v476, 7
        %v478 = vsub.s32 1, %v477
        %v479 = vrot.slane %v470, %v478
        %v480 = vlaneseq
        %v481 = vshrl.u32 %v480, 7
        %v482 = vsub.s32 2, %v481
        %v483 = vrot.slane %v470, %v482
        %v484 = vlaneseq
        %v485 = vshrl.u32 %v484, 7
        %v486 = vsub.s32 3, %v485
        %v487 = vrot.slane %v470, %v486
        %vm492 = vcmask 523264
        %v494 = vsel %vm492, %v430, 0
        %v497 = vsel %vm492, %v431, 0
        %v500 = vsel %vm492, %v432, 0
        %v503 = vsel %vm492, %v433, 0
        %v506 = vsel %vm492, %v434, 0
        %v509 = vsel %vm492, %v435, 0
        %v512 = vsel %vm492, %v436, 0
        %v515 = vsel %vm492, %v437, 0
        %517 = vmatprep.subr.mxu0 %v439
        %518 = vmatpush1.msra.mxu0 %v438
        %519 = vmatprep.subr.mxu0 %v443
        %520 = vmatpush1.msra.mxu0 %v442
        %521 = vmatprep.subr.mxu0 %v447
        %522 = vmatpush1.msra.mxu0 %v446
        %523 = vmatprep.subr.mxu0 %v451
        %524 = vmatpush1.msra.mxu0 %v450
        %525 = vmatprep.subr.mxu0 %v455
        %526 = vmatpush1.msra.mxu0 %v454
        %527 = vmatprep.subr.mxu0 %v459
        %528 = vmatpush1.msra.mxu0 %v458
        %529 = vmatprep.subr.mxu0 %v463
        %530 = vmatpush1.msra.mxu0 %v462
        %531 = vmatprep.subr.mxu0 %v467
        %532 = vmatpush1.msra.mxu0 %v466
        %533 = vmatprep.subr.mxu0 0.0
        %534 = vmatpush1.msra.mxu0 0.0
        %535 = vmatprep.subr.mxu0 0.0
        %536 = vmatpush1.msra.mxu0 0.0
        %537 = vmatprep.subr.mxu0 0.0
        %538 = vmatpush1.msra.mxu0 0.0
        %539 = vmatprep.subr.mxu0 0.0
        %540 = vmatpush1.msra.mxu0 0.0
        %541 = vmatprep.subr.mxu0 0.0
        %542 = vmatpush1.msra.mxu0 0.0
        %543 = vmatprep.subr.mxu0 0.0
        %544 = vmatpush1.msra.mxu0 0.0
        %545 = vmatprep.subr.mxu0 0.0
        %546 = vmatpush1.msra.mxu0 0.0
        %547 = vmatprep.subr.mxu0 0.0
        %548 = vmatpush1.msra.mxu0 0.0
        %549 = vmatprep.subr.mxu0 0.0
        %550 = vmatpush1.msra.mxu0 0.0
        %551 = vmatprep.subr.mxu0 0.0
        %552 = vmatpush1.msra.mxu0 0.0
        %553 = vmatprep.subr.mxu0 0.0
        %554 = vmatpush1.msra.mxu0 0.0
        %555 = vmatprep.subr.mxu0 0.0
        %556 = vmatpush1.msra.mxu0 0.0
        %557 = vmatprep.subr.mxu0 0.0
        %558 = vmatpush1.msra.mxu0 0.0
        %559 = vmatprep.subr.mxu0 0.0
        %560 = vmatpush1.msra.mxu0 0.0
        %561 = vmatprep.subr.mxu0 0.0
        %562 = vmatpush1.msra.mxu0 0.0
        %563 = vmatprep.subr.mxu0 0.0
        %564 = vmatpush1.msra.mxu0 0.0
        %565 = vmatprep.subr.mxu0 0.0
        %566 = vmatpush1.msra.mxu0 0.0
        %567 = vmatprep.subr.mxu0 0.0
        %568 = vmatpush1.msra.mxu0 0.0
        %569 = vmatprep.subr.mxu0 0.0
        %570 = vmatpush1.msra.mxu0 0.0
        %571 = vmatprep.subr.mxu0 0.0
        %572 = vmatpush1.msra.mxu0 0.0
        %573 = vmatprep.subr.mxu0 0.0
        %574 = vmatpush1.msra.mxu0 0.0
        %575 = vmatprep.subr.mxu0 0.0
        %576 = vmatpush1.msra.mxu0 0.0
        %577 = vmatprep.subr.mxu0 0.0
        %578 = vmatpush1.msra.mxu0 0.0
        %579 = vmatprep.subr.mxu0 0.0
        %580 = vmatpush1.msra.mxu0 0.0
        %581 = vmatprep.mubr.f32.mxu0 0.0
        %582 = vmatmul.mubr.f32.gmra.mrb[0].mxu0 %v494
        %v583 = vpop.f32.mrb[0].mxu0
        %v584 = vadd.f32 %v475, %v583
        %v585 = vpop.f32.mrb[0].mxu0
        %v586 = vadd.f32 %v479, %v585
        %587 = vmatprep.mubr.f32.mxu0 0.0
        %588 = vmatmul.mubr.f32.gmra.mrb[0].mxu0 %v497
        %v589 = vpop.f32.mrb[0].mxu0
        %v590 = vadd.f32 %v475, %v589
        %v591 = vpop.f32.mrb[0].mxu0
        %v592 = vadd.f32 %v479, %v591
        %593 = vmatprep.mubr.f32.mxu0 0.0
        %594 = vmatmul.mubr.f32.gmra.mrb[0].mxu0 %v500
        %v595 = vpop.f32.mrb[0].mxu0
        %v596 = vadd.f32 %v475, %v595
        %v597 = vpop.f32.mrb[0].mxu0
        %v598 = vadd.f32 %v479, %v597
        %599 = vmatprep.mubr.f32.mxu0 0.0
        %600 = vmatmul.mubr.f32.gmra.mrb[0].mxu0 %v503
        %v601 = vpop.f32.mrb[0].mxu0
        %v602 = vadd.f32 %v475, %v601
        %v603 = vpop.f32.mrb[0].mxu0
        %v604 = vadd.f32 %v479, %v603
        %605 = vmatprep.mubr.f32.mxu0 0.0
        %606 = vmatmul.mubr.f32.gmra.mrb[0].mxu0 %v506
        %v607 = vpop.f32.mrb[0].mxu0
        %v608 = vadd.f32 %v475, %v607
        %v609 = vpop.f32.mrb[0].mxu0
        %v610 = vadd.f32 %v479, %v609
        %611 = vmatprep.mubr.f32.mxu0 0.0
        %612 = vmatmul.mubr.f32.gmra.mrb[0].mxu0 %v509
        %v613 = vpop.f32.mrb[0].mxu0
        %v614 = vadd.f32 %v475, %v613
        %v615 = vpop.f32.mrb[0].mxu0
        %v616 = vadd.f32 %v479, %v615
        %617 = vmatprep.mubr.f32.mxu0 0.0
        %618 = vmatmul.mubr.f32.gmra.mrb[0].mxu0 %v512
        %v619 = vpop.f32.mrb[0].mxu0
        %v620 = vadd.f32 %v475, %v619
        %v621 = vpop.f32.mrb[0].mxu0
        %v622 = vadd.f32 %v479, %v621
        %623 = vmatprep.mubr.f32.mxu0 0.0
        %624 = vmatmul.mubr.f32.gmra.mrb[0].mxu0 %v515
        %v625 = vpop.f32.mrb[0].mxu0
        %v626 = vadd.f32 %v475, %v625
        %v627 = vpop.f32.mrb[0].mxu0
        %v628 = vadd.f32 %v479, %v627
        %629 = vdwg.mxu0
        %630 = vmatprep.subr.mxu0 %v441
        %631 = vmatpush1.msra.mxu0 %v440
        %632 = vmatprep.subr.mxu0 %v445
        %633 = vmatpush1.msra.mxu0 %v444
        %634 = vmatprep.subr.mxu0 %v449
        %635 = vmatpush1.msra.mxu0 %v448
        %636 = vmatprep.subr.mxu0 %v453
        %637 = vmatpush1.msra.mxu0 %v452
        %638 = vmatprep.subr.mxu0 %v457
        %639 = vmatpush1.msra.mxu0 %v456
        %640 = vmatprep.subr.mxu0 %v461
        %641 = vmatpush1.msra.mxu0 %v460
        %642 = vmatprep.subr.mxu0 %v465
        %643 = vmatpush1.msra.mxu0 %v464
        %644 = vmatprep.subr.mxu0 %v469
        %645 = vmatpush1.msra.mxu0 %v468
        %646 = vmatprep.subr.mxu0 0.0
        %647 = vmatpush1.msra.mxu0 0.0
        %648 = vmatprep.subr.mxu0 0.0
        %649 = vmatpush1.msra.mxu0 0.0
        %650 = vmatprep.subr.mxu0 0.0
        %651 = vmatpush1.msra.mxu0 0.0
        %652 = vmatprep.subr.mxu0 0.0
        %653 = vmatpush1.msra.mxu0 0.0
        %654 = vmatprep.subr.mxu0 0.0
        %655 = vmatpush1.msra.mxu0 0.0
        %656 = vmatprep.subr.mxu0 0.0
        %657 = vmatpush1.msra.mxu0 0.0
        %658 = vmatprep.subr.mxu0 0.0
        %659 = vmatpush1.msra.mxu0 0.0
        %660 = vmatprep.subr.mxu0 0.0
        %661 = vmatpush1.msra.mxu0 0.0
        %662 = vmatprep.subr.mxu0 0.0
        %663 = vmatpush1.msra.mxu0 0.0
        %664 = vmatprep.subr.mxu0 0.0
        %665 = vmatpush1.msra.mxu0 0.0
        %666 = vmatprep.subr.mxu0 0.0
        %667 = vmatpush1.msra.mxu0 0.0
        %668 = vmatprep.subr.mxu0 0.0
        %669 = vmatpush1.msra.mxu0 0.0
        %670 = vmatprep.subr.mxu0 0.0
        %671 = vmatpush1.msra.mxu0 0.0
        %672 = vmatprep.subr.mxu0 0.0
        %673 = vmatpush1.msra.mxu0 0.0
        %674 = vmatprep.subr.mxu0 0.0
        %675 = vmatpush1.msra.mxu0 0.0
        %676 = vmatprep.subr.mxu0 0.0
        %677 = vmatpush1.msra.mxu0 0.0
        %678 = vmatprep.subr.mxu0 0.0
        %679 = vmatpush1.msra.mxu0 0.0
        %680 = vmatprep.subr.mxu0 0.0
        %681 = vmatpush1.msra.mxu0 0.0
        %682 = vmatprep.subr.mxu0 0.0
        %683 = vmatpush1.msra.mxu0 0.0
        %684 = vmatprep.subr.mxu0 0.0
        %685 = vmatpush1.msra.mxu0 0.0
        %686 = vmatprep.subr.mxu0 0.0
        %687 = vmatpush1.msra.mxu0 0.0
        %688 = vmatprep.subr.mxu0 0.0
        %689 = vmatpush1.msra.mxu0 0.0
        %690 = vmatprep.subr.mxu0 0.0
        %691 = vmatpush1.msra.mxu0 0.0
        %692 = vmatprep.subr.mxu0 0.0
        %693 = vmatpush1.msra.mxu0 0.0
        %694 = vmatprep.mubr.f32.mxu0 0.0
        %695 = vmatmul.mubr.f32.gmra.mrb[0].mxu0 %v494
        %v696 = vpop.f32.mrb[0].mxu0
        %v697 = vadd.f32 %v483, %v696
        %v698 = vpop.f32.mrb[0].mxu0
        %v699 = vadd.f32 %v487, %v698
        %700 = vmatprep.mubr.f32.mxu0 0.0
        %701 = vmatmul.mubr.f32.gmra.mrb[0].mxu0 %v497
        %v702 = vpop.f32.mrb[0].mxu0
        %v703 = vadd.f32 %v483, %v702
        %v704 = vpop.f32.mrb[0].mxu0
        %v705 = vadd.f32 %v487, %v704
        %706 = vmatprep.mubr.f32.mxu0 0.0
        %707 = vmatmul.mubr.f32.gmra.mrb[0].mxu0 %v500
        %v708 = vpop.f32.mrb[0].mxu0
        %v709 = vadd.f32 %v483, %v708
        %v710 = vpop.f32.mrb[0].mxu0
        %v711 = vadd.f32 %v487, %v710
        %712 = vmatprep.mubr.f32.mxu0 0.0
        %713 = vmatmul.mubr.f32.gmra.mrb[0].mxu0 %v503
        %v714 = vpop.f32.mrb[0].mxu0
        %v715 = vadd.f32 %v483, %v714
        %v716 = vpop.f32.mrb[0].mxu0
        %v717 = vadd.f32 %v487, %v716
        %718 = vmatprep.mubr.f32.mxu0 0.0
        %719 = vmatmul.mubr.f32.gmra.mrb[0].mxu0 %v506
        %v720 = vpop.f32.mrb[0].mxu0
        %v721 = vadd.f32 %v483, %v720
        %v722 = vpop.f32.mrb[0].mxu0
        %v723 = vadd.f32 %v487, %v722
        %724 = vmatprep.mubr.f32.mxu0 0.0
        %725 = vmatmul.mubr.f32.gmra.mrb[0].mxu0 %v509
        %v726 = vpop.f32.mrb[0].mxu0
        %v727 = vadd.f32 %v483, %v726
        %v728 = vpop.f32.mrb[0].mxu0
        %v729 = vadd.f32 %v487, %v728
        %730 = vmatprep.mubr.f32.mxu0 0.0
        %731 = vmatmul.mubr.f32.gmra.mrb[0].mxu0 %v512
        %v732 = vpop.f32.mrb[0].mxu0
        %v733 = vadd.f32 %v483, %v732
        %v734 = vpop.f32.mrb[0].mxu0
        %v735 = vadd.f32 %v487, %v734
        %736 = vmatprep.mubr.f32.mxu0 0.0
        %737 = vmatmul.mubr.f32.gmra.mrb[0].mxu0 %v515
        %v738 = vpop.f32.mrb[0].mxu0
        %v739 = vadd.f32 %v483, %v738
        %v740 = vpop.f32.mrb[0].mxu0
        %v741 = vadd.f32 %v487, %v740
        %742 = vdwg.mxu0
        %743 = vst [vmem:[#allocation2] sm:$0xff] %v584
        %744 = vst [vmem:[#allocation2 + $0x8] sm:$0xff] %v586
        %745 = vst [vmem:[#allocation2 + $0x10] sm:$0xff] %v697
        %746 = vst [vmem:[#allocation2 + $0x18] sm:$0xff] %v699
        %747 = vst [vmem:[#allocation2 + $0x20] sm:$0xff] %v590
        %748 = vst [vmem:[#allocation2 + $0x28] sm:$0xff] %v592
        %749 = vst [vmem:[#allocation2 + $0x30] sm:$0xff] %v703
        %750 = vst [vmem:[#allocation2 + $0x38] sm:$0xff] %v705
        %751 = vst [vmem:[#allocation2 + $0x40] sm:$0xff] %v596
        %752 = vst [vmem:[#allocation2 + $0x48] sm:$0xff] %v598
        %753 = vst [vmem:[#allocation2 + $0x50] sm:$0xff] %v709
        %754 = vst [vmem:[#allocation2 + $0x58] sm:$0xff] %v711
        %755 = vst [vmem:[#allocation2 + $0x60] sm:$0xff] %v602
        %756 = vst [vmem:[#allocation2 + $0x68] sm:$0xff] %v604
        %757 = vst [vmem:[#allocation2 + $0x70] sm:$0xff] %v715
        %758 = vst [vmem:[#allocation2 + $0x78] sm:$0xff] %v717
        %759 = vst [vmem:[#allocation2 + $0x80] sm:$0xff] %v608
        %760 = vst [vmem:[#allocation2 + $0x88] sm:$0xff] %v610
        %761 = vst [vmem:[#allocation2 + $0x90] sm:$0xff] %v721
        %762 = vst [vmem:[#allocation2 + $0x98] sm:$0xff] %v723
        %763 = vst [vmem:[#allocation2 + $0xa0] sm:$0xff] %v614
        %764 = vst [vmem:[#allocation2 + $0xa8] sm:$0xff] %v616
        %765 = vst [vmem:[#allocation2 + $0xb0] sm:$0xff] %v727
        %766 = vst [vmem:[#allocation2 + $0xb8] sm:$0xff] %v729
        %767 = vst [vmem:[#allocation2 + $0xc0] sm:$0xff] %v620
        %768 = vst [vmem:[#allocation2 + $0xc8] sm:$0xff] %v622
        %769 = vst [vmem:[#allocation2 + $0xd0] sm:$0xff] %v733
        %770 = vst [vmem:[#allocation2 + $0xd8] sm:$0xff] %v735
        %771 = vst [vmem:[#allocation2 + $0xe0] sm:$0xff] %v626
        %772 = vst [vmem:[#allocation2 + $0xe8] sm:$0xff] %v628
        %773 = vst [vmem:[#allocation2 + $0xf0] sm:$0xff] %v739
        %774 = vst [vmem:[#allocation2 + $0xf8] sm:$0xff] %v741
        %v775 = vld [vmem:[%s416] sm:$0xff]
        %v776 = vld [vmem:[%s416 + $0x8] sm:$0xff]
        %v777 = vld [vmem:[%s416 + $0x10] sm:$0xff]
        %v778 = vld [vmem:[%s416 + $0x18] sm:$0xff]
        %v779 = vld [vmem:[%s416 + $0x20] sm:$0xff]
        %v780 = vld [vmem:[%s416 + $0x28] sm:$0xff]
        %v781 = vld [vmem:[%s416 + $0x30] sm:$0xff]
        %v782 = vld [vmem:[%s416 + $0x38] sm:$0xff]
        %v783 = vld [vmem:[#allocation8] sm:$0xff]
        %v784 = vld [vmem:[#allocation8 + $0x8] sm:$0xff]
        %v785 = vld [vmem:[#allocation8 + $0x10] sm:$0xff]
        %v786 = vld [vmem:[#allocation8 + $0x18] sm:$0xff]
        %v787 = vld [vmem:[#allocation8 + $0x20] sm:$0xff]
        %v788 = vld [vmem:[#allocation8 + $0x28] sm:$0xff]
        %v789 = vld [vmem:[#allocation8 + $0x30] sm:$0xff]
        %v790 = vld [vmem:[#allocation8 + $0x38] sm:$0xff]
        %v791 = vld [vmem:[#allocation8 + $0x40] sm:$0xff]
        %v792 = vld [vmem:[#allocation8 + $0x48] sm:$0xff]
        %v793 = vld [vmem:[#allocation8 + $0x50] sm:$0xff]
        %v794 = vld [vmem:[#allocation8 + $0x58] sm:$0xff]
        %v795 = vld [vmem:[#allocation8 + $0x60] sm:$0xff]
        %v796 = vld [vmem:[#allocation8 + $0x68] sm:$0xff]
        %v797 = vld [vmem:[#allocation8 + $0x70] sm:$0xff]
        %v798 = vld [vmem:[#allocation8 + $0x78] sm:$0xff]
        %v799 = vld [vmem:[#allocation8 + $0x80] sm:$0xff]
        %v800 = vld [vmem:[#allocation8 + $0x88] sm:$0xff]
        %v801 = vld [vmem:[#allocation8 + $0x90] sm:$0xff]
        %v802 = vld [vmem:[#allocation8 + $0x98] sm:$0xff]
        %v803 = vld [vmem:[#allocation8 + $0xa0] sm:$0xff]
        %v804 = vld [vmem:[#allocation8 + $0xa8] sm:$0xff]
        %v805 = vld [vmem:[#allocation8 + $0xb0] sm:$0xff]
        %v806 = vld [vmem:[#allocation8 + $0xb8] sm:$0xff]
        %v807 = vld [vmem:[#allocation8 + $0xc0] sm:$0xff]
        %v808 = vld [vmem:[#allocation8 + $0xc8] sm:$0xff]
        %v809 = vld [vmem:[#allocation8 + $0xd0] sm:$0xff]
        %v810 = vld [vmem:[#allocation8 + $0xd8] sm:$0xff]
        %v811 = vld [vmem:[#allocation8 + $0xe0] sm:$0xff]
        %v812 = vld [vmem:[#allocation8 + $0xe8] sm:$0xff]
        %v813 = vld [vmem:[#allocation8 + $0xf0] sm:$0xff]
        %v814 = vld [vmem:[#allocation8 + $0xf8] sm:$0xff]
        %v815 = vld [vmem:[%s5] sm:$0xf]
        %v817 = vlaneseq
        %v818 = vshrl.u32 %v817, 7
        %v819 = vsub.s32 0, %v818
        %v820 = vrot.slane %v815, %v819
        %v821 = vlaneseq
        %v822 = vshrl.u32 %v821, 7
        %v823 = vsub.s32 1, %v822
        %v824 = vrot.slane %v815, %v823
        %v825 = vlaneseq
        %v826 = vshrl.u32 %v825, 7
        %v827 = vsub.s32 2, %v826
        %v828 = vrot.slane %v815, %v827
        %v829 = vlaneseq
        %v830 = vshrl.u32 %v829, 7
        %v831 = vsub.s32 3, %v830
        %v832 = vrot.slane %v815, %v831
        %v838 = vsel %vm492, %v775, 0
        %v841 = vsel %vm492, %v776, 0
        %v844 = vsel %vm492, %v777, 0
        %v847 = vsel %vm492, %v778, 0
        %v850 = vsel %vm492, %v779, 0
        %v853 = vsel %vm492, %v780, 0
        %v856 = vsel %vm492, %v781, 0
        %v859 = vsel %vm492, %v782, 0
        %861 = vmatprep.subr.mxu0 %v784
        %862 = vmatpush1.msra.mxu0 %v783
        %863 = vmatprep.subr.mxu0 %v788
        %864 = vmatpush1.msra.mxu0 %v787
        %865 = vmatprep.subr.mxu0 %v792
        %866 = vmatpush1.msra.mxu0 %v791
        %867 = vmatprep.subr.mxu0 %v796
        %868 = vmatpush1.msra.mxu0 %v795
        %869 = vmatprep.subr.mxu0 %v800
        %870 = vmatpush1.msra.mxu0 %v799
        %871 = vmatprep.subr.mxu0 %v804
        %872 = vmatpush1.msra.mxu0 %v803
        %873 = vmatprep.subr.mxu0 %v808
        %874 = vmatpush1.msra.mxu0 %v807
        %875 = vmatprep.subr.mxu0 %v812
        %876 = vmatpush1.msra.mxu0 %v811
        %877 = vmatprep.subr.mxu0 0.0
        %878 = vmatpush1.msra.mxu0 0.0
        %879 = vmatprep.subr.mxu0 0.0
        %880 = vmatpush1.msra.mxu0 0.0
        %881 = vmatprep.subr.mxu0 0.0
        %882 = vmatpush1.msra.mxu0 0.0
        %883 = vmatprep.subr.mxu0 0.0
        %884 = vmatpush1.msra.mxu0 0.0
        %885 = vmatprep.subr.mxu0 0.0
        %886 = vmatpush1.msra.mxu0 0.0
        %887 = vmatprep.subr.mxu0 0.0
        %888 = vmatpush1.msra.mxu0 0.0
        %889 = vmatprep.subr.mxu0 0.0
        %890 = vmatpush1.msra.mxu0 0.0
        %891 = vmatprep.subr.mxu0 0.0
        %892 = vmatpush1.msra.mxu0 0.0
        %893 = vmatprep.subr.mxu0 0.0
        %894 = vmatpush1.msra.mxu0 0.0
        %895 = vmatprep.subr.mxu0 0.0
        %896 = vmatpush1.msra.mxu0 0.0
        %897 = vmatprep.subr.mxu0 0.0
        %898 = vmatpush1.msra.mxu0 0.0
        %899 = vmatprep.subr.mxu0 0.0
        %900 = vmatpush1.msra.mxu0 0.0
        %901 = vmatprep.subr.mxu0 0.0
        %902 = vmatpush1.msra.mxu0 0.0
        %903 = vmatprep.subr.mxu0 0.0
        %904 = vmatpush1.msra.mxu0 0.0
        %905 = vmatprep.subr.mxu0 0.0
        %906 = vmatpush1.msra.mxu0 0.0
        %907 = vmatprep.subr.mxu0 0.0
        %908 = vmatpush1.msra.mxu0 0.0
        %909 = vmatprep.subr.mxu0 0.0
        %910 = vmatpush1.msra.mxu0 0.0
        %911 = vmatprep.subr.mxu0 0.0
        %912 = vmatpush1.msra.mxu0 0.0
        %913 = vmatprep.subr.mxu0 0.0
        %914 = vmatpush1.msra.mxu0 0.0
        %915 = vmatprep.subr.mxu0 0.0
        %916 = vmatpush1.msra.mxu0 0.0
        %917 = vmatprep.subr.mxu0 0.0
        %918 = vmatpush1.msra.mxu0 0.0
        %919 = vmatprep.subr.mxu0 0.0
        %920 = vmatpush1.msra.mxu0 0.0
        %921 = vmatprep.subr.mxu0 0.0
        %922 = vmatpush1.msra.mxu0 0.0
        %923 = vmatprep.subr.mxu0 0.0
        %924 = vmatpush1.msra.mxu0 0.0
        %925 = vmatprep.mubr.f32.mxu0 0.0
        %926 = vmatmul.mubr.f32.gmra.mrb[0].mxu0 %v838
        %v927 = vpop.f32.mrb[0].mxu0
        %v928 = vadd.f32 %v820, %v927
        %v929 = vpop.f32.mrb[0].mxu0
        %v930 = vadd.f32 %v824, %v929
        %931 = vmatprep.mubr.f32.mxu0 0.0
        %932 = vmatmul.mubr.f32.gmra.mrb[0].mxu0 %v841
        %v933 = vpop.f32.mrb[0].mxu0
        %v934 = vadd.f32 %v820, %v933
        %v935 = vpop.f32.mrb[0].mxu0
        %v936 = vadd.f32 %v824, %v935
        %937 = vmatprep.mubr.f32.mxu0 0.0
        %938 = vmatmul.mubr.f32.gmra.mrb[0].mxu0 %v844
        %v939 = vpop.f32.mrb[0].mxu0
        %v940 = vadd.f32 %v820, %v939
        %v941 = vpop.f32.mrb[0].mxu0
        %v942 = vadd.f32 %v824, %v941
        %943 = vmatprep.mubr.f32.mxu0 0.0
        %944 = vmatmul.mubr.f32.gmra.mrb[0].mxu0 %v847
        %v945 = vpop.f32.mrb[0].mxu0
        %v946 = vadd.f32 %v820, %v945
        %v947 = vpop.f32.mrb[0].mxu0
        %v948 = vadd.f32 %v824, %v947
        %949 = vmatprep.mubr.f32.mxu0 0.0
        %950 = vmatmul.mubr.f32.gmra.mrb[0].mxu0 %v850
        %v951 = vpop.f32.mrb[0].mxu0
        %v952 = vadd.f32 %v820, %v951
        %v953 = vpop.f32.mrb[0].mxu0
        %v954 = vadd.f32 %v824, %v953
        %955 = vmatprep.mubr.f32.mxu0 0.0
        %956 = vmatmul.mubr.f32.gmra.mrb[0].mxu0 %v853
        %v957 = vpop.f32.mrb[0].mxu0
        %v958 = vadd.f32 %v820, %v957
        %v959 = vpop.f32.mrb[0].mxu0
        %v960 = vadd.f32 %v824, %v959
        %961 = vmatprep.mubr.f32.mxu0 0.0
        %962 = vmatmul.mubr.f32.gmra.mrb[0].mxu0 %v856
        %v963 = vpop.f32.mrb[0].mxu0
        %v964 = vadd.f32 %v820, %v963
        %v965 = vpop.f32.mrb[0].mxu0
        %v966 = vadd.f32 %v824, %v965
        %967 = vmatprep.mubr.f32.mxu0 0.0
        %968 = vmatmul.mubr.f32.gmra.mrb[0].mxu0 %v859
        %v969 = vpop.f32.mrb[0].mxu0
        %v970 = vadd.f32 %v820, %v969
        %v971 = vpop.f32.mrb[0].mxu0
        %v972 = vadd.f32 %v824, %v971
        %973 = vdwg.mxu0
        %974 = vmatprep.subr.mxu0 %v786
        %975 = vmatpush1.msra.mxu0 %v785
        %976 = vmatprep.subr.mxu0 %v790
        %977 = vmatpush1.msra.mxu0 %v789
        %978 = vmatprep.subr.mxu0 %v794
        %979 = vmatpush1.msra.mxu0 %v793
        %980 = vmatprep.subr.mxu0 %v798
        %981 = vmatpush1.msra.mxu0 %v797
        %982 = vmatprep.subr.mxu0 %v802
        %983 = vmatpush1.msra.mxu0 %v801
        %984 = vmatprep.subr.mxu0 %v806
        %985 = vmatpush1.msra.mxu0 %v805
        %986 = vmatprep.subr.mxu0 %v810
        %987 = vmatpush1.msra.mxu0 %v809
        %988 = vmatprep.subr.mxu0 %v814
        %989 = vmatpush1.msra.mxu0 %v813
        %990 = vmatprep.subr.mxu0 0.0
        %991 = vmatpush1.msra.mxu0 0.0
        %992 = vmatprep.subr.mxu0 0.0
        %993 = vmatpush1.msra.mxu0 0.0
        %994 = vmatprep.subr.mxu0 0.0
        %995 = vmatpush1.msra.mxu0 0.0
        %996 = vmatprep.subr.mxu0 0.0
        %997 = vmatpush1.msra.mxu0 0.0
        %998 = vmatprep.subr.mxu0 0.0
        %999 = vmatpush1.msra.mxu0 0.0
        %1000 = vmatprep.subr.mxu0 0.0
        %1001 = vmatpush1.msra.mxu0 0.0
        %1002 = vmatprep.subr.mxu0 0.0
        %1003 = vmatpush1.msra.mxu0 0.0
        %1004 = vmatprep.subr.mxu0 0.0
        %1005 = vmatpush1.msra.mxu0 0.0
        %1006 = vmatprep.subr.mxu0 0.0
        %1007 = vmatpush1.msra.mxu0 0.0
        %1008 = vmatprep.subr.mxu0 0.0
        %1009 = vmatpush1.msra.mxu0 0.0
        %1010 = vmatprep.subr.mxu0 0.0
        %1011 = vmatpush1.msra.mxu0 0.0
        %1012 = vmatprep.subr.mxu0 0.0
        %1013 = vmatpush1.msra.mxu0 0.0
        %1014 = vmatprep.subr.mxu0 0.0
        %1015 = vmatpush1.msra.mxu0 0.0
        %1016 = vmatprep.subr.mxu0 0.0
        %1017 = vmatpush1.msra.mxu0 0.0
        %1018 = vmatprep.subr.mxu0 0.0
        %1019 = vmatpush1.msra.mxu0 0.0
        %1020 = vmatprep.subr.mxu0 0.0
        %1021 = vmatpush1.msra.mxu0 0.0
        %1022 = vmatprep.subr.mxu0 0.0
        %1023 = vmatpush1.msra.mxu0 0.0
        %1024 = vmatprep.subr.mxu0 0.0
        %1025 = vmatpush1.msra.mxu0 0.0
        %1026 = vmatprep.subr.mxu0 0.0
        %1027 = vmatpush1.msra.mxu0 0.0
        %1028 = vmatprep.subr.mxu0 0.0
        %1029 = vmatpush1.msra.mxu0 0.0
        %1030 = vmatprep.subr.mxu0 0.0
        %1031 = vmatpush1.msra.mxu0 0.0
        %1032 = vmatprep.subr.mxu0 0.0
        %1033 = vmatpush1.msra.mxu0 0.0
        %1034 = vmatprep.subr.mxu0 0.0
        %1035 = vmatpush1.msra.mxu0 0.0
        %1036 = vmatprep.subr.mxu0 0.0
        %1037 = vmatpush1.msra.mxu0 0.0
        %1038 = vmatprep.mubr.f32.mxu0 0.0
        %1039 = vmatmul.mubr.f32.gmra.mrb[0].mxu0 %v838
        %v1040 = vpop.f32.mrb[0].mxu0
        %v1041 = vadd.f32 %v828, %v1040
        %v1042 = vpop.f32.mrb[0].mxu0
        %v1043 = vadd.f32 %v832, %v1042
        %1044 = vmatprep.mubr.f32.mxu0 0.0
        %1045 = vmatmul.mubr.f32.gmra.mrb[0].mxu0 %v841
        %v1046 = vpop.f32.mrb[0].mxu0
        %v1047 = vadd.f32 %v828, %v1046
        %v1048 = vpop.f32.mrb[0].mxu0
        %v1049 = vadd.f32 %v832, %v1048
        %1050 = vmatprep.mubr.f32.mxu0 0.0
        %1051 = vmatmul.mubr.f32.gmra.mrb[0].mxu0 %v844
        %v1052 = vpop.f32.mrb[0].mxu0
        %v1053 = vadd.f32 %v828, %v1052
        %v1054 = vpop.f32.mrb[0].mxu0
        %v1055 = vadd.f32 %v832, %v1054
        %1056 = vmatprep.mubr.f32.mxu0 0.0
        %1057 = vmatmul.mubr.f32.gmra.mrb[0].mxu0 %v847
        %v1058 = vpop.f32.mrb[0].mxu0
        %v1059 = vadd.f32 %v828, %v1058
        %v1060 = vpop.f32.mrb[0].mxu0
        %v1061 = vadd.f32 %v832, %v1060
        %1062 = vmatprep.mubr.f32.mxu0 0.0
        %1063 = vmatmul.mubr.f32.gmra.mrb[0].mxu0 %v850
        %v1064 = vpop.f32.mrb[0].mxu0
        %v1065 = vadd.f32 %v828, %v1064
        %v1066 = vpop.f32.mrb[0].mxu0
        %v1067 = vadd.f32 %v832, %v1066
        %1068 = vmatprep.mubr.f32.mxu0 0.0
        %1069 = vmatmul.mubr.f32.gmra.mrb[0].mxu0 %v853
        %v1070 = vpop.f32.mrb[0].mxu0
        %v1071 = vadd.f32 %v828, %v1070
        %v1072 = vpop.f32.mrb[0].mxu0
        %v1073 = vadd.f32 %v832, %v1072
        %1074 = vmatprep.mubr.f32.mxu0 0.0
        %1075 = vmatmul.mubr.f32.gmra.mrb[0].mxu0 %v856
        %v1076 = vpop.f32.mrb[0].mxu0
        %v1077 = vadd.f32 %v828, %v1076
        %v1078 = vpop.f32.mrb[0].mxu0
        %v1079 = vadd.f32 %v832, %v1078
        %1080 = vmatprep.mubr.f32.mxu0 0.0
        %1081 = vmatmul.mubr.f32.gmra.mrb[0].mxu0 %v859
        %v1082 = vpop.f32.mrb[0].mxu0
        %v1083 = vadd.f32 %v828, %v1082
        %v1084 = vpop.f32.mrb[0].mxu0
        %v1085 = vadd.f32 %v832, %v1084
        %1086 = vdwg.mxu0
        %1087 = vst [vmem:[#allocation3] sm:$0xff] %v928
        %1088 = vst [vmem:[#allocation3 + $0x8] sm:$0xff] %v930
        %1089 = vst [vmem:[#allocation3 + $0x10] sm:$0xff] %v1041
        %1090 = vst [vmem:[#allocation3 + $0x18] sm:$0xff] %v1043
        %1091 = vst [vmem:[#allocation3 + $0x20] sm:$0xff] %v934
        %1092 = vst [vmem:[#allocation3 + $0x28] sm:$0xff] %v936
        %1093 = vst [vmem:[#allocation3 + $0x30] sm:$0xff] %v1047
        %1094 = vst [vmem:[#allocation3 + $0x38] sm:$0xff] %v1049
        %1095 = vst [vmem:[#allocation3 + $0x40] sm:$0xff] %v940
        %1096 = vst [vmem:[#allocation3 + $0x48] sm:$0xff] %v942
        %1097 = vst [vmem:[#allocation3 + $0x50] sm:$0xff] %v1053
        %1098 = vst [vmem:[#allocation3 + $0x58] sm:$0xff] %v1055
        %1099 = vst [vmem:[#allocation3 + $0x60] sm:$0xff] %v946
        %1100 = vst [vmem:[#allocation3 + $0x68] sm:$0xff] %v948
        %1101 = vst [vmem:[#allocation3 + $0x70] sm:$0xff] %v1059
        %1102 = vst [vmem:[#allocation3 + $0x78] sm:$0xff] %v1061
        %1103 = vst [vmem:[#allocation3 + $0x80] sm:$0xff] %v952
        %1104 = vst [vmem:[#allocation3 + $0x88] sm:$0xff] %v954
        %1105 = vst [vmem:[#allocation3 + $0x90] sm:$0xff] %v1065
        %1106 = vst [vmem:[#allocation3 + $0x98] sm:$0xff] %v1067
        %1107 = vst [vmem:[#allocation3 + $0xa0] sm:$0xff] %v958
        %1108 = vst [vmem:[#allocation3 + $0xa8] sm:$0xff] %v960
        %1109 = vst [vmem:[#allocation3 + $0xb0] sm:$0xff] %v1071
        %1110 = vst [vmem:[#allocation3 + $0xb8] sm:$0xff] %v1073
        %1111 = vst [vmem:[#allocation3 + $0xc0] sm:$0xff] %v964
        %1112 = vst [vmem:[#allocation3 + $0xc8] sm:$0xff] %v966
        %1113 = vst [vmem:[#allocation3 + $0xd0] sm:$0xff] %v1077
        %1114 = vst [vmem:[#allocation3 + $0xd8] sm:$0xff] %v1079
        %1115 = vst [vmem:[#allocation3 + $0xe0] sm:$0xff] %v970
        %1116 = vst [vmem:[#allocation3 + $0xe8] sm:$0xff] %v972
        %1117 = vst [vmem:[#allocation3 + $0xf0] sm:$0xff] %v1083
        %1118 = vst [vmem:[#allocation3 + $0xf8] sm:$0xff] %v1085
        %s1119 = smul.u32 0, 4
        %s1120 = smul.addr %s1119, 8
        %s1121 = scalar_lea.vmem [#allocation2], %s1120
        %v1122 = vld [vmem:[%s1121] sm:$0xff]
        %v1123 = vld [vmem:[%s1121 + $0x8] sm:$0xff]
        %v1124 = vld [vmem:[%s1121 + $0x10] sm:$0xff]
        %v1125 = vld [vmem:[%s1121 + $0x18] sm:$0xff]
        %v1126 = vld [vmem:[#allocation4] sm:$0xff]
        %v1127 = vld [vmem:[#allocation11] sm:$0xff]
        %v1128 = vld [vmem:[#allocation11 + $0x8] sm:$0xff]
        %v1129 = vld [vmem:[#allocation11 + $0x10] sm:$0xff]
        %v1130 = vld [vmem:[#allocation11 + $0x18] sm:$0xff]
        %v1131 = vld [vmem:[#allocation11 + $0x20] sm:$0xff]
        %v1132 = vld [vmem:[#allocation11 + $0x28] sm:$0xff]
        %v1133 = vld [vmem:[#allocation11 + $0x30] sm:$0xff]
        %v1134 = vld [vmem:[#allocation11 + $0x38] sm:$0xff]
        %v1135 = vld [vmem:[#allocation11 + $0x40] sm:$0xff]
        %v1136 = vld [vmem:[#allocation11 + $0x48] sm:$0xff]
        %v1137 = vld [vmem:[#allocation11 + $0x50] sm:$0xff]
        %v1138 = vld [vmem:[#allocation11 + $0x58] sm:$0xff]
        %v1139 = vld [vmem:[#allocation11 + $0x60] sm:$0xff]
        %v1140 = vld [vmem:[#allocation11 + $0x68] sm:$0xff]
        %v1141 = vld [vmem:[#allocation11 + $0x70] sm:$0xff]
        %v1142 = vld [vmem:[#allocation11 + $0x78] sm:$0xff]
        %v1143 = vld [vmem:[#allocation11 + $0x80] sm:$0xff]
        %v1144 = vld [vmem:[#allocation11 + $0x88] sm:$0xff]
        %v1145 = vld [vmem:[#allocation11 + $0x90] sm:$0xff]
        %v1146 = vld [vmem:[#allocation11 + $0x98] sm:$0xff]
        %v1147 = vld [vmem:[#allocation11 + $0xa0] sm:$0xff]
        %v1148 = vld [vmem:[#allocation11 + $0xa8] sm:$0xff]
        %v1149 = vld [vmem:[#allocation11 + $0xb0] sm:$0xff]
        %v1150 = vld [vmem:[#allocation11 + $0xb8] sm:$0xff]
        %v1151 = vld [vmem:[#allocation11 + $0xc0] sm:$0xff]
        %v1152 = vld [vmem:[#allocation11 + $0xc8] sm:$0xff]
        %v1153 = vld [vmem:[#allocation11 + $0xd0] sm:$0xff]
        %v1154 = vld [vmem:[#allocation11 + $0xd8] sm:$0xff]
        %v1155 = vld [vmem:[#allocation11 + $0xe0] sm:$0xff]
        %v1156 = vld [vmem:[#allocation11 + $0xe8] sm:$0xff]
        %v1157 = vld [vmem:[#allocation11 + $0xf0] sm:$0xff]
        %v1158 = vld [vmem:[#allocation11 + $0xf8] sm:$0xff]
        %v1159 = vld [vmem:[#allocation11 + $0x100] sm:$0xff]
        %v1160 = vld [vmem:[#allocation11 + $0x108] sm:$0xff]
        %v1161 = vld [vmem:[#allocation11 + $0x110] sm:$0xff]
        %v1162 = vld [vmem:[#allocation11 + $0x118] sm:$0xff]
        %v1163 = vld [vmem:[#allocation11 + $0x120] sm:$0xff]
        %v1164 = vld [vmem:[#allocation11 + $0x128] sm:$0xff]
        %v1165 = vld [vmem:[#allocation11 + $0x130] sm:$0xff]
        %v1166 = vld [vmem:[#allocation11 + $0x138] sm:$0xff]
        %v1167 = vld [vmem:[#allocation11 + $0x140] sm:$0xff]
        %v1168 = vld [vmem:[#allocation11 + $0x148] sm:$0xff]
        %v1169 = vld [vmem:[#allocation11 + $0x150] sm:$0xff]
        %v1170 = vld [vmem:[#allocation11 + $0x158] sm:$0xff]
        %v1171 = vld [vmem:[#allocation11 + $0x160] sm:$0xff]
        %v1172 = vld [vmem:[#allocation11 + $0x168] sm:$0xff]
        %v1173 = vld [vmem:[#allocation11 + $0x170] sm:$0xff]
        %v1174 = vld [vmem:[#allocation11 + $0x178] sm:$0xff]
        %v1175 = vld [vmem:[#allocation11 + $0x180] sm:$0xff]
        %v1176 = vld [vmem:[#allocation11 + $0x188] sm:$0xff]
        %v1177 = vld [vmem:[#allocation11 + $0x190] sm:$0xff]
        %v1178 = vld [vmem:[#allocation11 + $0x198] sm:$0xff]
        %v1179 = vld [vmem:[#allocation11 + $0x1a0] sm:$0xff]
        %v1180 = vld [vmem:[#allocation11 + $0x1a8] sm:$0xff]
        %v1181 = vld [vmem:[#allocation11 + $0x1b0] sm:$0xff]
        %v1182 = vld [vmem:[#allocation11 + $0x1b8] sm:$0xff]
        %v1183 = vld [vmem:[#allocation11 + $0x1c0] sm:$0xff]
        %v1184 = vld [vmem:[#allocation11 + $0x1c8] sm:$0xff]
        %v1185 = vld [vmem:[#allocation11 + $0x1d0] sm:$0xff]
        %v1186 = vld [vmem:[#allocation11 + $0x1d8] sm:$0xff]
        %v1187 = vld [vmem:[#allocation11 + $0x1e0] sm:$0xff]
        %v1188 = vld [vmem:[#allocation11 + $0x1e8] sm:$0xff]
        %v1189 = vld [vmem:[#allocation11 + $0x1f0] sm:$0xff]
        %v1190 = vld [vmem:[#allocation11 + $0x1f8] sm:$0xff]
        %1191 = vmatprep.subr.mxu0 %v1128
        %1192 = vmatpush1.msra.mxu0 %v1127
        %1193 = vmatprep.subr.mxu0 %v1132
        %1194 = vmatpush1.msra.mxu0 %v1131
        %1195 = vmatprep.subr.mxu0 %v1136
        %1196 = vmatpush1.msra.mxu0 %v1135
        %1197 = vmatprep.subr.mxu0 %v1140
        %1198 = vmatpush1.msra.mxu0 %v1139
        %1199 = vmatprep.subr.mxu0 %v1144
        %1200 = vmatpush1.msra.mxu0 %v1143
        %1201 = vmatprep.subr.mxu0 %v1148
        %1202 = vmatpush1.msra.mxu0 %v1147
        %1203 = vmatprep.subr.mxu0 %v1152
        %1204 = vmatpush1.msra.mxu0 %v1151
        %1205 = vmatprep.subr.mxu0 %v1156
        %1206 = vmatpush1.msra.mxu0 %v1155
        %1207 = vmatprep.subr.mxu0 %v1160
        %1208 = vmatpush1.msra.mxu0 %v1159
        %1209 = vmatprep.subr.mxu0 %v1164
        %1210 = vmatpush1.msra.mxu0 %v1163
        %1211 = vmatprep.subr.mxu0 %v1168
        %1212 = vmatpush1.msra.mxu0 %v1167
        %1213 = vmatprep.subr.mxu0 %v1172
        %1214 = vmatpush1.msra.mxu0 %v1171
        %1215 = vmatprep.subr.mxu0 %v1176
        %1216 = vmatpush1.msra.mxu0 %v1175
        %1217 = vmatprep.subr.mxu0 %v1180
        %1218 = vmatpush1.msra.mxu0 %v1179
        %1219 = vmatprep.subr.mxu0 %v1184
        %1220 = vmatpush1.msra.mxu0 %v1183
        %1221 = vmatprep.subr.mxu0 %v1188
        %1222 = vmatpush1.msra.mxu0 %v1187
        %1223 = vmatprep.subr.mxu0 0.0
        %1224 = vmatpush1.msra.mxu0 0.0
        %1225 = vmatprep.subr.mxu0 0.0
        %1226 = vmatpush1.msra.mxu0 0.0
        %1227 = vmatprep.subr.mxu0 0.0
        %1228 = vmatpush1.msra.mxu0 0.0
        %1229 = vmatprep.subr.mxu0 0.0
        %1230 = vmatpush1.msra.mxu0 0.0
        %1231 = vmatprep.subr.mxu0 0.0
        %1232 = vmatpush1.msra.mxu0 0.0
        %1233 = vmatprep.subr.mxu0 0.0
        %1234 = vmatpush1.msra.mxu0 0.0
        %1235 = vmatprep.subr.mxu0 0.0
        %1236 = vmatpush1.msra.mxu0 0.0
        %1237 = vmatprep.subr.mxu0 0.0
        %1238 = vmatpush1.msra.mxu0 0.0
        %1239 = vmatprep.subr.mxu0 0.0
        %1240 = vmatpush1.msra.mxu0 0.0
        %1241 = vmatprep.subr.mxu0 0.0
        %1242 = vmatpush1.msra.mxu0 0.0
        %1243 = vmatprep.subr.mxu0 0.0
        %1244 = vmatpush1.msra.mxu0 0.0
        %1245 = vmatprep.subr.mxu0 0.0
        %1246 = vmatpush1.msra.mxu0 0.0
        %1247 = vmatprep.subr.mxu0 0.0
        %1248 = vmatpush1.msra.mxu0 0.0
        %1249 = vmatprep.subr.mxu0 0.0
        %1250 = vmatpush1.msra.mxu0 0.0
        %1251 = vmatprep.subr.mxu0 0.0
        %1252 = vmatpush1.msra.mxu0 0.0
        %1253 = vmatprep.subr.mxu0 0.0
        %1254 = vmatpush1.msra.mxu0 0.0
        %1255 = vmatprep.mubr.f32.mxu0 0.0
        %1256 = vmatmul.mubr.f32.gmra.mrb[0].mxu0 %v1126
        %v1257 = vpop.f32.mrb[0].mxu0
        %v1258 = vadd.f32 0.0, %v1257
        %v1259 = vpop.f32.mrb[0].mxu0
        %v1260 = vadd.f32 0.0, %v1259
        %1261 = vdwg.mxu0
        %1262 = vmatprep.subr.mxu0 %v1130
        %1263 = vmatpush1.msra.mxu0 %v1129
        %1264 = vmatprep.subr.mxu0 %v1134
        %1265 = vmatpush1.msra.mxu0 %v1133
        %1266 = vmatprep.subr.mxu0 %v1138
        %1267 = vmatpush1.msra.mxu0 %v1137
        %1268 = vmatprep.subr.mxu0 %v1142
        %1269 = vmatpush1.msra.mxu0 %v1141
        %1270 = vmatprep.subr.mxu0 %v1146
        %1271 = vmatpush1.msra.mxu0 %v1145
        %1272 = vmatprep.subr.mxu0 %v1150
        %1273 = vmatpush1.msra.mxu0 %v1149
        %1274 = vmatprep.subr.mxu0 %v1154
        %1275 = vmatpush1.msra.mxu0 %v1153
        %1276 = vmatprep.subr.mxu0 %v1158
        %1277 = vmatpush1.msra.mxu0 %v1157
        %1278 = vmatprep.subr.mxu0 %v1162
        %1279 = vmatpush1.msra.mxu0 %v1161
        %1280 = vmatprep.subr.mxu0 %v1166
        %1281 = vmatpush1.msra.mxu0 %v1165
        %1282 = vmatprep.subr.mxu0 %v1170
        %1283 = vmatpush1.msra.mxu0 %v1169
        %1284 = vmatprep.subr.mxu0 %v1174
        %1285 = vmatpush1.msra.mxu0 %v1173
        %1286 = vmatprep.subr.mxu0 %v1178
        %1287 = vmatpush1.msra.mxu0 %v1177
        %1288 = vmatprep.subr.mxu0 %v1182
        %1289 = vmatpush1.msra.mxu0 %v1181
        %1290 = vmatprep.subr.mxu0 %v1186
        %1291 = vmatpush1.msra.mxu0 %v1185
        %1292 = vmatprep.subr.mxu0 %v1190
        %1293 = vmatpush1.msra.mxu0 %v1189
        %1294 = vmatprep.subr.mxu0 0.0
        %1295 = vmatpush1.msra.mxu0 0.0
        %1296 = vmatprep.subr.mxu0 0.0
        %1297 = vmatpush1.msra.mxu0 0.0
        %1298 = vmatprep.subr.mxu0 0.0
        %1299 = vmatpush1.msra.mxu0 0.0
        %1300 = vmatprep.subr.mxu0 0.0
        %1301 = vmatpush1.msra.mxu0 0.0
        %1302 = vmatprep.subr.mxu0 0.0
        %1303 = vmatpush1.msra.mxu0 0.0
        %1304 = vmatprep.subr.mxu0 0.0
        %1305 = vmatpush1.msra.mxu0 0.0
        %1306 = vmatprep.subr.mxu0 0.0
        %1307 = vmatpush1.msra.mxu0 0.0
        %1308 = vmatprep.subr.mxu0 0.0
        %1309 = vmatpush1.msra.mxu0 0.0
        %1310 = vmatprep.subr.mxu0 0.0
        %1311 = vmatpush1.msra.mxu0 0.0
        %1312 = vmatprep.subr.mxu0 0.0
        %1313 = vmatpush1.msra.mxu0 0.0
        %1314 = vmatprep.subr.mxu0 0.0
        %1315 = vmatpush1.msra.mxu0 0.0
        %1316 = vmatprep.subr.mxu0 0.0
        %1317 = vmatpush1.msra.mxu0 0.0
        %1318 = vmatprep.subr.mxu0 0.0
        %1319 = vmatpush1.msra.mxu0 0.0
        %1320 = vmatprep.subr.mxu0 0.0
        %1321 = vmatpush1.msra.mxu0 0.0
        %1322 = vmatprep.subr.mxu0 0.0
        %1323 = vmatpush1.msra.mxu0 0.0
        %1324 = vmatprep.subr.mxu0 0.0
        %1325 = vmatpush1.msra.mxu0 0.0
        %1326 = vmatprep.mubr.f32.mxu0 0.0
        %1327 = vmatmul.mubr.f32.gmra.mrb[0].mxu0 %v1126
        %v1328 = vpop.f32.mrb[0].mxu0
        %v1329 = vadd.f32 0.0, %v1328
        %v1330 = vpop.f32.mrb[0].mxu0
        %v1331 = vadd.f32 0.0, %v1330
        %1332 = vdwg.mxu0
        %v1333 = vadd.f32 %v1122, %v1258
        %v1334 = vadd.f32 %v1123, %v1260
        %v1335 = vadd.f32 %v1124, %v1329
        %v1336 = vadd.f32 %v1125, %v1331
        %s1337 = smul.u32 7, 4
        %s1338 = smul.addr %s1337, 8
        %s1339 = scalar_lea.vmem [#allocation3], %s1338
        %v1340 = vld [vmem:[%s1339] sm:$0xff]
        %v1341 = vld [vmem:[%s1339 + $0x8] sm:$0xff]
        %v1342 = vld [vmem:[%s1339 + $0x10] sm:$0xff]
        %v1343 = vld [vmem:[%s1339 + $0x18] sm:$0xff]
        %v1344 = vld [vmem:[#allocation6] sm:$0xff]
        %v1345 = vld [vmem:[#allocation13] sm:$0xff]
        %v1346 = vld [vmem:[#allocation13 + $0x8] sm:$0xff]
        %v1347 = vld [vmem:[#allocation13 + $0x10] sm:$0xff]
        %v1348 = vld [vmem:[#allocation13 + $0x18] sm:$0xff]
        %v1349 = vld [vmem:[#allocation13 + $0x20] sm:$0xff]
        %v1350 = vld [vmem:[#allocation13 + $0x28] sm:$0xff]
        %v1351 = vld [vmem:[#allocation13 + $0x30] sm:$0xff]
        %v1352 = vld [vmem:[#allocation13 + $0x38] sm:$0xff]
        %v1353 = vld [vmem:[#allocation13 + $0x40] sm:$0xff]
        %v1354 = vld [vmem:[#allocation13 + $0x48] sm:$0xff]
        %v1355 = vld [vmem:[#allocation13 + $0x50] sm:$0xff]
        %v1356 = vld [vmem:[#allocation13 + $0x58] sm:$0xff]
        %v1357 = vld [vmem:[#allocation13 + $0x60] sm:$0xff]
        %v1358 = vld [vmem:[#allocation13 + $0x68] sm:$0xff]
        %v1359 = vld [vmem:[#allocation13 + $0x70] sm:$0xff]
        %v1360 = vld [vmem:[#allocation13 + $0x78] sm:$0xff]
        %v1361 = vld [vmem:[#allocation13 + $0x80] sm:$0xff]
        %v1362 = vld [vmem:[#allocation13 + $0x88] sm:$0xff]
        %v1363 = vld [vmem:[#allocation13 + $0x90] sm:$0xff]
        %v1364 = vld [vmem:[#allocation13 + $0x98] sm:$0xff]
        %v1365 = vld [vmem:[#allocation13 + $0xa0] sm:$0xff]
        %v1366 = vld [vmem:[#allocation13 + $0xa8] sm:$0xff]
        %v1367 = vld [vmem:[#allocation13 + $0xb0] sm:$0xff]
        %v1368 = vld [vmem:[#allocation13 + $0xb8] sm:$0xff]
        %v1369 = vld [vmem:[#allocation13 + $0xc0] sm:$0xff]
        %v1370 = vld [vmem:[#allocation13 + $0xc8] sm:$0xff]
        %v1371 = vld [vmem:[#allocation13 + $0xd0] sm:$0xff]
        %v1372 = vld [vmem:[#allocation13 + $0xd8] sm:$0xff]
        %v1373 = vld [vmem:[#allocation13 + $0xe0] sm:$0xff]
        %v1374 = vld [vmem:[#allocation13 + $0xe8] sm:$0xff]
        %v1375 = vld [vmem:[#allocation13 + $0xf0] sm:$0xff]
        %v1376 = vld [vmem:[#allocation13 + $0xf8] sm:$0xff]
        %v1377 = vld [vmem:[#allocation13 + $0x100] sm:$0xff]
        %v1378 = vld [vmem:[#allocation13 + $0x108] sm:$0xff]
        %v1379 = vld [vmem:[#allocation13 + $0x110] sm:$0xff]
        %v1380 = vld [vmem:[#allocation13 + $0x118] sm:$0xff]
        %v1381 = vld [vmem:[#allocation13 + $0x120] sm:$0xff]
        %v1382 = vld [vmem:[#allocation13 + $0x128] sm:$0xff]
        %v1383 = vld [vmem:[#allocation13 + $0x130] sm:$0xff]
        %v1384 = vld [vmem:[#allocation13 + $0x138] sm:$0xff]
        %v1385 = vld [vmem:[#allocation13 + $0x140] sm:$0xff]
        %v1386 = vld [vmem:[#allocation13 + $0x148] sm:$0xff]
        %v1387 = vld [vmem:[#allocation13 + $0x150] sm:$0xff]
        %v1388 = vld [vmem:[#allocation13 + $0x158] sm:$0xff]
        %v1389 = vld [vmem:[#allocation13 + $0x160] sm:$0xff]
        %v1390 = vld [vmem:[#allocation13 + $0x168] sm:$0xff]
        %v1391 = vld [vmem:[#allocation13 + $0x170] sm:$0xff]
        %v1392 = vld [vmem:[#allocation13 + $0x178] sm:$0xff]
        %v1393 = vld [vmem:[#allocation13 + $0x180] sm:$0xff]
        %v1394 = vld [vmem:[#allocation13 + $0x188] sm:$0xff]
        %v1395 = vld [vmem:[#allocation13 + $0x190] sm:$0xff]
        %v1396 = vld [vmem:[#allocation13 + $0x198] sm:$0xff]
        %v1397 = vld [vmem:[#allocation13 + $0x1a0] sm:$0xff]
        %v1398 = vld [vmem:[#allocation13 + $0x1a8] sm:$0xff]
        %v1399 = vld [vmem:[#allocation13 + $0x1b0] sm:$0xff]
        %v1400 = vld [vmem:[#allocation13 + $0x1b8] sm:$0xff]
        %v1401 = vld [vmem:[#allocation13 + $0x1c0] sm:$0xff]
        %v1402 = vld [vmem:[#allocation13 + $0x1c8] sm:$0xff]
        %v1403 = vld [vmem:[#allocation13 + $0x1d0] sm:$0xff]
        %v1404 = vld [vmem:[#allocation13 + $0x1d8] sm:$0xff]
        %v1405 = vld [vmem:[#allocation13 + $0x1e0] sm:$0xff]
        %v1406 = vld [vmem:[#allocation13 + $0x1e8] sm:$0xff]
        %v1407 = vld [vmem:[#allocation13 + $0x1f0] sm:$0xff]
        %v1408 = vld [vmem:[#allocation13 + $0x1f8] sm:$0xff]
        %1409 = vmatprep.subr.mxu0 %v1346
        %1410 = vmatpush1.msra.mxu0 %v1345
        %1411 = vmatprep.subr.mxu0 %v1350
        %1412 = vmatpush1.msra.mxu0 %v1349
        %1413 = vmatprep.subr.mxu0 %v1354
        %1414 = vmatpush1.msra.mxu0 %v1353
        %1415 = vmatprep.subr.mxu0 %v1358
        %1416 = vmatpush1.msra.mxu0 %v1357
        %1417 = vmatprep.subr.mxu0 %v1362
        %1418 = vmatpush1.msra.mxu0 %v1361
        %1419 = vmatprep.subr.mxu0 %v1366
        %1420 = vmatpush1.msra.mxu0 %v1365
        %1421 = vmatprep.subr.mxu0 %v1370
        %1422 = vmatpush1.msra.mxu0 %v1369
        %1423 = vmatprep.subr.mxu0 %v1374
        %1424 = vmatpush1.msra.mxu0 %v1373
        %1425 = vmatprep.subr.mxu0 %v1378
        %1426 = vmatpush1.msra.mxu0 %v1377
        %1427 = vmatprep.subr.mxu0 %v1382
        %1428 = vmatpush1.msra.mxu0 %v1381
        %1429 = vmatprep.subr.mxu0 %v1386
        %1430 = vmatpush1.msra.mxu0 %v1385
        %1431 = vmatprep.subr.mxu0 %v1390
        %1432 = vmatpush1.msra.mxu0 %v1389
        %1433 = vmatprep.subr.mxu0 %v1394
        %1434 = vmatpush1.msra.mxu0 %v1393
        %1435 = vmatprep.subr.mxu0 %v1398
        %1436 = vmatpush1.msra.mxu0 %v1397
        %1437 = vmatprep.subr.mxu0 %v1402
        %1438 = vmatpush1.msra.mxu0 %v1401
        %1439 = vmatprep.subr.mxu0 %v1406
        %1440 = vmatpush1.msra.mxu0 %v1405
        %1441 = vmatprep.subr.mxu0 0.0
        %1442 = vmatpush1.msra.mxu0 0.0
        %1443 = vmatprep.subr.mxu0 0.0
        %1444 = vmatpush1.msra.mxu0 0.0
        %1445 = vmatprep.subr.mxu0 0.0
        %1446 = vmatpush1.msra.mxu0 0.0
        %1447 = vmatprep.subr.mxu0 0.0
        %1448 = vmatpush1.msra.mxu0 0.0
        %1449 = vmatprep.subr.mxu0 0.0
        %1450 = vmatpush1.msra.mxu0 0.0
        %1451 = vmatprep.subr.mxu0 0.0
        %1452 = vmatpush1.msra.mxu0 0.0
        %1453 = vmatprep.subr.mxu0 0.0
        %1454 = vmatpush1.msra.mxu0 0.0
        %1455 = vmatprep.subr.mxu0 0.0
        %1456 = vmatpush1.msra.mxu0 0.0
        %1457 = vmatprep.subr.mxu0 0.0
        %1458 = vmatpush1.msra.mxu0 0.0
        %1459 = vmatprep.subr.mxu0 0.0
        %1460 = vmatpush1.msra.mxu0 0.0
        %1461 = vmatprep.subr.mxu0 0.0
        %1462 = vmatpush1.msra.mxu0 0.0
        %1463 = vmatprep.subr.mxu0 0.0
        %1464 = vmatpush1.msra.mxu0 0.0
        %1465 = vmatprep.subr.mxu0 0.0
        %1466 = vmatpush1.msra.mxu0 0.0
        %1467 = vmatprep.subr.mxu0 0.0
        %1468 = vmatpush1.msra.mxu0 0.0
        %1469 = vmatprep.subr.mxu0 0.0
        %1470 = vmatpush1.msra.mxu0 0.0
        %1471 = vmatprep.subr.mxu0 0.0
        %1472 = vmatpush1.msra.mxu0 0.0
        %1473 = vmatprep.mubr.f32.mxu0 0.0
        %1474 = vmatmul.mubr.f32.gmra.mrb[0].mxu0 %v1344
        %v1475 = vpop.f32.mrb[0].mxu0
        %v1476 = vadd.f32 0.0, %v1475
        %v1477 = vpop.f32.mrb[0].mxu0
        %v1478 = vadd.f32 0.0, %v1477
        %1479 = vdwg.mxu0
        %1480 = vmatprep.subr.mxu0 %v1348
        %1481 = vmatpush1.msra.mxu0 %v1347
        %1482 = vmatprep.subr.mxu0 %v1352
        %1483 = vmatpush1.msra.mxu0 %v1351
        %1484 = vmatprep.subr.mxu0 %v1356
        %1485 = vmatpush1.msra.mxu0 %v1355
        %1486 = vmatprep.subr.mxu0 %v1360
        %1487 = vmatpush1.msra.mxu0 %v1359
        %1488 = vmatprep.subr.mxu0 %v1364
        %1489 = vmatpush1.msra.mxu0 %v1363
        %1490 = vmatprep.subr.mxu0 %v1368
        %1491 = vmatpush1.msra.mxu0 %v1367
        %1492 = vmatprep.subr.mxu0 %v1372
        %1493 = vmatpush1.msra.mxu0 %v1371
        %1494 = vmatprep.subr.mxu0 %v1376
        %1495 = vmatpush1.msra.mxu0 %v1375
        %1496 = vmatprep.subr.mxu0 %v1380
        %1497 = vmatpush1.msra.mxu0 %v1379
        %1498 = vmatprep.subr.mxu0 %v1384
        %1499 = vmatpush1.msra.mxu0 %v1383
        %1500 = vmatprep.subr.mxu0 %v1388
        %1501 = vmatpush1.msra.mxu0 %v1387
        %1502 = vmatprep.subr.mxu0 %v1392
        %1503 = vmatpush1.msra.mxu0 %v1391
        %1504 = vmatprep.subr.mxu0 %v1396
        %1505 = vmatpush1.msra.mxu0 %v1395
        %1506 = vmatprep.subr.mxu0 %v1400
        %1507 = vmatpush1.msra.mxu0 %v1399
        %1508 = vmatprep.subr.mxu0 %v1404
        %1509 = vmatpush1.msra.mxu0 %v1403
        %1510 = vmatprep.subr.mxu0 %v1408
        %1511 = vmatpush1.msra.mxu0 %v1407
        %1512 = vmatprep.subr.mxu0 0.0
        %1513 = vmatpush1.msra.mxu0 0.0
        %1514 = vmatprep.subr.mxu0 0.0
        %1515 = vmatpush1.msra.mxu0 0.0
        %1516 = vmatprep.subr.mxu0 0.0
        %1517 = vmatpush1.msra.mxu0 0.0
        %1518 = vmatprep.subr.mxu0 0.0
        %1519 = vmatpush1.msra.mxu0 0.0
        %1520 = vmatprep.subr.mxu0 0.0
        %1521 = vmatpush1.msra.mxu0 0.0
        %1522 = vmatprep.subr.mxu0 0.0
        %1523 = vmatpush1.msra.mxu0 0.0
        %1524 = vmatprep.subr.mxu0 0.0
        %1525 = vmatpush1.msra.mxu0 0.0
        %1526 = vmatprep.subr.mxu0 0.0
        %1527 = vmatpush1.msra.mxu0 0.0
        %1528 = vmatprep.subr.mxu0 0.0
        %1529 = vmatpush1.msra.mxu0 0.0
        %1530 = vmatprep.subr.mxu0 0.0
        %1531 = vmatpush1.msra.mxu0 0.0
        %1532 = vmatprep.subr.mxu0 0.0
        %1533 = vmatpush1.msra.mxu0 0.0
        %1534 = vmatprep.subr.mxu0 0.0
        %1535 = vmatpush1.msra.mxu0 0.0
        %1536 = vmatprep.subr.mxu0 0.0
        %1537 = vmatpush1.msra.mxu0 0.0
        %1538 = vmatprep.subr.mxu0 0.0
        %1539 = vmatpush1.msra.mxu0 0.0
        %1540 = vmatprep.subr.mxu0 0.0
        %1541 = vmatpush1.msra.mxu0 0.0
        %1542 = vmatprep.subr.mxu0 0.0
        %1543 = vmatpush1.msra.mxu0 0.0
        %1544 = vmatprep.mubr.f32.mxu0 0.0
        %1545 = vmatmul.mubr.f32.gmra.mrb[0].mxu0 %v1344
        %v1546 = vpop.f32.mrb[0].mxu0
        %v1547 = vadd.f32 0.0, %v1546
        %v1548 = vpop.f32.mrb[0].mxu0
        %v1549 = vadd.f32 0.0, %v1548
        %1550 = vdwg.mxu0
        %v1551 = vadd.f32 %v1340, %v1476
        %v1552 = vadd.f32 %v1341, %v1478
        %v1553 = vadd.f32 %v1342, %v1547
        %v1554 = vadd.f32 %v1343, %v1549
        %v1555 = vld [vmem:[#allocation5] sm:$0xff]
        %v1556 = vmul.f32 %v1333, 0.5
        %v1557 = vtanh.pop %v1556
        %v1558 = vmul.f32 %v1557, 0.5
        %v1559 = vadd.f32 %v1558, 0.5
        %v1560 = vmul.f32 %v1334, 0.5
        %v1561 = vtanh.pop %v1560
        %v1562 = vmul.f32 %v1561, 0.5
        %v1563 = vadd.f32 %v1562, 0.5
        %v1564 = vtanh.pop %v1335
        %v1565 = vmul.f32 %v1336, 0.5
        %v1566 = vtanh.pop %v1565
        %v1567 = vmul.f32 %v1566, 0.5
        %v1568 = vadd.f32 %v1567, 0.5
        %v1569 = vmul.f32 %v1563, %v1555
        %v1570 = vmul.f32 %v1559, %v1564
        %v1571 = vadd.f32 %v1569, %v1570
        %v1572 = vtanh.pop %v1571
        %v1573 = vmul.f32 %v1568, %v1572
        %v1574 = vld [vmem:[#allocation7] sm:$0xff]
        %v1575 = vmul.f32 %v1551, 0.5
        %v1576 = vtanh.pop %v1575
        %v1577 = vmul.f32 %v1576, 0.5
        %v1578 = vadd.f32 %v1577, 0.5
        %v1579 = vmul.f32 %v1552, 0.5
        %v1580 = vtanh.pop %v1579
        %v1581 = vmul.f32 %v1580, 0.5
        %v1582 = vadd.f32 %v1581, 0.5
        %v1583 = vtanh.pop %v1553
        %v1584 = vmul.f32 %v1554, 0.5
        %v1585 = vtanh.pop %v1584
        %v1586 = vmul.f32 %v1585, 0.5
        %v1587 = vadd.f32 %v1586, 0.5
        %v1588 = vmul.f32 %v1582, %v1574
        %v1589 = vmul.f32 %v1578, %v1583
        %v1590 = vadd.f32 %v1588, %v1589
        %v1591 = vtanh.pop %v1590
        %v1592 = vmul.f32 %v1587, %v1591
        %1593 = vst [vmem:[#allocation4] sm:$0xff] %v1573
        %1594 = vst [vmem:[#allocation5] sm:$0xff] %v1571
        %1595 = vst [vmem:[%s397] sm:$0xff] %v1573
        %s1596 = scalar_lea.vmem %s404, 56 [#allocation15]
        %1597 = vst [vmem:[%s1596] sm:$0xff] %v1592
        %1598 = vst [vmem:[#allocation6] sm:$0xff] %v1592
        %1599 = vst [vmem:[#allocation7] sm:$0xff] %v1590
        %s1600 = smul.u32 1, 4
        %s1601 = smul.addr %s1600, 8
        %s1602 = scalar_lea.vmem [#allocation2], %s1601
        %v1603 = vld [vmem:[%s1602] sm:$0xff]
        %v1604 = vld [vmem:[%s1602 + $0x8] sm:$0xff]
        %v1605 = vld [vmem:[%s1602 + $0x10] sm:$0xff]
        %v1606 = vld [vmem:[%s1602 + $0x18] sm:$0xff]
        %v1607 = vld [vmem:[#allocation4] sm:$0xff]
        %v1608 = vld [vmem:[#allocation11] sm:$0xff]
        %v1609 = vld [vmem:[#allocation11 + $0x8] sm:$0xff]
        %v1610 = vld [vmem:[#allocation11 + $0x10] sm:$0xff]
        %v1611 = vld [vmem:[#allocation11 + $0x18] sm:$0xff]
        %v1612 = vld [vmem:[#allocation11 + $0x20] sm:$0xff]
        %v1613 = vld [vmem:[#allocation11 + $0x28] sm:$0xff]
        %v1614 = vld [vmem:[#allocation11 + $0x30] sm:$0xff]
        %v1615 = vld [vmem:[#allocation11 + $0x38] sm:$0xff]
        %v1616 = vld [vmem:[#allocation11 + $0x40] sm:$0xff]
        %v1617 = vld [vmem:[#allocation11 + $0x48] sm:$0xff]
        %v1618 = vld [vmem:[#allocation11 + $0x50] sm:$0xff]
        %v1619 = vld [vmem:[#allocation11 + $0x58] sm:$0xff]
        %v1620 = vld [vmem:[#allocation11 + $0x60] sm:$0xff]
        %v1621 = vld [vmem:[#allocation11 + $0x68] sm:$0xff]
        %v1622 = vld [vmem:[#allocation11 + $0x70] sm:$0xff]
        %v1623 = vld [vmem:[#allocation11 + $0x78] sm:$0xff]
        %v1624 = vld [vmem:[#allocation11 + $0x80] sm:$0xff]
        %v1625 = vld [vmem:[#allocation11 + $0x88] sm:$0xff]
        %v1626 = vld [vmem:[#allocation11 + $0x90] sm:$0xff]
        %v1627 = vld [vmem:[#allocation11 + $0x98] sm:$0xff]
        %v1628 = vld [vmem:[#allocation11 + $0xa0] sm:$0xff]
        %v1629 = vld [vmem:[#allocation11 + $0xa8] sm:$0xff]
        %v1630 = vld [vmem:[#allocation11 + $0xb0] sm:$0xff]
        %v1631 = vld [vmem:[#allocation11 + $0xb8] sm:$0xff]
        %v1632 = vld [vmem:[#allocation11 + $0xc0] sm:$0xff]
        %v1633 = vld [vmem:[#allocation11 + $0xc8] sm:$0xff]
        %v1634 = vld [vmem:[#allocation11 + $0xd0] sm:$0xff]
        %v1635 = vld [vmem:[#allocation11 + $0xd8] sm:$0xff]
        %v1636 = vld [vmem:[#allocation11 + $0xe0] sm:$0xff]
        %v1637 = vld [vmem:[#allocation11 + $0xe8] sm:$0xff]
        %v1638 = vld [vmem:[#allocation11 + $0xf0] sm:$0xff]
        %v1639 = vld [vmem:[#allocation11 + $0xf8] sm:$0xff]
        %v1640 = vld [vmem:[#allocation11 + $0x100] sm:$0xff]
        %v1641 = vld [vmem:[#allocation11 + $0x108] sm:$0xff]
        %v1642 = vld [vmem:[#allocation11 + $0x110] sm:$0xff]
        %v1643 = vld [vmem:[#allocation11 + $0x118] sm:$0xff]
        %v1644 = vld [vmem:[#allocation11 + $0x120] sm:$0xff]
        %v1645 = vld [vmem:[#allocation11 + $0x128] sm:$0xff]
        %v1646 = vld [vmem:[#allocation11 + $0x130] sm:$0xff]
        %v1647 = vld [vmem:[#allocation11 + $0x138] sm:$0xff]
        %v1648 = vld [vmem:[#allocation11 + $0x140] sm:$0xff]
        %v1649 = vld [vmem:[#allocation11 + $0x148] sm:$0xff]
        %v1650 = vld [vmem:[#allocation11 + $0x150] sm:$0xff]
        %v1651 = vld [vmem:[#allocation11 + $0x158] sm:$0xff]
        %v1652 = vld [vmem:[#allocation11 + $0x160] sm:$0xff]
        %v1653 = vld [vmem:[#allocation11 + $0x168] sm:$0xff]
        %v1654 = vld [vmem:[#allocation11 + $0x170] sm:$0xff]
        %v1655 = vld [vmem:[#allocation11 + $0x178] sm:$0xff]
        %v1656 = vld [vmem:[#allocation11 + $0x180] sm:$0xff]
        %v1657 = vld [vmem:[#allocation11 + $0x188] sm:$0xff]
        %v1658 = vld [vmem:[#allocation11 + $0x190] sm:$0xff]
        %v1659 = vld [vmem:[#allocation11 + $0x198] sm:$0xff]
        %v1660 = vld [vmem:[#allocation11 + $0x1a0] sm:$0xff]
        %v1661 = vld [vmem:[#allocation11 + $0x1a8] sm:$0xff]
        %v1662 = vld [vmem:[#allocation11 + $0x1b0] sm:$0xff]
        %v1663 = vld [vmem:[#allocation11 + $0x1b8] sm:$0xff]
        %v1664 = vld [vmem:[#allocation11 + $0x1c0] sm:$0xff]
        %v1665 = vld [vmem:[#allocation11 + $0x1c8] sm:$0xff]
        %v1666 = vld [vmem:[#allocation11 + $0x1d0] sm:$0xff]
        %v1667 = vld [vmem:[#allocation11 + $0x1d8] sm:$0xff]
        %v1668 = vld [vmem:[#allocation11 + $0x1e0] sm:$0xff]
        %v1669 = vld [vmem:[#allocation11 + $0x1e8] sm:$0xff]
        %v1670 = vld [vmem:[#allocation11 + $0x1f0] sm:$0xff]
        %v1671 = vld [vmem:[#allocation11 + $0x1f8] sm:$0xff]
        %1672 = vmatprep.subr.mxu0 %v1609
        %1673 = vmatpush1.msra.mxu0 %v1608
        %1674 = vmatprep.subr.mxu0 %v1613
        %1675 = vmatpush1.msra.mxu0 %v1612
        %1676 = vmatprep.subr.mxu0 %v1617
        %1677 = vmatpush1.msra.mxu0 %v1616
        %1678 = vmatprep.subr.mxu0 %v1621
        %1679 = vmatpush1.msra.mxu0 %v1620
        %1680 = vmatprep.subr.mxu0 %v1625
        %1681 = vmatpush1.msra.mxu0 %v1624
        %1682 = vmatprep.subr.mxu0 %v1629
        %1683 = vmatpush1.msra.mxu0 %v1628
        %1684 = vmatprep.subr.mxu0 %v1633
        %1685 = vmatpush1.msra.mxu0 %v1632
        %1686 = vmatprep.subr.mxu0 %v1637
        %1687 = vmatpush1.msra.mxu0 %v1636
        %1688 = vmatprep.subr.mxu0 %v1641
        %1689 = vmatpush1.msra.mxu0 %v1640
        %1690 = vmatprep.subr.mxu0 %v1645
        %1691 = vmatpush1.msra.mxu0 %v1644
        %1692 = vmatprep.subr.mxu0 %v1649
        %1693 = vmatpush1.msra.mxu0 %v1648
        %1694 = vmatprep.subr.mxu0 %v1653
        %1695 = vmatpush1.msra.mxu0 %v1652
        %1696 = vmatprep.subr.mxu0 %v1657
        %1697 = vmatpush1.msra.mxu0 %v1656
        %1698 = vmatprep.subr.mxu0 %v1661
        %1699 = vmatpush1.msra.mxu0 %v1660
        %1700 = vmatprep.subr.mxu0 %v1665
        %1701 = vmatpush1.msra.mxu0 %v1664
        %1702 = vmatprep.subr.mxu0 %v1669
        %1703 = vmatpush1.msra.mxu0 %v1668
        %1704 = vmatprep.subr.mxu0 0.0
        %1705 = vmatpush1.msra.mxu0 0.0
        %1706 = vmatprep.subr.mxu0 0.0
        %1707 = vmatpush1.msra.mxu0 0.0
        %1708 = vmatprep.subr.mxu0 0.0
        %1709 = vmatpush1.msra.mxu0 0.0
        %1710 = vmatprep.subr.mxu0 0.0
        %1711 = vmatpush1.msra.mxu0 0.0
        %1712 = vmatprep.subr.mxu0 0.0
        %1713 = vmatpush1.msra.mxu0 0.0
        %1714 = vmatprep.subr.mxu0 0.0
        %1715 = vmatpush1.msra.mxu0 0.0
        %1716 = vmatprep.subr.mxu0 0.0
        %1717 = vmatpush1.msra.mxu0 0.0
        %1718 = vmatprep.subr.mxu0 0.0
        %1719 = vmatpush1.msra.mxu0 0.0
        %1720 = vmatprep.subr.mxu0 0.0
        %1721 = vmatpush1.msra.mxu0 0.0
        %1722 = vmatprep.subr.mxu0 0.0
        %1723 = vmatpush1.msra.mxu0 0.0
        %1724 = vmatprep.subr.mxu0 0.0
        %1725 = vmatpush1.msra.mxu0 0.0
        %1726 = vmatprep.subr.mxu0 0.0
        %1727 = vmatpush1.msra.mxu0 0.0
        %1728 = vmatprep.subr.mxu0 0.0
        %1729 = vmatpush1.msra.mxu0 0.0
        %1730 = vmatprep.subr.mxu0 0.0
        %1731 = vmatpush1.msra.mxu0 0.0
        %1732 = vmatprep.subr.mxu0 0.0
        %1733 = vmatpush1.msra.mxu0 0.0
        %1734 = vmatprep.subr.mxu0 0.0
        %1735 = vmatpush1.msra.mxu0 0.0
        %1736 = vmatprep.mubr.f32.mxu0 0.0
        %1737 = vmatmul.mubr.f32.gmra.mrb[0].mxu0 %v1607
        %v1738 = vpop.f32.mrb[0].mxu0
        %v1739 = vadd.f32 0.0, %v1738
        %v1740 = vpop.f32.mrb[0].mxu0
        %v1741 = vadd.f32 0.0, %v1740
        %1742 = vdwg.mxu0
        %1743 = vmatprep.subr.mxu0 %v1611
        %1744 = vmatpush1.msra.mxu0 %v1610
        %1745 = vmatprep.subr.mxu0 %v1615
        %1746 = vmatpush1.msra.mxu0 %v1614
        %1747 = vmatprep.subr.mxu0 %v1619
        %1748 = vmatpush1.msra.mxu0 %v1618
        %1749 = vmatprep.subr.mxu0 %v1623
        %1750 = vmatpush1.msra.mxu0 %v1622
        %1751 = vmatprep.subr.mxu0 %v1627
        %1752 = vmatpush1.msra.mxu0 %v1626
        %1753 = vmatprep.subr.mxu0 %v1631
        %1754 = vmatpush1.msra.mxu0 %v1630
        %1755 = vmatprep.subr.mxu0 %v1635
        %1756 = vmatpush1.msra.mxu0 %v1634
        %1757 = vmatprep.subr.mxu0 %v1639
        %1758 = vmatpush1.msra.mxu0 %v1638
        %1759 = vmatprep.subr.mxu0 %v1643
        %1760 = vmatpush1.msra.mxu0 %v1642
        %1761 = vmatprep.subr.mxu0 %v1647
        %1762 = vmatpush1.msra.mxu0 %v1646
        %1763 = vmatprep.subr.mxu0 %v1651
        %1764 = vmatpush1.msra.mxu0 %v1650
        %1765 = vmatprep.subr.mxu0 %v1655
        %1766 = vmatpush1.msra.mxu0 %v1654
        %1767 = vmatprep.subr.mxu0 %v1659
        %1768 = vmatpush1.msra.mxu0 %v1658
        %1769 = vmatprep.subr.mxu0 %v1663
        %1770 = vmatpush1.msra.mxu0 %v1662
        %1771 = vmatprep.subr.mxu0 %v1667
        %1772 = vmatpush1.msra.mxu0 %v1666
        %1773 = vmatprep.subr.mxu0 %v1671
        %1774 = vmatpush1.msra.mxu0 %v1670
        %1775 = vmatprep.subr.mxu0 0.0
        %1776 = vmatpush1.msra.mxu0 0.0
        %1777 = vmatprep.subr.mxu0 0.0
        %1778 = vmatpush1.msra.mxu0 0.0
        %1779 = vmatprep.subr.mxu0 0.0
        %1780 = vmatpush1.msra.mxu0 0.0
        %1781 = vmatprep.subr.mxu0 0.0
        %1782 = vmatpush1.msra.mxu0 0.0
        %1783 = vmatprep.subr.mxu0 0.0
        %1784 = vmatpush1.msra.mxu0 0.0
        %1785 = vmatprep.subr.mxu0 0.0
        %1786 = vmatpush1.msra.mxu0 0.0
        %1787 = vmatprep.subr.mxu0 0.0
        %1788 = vmatpush1.msra.mxu0 0.0
        %1789 = vmatprep.subr.mxu0 0.0
        %1790 = vmatpush1.msra.mxu0 0.0
        %1791 = vmatprep.subr.mxu0 0.0
        %1792 = vmatpush1.msra.mxu0 0.0
        %1793 = vmatprep.subr.mxu0 0.0
        %1794 = vmatpush1.msra.mxu0 0.0
        %1795 = vmatprep.subr.mxu0 0.0
        %1796 = vmatpush1.msra.mxu0 0.0
        %1797 = vmatprep.subr.mxu0 0.0
        %1798 = vmatpush1.msra.mxu0 0.0
        %1799 = vmatprep.subr.mxu0 0.0
        %1800 = vmatpush1.msra.mxu0 0.0
        %1801 = vmatprep.subr.mxu0 0.0
        %1802 = vmatpush1.msra.mxu0 0.0
        %1803 = vmatprep.subr.mxu0 0.0
        %1804 = vmatpush1.msra.mxu0 0.0
        %1805 = vmatprep.subr.mxu0 0.0
        %1806 = vmatpush1.msra.mxu0 0.0
        %1807 = vmatprep.mubr.f32.mxu0 0.0
        %1808 = vmatmul.mubr.f32.gmra.mrb[0].mxu0 %v1607
        %v1809 = vpop.f32.mrb[0].mxu0
        %v1810 = vadd.f32 0.0, %v1809
        %v1811 = vpop.f32.mrb[0].mxu0
        %v1812 = vadd.f32 0.0, %v1811
        %1813 = vdwg.mxu0
        %v1814 = vadd.f32 %v1603, %v1739
        %v1815 = vadd.f32 %v1604, %v1741
        %v1816 = vadd.f32 %v1605, %v1810
        %v1817 = vadd.f32 %v1606, %v1812
        %s1818 = smul.u32 6, 4
        %s1819 = smul.addr %s1818, 8
        %s1820 = scalar_lea.vmem [#allocation3], %s1819
        %v1821 = vld [vmem:[%s1820] sm:$0xff]
        %v1822 = vld [vmem:[%s1820 + $0x8] sm:$0xff]
        %v1823 = vld [vmem:[%s1820 + $0x10] sm:$0xff]
        %v1824 = vld [vmem:[%s1820 + $0x18] sm:$0xff]
        %v1825 = vld [vmem:[#allocation6] sm:$0xff]
        %v1826 = vld [vmem:[#allocation13] sm:$0xff]
        %v1827 = vld [vmem:[#allocation13 + $0x8] sm:$0xff]
        %v1828 = vld [vmem:[#allocation13 + $0x10] sm:$0xff]
        %v1829 = vld [vmem:[#allocation13 + $0x18] sm:$0xff]
        %v1830 = vld [vmem:[#allocation13 + $0x20] sm:$0xff]
        %v1831 = vld [vmem:[#allocation13 + $0x28] sm:$0xff]
        %v1832 = vld [vmem:[#allocation13 + $0x30] sm:$0xff]
        %v1833 = vld [vmem:[#allocation13 + $0x38] sm:$0xff]
        %v1834 = vld [vmem:[#allocation13 + $0x40] sm:$0xff]
        %v1835 = vld [vmem:[#allocation13 + $0x48] sm:$0xff]
        %v1836 = vld [vmem:[#allocation13 + $0x50] sm:$0xff]
        %v1837 = vld [vmem:[#allocation13 + $0x58] sm:$0xff]
        %v1838 = vld [vmem:[#allocation13 + $0x60] sm:$0xff]
        %v1839 = vld [vmem:[#allocation13 + $0x68] sm:$0xff]
        %v1840 = vld [vmem:[#allocation13 + $0x70] sm:$0xff]
        %v1841 = vld [vmem:[#allocation13 + $0x78] sm:$0xff]
        %v1842 = vld [vmem:[#allocation13 + $0x80] sm:$0xff]
        %v1843 = vld [vmem:[#allocation13 + $0x88] sm:$0xff]
        %v1844 = vld [vmem:[#allocation13 + $0x90] sm:$0xff]
        %v1845 = vld [vmem:[#allocation13 + $0x98] sm:$0xff]
        %v1846 = vld [vmem:[#allocation13 + $0xa0] sm:$0xff]
        %v1847 = vld [vmem:[#allocation13 + $0xa8] sm:$0xff]
        %v1848 = vld [vmem:[#allocation13 + $0xb0] sm:$0xff]
        %v1849 = vld [vmem:[#allocation13 + $0xb8] sm:$0xff]
        %v1850 = vld [vmem:[#allocation13 + $0xc0] sm:$0xff]
        %v1851 = vld [vmem:[#allocation13 + $0xc8] sm:$0xff]
        %v1852 = vld [vmem:[#allocation13 + $0xd0] sm:$0xff]
        %v1853 = vld [vmem:[#allocation13 + $0xd8] sm:$0xff]
        %v1854 = vld [vmem:[#allocation13 + $0xe0] sm:$0xff]
        %v1855 = vld [vmem:[#allocation13 + $0xe8] sm:$0xff]
        %v1856 = vld [vmem:[#allocation13 + $0xf0] sm:$0xff]
        %v1857 = vld [vmem:[#allocation13 + $0xf8] sm:$0xff]
        %v1858 = vld [vmem:[#allocation13 + $0x100] sm:$0xff]
        %v1859 = vld [vmem:[#allocation13 + $0x108] sm:$0xff]
        %v1860 = vld [vmem:[#allocation13 + $0x110] sm:$0xff]
        %v1861 = vld [vmem:[#allocation13 + $0x118] sm:$0xff]
        %v1862 = vld [vmem:[#allocation13 + $0x120] sm:$0xff]
        %v1863 = vld [vmem:[#allocation13 + $0x128] sm:$0xff]
        %v1864 = vld [vmem:[#allocation13 + $0x130] sm:$0xff]
        %v1865 = vld [vmem:[#allocation13 + $0x138] sm:$0xff]
        %v1866 = vld [vmem:[#allocation13 + $0x140] sm:$0xff]
        %v1867 = vld [vmem:[#allocation13 + $0x148] sm:$0xff]
        %v1868 = vld [vmem:[#allocation13 + $0x150] sm:$0xff]
        %v1869 = vld [vmem:[#allocation13 + $0x158] sm:$0xff]
        %v1870 = vld [vmem:[#allocation13 + $0x160] sm:$0xff]
        %v1871 = vld [vmem:[#allocation13 + $0x168] sm:$0xff]
        %v1872 = vld [vmem:[#allocation13 + $0x170] sm:$0xff]
        %v1873 = vld [vmem:[#allocation13 + $0x178] sm:$0xff]
        %v1874 = vld [vmem:[#allocation13 + $0x180] sm:$0xff]
        %v1875 = vld [vmem:[#allocation13 + $0x188] sm:$0xff]
        %v1876 = vld [vmem:[#allocation13 + $0x190] sm:$0xff]
        %v1877 = vld [vmem:[#allocation13 + $0x198] sm:$0xff]
        %v1878 = vld [vmem:[#allocation13 + $0x1a0] sm:$0xff]
        %v1879 = vld [vmem:[#allocation13 + $0x1a8] sm:$0xff]
        %v1880 = vld [vmem:[#allocation13 + $0x1b0] sm:$0xff]
        %v1881 = vld [vmem:[#allocation13 + $0x1b8] sm:$0xff]
        %v1882 = vld [vmem:[#allocation13 + $0x1c0] sm:$0xff]
        %v1883 = vld [vmem:[#allocation13 + $0x1c8] sm:$0xff]
        %v1884 = vld [vmem:[#allocation13 + $0x1d0] sm:$0xff]
        %v1885 = vld [vmem:[#allocation13 + $0x1d8] sm:$0xff]
        %v1886 = vld [vmem:[#allocation13 + $0x1e0] sm:$0xff]
        %v1887 = vld [vmem:[#allocation13 + $0x1e8] sm:$0xff]
        %v1888 = vld [vmem:[#allocation13 + $0x1f0] sm:$0xff]
        %v1889 = vld [vmem:[#allocation13 + $0x1f8] sm:$0xff]
        %1890 = vmatprep.subr.mxu0 %v1827
        %1891 = vmatpush1.msra.mxu0 %v1826
        %1892 = vmatprep.subr.mxu0 %v1831
        %1893 = vmatpush1.msra.mxu0 %v1830
        %1894 = vmatprep.subr.mxu0 %v1835
        %1895 = vmatpush1.msra.mxu0 %v1834
        %1896 = vmatprep.subr.mxu0 %v1839
        %1897 = vmatpush1.msra.mxu0 %v1838
        %1898 = vmatprep.subr.mxu0 %v1843
        %1899 = vmatpush1.msra.mxu0 %v1842
        %1900 = vmatprep.subr.mxu0 %v1847
        %1901 = vmatpush1.msra.mxu0 %v1846
        %1902 = vmatprep.subr.mxu0 %v1851
        %1903 = vmatpush1.msra.mxu0 %v1850
        %1904 = vmatprep.subr.mxu0 %v1855
        %1905 = vmatpush1.msra.mxu0 %v1854
        %1906 = vmatprep.subr.mxu0 %v1859
        %1907 = vmatpush1.msra.mxu0 %v1858
        %1908 = vmatprep.subr.mxu0 %v1863
        %1909 = vmatpush1.msra.mxu0 %v1862
        %1910 = vmatprep.subr.mxu0 %v1867
        %1911 = vmatpush1.msra.mxu0 %v1866
        %1912 = vmatprep.subr.mxu0 %v1871
        %1913 = vmatpush1.msra.mxu0 %v1870
        %1914 = vmatprep.subr.mxu0 %v1875
        %1915 = vmatpush1.msra.mxu0 %v1874
        %1916 = vmatprep.subr.mxu0 %v1879
        %1917 = vmatpush1.msra.mxu0 %v1878
        %1918 = vmatprep.subr.mxu0 %v1883
        %1919 = vmatpush1.msra.mxu0 %v1882
        %1920 = vmatprep.subr.mxu0 %v1887
        %1921 = vmatpush1.msra.mxu0 %v1886
        %1922 = vmatprep.subr.mxu0 0.0
        %1923 = vmatpush1.msra.mxu0 0.0
        %1924 = vmatprep.subr.mxu0 0.0
        %1925 = vmatpush1.msra.mxu0 0.0
        %1926 = vmatprep.subr.mxu0 0.0
        %1927 = vmatpush1.msra.mxu0 0.0
        %1928 = vmatprep.subr.mxu0 0.0
        %1929 = vmatpush1.msra.mxu0 0.0
        %1930 = vmatprep.subr.mxu0 0.0
        %1931 = vmatpush1.msra.mxu0 0.0
        %1932 = vmatprep.subr.mxu0 0.0
        %1933 = vmatpush1.msra.mxu0 0.0
        %1934 = vmatprep.subr.mxu0 0.0
        %1935 = vmatpush1.msra.mxu0 0.0
        %1936 = vmatprep.subr.mxu0 0.0
        %1937 = vmatpush1.msra.mxu0 0.0
        %1938 = vmatprep.subr.mxu0 0.0
        %1939 = vmatpush1.msra.mxu0 0.0
        %1940 = vmatprep.subr.mxu0 0.0
        %1941 = vmatpush1.msra.mxu0 0.0
        %1942 = vmatprep.subr.mxu0 0.0
        %1943 = vmatpush1.msra.mxu0 0.0
        %1944 = vmatprep.subr.mxu0 0.0
        %1945 = vmatpush1.msra.mxu0 0.0
        %1946 = vmatprep.subr.mxu0 0.0
        %1947 = vmatpush1.msra.mxu0 0.0
        %1948 = vmatprep.subr.mxu0 0.0
        %1949 = vmatpush1.msra.mxu0 0.0
        %1950 = vmatprep.subr.mxu0 0.0
        %1951 = vmatpush1.msra.mxu0 0.0
        %1952 = vmatprep.subr.mxu0 0.0
        %1953 = vmatpush1.msra.mxu0 0.0
        %1954 = vmatprep.mubr.f32.mxu0 0.0
        %1955 = vmatmul.mubr.f32.gmra.mrb[0].mxu0 %v1825
        %v1956 = vpop.f32.mrb[0].mxu0
        %v1957 = vadd.f32 0.0, %v1956
        %v1958 = vpop.f32.mrb[0].mxu0
        %v1959 = vadd.f32 0.0, %v1958
        %1960 = vdwg.mxu0
        %1961 = vmatprep.subr.mxu0 %v1829
        %1962 = vmatpush1.msra.mxu0 %v1828
        %1963 = vmatprep.subr.mxu0 %v1833
        %1964 = vmatpush1.msra.mxu0 %v1832
        %1965 = vmatprep.subr.mxu0 %v1837
        %1966 = vmatpush1.msra.mxu0 %v1836
        %1967 = vmatprep.subr.mxu0 %v1841
        %1968 = vmatpush1.msra.mxu0 %v1840
        %1969 = vmatprep.subr.mxu0 %v1845
        %1970 = vmatpush1.msra.mxu0 %v1844
        %1971 = vmatprep.subr.mxu0 %v1849
        %1972 = vmatpush1.msra.mxu0 %v1848
        %1973 = vmatprep.subr.mxu0 %v1853
        %1974 = vmatpush1.msra.mxu0 %v1852
        %1975 = vmatprep.subr.mxu0 %v1857
        %1976 = vmatpush1.msra.mxu0 %v1856
        %1977 = vmatprep.subr.mxu0 %v1861
        %1978 = vmatpush1.msra.mxu0 %v1860
        %1979 = vmatprep.subr.mxu0 %v1865
        %1980 = vmatpush1.msra.mxu0 %v1864
        %1981 = vmatprep.subr.mxu0 %v1869
        %1982 = vmatpush1.msra.mxu0 %v1868
        %1983 = vmatprep.subr.mxu0 %v1873
        %1984 = vmatpush1.msra.mxu0 %v1872
        %1985 = vmatprep.subr.mxu0 %v1877
        %1986 = vmatpush1.msra.mxu0 %v1876
        %1987 = vmatprep.subr.mxu0 %v1881
        %1988 = vmatpush1.msra.mxu0 %v1880
        %1989 = vmatprep.subr.mxu0 %v1885
        %1990 = vmatpush1.msra.mxu0 %v1884
        %1991 = vmatprep.subr.mxu0 %v1889
        %1992 = vmatpush1.msra.mxu0 %v1888
        %1993 = vmatprep.subr.mxu0 0.0
        %1994 = vmatpush1.msra.mxu0 0.0
        %1995 = vmatprep.subr.mxu0 0.0
        %1996 = vmatpush1.msra.mxu0 0.0
        %1997 = vmatprep.subr.mxu0 0.0
        %1998 = vmatpush1.msra.mxu0 0.0
        %1999 = vmatprep.subr.mxu0 0.0
        %2000 = vmatpush1.msra.mxu0 0.0
        %2001 = vmatprep.subr.mxu0 0.0
        %2002 = vmatpush1.msra.mxu0 0.0
        %2003 = vmatprep.subr.mxu0 0.0
        %2004 = vmatpush1.msra.mxu0 0.0
        %2005 = vmatprep.subr.mxu0 0.0
        %2006 = vmatpush1.msra.mxu0 0.0
        %2007 = vmatprep.subr.mxu0 0.0
        %2008 = vmatpush1.msra.mxu0 0.0
        %2009 = vmatprep.subr.mxu0 0.0
        %2010 = vmatpush1.msra.mxu0 0.0
        %2011 = vmatprep.subr.mxu0 0.0
        %2012 = vmatpush1.msra.mxu0 0.0
        %2013 = vmatprep.subr.mxu0 0.0
        %2014 = vmatpush1.msra.mxu0 0.0
        %2015 = vmatprep.subr.mxu0 0.0
        %2016 = vmatpush1.msra.mxu0 0.0
        %2017 = vmatprep.subr.mxu0 0.0
        %2018 = vmatpush1.msra.mxu0 0.0
        %2019 = vmatprep.subr.mxu0 0.0
        %2020 = vmatpush1.msra.mxu0 0.0
        %2021 = vmatprep.subr.mxu0 0.0
        %2022 = vmatpush1.msra.mxu0 0.0
        %2023 = vmatprep.subr.mxu0 0.0
        %2024 = vmatpush1.msra.mxu0 0.0
        %2025 = vmatprep.mubr.f32.mxu0 0.0
        %2026 = vmatmul.mubr.f32.gmra.mrb[0].mxu0 %v1825
        %v2027 = vpop.f32.mrb[0].mxu0
        %v2028 = vadd.f32 0.0, %v2027
        %v2029 = vpop.f32.mrb[0].mxu0
        %v2030 = vadd.f32 0.0, %v2029
        %2031 = vdwg.mxu0
        %v2032 = vadd.f32 %v1821, %v1957
        %v2033 = vadd.f32 %v1822, %v1959
        %v2034 = vadd.f32 %v1823, %v2028
        %v2035 = vadd.f32 %v1824, %v2030
        %v2036 = vld [vmem:[#allocation5] sm:$0xff]
        %v2037 = vmul.f32 %v1814, 0.5
        %v2038 = vtanh.pop %v2037
        %v2039 = vmul.f32 %v2038, 0.5
        %v2040 = vadd.f32 %v2039, 0.5
        %v2041 = vmul.f32 %v1815, 0.5
        %v2042 = vtanh.pop %v2041
        %v2043 = vmul.f32 %v2042, 0.5
        %v2044 = vadd.f32 %v2043, 0.5
        %v2045 = vtanh.pop %v1816
        %v2046 = vmul.f32 %v1817, 0.5
        %v2047 = vtanh.pop %v2046
        %v2048 = vmul.f32 %v2047, 0.5
        %v2049 = vadd.f32 %v2048, 0.5
        %v2050 = vmul.f32 %v2044, %v2036
        %v2051 = vmul.f32 %v2040, %v2045
        %v2052 = vadd.f32 %v2050, %v2051
        %v2053 = vtanh.pop %v2052
        %v2054 = vmul.f32 %v2049, %v2053
        %v2055 = vld [vmem:[#allocation7] sm:$0xff]
        %v2056 = vmul.f32 %v2032, 0.5
        %v2057 = vtanh.pop %v2056
        %v2058 = vmul.f32 %v2057, 0.5
        %v2059 = vadd.f32 %v2058, 0.5
        %v2060 = vmul.f32 %v2033, 0.5
        %v2061 = vtanh.pop %v2060
        %v2062 = vmul.f32 %v2061, 0.5
        %v2063 = vadd.f32 %v2062, 0.5
        %v2064 = vtanh.pop %v2034
        %v2065 = vmul.f32 %v2035, 0.5
        %v2066 = vtanh.pop %v2065
        %v2067 = vmul.f32 %v2066, 0.5
        %v2068 = vadd.f32 %v2067, 0.5
        %v2069 = vmul.f32 %v2063, %v2055
        %v2070 = vmul.f32 %v2059, %v2064
        %v2071 = vadd.f32 %v2069, %v2070
        %v2072 = vtanh.pop %v2071
        %v2073 = vmul.f32 %v2068, %v2072
        %2074 = vst [vmem:[#allocation4] sm:$0xff] %v2054
        %2075 = vst [vmem:[#allocation5] sm:$0xff] %v2052
        %s2076 = scalar_lea.vmem %s397, 8 [#allocation14]
        %2077 = vst [vmem:[%s2076] sm:$0xff] %v2054
        %s2078 = scalar_lea.vmem %s404, 48 [#allocation15]
        %2079 = vst [vmem:[%s2078] sm:$0xff] %v2073
        %2080 = vst [vmem:[#allocation6] sm:$0xff] %v2073
        %2081 = vst [vmem:[#allocation7] sm:$0xff] %v2071
        %s2082 = smul.u32 2, 4
        %s2083 = smul.addr %s2082, 8
        %s2084 = scalar_lea.vmem [#allocation2], %s2083
        %v2085 = vld [vmem:[%s2084] sm:$0xff]
        %v2086 = vld [vmem:[%s2084 + $0x8] sm:$0xff]
        %v2087 = vld [vmem:[%s2084 + $0x10] sm:$0xff]
        %v2088 = vld [vmem:[%s2084 + $0x18] sm:$0xff]
        %v2089 = vld [vmem:[#allocation4] sm:$0xff]
        %v2090 = vld [vmem:[#allocation11] sm:$0xff]
        %v2091 = vld [vmem:[#allocation11 + $0x8] sm:$0xff]
        %v2092 = vld [vmem:[#allocation11 + $0x10] sm:$0xff]
        %v2093 = vld [vmem:[#allocation11 + $0x18] sm:$0xff]
        %v2094 = vld [vmem:[#allocation11 + $0x20] sm:$0xff]
        %v2095 = vld [vmem:[#allocation11 + $0x28] sm:$0xff]
        %v2096 = vld [vmem:[#allocation11 + $0x30] sm:$0xff]
        %v2097 = vld [vmem:[#allocation11 + $0x38] sm:$0xff]
        %v2098 = vld [vmem:[#allocation11 + $0x40] sm:$0xff]
        %v2099 = vld [vmem:[#allocation11 + $0x48] sm:$0xff]
        %v2100 = vld [vmem:[#allocation11 + $0x50] sm:$0xff]
        %v2101 = vld [vmem:[#allocation11 + $0x58] sm:$0xff]
        %v2102 = vld [vmem:[#allocation11 + $0x60] sm:$0xff]
        %v2103 = vld [vmem:[#allocation11 + $0x68] sm:$0xff]
        %v2104 = vld [vmem:[#allocation11 + $0x70] sm:$0xff]
        %v2105 = vld [vmem:[#allocation11 + $0x78] sm:$0xff]
        %v2106 = vld [vmem:[#allocation11 + $0x80] sm:$0xff]
        %v2107 = vld [vmem:[#allocation11 + $0x88] sm:$0xff]
        %v2108 = vld [vmem:[#allocation11 + $0x90] sm:$0xff]
        %v2109 = vld [vmem:[#allocation11 + $0x98] sm:$0xff]
        %v2110 = vld [vmem:[#allocation11 + $0xa0] sm:$0xff]
        %v2111 = vld [vmem:[#allocation11 + $0xa8] sm:$0xff]
        %v2112 = vld [vmem:[#allocation11 + $0xb0] sm:$0xff]
        %v2113 = vld [vmem:[#allocation11 + $0xb8] sm:$0xff]
        %v2114 = vld [vmem:[#allocation11 + $0xc0] sm:$0xff]
        %v2115 = vld [vmem:[#allocation11 + $0xc8] sm:$0xff]
        %v2116 = vld [vmem:[#allocation11 + $0xd0] sm:$0xff]
        %v2117 = vld [vmem:[#allocation11 + $0xd8] sm:$0xff]
        %v2118 = vld [vmem:[#allocation11 + $0xe0] sm:$0xff]
        %v2119 = vld [vmem:[#allocation11 + $0xe8] sm:$0xff]
        %v2120 = vld [vmem:[#allocation11 + $0xf0] sm:$0xff]
        %v2121 = vld [vmem:[#allocation11 + $0xf8] sm:$0xff]
        %v2122 = vld [vmem:[#allocation11 + $0x100] sm:$0xff]
        %v2123 = vld [vmem:[#allocation11 + $0x108] sm:$0xff]
        %v2124 = vld [vmem:[#allocation11 + $0x110] sm:$0xff]
        %v2125 = vld [vmem:[#allocation11 + $0x118] sm:$0xff]
        %v2126 = vld [vmem:[#allocation11 + $0x120] sm:$0xff]
        %v2127 = vld [vmem:[#allocation11 + $0x128] sm:$0xff]
        %v2128 = vld [vmem:[#allocation11 + $0x130] sm:$0xff]
        %v2129 = vld [vmem:[#allocation11 + $0x138] sm:$0xff]
        %v2130 = vld [vmem:[#allocation11 + $0x140] sm:$0xff]
        %v2131 = vld [vmem:[#allocation11 + $0x148] sm:$0xff]
        %v2132 = vld [vmem:[#allocation11 + $0x150] sm:$0xff]
        %v2133 = vld [vmem:[#allocation11 + $0x158] sm:$0xff]
        %v2134 = vld [vmem:[#allocation11 + $0x160] sm:$0xff]
        %v2135 = vld [vmem:[#allocation11 + $0x168] sm:$0xff]
        %v2136 = vld [vmem:[#allocation11 + $0x170] sm:$0xff]
        %v2137 = vld [vmem:[#allocation11 + $0x178] sm:$0xff]
        %v2138 = vld [vmem:[#allocation11 + $0x180] sm:$0xff]
        %v2139 = vld [vmem:[#allocation11 + $0x188] sm:$0xff]
        %v2140 = vld [vmem:[#allocation11 + $0x190] sm:$0xff]
        %v2141 = vld [vmem:[#allocation11 + $0x198] sm:$0xff]
        %v2142 = vld [vmem:[#allocation11 + $0x1a0] sm:$0xff]
        %v2143 = vld [vmem:[#allocation11 + $0x1a8] sm:$0xff]
        %v2144 = vld [vmem:[#allocation11 + $0x1b0] sm:$0xff]
        %v2145 = vld [vmem:[#allocation11 + $0x1b8] sm:$0xff]
        %v2146 = vld [vmem:[#allocation11 + $0x1c0] sm:$0xff]
        %v2147 = vld [vmem:[#allocation11 + $0x1c8] sm:$0xff]
        %v2148 = vld [vmem:[#allocation11 + $0x1d0] sm:$0xff]
        %v2149 = vld [vmem:[#allocation11 + $0x1d8] sm:$0xff]
        %v2150 = vld [vmem:[#allocation11 + $0x1e0] sm:$0xff]
        %v2151 = vld [vmem:[#allocation11 + $0x1e8] sm:$0xff]
        %v2152 = vld [vmem:[#allocation11 + $0x1f0] sm:$0xff]
        %v2153 = vld [vmem:[#allocation11 + $0x1f8] sm:$0xff]
        %2154 = vmatprep.subr.mxu0 %v2091
        %2155 = vmatpush1.msra.mxu0 %v2090
        %2156 = vmatprep.subr.mxu0 %v2095
        %2157 = vmatpush1.msra.mxu0 %v2094
        %2158 = vmatprep.subr.mxu0 %v2099
        %2159 = vmatpush1.msra.mxu0 %v2098
        %2160 = vmatprep.subr.mxu0 %v2103
        %2161 = vmatpush1.msra.mxu0 %v2102
        %2162 = vmatprep.subr.mxu0 %v2107
        %2163 = vmatpush1.msra.mxu0 %v2106
        %2164 = vmatprep.subr.mxu0 %v2111
        %2165 = vmatpush1.msra.mxu0 %v2110
        %2166 = vmatprep.subr.mxu0 %v2115
        %2167 = vmatpush1.msra.mxu0 %v2114
        %2168 = vmatprep.subr.mxu0 %v2119
        %2169 = vmatpush1.msra.mxu0 %v2118
        %2170 = vmatprep.subr.mxu0 %v2123
        %2171 = vmatpush1.msra.mxu0 %v2122
        %2172 = vmatprep.subr.mxu0 %v2127
        %2173 = vmatpush1.msra.mxu0 %v2126
        %2174 = vmatprep.subr.mxu0 %v2131
        %2175 = vmatpush1.msra.mxu0 %v2130
        %2176 = vmatprep.subr.mxu0 %v2135
        %2177 = vmatpush1.msra.mxu0 %v2134
        %2178 = vmatprep.subr.mxu0 %v2139
        %2179 = vmatpush1.msra.mxu0 %v2138
        %2180 = vmatprep.subr.mxu0 %v2143
        %2181 = vmatpush1.msra.mxu0 %v2142
        %2182 = vmatprep.subr.mxu0 %v2147
        %2183 = vmatpush1.msra.mxu0 %v2146
        %2184 = vmatprep.subr.mxu0 %v2151
        %2185 = vmatpush1.msra.mxu0 %v2150
        %2186 = vmatprep.subr.mxu0 0.0
        %2187 = vmatpush1.msra.mxu0 0.0
        %2188 = vmatprep.subr.mxu0 0.0
        %2189 = vmatpush1.msra.mxu0 0.0
        %2190 = vmatprep.subr.mxu0 0.0
        %2191 = vmatpush1.msra.mxu0 0.0
        %2192 = vmatprep.subr.mxu0 0.0
        %2193 = vmatpush1.msra.mxu0 0.0
        %2194 = vmatprep.subr.mxu0 0.0
        %2195 = vmatpush1.msra.mxu0 0.0
        %2196 = vmatprep.subr.mxu0 0.0
        %2197 = vmatpush1.msra.mxu0 0.0
        %2198 = vmatprep.subr.mxu0 0.0
        %2199 = vmatpush1.msra.mxu0 0.0
        %2200 = vmatprep.subr.mxu0 0.0
        %2201 = vmatpush1.msra.mxu0 0.0
        %2202 = vmatprep.subr.mxu0 0.0
        %2203 = vmatpush1.msra.mxu0 0.0
        %2204 = vmatprep.subr.mxu0 0.0
        %2205 = vmatpush1.msra.mxu0 0.0
        %2206 = vmatprep.subr.mxu0 0.0
        %2207 = vmatpush1.msra.mxu0 0.0
        %2208 = vmatprep.subr.mxu0 0.0
        %2209 = vmatpush1.msra.mxu0 0.0
        %2210 = vmatprep.subr.mxu0 0.0
        %2211 = vmatpush1.msra.mxu0 0.0
        %2212 = vmatprep.subr.mxu0 0.0
        %2213 = vmatpush1.msra.mxu0 0.0
        %2214 = vmatprep.subr.mxu0 0.0
        %2215 = vmatpush1.msra.mxu0 0.0
        %2216 = vmatprep.subr.mxu0 0.0
        %2217 = vmatpush1.msra.mxu0 0.0
        %2218 = vmatprep.mubr.f32.mxu0 0.0
        %2219 = vmatmul.mubr.f32.gmra.mrb[0].mxu0 %v2089
        %v2220 = vpop.f32.mrb[0].mxu0
        %v2221 = vadd.f32 0.0, %v2220
        %v2222 = vpop.f32.mrb[0].mxu0
        %v2223 = vadd.f32 0.0, %v2222
        %2224 = vdwg.mxu0
        %2225 = vmatprep.subr.mxu0 %v2093
        %2226 = vmatpush1.msra.mxu0 %v2092
        %2227 = vmatprep.subr.mxu0 %v2097
        %2228 = vmatpush1.msra.mxu0 %v2096
        %2229 = vmatprep.subr.mxu0 %v2101
        %2230 = vmatpush1.msra.mxu0 %v2100
        %2231 = vmatprep.subr.mxu0 %v2105
        %2232 = vmatpush1.msra.mxu0 %v2104
        %2233 = vmatprep.subr.mxu0 %v2109
        %2234 = vmatpush1.msra.mxu0 %v2108
        %2235 = vmatprep.subr.mxu0 %v2113
        %2236 = vmatpush1.msra.mxu0 %v2112
        %2237 = vmatprep.subr.mxu0 %v2117
        %2238 = vmatpush1.msra.mxu0 %v2116
        %2239 = vmatprep.subr.mxu0 %v2121
        %2240 = vmatpush1.msra.mxu0 %v2120
        %2241 = vmatprep.subr.mxu0 %v2125
        %2242 = vmatpush1.msra.mxu0 %v2124
        %2243 = vmatprep.subr.mxu0 %v2129
        %2244 = vmatpush1.msra.mxu0 %v2128
        %2245 = vmatprep.subr.mxu0 %v2133
        %2246 = vmatpush1.msra.mxu0 %v2132
        %2247 = vmatprep.subr.mxu0 %v2137
        %2248 = vmatpush1.msra.mxu0 %v2136
        %2249 = vmatprep.subr.mxu0 %v2141
        %2250 = vmatpush1.msra.mxu0 %v2140
        %2251 = vmatprep.subr.mxu0 %v2145
        %2252 = vmatpush1.msra.mxu0 %v2144
        %2253 = vmatprep.subr.mxu0 %v2149
        %2254 = vmatpush1.msra.mxu0 %v2148
        %2255 = vmatprep.subr.mxu0 %v2153
        %2256 = vmatpush1.msra.mxu0 %v2152
        %2257 = vmatprep.subr.mxu0 0.0
        %2258 = vmatpush1.msra.mxu0 0.0
        %2259 = vmatprep.subr.mxu0 0.0
        %2260 = vmatpush1.msra.mxu0 0.0
        %2261 = vmatprep.subr.mxu0 0.0
        %2262 = vmatpush1.msra.mxu0 0.0
        %2263 = vmatprep.subr.mxu0 0.0
        %2264 = vmatpush1.msra.mxu0 0.0
        %2265 = vmatprep.subr.mxu0 0.0
        %2266 = vmatpush1.msra.mxu0 0.0
        %2267 = vmatprep.subr.mxu0 0.0
        %2268 = vmatpush1.msra.mxu0 0.0
        %2269 = vmatprep.subr.mxu0 0.0
        %2270 = vmatpush1.msra.mxu0 0.0
        %2271 = vmatprep.subr.mxu0 0.0
        %2272 = vmatpush1.msra.mxu0 0.0
        %2273 = vmatprep.subr.mxu0 0.0
        %2274 = vmatpush1.msra.mxu0 0.0
        %2275 = vmatprep.subr.mxu0 0.0
        %2276 = vmatpush1.msra.mxu0 0.0
        %2277 = vmatprep.subr.mxu0 0.0
        %2278 = vmatpush1.msra.mxu0 0.0
        %2279 = vmatprep.subr.mxu0 0.0
        %2280 = vmatpush1.msra.mxu0 0.0
        %2281 = vmatprep.subr.mxu0 0.0
        %2282 = vmatpush1.msra.mxu0 0.0
        %2283 = vmatprep.subr.mxu0 0.0
        %2284 = vmatpush1.msra.mxu0 0.0
        %2285 = vmatprep.subr.mxu0 0.0
        %2286 = vmatpush1.msra.mxu0 0.0
        %2287 = vmatprep.subr.mxu0 0.0
        %2288 = vmatpush1.msra.mxu0 0.0
        %2289 = vmatprep.mubr.f32.mxu0 0.0
        %2290 = vmatmul.mubr.f32.gmra.mrb[0].mxu0 %v2089
        %v2291 = vpop.f32.mrb[0].mxu0
        %v2292 = vadd.f32 0.0, %v2291
        %v2293 = vpop.f32.mrb[0].mxu0
        %v2294 = vadd.f32 0.0, %v2293
        %2295 = vdwg.mxu0
        %v2296 = vadd.f32 %v2085, %v2221
        %v2297 = vadd.f32 %v2086, %v2223
        %v2298 = vadd.f32 %v2087, %v2292
        %v2299 = vadd.f32 %v2088, %v2294
        %s2300 = smul.u32 5, 4
        %s2301 = smul.addr %s2300, 8
        %s2302 = scalar_lea.vmem [#allocation3], %s2301
        %v2303 = vld [vmem:[%s2302] sm:$0xff]
        %v2304 = vld [vmem:[%s2302 + $0x8] sm:$0xff]
        %v2305 = vld [vmem:[%s2302 + $0x10] sm:$0xff]
        %v2306 = vld [vmem:[%s2302 + $0x18] sm:$0xff]
        %v2307 = vld [vmem:[#allocation6] sm:$0xff]
        %v2308 = vld [vmem:[#allocation13] sm:$0xff]
        %v2309 = vld [vmem:[#allocation13 + $0x8] sm:$0xff]
        %v2310 = vld [vmem:[#allocation13 + $0x10] sm:$0xff]
        %v2311 = vld [vmem:[#allocation13 + $0x18] sm:$0xff]
        %v2312 = vld [vmem:[#allocation13 + $0x20] sm:$0xff]
        %v2313 = vld [vmem:[#allocation13 + $0x28] sm:$0xff]
        %v2314 = vld [vmem:[#allocation13 + $0x30] sm:$0xff]
        %v2315 = vld [vmem:[#allocation13 + $0x38] sm:$0xff]
        %v2316 = vld [vmem:[#allocation13 + $0x40] sm:$0xff]
        %v2317 = vld [vmem:[#allocation13 + $0x48] sm:$0xff]
        %v2318 = vld [vmem:[#allocation13 + $0x50] sm:$0xff]
        %v2319 = vld [vmem:[#allocation13 + $0x58] sm:$0xff]
        %v2320 = vld [vmem:[#allocation13 + $0x60] sm:$0xff]
        %v2321 = vld [vmem:[#allocation13 + $0x68] sm:$0xff]
        %v2322 = vld [vmem:[#allocation13 + $0x70] sm:$0xff]
        %v2323 = vld [vmem:[#allocation13 + $0x78] sm:$0xff]
        %v2324 = vld [vmem:[#allocation13 + $0x80] sm:$0xff]
        %v2325 = vld [vmem:[#allocation13 + $0x88] sm:$0xff]
        %v2326 = vld [vmem:[#allocation13 + $0x90] sm:$0xff]
        %v2327 = vld [vmem:[#allocation13 + $0x98] sm:$0xff]
        %v2328 = vld [vmem:[#allocation13 + $0xa0] sm:$0xff]
        %v2329 = vld [vmem:[#allocation13 + $0xa8] sm:$0xff]
        %v2330 = vld [vmem:[#allocation13 + $0xb0] sm:$0xff]
        %v2331 = vld [vmem:[#allocation13 + $0xb8] sm:$0xff]
        %v2332 = vld [vmem:[#allocation13 + $0xc0] sm:$0xff]
        %v2333 = vld [vmem:[#allocation13 + $0xc8] sm:$0xff]
        %v2334 = vld [vmem:[#allocation13 + $0xd0] sm:$0xff]
        %v2335 = vld [vmem:[#allocation13 + $0xd8] sm:$0xff]
        %v2336 = vld [vmem:[#allocation13 + $0xe0] sm:$0xff]
        %v2337 = vld [vmem:[#allocation13 + $0xe8] sm:$0xff]
        %v2338 = vld [vmem:[#allocation13 + $0xf0] sm:$0xff]
        %v2339 = vld [vmem:[#allocation13 + $0xf8] sm:$0xff]
        %v2340 = vld [vmem:[#allocation13 + $0x100] sm:$0xff]
        %v2341 = vld [vmem:[#allocation13 + $0x108] sm:$0xff]
        %v2342 = vld [vmem:[#allocation13 + $0x110] sm:$0xff]
        %v2343 = vld [vmem:[#allocation13 + $0x118] sm:$0xff]
        %v2344 = vld [vmem:[#allocation13 + $0x120] sm:$0xff]
        %v2345 = vld [vmem:[#allocation13 + $0x128] sm:$0xff]
        %v2346 = vld [vmem:[#allocation13 + $0x130] sm:$0xff]
        %v2347 = vld [vmem:[#allocation13 + $0x138] sm:$0xff]
        %v2348 = vld [vmem:[#allocation13 + $0x140] sm:$0xff]
        %v2349 = vld [vmem:[#allocation13 + $0x148] sm:$0xff]
        %v2350 = vld [vmem:[#allocation13 + $0x150] sm:$0xff]
        %v2351 = vld [vmem:[#allocation13 + $0x158] sm:$0xff]
        %v2352 = vld [vmem:[#allocation13 + $0x160] sm:$0xff]
        %v2353 = vld [vmem:[#allocation13 + $0x168] sm:$0xff]
        %v2354 = vld [vmem:[#allocation13 + $0x170] sm:$0xff]
        %v2355 = vld [vmem:[#allocation13 + $0x178] sm:$0xff]
        %v2356 = vld [vmem:[#allocation13 + $0x180] sm:$0xff]
        %v2357 = vld [vmem:[#allocation13 + $0x188] sm:$0xff]
        %v2358 = vld [vmem:[#allocation13 + $0x190] sm:$0xff]
        %v2359 = vld [vmem:[#allocation13 + $0x198] sm:$0xff]
        %v2360 = vld [vmem:[#allocation13 + $0x1a0] sm:$0xff]
        %v2361 = vld [vmem:[#allocation13 + $0x1a8] sm:$0xff]
        %v2362 = vld [vmem:[#allocation13 + $0x1b0] sm:$0xff]
        %v2363 = vld [vmem:[#allocation13 + $0x1b8] sm:$0xff]
        %v2364 = vld [vmem:[#allocation13 + $0x1c0] sm:$0xff]
        %v2365 = vld [vmem:[#allocation13 + $0x1c8] sm:$0xff]
        %v2366 = vld [vmem:[#allocation13 + $0x1d0] sm:$0xff]
        %v2367 = vld [vmem:[#allocation13 + $0x1d8] sm:$0xff]
        %v2368 = vld [vmem:[#allocation13 + $0x1e0] sm:$0xff]
        %v2369 = vld [vmem:[#allocation13 + $0x1e8] sm:$0xff]
        %v2370 = vld [vmem:[#allocation13 + $0x1f0] sm:$0xff]
        %v2371 = vld [vmem:[#allocation13 + $0x1f8] sm:$0xff]
        %2372 = vmatprep.subr.mxu0 %v2309
        %2373 = vmatpush1.msra.mxu0 %v2308
        %2374 = vmatprep.subr.mxu0 %v2313
        %2375 = vmatpush1.msra.mxu0 %v2312
        %2376 = vmatprep.subr.mxu0 %v2317
        %2377 = vmatpush1.msra.mxu0 %v2316
        %2378 = vmatprep.subr.mxu0 %v2321
        %2379 = vmatpush1.msra.mxu0 %v2320
        %2380 = vmatprep.subr.mxu0 %v2325
        %2381 = vmatpush1.msra.mxu0 %v2324
        %2382 = vmatprep.subr.mxu0 %v2329
        %2383 = vmatpush1.msra.mxu0 %v2328
        %2384 = vmatprep.subr.mxu0 %v2333
        %2385 = vmatpush1.msra.mxu0 %v2332
        %2386 = vmatprep.subr.mxu0 %v2337
        %2387 = vmatpush1.msra.mxu0 %v2336
        %2388 = vmatprep.subr.mxu0 %v2341
        %2389 = vmatpush1.msra.mxu0 %v2340
        %2390 = vmatprep.subr.mxu0 %v2345
        %2391 = vmatpush1.msra.mxu0 %v2344
        %2392 = vmatprep.subr.mxu0 %v2349
        %2393 = vmatpush1.msra.mxu0 %v2348
        %2394 = vmatprep.subr.mxu0 %v2353
        %2395 = vmatpush1.msra.mxu0 %v2352
        %2396 = vmatprep.subr.mxu0 %v2357
        %2397 = vmatpush1.msra.mxu0 %v2356
        %2398 = vmatprep.subr.mxu0 %v2361
        %2399 = vmatpush1.msra.mxu0 %v2360
        %2400 = vmatprep.subr.mxu0 %v2365
        %2401 = vmatpush1.msra.mxu0 %v2364
        %2402 = vmatprep.subr.mxu0 %v2369
        %2403 = vmatpush1.msra.mxu0 %v2368
        %2404 = vmatprep.subr.mxu0 0.0
        %2405 = vmatpush1.msra.mxu0 0.0
        %2406 = vmatprep.subr.mxu0 0.0
        %2407 = vmatpush1.msra.mxu0 0.0
        %2408 = vmatprep.subr.mxu0 0.0
        %2409 = vmatpush1.msra.mxu0 0.0
        %2410 = vmatprep.subr.mxu0 0.0
        %2411 = vmatpush1.msra.mxu0 0.0
        %2412 = vmatprep.subr.mxu0 0.0
        %2413 = vmatpush1.msra.mxu0 0.0
        %2414 = vmatprep.subr.mxu0 0.0
        %2415 = vmatpush1.msra.mxu0 0.0
        %2416 = vmatprep.subr.mxu0 0.0
        %2417 = vmatpush1.msra.mxu0 0.0
        %2418 = vmatprep.subr.mxu0 0.0
        %2419 = vmatpush1.msra.mxu0 0.0
        %2420 = vmatprep.subr.mxu0 0.0
        %2421 = vmatpush1.msra.mxu0 0.0
        %2422 = vmatprep.subr.mxu0 0.0
        %2423 = vmatpush1.msra.mxu0 0.0
        %2424 = vmatprep.subr.mxu0 0.0
        %2425 = vmatpush1.msra.mxu0 0.0
        %2426 = vmatprep.subr.mxu0 0.0
        %2427 = vmatpush1.msra.mxu0 0.0
        %2428 = vmatprep.subr.mxu0 0.0
        %2429 = vmatpush1.msra.mxu0 0.0
        %2430 = vmatprep.subr.mxu0 0.0
        %2431 = vmatpush1.msra.mxu0 0.0
        %2432 = vmatprep.subr.mxu0 0.0
        %2433 = vmatpush1.msra.mxu0 0.0
        %2434 = vmatprep.subr.mxu0 0.0
        %2435 = vmatpush1.msra.mxu0 0.0
        %2436 = vmatprep.mubr.f32.mxu0 0.0
        %2437 = vmatmul.mubr.f32.gmra.mrb[0].mxu0 %v2307
        %v2438 = vpop.f32.mrb[0].mxu0
        %v2439 = vadd.f32 0.0, %v2438
        %v2440 = vpop.f32.mrb[0].mxu0
        %v2441 = vadd.f32 0.0, %v2440
        %2442 = vdwg.mxu0
        %2443 = vmatprep.subr.mxu0 %v2311
        %2444 = vmatpush1.msra.mxu0 %v2310
        %2445 = vmatprep.subr.mxu0 %v2315
        %2446 = vmatpush1.msra.mxu0 %v2314
        %2447 = vmatprep.subr.mxu0 %v2319
        %2448 = vmatpush1.msra.mxu0 %v2318
        %2449 = vmatprep.subr.mxu0 %v2323
        %2450 = vmatpush1.msra.mxu0 %v2322
        %2451 = vmatprep.subr.mxu0 %v2327
        %2452 = vmatpush1.msra.mxu0 %v2326
        %2453 = vmatprep.subr.mxu0 %v2331
        %2454 = vmatpush1.msra.mxu0 %v2330
        %2455 = vmatprep.subr.mxu0 %v2335
        %2456 = vmatpush1.msra.mxu0 %v2334
        %2457 = vmatprep.subr.mxu0 %v2339
        %2458 = vmatpush1.msra.mxu0 %v2338
        %2459 = vmatprep.subr.mxu0 %v2343
        %2460 = vmatpush1.msra.mxu0 %v2342
        %2461 = vmatprep.subr.mxu0 %v2347
        %2462 = vmatpush1.msra.mxu0 %v2346
        %2463 = vmatprep.subr.mxu0 %v2351
        %2464 = vmatpush1.msra.mxu0 %v2350
        %2465 = vmatprep.subr.mxu0 %v2355
        %2466 = vmatpush1.msra.mxu0 %v2354
        %2467 = vmatprep.subr.mxu0 %v2359
        %2468 = vmatpush1.msra.mxu0 %v2358
        %2469 = vmatprep.subr.mxu0 %v2363
        %2470 = vmatpush1.msra.mxu0 %v2362
        %2471 = vmatprep.subr.mxu0 %v2367
        %2472 = vmatpush1.msra.mxu0 %v2366
        %2473 = vmatprep.subr.mxu0 %v2371
        %2474 = vmatpush1.msra.mxu0 %v2370
        %2475 = vmatprep.subr.mxu0 0.0
        %2476 = vmatpush1.msra.mxu0 0.0
        %2477 = vmatprep.subr.mxu0 0.0
        %2478 = vmatpush1.msra.mxu0 0.0
        %2479 = vmatprep.subr.mxu0 0.0
        %2480 = vmatpush1.msra.mxu0 0.0
        %2481 = vmatprep.subr.mxu0 0.0
        %2482 = vmatpush1.msra.mxu0 0.0
        %2483 = vmatprep.subr.mxu0 0.0
        %2484 = vmatpush1.msra.mxu0 0.0
        %2485 = vmatprep.subr.mxu0 0.0
        %2486 = vmatpush1.msra.mxu0 0.0
        %2487 = vmatprep.subr.mxu0 0.0
        %2488 = vmatpush1.msra.mxu0 0.0
        %2489 = vmatprep.subr.mxu0 0.0
        %2490 = vmatpush1.msra.mxu0 0.0
        %2491 = vmatprep.subr.mxu0 0.0
        %2492 = vmatpush1.msra.mxu0 0.0
        %2493 = vmatprep.subr.mxu0 0.0
        %2494 = vmatpush1.msra.mxu0 0.0
        %2495 = vmatprep.subr.mxu0 0.0
        %2496 = vmatpush1.msra.mxu0 0.0
        %2497 = vmatprep.subr.mxu0 0.0
        %2498 = vmatpush1.msra.mxu0 0.0
        %2499 = vmatprep.subr.mxu0 0.0
        %2500 = vmatpush1.msra.mxu0 0.0
        %2501 = vmatprep.subr.mxu0 0.0
        %2502 = vmatpush1.msra.mxu0 0.0
        %2503 = vmatprep.subr.mxu0 0.0
        %2504 = vmatpush1.msra.mxu0 0.0
        %2505 = vmatprep.subr.mxu0 0.0
        %2506 = vmatpush1.msra.mxu0 0.0
        %2507 = vmatprep.mubr.f32.mxu0 0.0
        %2508 = vmatmul.mubr.f32.gmra.mrb[0].mxu0 %v2307
        %v2509 = vpop.f32.mrb[0].mxu0
        %v2510 = vadd.f32 0.0, %v2509
        %v2511 = vpop.f32.mrb[0].mxu0
        %v2512 = vadd.f32 0.0, %v2511
        %2513 = vdwg.mxu0
        %v2514 = vadd.f32 %v2303, %v2439
        %v2515 = vadd.f32 %v2304, %v2441
        %v2516 = vadd.f32 %v2305, %v2510
        %v2517 = vadd.f32 %v2306, %v2512
        %v2518 = vld [vmem:[#allocation5] sm:$0xff]
        %v2519 = vmul.f32 %v2296, 0.5
        %v2520 = vtanh.pop %v2519
        %v2521 = vmul.f32 %v2520, 0.5
        %v2522 = vadd.f32 %v2521, 0.5
        %v2523 = vmul.f32 %v2297, 0.5
        %v2524 = vtanh.pop %v2523
        %v2525 = vmul.f32 %v2524, 0.5
        %v2526 = vadd.f32 %v2525, 0.5
        %v2527 = vtanh.pop %v2298
        %v2528 = vmul.f32 %v2299, 0.5
        %v2529 = vtanh.pop %v2528
        %v2530 = vmul.f32 %v2529, 0.5
        %v2531 = vadd.f32 %v2530, 0.5
        %v2532 = vmul.f32 %v2526, %v2518
        %v2533 = vmul.f32 %v2522, %v2527
        %v2534 = vadd.f32 %v2532, %v2533
        %v2535 = vtanh.pop %v2534
        %v2536 = vmul.f32 %v2531, %v2535
        %v2537 = vld [vmem:[#allocation7] sm:$0xff]
        %v2538 = vmul.f32 %v2514, 0.5
        %v2539 = vtanh.pop %v2538
        %v2540 = vmul.f32 %v2539, 0.5
        %v2541 = vadd.f32 %v2540, 0.5
        %v2542 = vmul.f32 %v2515, 0.5
        %v2543 = vtanh.pop %v2542
        %v2544 = vmul.f32 %v2543, 0.5
        %v2545 = vadd.f32 %v2544, 0.5
        %v2546 = vtanh.pop %v2516
        %v2547 = vmul.f32 %v2517, 0.5
        %v2548 = vtanh.pop %v2547
        %v2549 = vmul.f32 %v2548, 0.5
        %v2550 = vadd.f32 %v2549, 0.5
        %v2551 = vmul.f32 %v2545, %v2537
        %v2552 = vmul.f32 %v2541, %v2546
        %v2553 = vadd.f32 %v2551, %v2552
        %v2554 = vtanh.pop %v2553
        %v2555 = vmul.f32 %v2550, %v2554
        %2556 = vst [vmem:[#allocation4] sm:$0xff] %v2536
        %2557 = vst [vmem:[#allocation5] sm:$0xff] %v2534
        %s2558 = scalar_lea.vmem %s397, 16 [#allocation14]
        %2559 = vst [vmem:[%s2558] sm:$0xff] %v2536
        %s2560 = scalar_lea.vmem %s404, 40 [#allocation15]
        %2561 = vst [vmem:[%s2560] sm:$0xff] %v2555
        %2562 = vst [vmem:[#allocation6] sm:$0xff] %v2555
        %2563 = vst [vmem:[#allocation7] sm:$0xff] %v2553
        %s2564 = smul.u32 3, 4
        %s2565 = smul.addr %s2564, 8
        %s2566 = scalar_lea.vmem [#allocation2], %s2565
        %v2567 = vld [vmem:[%s2566] sm:$0xff]
        %v2568 = vld [vmem:[%s2566 + $0x8] sm:$0xff]
        %v2569 = vld [vmem:[%s2566 + $0x10] sm:$0xff]
        %v2570 = vld [vmem:[%s2566 + $0x18] sm:$0xff]
        %v2571 = vld [vmem:[#allocation4] sm:$0xff]
        %v2572 = vld [vmem:[#allocation11] sm:$0xff]
        %v2573 = vld [vmem:[#allocation11 + $0x8] sm:$0xff]
        %v2574 = vld [vmem:[#allocation11 + $0x10] sm:$0xff]
        %v2575 = vld [vmem:[#allocation11 + $0x18] sm:$0xff]
        %v2576 = vld [vmem:[#allocation11 + $0x20] sm:$0xff]
        %v2577 = vld [vmem:[#allocation11 + $0x28] sm:$0xff]
        %v2578 = vld [vmem:[#allocation11 + $0x30] sm:$0xff]
        %v2579 = vld [vmem:[#allocation11 + $0x38] sm:$0xff]
        %v2580 = vld [vmem:[#allocation11 + $0x40] sm:$0xff]
        %v2581 = vld [vmem:[#allocation11 + $0x48] sm:$0xff]
        %v2582 = vld [vmem:[#allocation11 + $0x50] sm:$0xff]
        %v2583 = vld [vmem:[#allocation11 + $0x58] sm:$0xff]
        %v2584 = vld [vmem:[#allocation11 + $0x60] sm:$0xff]
        %v2585 = vld [vmem:[#allocation11 + $0x68] sm:$0xff]
        %v2586 = vld [vmem:[#allocation11 + $0x70] sm:$0xff]
        %v2587 = vld [vmem:[#allocation11 + $0x78] sm:$0xff]
        %v2588 = vld [vmem:[#allocation11 + $0x80] sm:$0xff]
        %v2589 = vld [vmem:[#allocation11 + $0x88] sm:$0xff]
        %v2590 = vld [vmem:[#allocation11 + $0x90] sm:$0xff]
        %v2591 = vld [vmem:[#allocation11 + $0x98] sm:$0xff]
        %v2592 = vld [vmem:[#allocation11 + $0xa0] sm:$0xff]
        %v2593 = vld [vmem:[#allocation11 + $0xa8] sm:$0xff]
        %v2594 = vld [vmem:[#allocation11 + $0xb0] sm:$0xff]
        %v2595 = vld [vmem:[#allocation11 + $0xb8] sm:$0xff]
        %v2596 = vld [vmem:[#allocation11 + $0xc0] sm:$0xff]
        %v2597 = vld [vmem:[#allocation11 + $0xc8] sm:$0xff]
        %v2598 = vld [vmem:[#allocation11 + $0xd0] sm:$0xff]
        %v2599 = vld [vmem:[#allocation11 + $0xd8] sm:$0xff]
        %v2600 = vld [vmem:[#allocation11 + $0xe0] sm:$0xff]
        %v2601 = vld [vmem:[#allocation11 + $0xe8] sm:$0xff]
        %v2602 = vld [vmem:[#allocation11 + $0xf0] sm:$0xff]
        %v2603 = vld [vmem:[#allocation11 + $0xf8] sm:$0xff]
        %v2604 = vld [vmem:[#allocation11 + $0x100] sm:$0xff]
        %v2605 = vld [vmem:[#allocation11 + $0x108] sm:$0xff]
        %v2606 = vld [vmem:[#allocation11 + $0x110] sm:$0xff]
        %v2607 = vld [vmem:[#allocation11 + $0x118] sm:$0xff]
        %v2608 = vld [vmem:[#allocation11 + $0x120] sm:$0xff]
        %v2609 = vld [vmem:[#allocation11 + $0x128] sm:$0xff]
        %v2610 = vld [vmem:[#allocation11 + $0x130] sm:$0xff]
        %v2611 = vld [vmem:[#allocation11 + $0x138] sm:$0xff]
        %v2612 = vld [vmem:[#allocation11 + $0x140] sm:$0xff]
        %v2613 = vld [vmem:[#allocation11 + $0x148] sm:$0xff]
        %v2614 = vld [vmem:[#allocation11 + $0x150] sm:$0xff]
        %v2615 = vld [vmem:[#allocation11 + $0x158] sm:$0xff]
        %v2616 = vld [vmem:[#allocation11 + $0x160] sm:$0xff]
        %v2617 = vld [vmem:[#allocation11 + $0x168] sm:$0xff]
        %v2618 = vld [vmem:[#allocation11 + $0x170] sm:$0xff]
        %v2619 = vld [vmem:[#allocation11 + $0x178] sm:$0xff]
        %v2620 = vld [vmem:[#allocation11 + $0x180] sm:$0xff]
        %v2621 = vld [vmem:[#allocation11 + $0x188] sm:$0xff]
        %v2622 = vld [vmem:[#allocation11 + $0x190] sm:$0xff]
        %v2623 = vld [vmem:[#allocation11 + $0x198] sm:$0xff]
        %v2624 = vld [vmem:[#allocation11 + $0x1a0] sm:$0xff]
        %v2625 = vld [vmem:[#allocation11 + $0x1a8] sm:$0xff]
        %v2626 = vld [vmem:[#allocation11 + $0x1b0] sm:$0xff]
        %v2627 = vld [vmem:[#allocation11 + $0x1b8] sm:$0xff]
        %v2628 = vld [vmem:[#allocation11 + $0x1c0] sm:$0xff]
        %v2629 = vld [vmem:[#allocation11 + $0x1c8] sm:$0xff]
        %v2630 = vld [vmem:[#allocation11 + $0x1d0] sm:$0xff]
        %v2631 = vld [vmem:[#allocation11 + $0x1d8] sm:$0xff]
        %v2632 = vld [vmem:[#allocation11 + $0x1e0] sm:$0xff]
        %v2633 = vld [vmem:[#allocation11 + $0x1e8] sm:$0xff]
        %v2634 = vld [vmem:[#allocation11 + $0x1f0] sm:$0xff]
        %v2635 = vld [vmem:[#allocation11 + $0x1f8] sm:$0xff]
        %2636 = vmatprep.subr.mxu0 %v2573
        %2637 = vmatpush1.msra.mxu0 %v2572
        %2638 = vmatprep.subr.mxu0 %v2577
        %2639 = vmatpush1.msra.mxu0 %v2576
        %2640 = vmatprep.subr.mxu0 %v2581
        %2641 = vmatpush1.msra.mxu0 %v2580
        %2642 = vmatprep.subr.mxu0 %v2585
        %2643 = vmatpush1.msra.mxu0 %v2584
        %2644 = vmatprep.subr.mxu0 %v2589
        %2645 = vmatpush1.msra.mxu0 %v2588
        %2646 = vmatprep.subr.mxu0 %v2593
        %2647 = vmatpush1.msra.mxu0 %v2592
        %2648 = vmatprep.subr.mxu0 %v2597
        %2649 = vmatpush1.msra.mxu0 %v2596
        %2650 = vmatprep.subr.mxu0 %v2601
        %2651 = vmatpush1.msra.mxu0 %v2600
        %2652 = vmatprep.subr.mxu0 %v2605
        %2653 = vmatpush1.msra.mxu0 %v2604
        %2654 = vmatprep.subr.mxu0 %v2609
        %2655 = vmatpush1.msra.mxu0 %v2608
        %2656 = vmatprep.subr.mxu0 %v2613
        %2657 = vmatpush1.msra.mxu0 %v2612
        %2658 = vmatprep.subr.mxu0 %v2617
        %2659 = vmatpush1.msra.mxu0 %v2616
        %2660 = vmatprep.subr.mxu0 %v2621
        %2661 = vmatpush1.msra.mxu0 %v2620
        %2662 = vmatprep.subr.mxu0 %v2625
        %2663 = vmatpush1.msra.mxu0 %v2624
        %2664 = vmatprep.subr.mxu0 %v2629
        %2665 = vmatpush1.msra.mxu0 %v2628
        %2666 = vmatprep.subr.mxu0 %v2633
        %2667 = vmatpush1.msra.mxu0 %v2632
        %2668 = vmatprep.subr.mxu0 0.0
        %2669 = vmatpush1.msra.mxu0 0.0
        %2670 = vmatprep.subr.mxu0 0.0
        %2671 = vmatpush1.msra.mxu0 0.0
        %2672 = vmatprep.subr.mxu0 0.0
        %2673 = vmatpush1.msra.mxu0 0.0
        %2674 = vmatprep.subr.mxu0 0.0
        %2675 = vmatpush1.msra.mxu0 0.0
        %2676 = vmatprep.subr.mxu0 0.0
        %2677 = vmatpush1.msra.mxu0 0.0
        %2678 = vmatprep.subr.mxu0 0.0
        %2679 = vmatpush1.msra.mxu0 0.0
        %2680 = vmatprep.subr.mxu0 0.0
        %2681 = vmatpush1.msra.mxu0 0.0
        %2682 = vmatprep.subr.mxu0 0.0
        %2683 = vmatpush1.msra.mxu0 0.0
        %2684 = vmatprep.subr.mxu0 0.0
        %2685 = vmatpush1.msra.mxu0 0.0
        %2686 = vmatprep.subr.mxu0 0.0
        %2687 = vmatpush1.msra.mxu0 0.0
        %2688 = vmatprep.subr.mxu0 0.0
        %2689 = vmatpush1.msra.mxu0 0.0
        %2690 = vmatprep.subr.mxu0 0.0
        %2691 = vmatpush1.msra.mxu0 0.0
        %2692 = vmatprep.subr.mxu0 0.0
        %2693 = vmatpush1.msra.mxu0 0.0
        %2694 = vmatprep.subr.mxu0 0.0
        %2695 = vmatpush1.msra.mxu0 0.0
        %2696 = vmatprep.subr.mxu0 0.0
        %2697 = vmatpush1.msra.mxu0 0.0
        %2698 = vmatprep.subr.mxu0 0.0
        %2699 = vmatpush1.msra.mxu0 0.0
        %2700 = vmatprep.mubr.f32.mxu0 0.0
        %2701 = vmatmul.mubr.f32.gmra.mrb[0].mxu0 %v2571
        %v2702 = vpop.f32.mrb[0].mxu0
        %v2703 = vadd.f32 0.0, %v2702
        %v2704 = vpop.f32.mrb[0].mxu0
        %v2705 = vadd.f32 0.0, %v2704
        %2706 = vdwg.mxu0
        %2707 = vmatprep.subr.mxu0 %v2575
        %2708 = vmatpush1.msra.mxu0 %v2574
        %2709 = vmatprep.subr.mxu0 %v2579
        %2710 = vmatpush1.msra.mxu0 %v2578
        %2711 = vmatprep.subr.mxu0 %v2583
        %2712 = vmatpush1.msra.mxu0 %v2582
        %2713 = vmatprep.subr.mxu0 %v2587
        %2714 = vmatpush1.msra.mxu0 %v2586
        %2715 = vmatprep.subr.mxu0 %v2591
        %2716 = vmatpush1.msra.mxu0 %v2590
        %2717 = vmatprep.subr.mxu0 %v2595
        %2718 = vmatpush1.msra.mxu0 %v2594
        %2719 = vmatprep.subr.mxu0 %v2599
        %2720 = vmatpush1.msra.mxu0 %v2598
        %2721 = vmatprep.subr.mxu0 %v2603
        %2722 = vmatpush1.msra.mxu0 %v2602
        %2723 = vmatprep.subr.mxu0 %v2607
        %2724 = vmatpush1.msra.mxu0 %v2606
        %2725 = vmatprep.subr.mxu0 %v2611
        %2726 = vmatpush1.msra.mxu0 %v2610
        %2727 = vmatprep.subr.mxu0 %v2615
        %2728 = vmatpush1.msra.mxu0 %v2614
        %2729 = vmatprep.subr.mxu0 %v2619
        %2730 = vmatpush1.msra.mxu0 %v2618
        %2731 = vmatprep.subr.mxu0 %v2623
        %2732 = vmatpush1.msra.mxu0 %v2622
        %2733 = vmatprep.subr.mxu0 %v2627
        %2734 = vmatpush1.msra.mxu0 %v2626
        %2735 = vmatprep.subr.mxu0 %v2631
        %2736 = vmatpush1.msra.mxu0 %v2630
        %2737 = vmatprep.subr.mxu0 %v2635
        %2738 = vmatpush1.msra.mxu0 %v2634
        %2739 = vmatprep.subr.mxu0 0.0
        %2740 = vmatpush1.msra.mxu0 0.0
        %2741 = vmatprep.subr.mxu0 0.0
        %2742 = vmatpush1.msra.mxu0 0.0
        %2743 = vmatprep.subr.mxu0 0.0
        %2744 = vmatpush1.msra.mxu0 0.0
        %2745 = vmatprep.subr.mxu0 0.0
        %2746 = vmatpush1.msra.mxu0 0.0
        %2747 = vmatprep.subr.mxu0 0.0
        %2748 = vmatpush1.msra.mxu0 0.0
        %2749 = vmatprep.subr.mxu0 0.0
        %2750 = vmatpush1.msra.mxu0 0.0
        %2751 = vmatprep.subr.mxu0 0.0
        %2752 = vmatpush1.msra.mxu0 0.0
        %2753 = vmatprep.subr.mxu0 0.0
        %2754 = vmatpush1.msra.mxu0 0.0
        %2755 = vmatprep.subr.mxu0 0.0
        %2756 = vmatpush1.msra.mxu0 0.0
        %2757 = vmatprep.subr.mxu0 0.0
        %2758 = vmatpush1.msra.mxu0 0.0
        %2759 = vmatprep.subr.mxu0 0.0
        %2760 = vmatpush1.msra.mxu0 0.0
        %2761 = vmatprep.subr.mxu0 0.0
        %2762 = vmatpush1.msra.mxu0 0.0
        %2763 = vmatprep.subr.mxu0 0.0
        %2764 = vmatpush1.msra.mxu0 0.0
        %2765 = vmatprep.subr.mxu0 0.0
        %2766 = vmatpush1.msra.mxu0 0.0
        %2767 = vmatprep.subr.mxu0 0.0
        %2768 = vmatpush1.msra.mxu0 0.0
        %2769 = vmatprep.subr.mxu0 0.0
        %2770 = vmatpush1.msra.mxu0 0.0
        %2771 = vmatprep.mubr.f32.mxu0 0.0
        %2772 = vmatmul.mubr.f32.gmra.mrb[0].mxu0 %v2571
        %v2773 = vpop.f32.mrb[0].mxu0
        %v2774 = vadd.f32 0.0, %v2773
        %v2775 = vpop.f32.mrb[0].mxu0
        %v2776 = vadd.f32 0.0, %v2775
        %2777 = vdwg.mxu0
        %v2778 = vadd.f32 %v2567, %v2703
        %v2779 = vadd.f32 %v2568, %v2705
        %v2780 = vadd.f32 %v2569, %v2774
        %v2781 = vadd.f32 %v2570, %v2776
        %s2782 = smul.u32 4, 4
        %s2783 = smul.addr %s2782, 8
        %s2784 = scalar_lea.vmem [#allocation3], %s2783
        %v2785 = vld [vmem:[%s2784] sm:$0xff]
        %v2786 = vld [vmem:[%s2784 + $0x8] sm:$0xff]
        %v2787 = vld [vmem:[%s2784 + $0x10] sm:$0xff]
        %v2788 = vld [vmem:[%s2784 + $0x18] sm:$0xff]
        %v2789 = vld [vmem:[#allocation6] sm:$0xff]
        %v2790 = vld [vmem:[#allocation13] sm:$0xff]
        %v2791 = vld [vmem:[#allocation13 + $0x8] sm:$0xff]
        %v2792 = vld [vmem:[#allocation13 + $0x10] sm:$0xff]
        %v2793 = vld [vmem:[#allocation13 + $0x18] sm:$0xff]
        %v2794 = vld [vmem:[#allocation13 + $0x20] sm:$0xff]
        %v2795 = vld [vmem:[#allocation13 + $0x28] sm:$0xff]
        %v2796 = vld [vmem:[#allocation13 + $0x30] sm:$0xff]
        %v2797 = vld [vmem:[#allocation13 + $0x38] sm:$0xff]
        %v2798 = vld [vmem:[#allocation13 + $0x40] sm:$0xff]
        %v2799 = vld [vmem:[#allocation13 + $0x48] sm:$0xff]
        %v2800 = vld [vmem:[#allocation13 + $0x50] sm:$0xff]
        %v2801 = vld [vmem:[#allocation13 + $0x58] sm:$0xff]
        %v2802 = vld [vmem:[#allocation13 + $0x60] sm:$0xff]
        %v2803 = vld [vmem:[#allocation13 + $0x68] sm:$0xff]
        %v2804 = vld [vmem:[#allocation13 + $0x70] sm:$0xff]
        %v2805 = vld [vmem:[#allocation13 + $0x78] sm:$0xff]
        %v2806 = vld [vmem:[#allocation13 + $0x80] sm:$0xff]
        %v2807 = vld [vmem:[#allocation13 + $0x88] sm:$0xff]
        %v2808 = vld [vmem:[#allocation13 + $0x90] sm:$0xff]
        %v2809 = vld [vmem:[#allocation13 + $0x98] sm:$0xff]
        %v2810 = vld [vmem:[#allocation13 + $0xa0] sm:$0xff]
        %v2811 = vld [vmem:[#allocation13 + $0xa8] sm:$0xff]
        %v2812 = vld [vmem:[#allocation13 + $0xb0] sm:$0xff]
        %v2813 = vld [vmem:[#allocation13 + $0xb8] sm:$0xff]
        %v2814 = vld [vmem:[#allocation13 + $0xc0] sm:$0xff]
        %v2815 = vld [vmem:[#allocation13 + $0xc8] sm:$0xff]
        %v2816 = vld [vmem:[#allocation13 + $0xd0] sm:$0xff]
        %v2817 = vld [vmem:[#allocation13 + $0xd8] sm:$0xff]
        %v2818 = vld [vmem:[#allocation13 + $0xe0] sm:$0xff]
        %v2819 = vld [vmem:[#allocation13 + $0xe8] sm:$0xff]
        %v2820 = vld [vmem:[#allocation13 + $0xf0] sm:$0xff]
        %v2821 = vld [vmem:[#allocation13 + $0xf8] sm:$0xff]
        %v2822 = vld [vmem:[#allocation13 + $0x100] sm:$0xff]
        %v2823 = vld [vmem:[#allocation13 + $0x108] sm:$0xff]
        %v2824 = vld [vmem:[#allocation13 + $0x110] sm:$0xff]
        %v2825 = vld [vmem:[#allocation13 + $0x118] sm:$0xff]
        %v2826 = vld [vmem:[#allocation13 + $0x120] sm:$0xff]
        %v2827 = vld [vmem:[#allocation13 + $0x128] sm:$0xff]
        %v2828 = vld [vmem:[#allocation13 + $0x130] sm:$0xff]
        %v2829 = vld [vmem:[#allocation13 + $0x138] sm:$0xff]
        %v2830 = vld [vmem:[#allocation13 + $0x140] sm:$0xff]
        %v2831 = vld [vmem:[#allocation13 + $0x148] sm:$0xff]
        %v2832 = vld [vmem:[#allocation13 + $0x150] sm:$0xff]
        %v2833 = vld [vmem:[#allocation13 + $0x158] sm:$0xff]
        %v2834 = vld [vmem:[#allocation13 + $0x160] sm:$0xff]
        %v2835 = vld [vmem:[#allocation13 + $0x168] sm:$0xff]
        %v2836 = vld [vmem:[#allocation13 + $0x170] sm:$0xff]
        %v2837 = vld [vmem:[#allocation13 + $0x178] sm:$0xff]
        %v2838 = vld [vmem:[#allocation13 + $0x180] sm:$0xff]
        %v2839 = vld [vmem:[#allocation13 + $0x188] sm:$0xff]
        %v2840 = vld [vmem:[#allocation13 + $0x190] sm:$0xff]
        %v2841 = vld [vmem:[#allocation13 + $0x198] sm:$0xff]
        %v2842 = vld [vmem:[#allocation13 + $0x1a0] sm:$0xff]
        %v2843 = vld [vmem:[#allocation13 + $0x1a8] sm:$0xff]
        %v2844 = vld [vmem:[#allocation13 + $0x1b0] sm:$0xff]
        %v2845 = vld [vmem:[#allocation13 + $0x1b8] sm:$0xff]
        %v2846 = vld [vmem:[#allocation13 + $0x1c0] sm:$0xff]
        %v2847 = vld [vmem:[#allocation13 + $0x1c8] sm:$0xff]
        %v2848 = vld [vmem:[#allocation13 + $0x1d0] sm:$0xff]
        %v2849 = vld [vmem:[#allocation13 + $0x1d8] sm:$0xff]
        %v2850 = vld [vmem:[#allocation13 + $0x1e0] sm:$0xff]
        %v2851 = vld [vmem:[#allocation13 + $0x1e8] sm:$0xff]
        %v2852 = vld [vmem:[#allocation13 + $0x1f0] sm:$0xff]
        %v2853 = vld [vmem:[#allocation13 + $0x1f8] sm:$0xff]
        %2854 = vmatprep.subr.mxu0 %v2791
        %2855 = vmatpush1.msra.mxu0 %v2790
        %2856 = vmatprep.subr.mxu0 %v2795
        %2857 = vmatpush1.msra.mxu0 %v2794
        %2858 = vmatprep.subr.mxu0 %v2799
        %2859 = vmatpush1.msra.mxu0 %v2798
        %2860 = vmatprep.subr.mxu0 %v2803
        %2861 = vmatpush1.msra.mxu0 %v2802
        %2862 = vmatprep.subr.mxu0 %v2807
        %2863 = vmatpush1.msra.mxu0 %v2806
        %2864 = vmatprep.subr.mxu0 %v2811
        %2865 = vmatpush1.msra.mxu0 %v2810
        %2866 = vmatprep.subr.mxu0 %v2815
        %2867 = vmatpush1.msra.mxu0 %v2814
        %2868 = vmatprep.subr.mxu0 %v2819
        %2869 = vmatpush1.msra.mxu0 %v2818
        %2870 = vmatprep.subr.mxu0 %v2823
        %2871 = vmatpush1.msra.mxu0 %v2822
        %2872 = vmatprep.subr.mxu0 %v2827
        %2873 = vmatpush1.msra.mxu0 %v2826
        %2874 = vmatprep.subr.mxu0 %v2831
        %2875 = vmatpush1.msra.mxu0 %v2830
        %2876 = vmatprep.subr.mxu0 %v2835
        %2877 = vmatpush1.msra.mxu0 %v2834
        %2878 = vmatprep.subr.mxu0 %v2839
        %2879 = vmatpush1.msra.mxu0 %v2838
        %2880 = vmatprep.subr.mxu0 %v2843
        %2881 = vmatpush1.msra.mxu0 %v2842
        %2882 = vmatprep.subr.mxu0 %v2847
        %2883 = vmatpush1.msra.mxu0 %v2846
        %2884 = vmatprep.subr.mxu0 %v2851
        %2885 = vmatpush1.msra.mxu0 %v2850
        %2886 = vmatprep.subr.mxu0 0.0
        %2887 = vmatpush1.msra.mxu0 0.0
        %2888 = vmatprep.subr.mxu0 0.0
        %2889 = vmatpush1.msra.mxu0 0.0
        %2890 = vmatprep.subr.mxu0 0.0
        %2891 = vmatpush1.msra.mxu0 0.0
        %2892 = vmatprep.subr.mxu0 0.0
        %2893 = vmatpush1.msra.mxu0 0.0
        %2894 = vmatprep.subr.mxu0 0.0
        %2895 = vmatpush1.msra.mxu0 0.0
        %2896 = vmatprep.subr.mxu0 0.0
        %2897 = vmatpush1.msra.mxu0 0.0
        %2898 = vmatprep.subr.mxu0 0.0
        %2899 = vmatpush1.msra.mxu0 0.0
        %2900 = vmatprep.subr.mxu0 0.0
        %2901 = vmatpush1.msra.mxu0 0.0
        %2902 = vmatprep.subr.mxu0 0.0
        %2903 = vmatpush1.msra.mxu0 0.0
        %2904 = vmatprep.subr.mxu0 0.0
        %2905 = vmatpush1.msra.mxu0 0.0
        %2906 = vmatprep.subr.mxu0 0.0
        %2907 = vmatpush1.msra.mxu0 0.0
        %2908 = vmatprep.subr.mxu0 0.0
        %2909 = vmatpush1.msra.mxu0 0.0
        %2910 = vmatprep.subr.mxu0 0.0
        %2911 = vmatpush1.msra.mxu0 0.0
        %2912 = vmatprep.subr.mxu0 0.0
        %2913 = vmatpush1.msra.mxu0 0.0
        %2914 = vmatprep.subr.mxu0 0.0
        %2915 = vmatpush1.msra.mxu0 0.0
        %2916 = vmatprep.subr.mxu0 0.0
        %2917 = vmatpush1.msra.mxu0 0.0
        %2918 = vmatprep.mubr.f32.mxu0 0.0
        %2919 = vmatmul.mubr.f32.gmra.mrb[0].mxu0 %v2789
        %v2920 = vpop.f32.mrb[0].mxu0
        %v2921 = vadd.f32 0.0, %v2920
        %v2922 = vpop.f32.mrb[0].mxu0
        %v2923 = vadd.f32 0.0, %v2922
        %2924 = vdwg.mxu0
        %2925 = vmatprep.subr.mxu0 %v2793
        %2926 = vmatpush1.msra.mxu0 %v2792
        %2927 = vmatprep.subr.mxu0 %v2797
        %2928 = vmatpush1.msra.mxu0 %v2796
        %2929 = vmatprep.subr.mxu0 %v2801
        %2930 = vmatpush1.msra.mxu0 %v2800
        %2931 = vmatprep.subr.mxu0 %v2805
        %2932 = vmatpush1.msra.mxu0 %v2804
        %2933 = vmatprep.subr.mxu0 %v2809
        %2934 = vmatpush1.msra.mxu0 %v2808
        %2935 = vmatprep.subr.mxu0 %v2813
        %2936 = vmatpush1.msra.mxu0 %v2812
        %2937 = vmatprep.subr.mxu0 %v2817
        %2938 = vmatpush1.msra.mxu0 %v2816
        %2939 = vmatprep.subr.mxu0 %v2821
        %2940 = vmatpush1.msra.mxu0 %v2820
        %2941 = vmatprep.subr.mxu0 %v2825
        %2942 = vmatpush1.msra.mxu0 %v2824
        %2943 = vmatprep.subr.mxu0 %v2829
        %2944 = vmatpush1.msra.mxu0 %v2828
        %2945 = vmatprep.subr.mxu0 %v2833
        %2946 = vmatpush1.msra.mxu0 %v2832
        %2947 = vmatprep.subr.mxu0 %v2837
        %2948 = vmatpush1.msra.mxu0 %v2836
        %2949 = vmatprep.subr.mxu0 %v2841
        %2950 = vmatpush1.msra.mxu0 %v2840
        %2951 = vmatprep.subr.mxu0 %v2845
        %2952 = vmatpush1.msra.mxu0 %v2844
        %2953 = vmatprep.subr.mxu0 %v2849
        %2954 = vmatpush1.msra.mxu0 %v2848
        %2955 = vmatprep.subr.mxu0 %v2853
        %2956 = vmatpush1.msra.mxu0 %v2852
        %2957 = vmatprep.subr.mxu0 0.0
        %2958 = vmatpush1.msra.mxu0 0.0
        %2959 = vmatprep.subr.mxu0 0.0
        %2960 = vmatpush1.msra.mxu0 0.0
        %2961 = vmatprep.subr.mxu0 0.0
        %2962 = vmatpush1.msra.mxu0 0.0
        %2963 = vmatprep.subr.mxu0 0.0
        %2964 = vmatpush1.msra.mxu0 0.0
        %2965 = vmatprep.subr.mxu0 0.0
        %2966 = vmatpush1.msra.mxu0 0.0
        %2967 = vmatprep.subr.mxu0 0.0
        %2968 = vmatpush1.msra.mxu0 0.0
        %2969 = vmatprep.subr.mxu0 0.0
        %2970 = vmatpush1.msra.mxu0 0.0
        %2971 = vmatprep.subr.mxu0 0.0
        %2972 = vmatpush1.msra.mxu0 0.0
        %2973 = vmatprep.subr.mxu0 0.0
        %2974 = vmatpush1.msra.mxu0 0.0
        %2975 = vmatprep.subr.mxu0 0.0
        %2976 = vmatpush1.msra.mxu0 0.0
        %2977 = vmatprep.subr.mxu0 0.0
        %2978 = vmatpush1.msra.mxu0 0.0
        %2979 = vmatprep.subr.mxu0 0.0
        %2980 = vmatpush1.msra.mxu0 0.0
        %2981 = vmatprep.subr.mxu0 0.0
        %2982 = vmatpush1.msra.mxu0 0.0
        %2983 = vmatprep.subr.mxu0 0.0
        %2984 = vmatpush1.msra.mxu0 0.0
        %2985 = vmatprep.subr.mxu0 0.0
        %2986 = vmatpush1.msra.mxu0 0.0
        %2987 = vmatprep.subr.mxu0 0.0
        %2988 = vmatpush1.msra.mxu0 0.0
        %2989 = vmatprep.mubr.f32.mxu0 0.0
        %2990 = vmatmul.mubr.f32.gmra.mrb[0].mxu0 %v2789
        %v2991 = vpop.f32.mrb[0].mxu0
        %v2992 = vadd.f32 0.0, %v2991
        %v2993 = vpop.f32.mrb[0].mxu0
        %v2994 = vadd.f32 0.0, %v2993
        %2995 = vdwg.mxu0
        %v2996 = vadd.f32 %v2785, %v2921
        %v2997 = vadd.f32 %v2786, %v2923
        %v2998 = vadd.f32 %v2787, %v2992
        %v2999 = vadd.f32 %v2788, %v2994
        %v3000 = vld [vmem:[#allocation5] sm:$0xff]
        %v3001 = vmul.f32 %v2778, 0.5
        %v3002 = vtanh.pop %v3001
        %v3003 = vmul.f32 %v3002, 0.5
        %v3004 = vadd.f32 %v3003, 0.5
        %v3005 = vmul.f32 %v2779, 0.5
        %v3006 = vtanh.pop %v3005
        %v3007 = vmul.f32 %v3006, 0.5
        %v3008 = vadd.f32 %v3007, 0.5
        %v3009 = vtanh.pop %v2780
        %v3010 = vmul.f32 %v2781, 0.5
        %v3011 = vtanh.pop %v3010
        %v3012 = vmul.f32 %v3011, 0.5
        %v3013 = vadd.f32 %v3012, 0.5
        %v3014 = vmul.f32 %v3008, %v3000
        %v3015 = vmul.f32 %v3004, %v3009
        %v3016 = vadd.f32 %v3014, %v3015
        %v3017 = vtanh.pop %v3016
        %v3018 = vmul.f32 %v3013, %v3017
        %v3019 = vld [vmem:[#allocation7] sm:$0xff]
        %v3020 = vmul.f32 %v2996, 0.5
        %v3021 = vtanh.pop %v3020
        %v3022 = vmul.f32 %v3021, 0.5
        %v3023 = vadd.f32 %v3022, 0.5
        %v3024 = vmul.f32 %v2997, 0.5
        %v3025 = vtanh.pop %v3024
        %v3026 = vmul.f32 %v3025, 0.5
        %v3027 = vadd.f32 %v3026, 0.5
        %v3028 = vtanh.pop %v2998
        %v3029 = vmul.f32 %v2999, 0.5
        %v3030 = vtanh.pop %v3029
        %v3031 = vmul.f32 %v3030, 0.5
        %v3032 = vadd.f32 %v3031, 0.5
        %v3033 = vmul.f32 %v3027, %v3019
        %v3034 = vmul.f32 %v3023, %v3028
        %v3035 = vadd.f32 %v3033, %v3034
        %v3036 = vtanh.pop %v3035
        %v3037 = vmul.f32 %v3032, %v3036
        %3038 = vst [vmem:[#allocation4] sm:$0xff] %v3018
        %3039 = vst [vmem:[#allocation5] sm:$0xff] %v3016
        %s3040 = scalar_lea.vmem %s397, 24 [#allocation14]
        %3041 = vst [vmem:[%s3040] sm:$0xff] %v3018
        %s3042 = scalar_lea.vmem %s404, 32 [#allocation15]
        %3043 = vst [vmem:[%s3042] sm:$0xff] %v3037
        %3044 = vst [vmem:[#allocation6] sm:$0xff] %v3037
        %3045 = vst [vmem:[#allocation7] sm:$0xff] %v3035
        %s3046 = smul.addr %s2782, 8
        %s3047 = scalar_lea.vmem [#allocation2], %s3046
        %v3048 = vld [vmem:[%s3047] sm:$0xff]
        %v3049 = vld [vmem:[%s3047 + $0x8] sm:$0xff]
        %v3050 = vld [vmem:[%s3047 + $0x10] sm:$0xff]
        %v3051 = vld [vmem:[%s3047 + $0x18] sm:$0xff]
        %v3052 = vld [vmem:[#allocation4] sm:$0xff]
        %v3053 = vld [vmem:[#allocation11] sm:$0xff]
        %v3054 = vld [vmem:[#allocation11 + $0x8] sm:$0xff]
        %v3055 = vld [vmem:[#allocation11 + $0x10] sm:$0xff]
        %v3056 = vld [vmem:[#allocation11 + $0x18] sm:$0xff]
        %v3057 = vld [vmem:[#allocation11 + $0x20] sm:$0xff]
        %v3058 = vld [vmem:[#allocation11 + $0x28] sm:$0xff]
        %v3059 = vld [vmem:[#allocation11 + $0x30] sm:$0xff]
        %v3060 = vld [vmem:[#allocation11 + $0x38] sm:$0xff]
        %v3061 = vld [vmem:[#allocation11 + $0x40] sm:$0xff]
        %v3062 = vld [vmem:[#allocation11 + $0x48] sm:$0xff]
        %v3063 = vld [vmem:[#allocation11 + $0x50] sm:$0xff]
        %v3064 = vld [vmem:[#allocation11 + $0x58] sm:$0xff]
        %v3065 = vld [vmem:[#allocation11 + $0x60] sm:$0xff]
        %v3066 = vld [vmem:[#allocation11 + $0x68] sm:$0xff]
        %v3067 = vld [vmem:[#allocation11 + $0x70] sm:$0xff]
        %v3068 = vld [vmem:[#allocation11 + $0x78] sm:$0xff]
        %v3069 = vld [vmem:[#allocation11 + $0x80] sm:$0xff]
        %v3070 = vld [vmem:[#allocation11 + $0x88] sm:$0xff]
        %v3071 = vld [vmem:[#allocation11 + $0x90] sm:$0xff]
        %v3072 = vld [vmem:[#allocation11 + $0x98] sm:$0xff]
        %v3073 = vld [vmem:[#allocation11 + $0xa0] sm:$0xff]
        %v3074 = vld [vmem:[#allocation11 + $0xa8] sm:$0xff]
        %v3075 = vld [vmem:[#allocation11 + $0xb0] sm:$0xff]
        %v3076 = vld [vmem:[#allocation11 + $0xb8] sm:$0xff]
        %v3077 = vld [vmem:[#allocation11 + $0xc0] sm:$0xff]
        %v3078 = vld [vmem:[#allocation11 + $0xc8] sm:$0xff]
        %v3079 = vld [vmem:[#allocation11 + $0xd0] sm:$0xff]
        %v3080 = vld [vmem:[#allocation11 + $0xd8] sm:$0xff]
        %v3081 = vld [vmem:[#allocation11 + $0xe0] sm:$0xff]
        %v3082 = vld [vmem:[#allocation11 + $0xe8] sm:$0xff]
        %v3083 = vld [vmem:[#allocation11 + $0xf0] sm:$0xff]
        %v3084 = vld [vmem:[#allocation11 + $0xf8] sm:$0xff]
        %v3085 = vld [vmem:[#allocation11 + $0x100] sm:$0xff]
        %v3086 = vld [vmem:[#allocation11 + $0x108] sm:$0xff]
        %v3087 = vld [vmem:[#allocation11 + $0x110] sm:$0xff]
        %v3088 = vld [vmem:[#allocation11 + $0x118] sm:$0xff]
        %v3089 = vld [vmem:[#allocation11 + $0x120] sm:$0xff]
        %v3090 = vld [vmem:[#allocation11 + $0x128] sm:$0xff]
        %v3091 = vld [vmem:[#allocation11 + $0x130] sm:$0xff]
        %v3092 = vld [vmem:[#allocation11 + $0x138] sm:$0xff]
        %v3093 = vld [vmem:[#allocation11 + $0x140] sm:$0xff]
        %v3094 = vld [vmem:[#allocation11 + $0x148] sm:$0xff]
        %v3095 = vld [vmem:[#allocation11 + $0x150] sm:$0xff]
        %v3096 = vld [vmem:[#allocation11 + $0x158] sm:$0xff]
        %v3097 = vld [vmem:[#allocation11 + $0x160] sm:$0xff]
        %v3098 = vld [vmem:[#allocation11 + $0x168] sm:$0xff]
        %v3099 = vld [vmem:[#allocation11 + $0x170] sm:$0xff]
        %v3100 = vld [vmem:[#allocation11 + $0x178] sm:$0xff]
        %v3101 = vld [vmem:[#allocation11 + $0x180] sm:$0xff]
        %v3102 = vld [vmem:[#allocation11 + $0x188] sm:$0xff]
        %v3103 = vld [vmem:[#allocation11 + $0x190] sm:$0xff]
        %v3104 = vld [vmem:[#allocation11 + $0x198] sm:$0xff]
        %v3105 = vld [vmem:[#allocation11 + $0x1a0] sm:$0xff]
        %v3106 = vld [vmem:[#allocation11 + $0x1a8] sm:$0xff]
        %v3107 = vld [vmem:[#allocation11 + $0x1b0] sm:$0xff]
        %v3108 = vld [vmem:[#allocation11 + $0x1b8] sm:$0xff]
        %v3109 = vld [vmem:[#allocation11 + $0x1c0] sm:$0xff]
        %v3110 = vld [vmem:[#allocation11 + $0x1c8] sm:$0xff]
        %v3111 = vld [vmem:[#allocation11 + $0x1d0] sm:$0xff]
        %v3112 = vld [vmem:[#allocation11 + $0x1d8] sm:$0xff]
        %v3113 = vld [vmem:[#allocation11 + $0x1e0] sm:$0xff]
        %v3114 = vld [vmem:[#allocation11 + $0x1e8] sm:$0xff]
        %v3115 = vld [vmem:[#allocation11 + $0x1f0] sm:$0xff]
        %v3116 = vld [vmem:[#allocation11 + $0x1f8] sm:$0xff]
        %3117 = vmatprep.subr.mxu0 %v3054
        %3118 = vmatpush1.msra.mxu0 %v3053
        %3119 = vmatprep.subr.mxu0 %v3058
        %3120 = vmatpush1.msra.mxu0 %v3057
        %3121 = vmatprep.subr.mxu0 %v3062
        %3122 = vmatpush1.msra.mxu0 %v3061
        %3123 = vmatprep.subr.mxu0 %v3066
        %3124 = vmatpush1.msra.mxu0 %v3065
        %3125 = vmatprep.subr.mxu0 %v3070
        %3126 = vmatpush1.msra.mxu0 %v3069
        %3127 = vmatprep.subr.mxu0 %v3074
        %3128 = vmatpush1.msra.mxu0 %v3073
        %3129 = vmatprep.subr.mxu0 %v3078
        %3130 = vmatpush1.msra.mxu0 %v3077
        %3131 = vmatprep.subr.mxu0 %v3082
        %3132 = vmatpush1.msra.mxu0 %v3081
        %3133 = vmatprep.subr.mxu0 %v3086
        %3134 = vmatpush1.msra.mxu0 %v3085
        %3135 = vmatprep.subr.mxu0 %v3090
        %3136 = vmatpush1.msra.mxu0 %v3089
        %3137 = vmatprep.subr.mxu0 %v3094
        %3138 = vmatpush1.msra.mxu0 %v3093
        %3139 = vmatprep.subr.mxu0 %v3098
        %3140 = vmatpush1.msra.mxu0 %v3097
        %3141 = vmatprep.subr.mxu0 %v3102
        %3142 = vmatpush1.msra.mxu0 %v3101
        %3143 = vmatprep.subr.mxu0 %v3106
        %3144 = vmatpush1.msra.mxu0 %v3105
        %3145 = vmatprep.subr.mxu0 %v3110
        %3146 = vmatpush1.msra.mxu0 %v3109
        %3147 = vmatprep.subr.mxu0 %v3114
        %3148 = vmatpush1.msra.mxu0 %v3113
        %3149 = vmatprep.subr.mxu0 0.0
        %3150 = vmatpush1.msra.mxu0 0.0
        %3151 = vmatprep.subr.mxu0 0.0
        %3152 = vmatpush1.msra.mxu0 0.0
        %3153 = vmatprep.subr.mxu0 0.0
        %3154 = vmatpush1.msra.mxu0 0.0
        %3155 = vmatprep.subr.mxu0 0.0
        %3156 = vmatpush1.msra.mxu0 0.0
        %3157 = vmatprep.subr.mxu0 0.0
        %3158 = vmatpush1.msra.mxu0 0.0
        %3159 = vmatprep.subr.mxu0 0.0
        %3160 = vmatpush1.msra.mxu0 0.0
        %3161 = vmatprep.subr.mxu0 0.0
        %3162 = vmatpush1.msra.mxu0 0.0
        %3163 = vmatprep.subr.mxu0 0.0
        %3164 = vmatpush1.msra.mxu0 0.0
        %3165 = vmatprep.subr.mxu0 0.0
        %3166 = vmatpush1.msra.mxu0 0.0
        %3167 = vmatprep.subr.mxu0 0.0
        %3168 = vmatpush1.msra.mxu0 0.0
        %3169 = vmatprep.subr.mxu0 0.0
        %3170 = vmatpush1.msra.mxu0 0.0
        %3171 = vmatprep.subr.mxu0 0.0
        %3172 = vmatpush1.msra.mxu0 0.0
        %3173 = vmatprep.subr.mxu0 0.0
        %3174 = vmatpush1.msra.mxu0 0.0
        %3175 = vmatprep.subr.mxu0 0.0
        %3176 = vmatpush1.msra.mxu0 0.0
        %3177 = vmatprep.subr.mxu0 0.0
        %3178 = vmatpush1.msra.mxu0 0.0
        %3179 = vmatprep.subr.mxu0 0.0
        %3180 = vmatpush1.msra.mxu0 0.0
        %3181 = vmatprep.mubr.f32.mxu0 0.0
        %3182 = vmatmul.mubr.f32.gmra.mrb[0].mxu0 %v3052
        %v3183 = vpop.f32.mrb[0].mxu0
        %v3184 = vadd.f32 0.0, %v3183
        %v3185 = vpop.f32.mrb[0].mxu0
        %v3186 = vadd.f32 0.0, %v3185
        %3187 = vdwg.mxu0
        %3188 = vmatprep.subr.mxu0 %v3056
        %3189 = vmatpush1.msra.mxu0 %v3055
        %3190 = vmatprep.subr.mxu0 %v3060
        %3191 = vmatpush1.msra.mxu0 %v3059
        %3192 = vmatprep.subr.mxu0 %v3064
        %3193 = vmatpush1.msra.mxu0 %v3063
        %3194 = vmatprep.subr.mxu0 %v3068
        %3195 = vmatpush1.msra.mxu0 %v3067
        %3196 = vmatprep.subr.mxu0 %v3072
        %3197 = vmatpush1.msra.mxu0 %v3071
        %3198 = vmatprep.subr.mxu0 %v3076
        %3199 = vmatpush1.msra.mxu0 %v3075
        %3200 = vmatprep.subr.mxu0 %v3080
        %3201 = vmatpush1.msra.mxu0 %v3079
        %3202 = vmatprep.subr.mxu0 %v3084
        %3203 = vmatpush1.msra.mxu0 %v3083
        %3204 = vmatprep.subr.mxu0 %v3088
        %3205 = vmatpush1.msra.mxu0 %v3087
        %3206 = vmatprep.subr.mxu0 %v3092
        %3207 = vmatpush1.msra.mxu0 %v3091
        %3208 = vmatprep.subr.mxu0 %v3096
        %3209 = vmatpush1.msra.mxu0 %v3095
        %3210 = vmatprep.subr.mxu0 %v3100
        %3211 = vmatpush1.msra.mxu0 %v3099
        %3212 = vmatprep.subr.mxu0 %v3104
        %3213 = vmatpush1.msra.mxu0 %v3103
        %3214 = vmatprep.subr.mxu0 %v3108
        %3215 = vmatpush1.msra.mxu0 %v3107
        %3216 = vmatprep.subr.mxu0 %v3112
        %3217 = vmatpush1.msra.mxu0 %v3111
        %3218 = vmatprep.subr.mxu0 %v3116
        %3219 = vmatpush1.msra.mxu0 %v3115
        %3220 = vmatprep.subr.mxu0 0.0
        %3221 = vmatpush1.msra.mxu0 0.0
        %3222 = vmatprep.subr.mxu0 0.0
        %3223 = vmatpush1.msra.mxu0 0.0
        %3224 = vmatprep.subr.mxu0 0.0
        %3225 = vmatpush1.msra.mxu0 0.0
        %3226 = vmatprep.subr.mxu0 0.0
        %3227 = vmatpush1.msra.mxu0 0.0
        %3228 = vmatprep.subr.mxu0 0.0
        %3229 = vmatpush1.msra.mxu0 0.0
        %3230 = vmatprep.subr.mxu0 0.0
        %3231 = vmatpush1.msra.mxu0 0.0
        %3232 = vmatprep.subr.mxu0 0.0
        %3233 = vmatpush1.msra.mxu0 0.0
        %3234 = vmatprep.subr.mxu0 0.0
        %3235 = vmatpush1.msra.mxu0 0.0
        %3236 = vmatprep.subr.mxu0 0.0
        %3237 = vmatpush1.msra.mxu0 0.0
        %3238 = vmatprep.subr.mxu0 0.0
        %3239 = vmatpush1.msra.mxu0 0.0
        %3240 = vmatprep.subr.mxu0 0.0
        %3241 = vmatpush1.msra.mxu0 0.0
        %3242 = vmatprep.subr.mxu0 0.0
        %3243 = vmatpush1.msra.mxu0 0.0
        %3244 = vmatprep.subr.mxu0 0.0
        %3245 = vmatpush1.msra.mxu0 0.0
        %3246 = vmatprep.subr.mxu0 0.0
        %3247 = vmatpush1.msra.mxu0 0.0
        %3248 = vmatprep.subr.mxu0 0.0
        %3249 = vmatpush1.msra.mxu0 0.0
        %3250 = vmatprep.subr.mxu0 0.0
        %3251 = vmatpush1.msra.mxu0 0.0
        %3252 = vmatprep.mubr.f32.mxu0 0.0
        %3253 = vmatmul.mubr.f32.gmra.mrb[0].mxu0 %v3052
        %v3254 = vpop.f32.mrb[0].mxu0
        %v3255 = vadd.f32 0.0, %v3254
        %v3256 = vpop.f32.mrb[0].mxu0
        %v3257 = vadd.f32 0.0, %v3256
        %3258 = vdwg.mxu0
        %v3259 = vadd.f32 %v3048, %v3184
        %v3260 = vadd.f32 %v3049, %v3186
        %v3261 = vadd.f32 %v3050, %v3255
        %v3262 = vadd.f32 %v3051, %v3257
        %s3263 = smul.addr %s2564, 8
        %s3264 = scalar_lea.vmem [#allocation3], %s3263
        %v3265 = vld [vmem:[%s3264] sm:$0xff]
        %v3266 = vld [vmem:[%s3264 + $0x8] sm:$0xff]
        %v3267 = vld [vmem:[%s3264 + $0x10] sm:$0xff]
        %v3268 = vld [vmem:[%s3264 + $0x18] sm:$0xff]
        %v3269 = vld [vmem:[#allocation6] sm:$0xff]
        %v3270 = vld [vmem:[#allocation13] sm:$0xff]
        %v3271 = vld [vmem:[#allocation13 + $0x8] sm:$0xff]
        %v3272 = vld [vmem:[#allocation13 + $0x10] sm:$0xff]
        %v3273 = vld [vmem:[#allocation13 + $0x18] sm:$0xff]
        %v3274 = vld [vmem:[#allocation13 + $0x20] sm:$0xff]
        %v3275 = vld [vmem:[#allocation13 + $0x28] sm:$0xff]
        %v3276 = vld [vmem:[#allocation13 + $0x30] sm:$0xff]
        %v3277 = vld [vmem:[#allocation13 + $0x38] sm:$0xff]
        %v3278 = vld [vmem:[#allocation13 + $0x40] sm:$0xff]
        %v3279 = vld [vmem:[#allocation13 + $0x48] sm:$0xff]
        %v3280 = vld [vmem:[#allocation13 + $0x50] sm:$0xff]
        %v3281 = vld [vmem:[#allocation13 + $0x58] sm:$0xff]
        %v3282 = vld [vmem:[#allocation13 + $0x60] sm:$0xff]
        %v3283 = vld [vmem:[#allocation13 + $0x68] sm:$0xff]
        %v3284 = vld [vmem:[#allocation13 + $0x70] sm:$0xff]
        %v3285 = vld [vmem:[#allocation13 + $0x78] sm:$0xff]
        %v3286 = vld [vmem:[#allocation13 + $0x80] sm:$0xff]
        %v3287 = vld [vmem:[#allocation13 + $0x88] sm:$0xff]
        %v3288 = vld [vmem:[#allocation13 + $0x90] sm:$0xff]
        %v3289 = vld [vmem:[#allocation13 + $0x98] sm:$0xff]
        %v3290 = vld [vmem:[#allocation13 + $0xa0] sm:$0xff]
        %v3291 = vld [vmem:[#allocation13 + $0xa8] sm:$0xff]
        %v3292 = vld [vmem:[#allocation13 + $0xb0] sm:$0xff]
        %v3293 = vld [vmem:[#allocation13 + $0xb8] sm:$0xff]
        %v3294 = vld [vmem:[#allocation13 + $0xc0] sm:$0xff]
        %v3295 = vld [vmem:[#allocation13 + $0xc8] sm:$0xff]
        %v3296 = vld [vmem:[#allocation13 + $0xd0] sm:$0xff]
        %v3297 = vld [vmem:[#allocation13 + $0xd8] sm:$0xff]
        %v3298 = vld [vmem:[#allocation13 + $0xe0] sm:$0xff]
        %v3299 = vld [vmem:[#allocation13 + $0xe8] sm:$0xff]
        %v3300 = vld [vmem:[#allocation13 + $0xf0] sm:$0xff]
        %v3301 = vld [vmem:[#allocation13 + $0xf8] sm:$0xff]
        %v3302 = vld [vmem:[#allocation13 + $0x100] sm:$0xff]
        %v3303 = vld [vmem:[#allocation13 + $0x108] sm:$0xff]
        %v3304 = vld [vmem:[#allocation13 + $0x110] sm:$0xff]
        %v3305 = vld [vmem:[#allocation13 + $0x118] sm:$0xff]
        %v3306 = vld [vmem:[#allocation13 + $0x120] sm:$0xff]
        %v3307 = vld [vmem:[#allocation13 + $0x128] sm:$0xff]
        %v3308 = vld [vmem:[#allocation13 + $0x130] sm:$0xff]
        %v3309 = vld [vmem:[#allocation13 + $0x138] sm:$0xff]
        %v3310 = vld [vmem:[#allocation13 + $0x140] sm:$0xff]
        %v3311 = vld [vmem:[#allocation13 + $0x148] sm:$0xff]
        %v3312 = vld [vmem:[#allocation13 + $0x150] sm:$0xff]
        %v3313 = vld [vmem:[#allocation13 + $0x158] sm:$0xff]
        %v3314 = vld [vmem:[#allocation13 + $0x160] sm:$0xff]
        %v3315 = vld [vmem:[#allocation13 + $0x168] sm:$0xff]
        %v3316 = vld [vmem:[#allocation13 + $0x170] sm:$0xff]
        %v3317 = vld [vmem:[#allocation13 + $0x178] sm:$0xff]
        %v3318 = vld [vmem:[#allocation13 + $0x180] sm:$0xff]
        %v3319 = vld [vmem:[#allocation13 + $0x188] sm:$0xff]
        %v3320 = vld [vmem:[#allocation13 + $0x190] sm:$0xff]
        %v3321 = vld [vmem:[#allocation13 + $0x198] sm:$0xff]
        %v3322 = vld [vmem:[#allocation13 + $0x1a0] sm:$0xff]
        %v3323 = vld [vmem:[#allocation13 + $0x1a8] sm:$0xff]
        %v3324 = vld [vmem:[#allocation13 + $0x1b0] sm:$0xff]
        %v3325 = vld [vmem:[#allocation13 + $0x1b8] sm:$0xff]
        %v3326 = vld [vmem:[#allocation13 + $0x1c0] sm:$0xff]
        %v3327 = vld [vmem:[#allocation13 + $0x1c8] sm:$0xff]
        %v3328 = vld [vmem:[#allocation13 + $0x1d0] sm:$0xff]
        %v3329 = vld [vmem:[#allocation13 + $0x1d8] sm:$0xff]
        %v3330 = vld [vmem:[#allocation13 + $0x1e0] sm:$0xff]
        %v3331 = vld [vmem:[#allocation13 + $0x1e8] sm:$0xff]
        %v3332 = vld [vmem:[#allocation13 + $0x1f0] sm:$0xff]
        %v3333 = vld [vmem:[#allocation13 + $0x1f8] sm:$0xff]
        %3334 = vmatprep.subr.mxu0 %v3271
        %3335 = vmatpush1.msra.mxu0 %v3270
        %3336 = vmatprep.subr.mxu0 %v3275
        %3337 = vmatpush1.msra.mxu0 %v3274
        %3338 = vmatprep.subr.mxu0 %v3279
        %3339 = vmatpush1.msra.mxu0 %v3278
        %3340 = vmatprep.subr.mxu0 %v3283
        %3341 = vmatpush1.msra.mxu0 %v3282
        %3342 = vmatprep.subr.mxu0 %v3287
        %3343 = vmatpush1.msra.mxu0 %v3286
        %3344 = vmatprep.subr.mxu0 %v3291
        %3345 = vmatpush1.msra.mxu0 %v3290
        %3346 = vmatprep.subr.mxu0 %v3295
        %3347 = vmatpush1.msra.mxu0 %v3294
        %3348 = vmatprep.subr.mxu0 %v3299
        %3349 = vmatpush1.msra.mxu0 %v3298
        %3350 = vmatprep.subr.mxu0 %v3303
        %3351 = vmatpush1.msra.mxu0 %v3302
        %3352 = vmatprep.subr.mxu0 %v3307
        %3353 = vmatpush1.msra.mxu0 %v3306
        %3354 = vmatprep.subr.mxu0 %v3311
        %3355 = vmatpush1.msra.mxu0 %v3310
        %3356 = vmatprep.subr.mxu0 %v3315
        %3357 = vmatpush1.msra.mxu0 %v3314
        %3358 = vmatprep.subr.mxu0 %v3319
        %3359 = vmatpush1.msra.mxu0 %v3318
        %3360 = vmatprep.subr.mxu0 %v3323
        %3361 = vmatpush1.msra.mxu0 %v3322
        %3362 = vmatprep.subr.mxu0 %v3327
        %3363 = vmatpush1.msra.mxu0 %v3326
        %3364 = vmatprep.subr.mxu0 %v3331
        %3365 = vmatpush1.msra.mxu0 %v3330
        %3366 = vmatprep.subr.mxu0 0.0
        %3367 = vmatpush1.msra.mxu0 0.0
        %3368 = vmatprep.subr.mxu0 0.0
        %3369 = vmatpush1.msra.mxu0 0.0
        %3370 = vmatprep.subr.mxu0 0.0
        %3371 = vmatpush1.msra.mxu0 0.0
        %3372 = vmatprep.subr.mxu0 0.0
        %3373 = vmatpush1.msra.mxu0 0.0
        %3374 = vmatprep.subr.mxu0 0.0
        %3375 = vmatpush1.msra.mxu0 0.0
        %3376 = vmatprep.subr.mxu0 0.0
        %3377 = vmatpush1.msra.mxu0 0.0
        %3378 = vmatprep.subr.mxu0 0.0
        %3379 = vmatpush1.msra.mxu0 0.0
        %3380 = vmatprep.subr.mxu0 0.0
        %3381 = vmatpush1.msra.mxu0 0.0
        %3382 = vmatprep.subr.mxu0 0.0
        %3383 = vmatpush1.msra.mxu0 0.0
        %3384 = vmatprep.subr.mxu0 0.0
        %3385 = vmatpush1.msra.mxu0 0.0
        %3386 = vmatprep.subr.mxu0 0.0
        %3387 = vmatpush1.msra.mxu0 0.0
        %3388 = vmatprep.subr.mxu0 0.0
        %3389 = vmatpush1.msra.mxu0 0.0
        %3390 = vmatprep.subr.mxu0 0.0
        %3391 = vmatpush1.msra.mxu0 0.0
        %3392 = vmatprep.subr.mxu0 0.0
        %3393 = vmatpush1.msra.mxu0 0.0
        %3394 = vmatprep.subr.mxu0 0.0
        %3395 = vmatpush1.msra.mxu0 0.0
        %3396 = vmatprep.subr.mxu0 0.0
        %3397 = vmatpush1.msra.mxu0 0.0
        %3398 = vmatprep.mubr.f32.mxu0 0.0
        %3399 = vmatmul.mubr.f32.gmra.mrb[0].mxu0 %v3269
        %v3400 = vpop.f32.mrb[0].mxu0
        %v3401 = vadd.f32 0.0, %v3400
        %v3402 = vpop.f32.mrb[0].mxu0
        %v3403 = vadd.f32 0.0, %v3402
        %3404 = vdwg.mxu0
        %3405 = vmatprep.subr.mxu0 %v3273
        %3406 = vmatpush1.msra.mxu0 %v3272
        %3407 = vmatprep.subr.mxu0 %v3277
        %3408 = vmatpush1.msra.mxu0 %v3276
        %3409 = vmatprep.subr.mxu0 %v3281
        %3410 = vmatpush1.msra.mxu0 %v3280
        %3411 = vmatprep.subr.mxu0 %v3285
        %3412 = vmatpush1.msra.mxu0 %v3284
        %3413 = vmatprep.subr.mxu0 %v3289
        %3414 = vmatpush1.msra.mxu0 %v3288
        %3415 = vmatprep.subr.mxu0 %v3293
        %3416 = vmatpush1.msra.mxu0 %v3292
        %3417 = vmatprep.subr.mxu0 %v3297
        %3418 = vmatpush1.msra.mxu0 %v3296
        %3419 = vmatprep.subr.mxu0 %v3301
        %3420 = vmatpush1.msra.mxu0 %v3300
        %3421 = vmatprep.subr.mxu0 %v3305
        %3422 = vmatpush1.msra.mxu0 %v3304
        %3423 = vmatprep.subr.mxu0 %v3309
        %3424 = vmatpush1.msra.mxu0 %v3308
        %3425 = vmatprep.subr.mxu0 %v3313
        %3426 = vmatpush1.msra.mxu0 %v3312
        %3427 = vmatprep.subr.mxu0 %v3317
        %3428 = vmatpush1.msra.mxu0 %v3316
        %3429 = vmatprep.subr.mxu0 %v3321
        %3430 = vmatpush1.msra.mxu0 %v3320
        %3431 = vmatprep.subr.mxu0 %v3325
        %3432 = vmatpush1.msra.mxu0 %v3324
        %3433 = vmatprep.subr.mxu0 %v3329
        %3434 = vmatpush1.msra.mxu0 %v3328
        %3435 = vmatprep.subr.mxu0 %v3333
        %3436 = vmatpush1.msra.mxu0 %v3332
        %3437 = vmatprep.subr.mxu0 0.0
        %3438 = vmatpush1.msra.mxu0 0.0
        %3439 = vmatprep.subr.mxu0 0.0
        %3440 = vmatpush1.msra.mxu0 0.0
        %3441 = vmatprep.subr.mxu0 0.0
        %3442 = vmatpush1.msra.mxu0 0.0
        %3443 = vmatprep.subr.mxu0 0.0
        %3444 = vmatpush1.msra.mxu0 0.0
        %3445 = vmatprep.subr.mxu0 0.0
        %3446 = vmatpush1.msra.mxu0 0.0
        %3447 = vmatprep.subr.mxu0 0.0
        %3448 = vmatpush1.msra.mxu0 0.0
        %3449 = vmatprep.subr.mxu0 0.0
        %3450 = vmatpush1.msra.mxu0 0.0
        %3451 = vmatprep.subr.mxu0 0.0
        %3452 = vmatpush1.msra.mxu0 0.0
        %3453 = vmatprep.subr.mxu0 0.0
        %3454 = vmatpush1.msra.mxu0 0.0
        %3455 = vmatprep.subr.mxu0 0.0
        %3456 = vmatpush1.msra.mxu0 0.0
        %3457 = vmatprep.subr.mxu0 0.0
        %3458 = vmatpush1.msra.mxu0 0.0
        %3459 = vmatprep.subr.mxu0 0.0
        %3460 = vmatpush1.msra.mxu0 0.0
        %3461 = vmatprep.subr.mxu0 0.0
        %3462 = vmatpush1.msra.mxu0 0.0
        %3463 = vmatprep.subr.mxu0 0.0
        %3464 = vmatpush1.msra.mxu0 0.0
        %3465 = vmatprep.subr.mxu0 0.0
        %3466 = vmatpush1.msra.mxu0 0.0
        %3467 = vmatprep.subr.mxu0 0.0
        %3468 = vmatpush1.msra.mxu0 0.0
        %3469 = vmatprep.mubr.f32.mxu0 0.0
        %3470 = vmatmul.mubr.f32.gmra.mrb[0].mxu0 %v3269
        %v3471 = vpop.f32.mrb[0].mxu0
        %v3472 = vadd.f32 0.0, %v3471
        %v3473 = vpop.f32.mrb[0].mxu0
        %v3474 = vadd.f32 0.0, %v3473
        %3475 = vdwg.mxu0
        %v3476 = vadd.f32 %v3265, %v3401
        %v3477 = vadd.f32 %v3266, %v3403
        %v3478 = vadd.f32 %v3267, %v3472
        %v3479 = vadd.f32 %v3268, %v3474
        %v3480 = vld [vmem:[#allocation5] sm:$0xff]
        %v3481 = vmul.f32 %v3259, 0.5
        %v3482 = vtanh.pop %v3481
        %v3483 = vmul.f32 %v3482, 0.5
        %v3484 = vadd.f32 %v3483, 0.5
        %v3485 = vmul.f32 %v3260, 0.5
        %v3486 = vtanh.pop %v3485
        %v3487 = vmul.f32 %v3486, 0.5
        %v3488 = vadd.f32 %v3487, 0.5
        %v3489 = vtanh.pop %v3261
        %v3490 = vmul.f32 %v3262, 0.5
        %v3491 = vtanh.pop %v3490
        %v3492 = vmul.f32 %v3491, 0.5
        %v3493 = vadd.f32 %v3492, 0.5
        %v3494 = vmul.f32 %v3488, %v3480
        %v3495 = vmul.f32 %v3484, %v3489
        %v3496 = vadd.f32 %v3494, %v3495
        %v3497 = vtanh.pop %v3496
        %v3498 = vmul.f32 %v3493, %v3497
        %v3499 = vld [vmem:[#allocation7] sm:$0xff]
        %v3500 = vmul.f32 %v3476, 0.5
        %v3501 = vtanh.pop %v3500
        %v3502 = vmul.f32 %v3501, 0.5
        %v3503 = vadd.f32 %v3502, 0.5
        %v3504 = vmul.f32 %v3477, 0.5
        %v3505 = vtanh.pop %v3504
        %v3506 = vmul.f32 %v3505, 0.5
        %v3507 = vadd.f32 %v3506, 0.5
        %v3508 = vtanh.pop %v3478
        %v3509 = vmul.f32 %v3479, 0.5
        %v3510 = vtanh.pop %v3509
        %v3511 = vmul.f32 %v3510, 0.5
        %v3512 = vadd.f32 %v3511, 0.5
        %v3513 = vmul.f32 %v3507, %v3499
        %v3514 = vmul.f32 %v3503, %v3508
        %v3515 = vadd.f32 %v3513, %v3514
        %v3516 = vtanh.pop %v3515
        %v3517 = vmul.f32 %v3512, %v3516
        %3518 = vst [vmem:[#allocation4] sm:$0xff] %v3498
        %3519 = vst [vmem:[#allocation5] sm:$0xff] %v3496
        %s3520 = scalar_lea.vmem %s397, 32 [#allocation14]
        %3521 = vst [vmem:[%s3520] sm:$0xff] %v3498
        %s3522 = scalar_lea.vmem %s404, 24 [#allocation15]
        %3523 = vst [vmem:[%s3522] sm:$0xff] %v3517
        %3524 = vst [vmem:[#allocation6] sm:$0xff] %v3517
        %3525 = vst [vmem:[#allocation7] sm:$0xff] %v3515
        %s3526 = smul.addr %s2300, 8
        %s3527 = scalar_lea.vmem [#allocation2], %s3526
        %v3528 = vld [vmem:[%s3527] sm:$0xff]
        %v3529 = vld [vmem:[%s3527 + $0x8] sm:$0xff]
        %v3530 = vld [vmem:[%s3527 + $0x10] sm:$0xff]
        %v3531 = vld [vmem:[%s3527 + $0x18] sm:$0xff]
        %v3532 = vld [vmem:[#allocation4] sm:$0xff]
        %v3533 = vld [vmem:[#allocation11] sm:$0xff]
        %v3534 = vld [vmem:[#allocation11 + $0x8] sm:$0xff]
        %v3535 = vld [vmem:[#allocation11 + $0x10] sm:$0xff]
        %v3536 = vld [vmem:[#allocation11 + $0x18] sm:$0xff]
        %v3537 = vld [vmem:[#allocation11 + $0x20] sm:$0xff]
        %v3538 = vld [vmem:[#allocation11 + $0x28] sm:$0xff]
        %v3539 = vld [vmem:[#allocation11 + $0x30] sm:$0xff]
        %v3540 = vld [vmem:[#allocation11 + $0x38] sm:$0xff]
        %v3541 = vld [vmem:[#allocation11 + $0x40] sm:$0xff]
        %v3542 = vld [vmem:[#allocation11 + $0x48] sm:$0xff]
        %v3543 = vld [vmem:[#allocation11 + $0x50] sm:$0xff]
        %v3544 = vld [vmem:[#allocation11 + $0x58] sm:$0xff]
        %v3545 = vld [vmem:[#allocation11 + $0x60] sm:$0xff]
        %v3546 = vld [vmem:[#allocation11 + $0x68] sm:$0xff]
        %v3547 = vld [vmem:[#allocation11 + $0x70] sm:$0xff]
        %v3548 = vld [vmem:[#allocation11 + $0x78] sm:$0xff]
        %v3549 = vld [vmem:[#allocation11 + $0x80] sm:$0xff]
        %v3550 = vld [vmem:[#allocation11 + $0x88] sm:$0xff]
        %v3551 = vld [vmem:[#allocation11 + $0x90] sm:$0xff]
        %v3552 = vld [vmem:[#allocation11 + $0x98] sm:$0xff]
        %v3553 = vld [vmem:[#allocation11 + $0xa0] sm:$0xff]
        %v3554 = vld [vmem:[#allocation11 + $0xa8] sm:$0xff]
        %v3555 = vld [vmem:[#allocation11 + $0xb0] sm:$0xff]
        %v3556 = vld [vmem:[#allocation11 + $0xb8] sm:$0xff]
        %v3557 = vld [vmem:[#allocation11 + $0xc0] sm:$0xff]
        %v3558 = vld [vmem:[#allocation11 + $0xc8] sm:$0xff]
        %v3559 = vld [vmem:[#allocation11 + $0xd0] sm:$0xff]
        %v3560 = vld [vmem:[#allocation11 + $0xd8] sm:$0xff]
        %v3561 = vld [vmem:[#allocation11 + $0xe0] sm:$0xff]
        %v3562 = vld [vmem:[#allocation11 + $0xe8] sm:$0xff]
        %v3563 = vld [vmem:[#allocation11 + $0xf0] sm:$0xff]
        %v3564 = vld [vmem:[#allocation11 + $0xf8] sm:$0xff]
        %v3565 = vld [vmem:[#allocation11 + $0x100] sm:$0xff]
        %v3566 = vld [vmem:[#allocation11 + $0x108] sm:$0xff]
        %v3567 = vld [vmem:[#allocation11 + $0x110] sm:$0xff]
        %v3568 = vld [vmem:[#allocation11 + $0x118] sm:$0xff]
        %v3569 = vld [vmem:[#allocation11 + $0x120] sm:$0xff]
        %v3570 = vld [vmem:[#allocation11 + $0x128] sm:$0xff]
        %v3571 = vld [vmem:[#allocation11 + $0x130] sm:$0xff]
        %v3572 = vld [vmem:[#allocation11 + $0x138] sm:$0xff]
        %v3573 = vld [vmem:[#allocation11 + $0x140] sm:$0xff]
        %v3574 = vld [vmem:[#allocation11 + $0x148] sm:$0xff]
        %v3575 = vld [vmem:[#allocation11 + $0x150] sm:$0xff]
        %v3576 = vld [vmem:[#allocation11 + $0x158] sm:$0xff]
        %v3577 = vld [vmem:[#allocation11 + $0x160] sm:$0xff]
        %v3578 = vld [vmem:[#allocation11 + $0x168] sm:$0xff]
        %v3579 = vld [vmem:[#allocation11 + $0x170] sm:$0xff]
        %v3580 = vld [vmem:[#allocation11 + $0x178] sm:$0xff]
        %v3581 = vld [vmem:[#allocation11 + $0x180] sm:$0xff]
        %v3582 = vld [vmem:[#allocation11 + $0x188] sm:$0xff]
        %v3583 = vld [vmem:[#allocation11 + $0x190] sm:$0xff]
        %v3584 = vld [vmem:[#allocation11 + $0x198] sm:$0xff]
        %v3585 = vld [vmem:[#allocation11 + $0x1a0] sm:$0xff]
        %v3586 = vld [vmem:[#allocation11 + $0x1a8] sm:$0xff]
        %v3587 = vld [vmem:[#allocation11 + $0x1b0] sm:$0xff]
        %v3588 = vld [vmem:[#allocation11 + $0x1b8] sm:$0xff]
        %v3589 = vld [vmem:[#allocation11 + $0x1c0] sm:$0xff]
        %v3590 = vld [vmem:[#allocation11 + $0x1c8] sm:$0xff]
        %v3591 = vld [vmem:[#allocation11 + $0x1d0] sm:$0xff]
        %v3592 = vld [vmem:[#allocation11 + $0x1d8] sm:$0xff]
        %v3593 = vld [vmem:[#allocation11 + $0x1e0] sm:$0xff]
        %v3594 = vld [vmem:[#allocation11 + $0x1e8] sm:$0xff]
        %v3595 = vld [vmem:[#allocation11 + $0x1f0] sm:$0xff]
        %v3596 = vld [vmem:[#allocation11 + $0x1f8] sm:$0xff]
        %3597 = vmatprep.subr.mxu0 %v3534
        %3598 = vmatpush1.msra.mxu0 %v3533
        %3599 = vmatprep.subr.mxu0 %v3538
        %3600 = vmatpush1.msra.mxu0 %v3537
        %3601 = vmatprep.subr.mxu0 %v3542
        %3602 = vmatpush1.msra.mxu0 %v3541
        %3603 = vmatprep.subr.mxu0 %v3546
        %3604 = vmatpush1.msra.mxu0 %v3545
        %3605 = vmatprep.subr.mxu0 %v3550
        %3606 = vmatpush1.msra.mxu0 %v3549
        %3607 = vmatprep.subr.mxu0 %v3554
        %3608 = vmatpush1.msra.mxu0 %v3553
        %3609 = vmatprep.subr.mxu0 %v3558
        %3610 = vmatpush1.msra.mxu0 %v3557
        %3611 = vmatprep.subr.mxu0 %v3562
        %3612 = vmatpush1.msra.mxu0 %v3561
        %3613 = vmatprep.subr.mxu0 %v3566
        %3614 = vmatpush1.msra.mxu0 %v3565
        %3615 = vmatprep.subr.mxu0 %v3570
        %3616 = vmatpush1.msra.mxu0 %v3569
        %3617 = vmatprep.subr.mxu0 %v3574
        %3618 = vmatpush1.msra.mxu0 %v3573
        %3619 = vmatprep.subr.mxu0 %v3578
        %3620 = vmatpush1.msra.mxu0 %v3577
        %3621 = vmatprep.subr.mxu0 %v3582
        %3622 = vmatpush1.msra.mxu0 %v3581
        %3623 = vmatprep.subr.mxu0 %v3586
        %3624 = vmatpush1.msra.mxu0 %v3585
        %3625 = vmatprep.subr.mxu0 %v3590
        %3626 = vmatpush1.msra.mxu0 %v3589
        %3627 = vmatprep.subr.mxu0 %v3594
        %3628 = vmatpush1.msra.mxu0 %v3593
        %3629 = vmatprep.subr.mxu0 0.0
        %3630 = vmatpush1.msra.mxu0 0.0
        %3631 = vmatprep.subr.mxu0 0.0
        %3632 = vmatpush1.msra.mxu0 0.0
        %3633 = vmatprep.subr.mxu0 0.0
        %3634 = vmatpush1.msra.mxu0 0.0
        %3635 = vmatprep.subr.mxu0 0.0
        %3636 = vmatpush1.msra.mxu0 0.0
        %3637 = vmatprep.subr.mxu0 0.0
        %3638 = vmatpush1.msra.mxu0 0.0
        %3639 = vmatprep.subr.mxu0 0.0
        %3640 = vmatpush1.msra.mxu0 0.0
        %3641 = vmatprep.subr.mxu0 0.0
        %3642 = vmatpush1.msra.mxu0 0.0
        %3643 = vmatprep.subr.mxu0 0.0
        %3644 = vmatpush1.msra.mxu0 0.0
        %3645 = vmatprep.subr.mxu0 0.0
        %3646 = vmatpush1.msra.mxu0 0.0
        %3647 = vmatprep.subr.mxu0 0.0
        %3648 = vmatpush1.msra.mxu0 0.0
        %3649 = vmatprep.subr.mxu0 0.0
        %3650 = vmatpush1.msra.mxu0 0.0
        %3651 = vmatprep.subr.mxu0 0.0
        %3652 = vmatpush1.msra.mxu0 0.0
        %3653 = vmatprep.subr.mxu0 0.0
        %3654 = vmatpush1.msra.mxu0 0.0
        %3655 = vmatprep.subr.mxu0 0.0
        %3656 = vmatpush1.msra.mxu0 0.0
        %3657 = vmatprep.subr.mxu0 0.0
        %3658 = vmatpush1.msra.mxu0 0.0
        %3659 = vmatprep.subr.mxu0 0.0
        %3660 = vmatpush1.msra.mxu0 0.0
        %3661 = vmatprep.mubr.f32.mxu0 0.0
        %3662 = vmatmul.mubr.f32.gmra.mrb[0].mxu0 %v3532
        %v3663 = vpop.f32.mrb[0].mxu0
        %v3664 = vadd.f32 0.0, %v3663
        %v3665 = vpop.f32.mrb[0].mxu0
        %v3666 = vadd.f32 0.0, %v3665
        %3667 = vdwg.mxu0
        %3668 = vmatprep.subr.mxu0 %v3536
        %3669 = vmatpush1.msra.mxu0 %v3535
        %3670 = vmatprep.subr.mxu0 %v3540
        %3671 = vmatpush1.msra.mxu0 %v3539
        %3672 = vmatprep.subr.mxu0 %v3544
        %3673 = vmatpush1.msra.mxu0 %v3543
        %3674 = vmatprep.subr.mxu0 %v3548
        %3675 = vmatpush1.msra.mxu0 %v3547
        %3676 = vmatprep.subr.mxu0 %v3552
        %3677 = vmatpush1.msra.mxu0 %v3551
        %3678 = vmatprep.subr.mxu0 %v3556
        %3679 = vmatpush1.msra.mxu0 %v3555
        %3680 = vmatprep.subr.mxu0 %v3560
        %3681 = vmatpush1.msra.mxu0 %v3559
        %3682 = vmatprep.subr.mxu0 %v3564
        %3683 = vmatpush1.msra.mxu0 %v3563
        %3684 = vmatprep.subr.mxu0 %v3568
        %3685 = vmatpush1.msra.mxu0 %v3567
        %3686 = vmatprep.subr.mxu0 %v3572
        %3687 = vmatpush1.msra.mxu0 %v3571
        %3688 = vmatprep.subr.mxu0 %v3576
        %3689 = vmatpush1.msra.mxu0 %v3575
        %3690 = vmatprep.subr.mxu0 %v3580
        %3691 = vmatpush1.msra.mxu0 %v3579
        %3692 = vmatprep.subr.mxu0 %v3584
        %3693 = vmatpush1.msra.mxu0 %v3583
        %3694 = vmatprep.subr.mxu0 %v3588
        %3695 = vmatpush1.msra.mxu0 %v3587
        %3696 = vmatprep.subr.mxu0 %v3592
        %3697 = vmatpush1.msra.mxu0 %v3591
        %3698 = vmatprep.subr.mxu0 %v3596
        %3699 = vmatpush1.msra.mxu0 %v3595
        %3700 = vmatprep.subr.mxu0 0.0
        %3701 = vmatpush1.msra.mxu0 0.0
        %3702 = vmatprep.subr.mxu0 0.0
        %3703 = vmatpush1.msra.mxu0 0.0
        %3704 = vmatprep.subr.mxu0 0.0
        %3705 = vmatpush1.msra.mxu0 0.0
        %3706 = vmatprep.subr.mxu0 0.0
        %3707 = vmatpush1.msra.mxu0 0.0
        %3708 = vmatprep.subr.mxu0 0.0
        %3709 = vmatpush1.msra.mxu0 0.0
        %3710 = vmatprep.subr.mxu0 0.0
        %3711 = vmatpush1.msra.mxu0 0.0
        %3712 = vmatprep.subr.mxu0 0.0
        %3713 = vmatpush1.msra.mxu0 0.0
        %3714 = vmatprep.subr.mxu0 0.0
        %3715 = vmatpush1.msra.mxu0 0.0
        %3716 = vmatprep.subr.mxu0 0.0
        %3717 = vmatpush1.msra.mxu0 0.0
        %3718 = vmatprep.subr.mxu0 0.0
        %3719 = vmatpush1.msra.mxu0 0.0
        %3720 = vmatprep.subr.mxu0 0.0
        %3721 = vmatpush1.msra.mxu0 0.0
        %3722 = vmatprep.subr.mxu0 0.0
        %3723 = vmatpush1.msra.mxu0 0.0
        %3724 = vmatprep.subr.mxu0 0.0
        %3725 = vmatpush1.msra.mxu0 0.0
        %3726 = vmatprep.subr.mxu0 0.0
        %3727 = vmatpush1.msra.mxu0 0.0
        %3728 = vmatprep.subr.mxu0 0.0
        %3729 = vmatpush1.msra.mxu0 0.0
        %3730 = vmatprep.subr.mxu0 0.0
        %3731 = vmatpush1.msra.mxu0 0.0
        %3732 = vmatprep.mubr.f32.mxu0 0.0
        %3733 = vmatmul.mubr.f32.gmra.mrb[0].mxu0 %v3532
        %v3734 = vpop.f32.mrb[0].mxu0
        %v3735 = vadd.f32 0.0, %v3734
        %v3736 = vpop.f32.mrb[0].mxu0
        %v3737 = vadd.f32 0.0, %v3736
        %3738 = vdwg.mxu0
        %v3739 = vadd.f32 %v3528, %v3664
        %v3740 = vadd.f32 %v3529, %v3666
        %v3741 = vadd.f32 %v3530, %v3735
        %v3742 = vadd.f32 %v3531, %v3737
        %s3743 = smul.addr %s2082, 8
        %s3744 = scalar_lea.vmem [#allocation3], %s3743
        %v3745 = vld [vmem:[%s3744] sm:$0xff]
        %v3746 = vld [vmem:[%s3744 + $0x8] sm:$0xff]
        %v3747 = vld [vmem:[%s3744 + $0x10] sm:$0xff]
        %v3748 = vld [vmem:[%s3744 + $0x18] sm:$0xff]
        %v3749 = vld [vmem:[#allocation6] sm:$0xff]
        %v3750 = vld [vmem:[#allocation13] sm:$0xff]
        %v3751 = vld [vmem:[#allocation13 + $0x8] sm:$0xff]
        %v3752 = vld [vmem:[#allocation13 + $0x10] sm:$0xff]
        %v3753 = vld [vmem:[#allocation13 + $0x18] sm:$0xff]
        %v3754 = vld [vmem:[#allocation13 + $0x20] sm:$0xff]
        %v3755 = vld [vmem:[#allocation13 + $0x28] sm:$0xff]
        %v3756 = vld [vmem:[#allocation13 + $0x30] sm:$0xff]
        %v3757 = vld [vmem:[#allocation13 + $0x38] sm:$0xff]
        %v3758 = vld [vmem:[#allocation13 + $0x40] sm:$0xff]
        %v3759 = vld [vmem:[#allocation13 + $0x48] sm:$0xff]
        %v3760 = vld [vmem:[#allocation13 + $0x50] sm:$0xff]
        %v3761 = vld [vmem:[#allocation13 + $0x58] sm:$0xff]
        %v3762 = vld [vmem:[#allocation13 + $0x60] sm:$0xff]
        %v3763 = vld [vmem:[#allocation13 + $0x68] sm:$0xff]
        %v3764 = vld [vmem:[#allocation13 + $0x70] sm:$0xff]
        %v3765 = vld [vmem:[#allocation13 + $0x78] sm:$0xff]
        %v3766 = vld [vmem:[#allocation13 + $0x80] sm:$0xff]
        %v3767 = vld [vmem:[#allocation13 + $0x88] sm:$0xff]
        %v3768 = vld [vmem:[#allocation13 + $0x90] sm:$0xff]
        %v3769 = vld [vmem:[#allocation13 + $0x98] sm:$0xff]
        %v3770 = vld [vmem:[#allocation13 + $0xa0] sm:$0xff]
        %v3771 = vld [vmem:[#allocation13 + $0xa8] sm:$0xff]
        %v3772 = vld [vmem:[#allocation13 + $0xb0] sm:$0xff]
        %v3773 = vld [vmem:[#allocation13 + $0xb8] sm:$0xff]
        %v3774 = vld [vmem:[#allocation13 + $0xc0] sm:$0xff]
        %v3775 = vld [vmem:[#allocation13 + $0xc8] sm:$0xff]
        %v3776 = vld [vmem:[#allocation13 + $0xd0] sm:$0xff]
        %v3777 = vld [vmem:[#allocation13 + $0xd8] sm:$0xff]
        %v3778 = vld [vmem:[#allocation13 + $0xe0] sm:$0xff]
        %v3779 = vld [vmem:[#allocation13 + $0xe8] sm:$0xff]
        %v3780 = vld [vmem:[#allocation13 + $0xf0] sm:$0xff]
        %v3781 = vld [vmem:[#allocation13 + $0xf8] sm:$0xff]
        %v3782 = vld [vmem:[#allocation13 + $0x100] sm:$0xff]
        %v3783 = vld [vmem:[#allocation13 + $0x108] sm:$0xff]
        %v3784 = vld [vmem:[#allocation13 + $0x110] sm:$0xff]
        %v3785 = vld [vmem:[#allocation13 + $0x118] sm:$0xff]
        %v3786 = vld [vmem:[#allocation13 + $0x120] sm:$0xff]
        %v3787 = vld [vmem:[#allocation13 + $0x128] sm:$0xff]
        %v3788 = vld [vmem:[#allocation13 + $0x130] sm:$0xff]
        %v3789 = vld [vmem:[#allocation13 + $0x138] sm:$0xff]
        %v3790 = vld [vmem:[#allocation13 + $0x140] sm:$0xff]
        %v3791 = vld [vmem:[#allocation13 + $0x148] sm:$0xff]
        %v3792 = vld [vmem:[#allocation13 + $0x150] sm:$0xff]
        %v3793 = vld [vmem:[#allocation13 + $0x158] sm:$0xff]
        %v3794 = vld [vmem:[#allocation13 + $0x160] sm:$0xff]
        %v3795 = vld [vmem:[#allocation13 + $0x168] sm:$0xff]
        %v3796 = vld [vmem:[#allocation13 + $0x170] sm:$0xff]
        %v3797 = vld [vmem:[#allocation13 + $0x178] sm:$0xff]
        %v3798 = vld [vmem:[#allocation13 + $0x180] sm:$0xff]
        %v3799 = vld [vmem:[#allocation13 + $0x188] sm:$0xff]
        %v3800 = vld [vmem:[#allocation13 + $0x190] sm:$0xff]
        %v3801 = vld [vmem:[#allocation13 + $0x198] sm:$0xff]
        %v3802 = vld [vmem:[#allocation13 + $0x1a0] sm:$0xff]
        %v3803 = vld [vmem:[#allocation13 + $0x1a8] sm:$0xff]
        %v3804 = vld [vmem:[#allocation13 + $0x1b0] sm:$0xff]
        %v3805 = vld [vmem:[#allocation13 + $0x1b8] sm:$0xff]
        %v3806 = vld [vmem:[#allocation13 + $0x1c0] sm:$0xff]
        %v3807 = vld [vmem:[#allocation13 + $0x1c8] sm:$0xff]
        %v3808 = vld [vmem:[#allocation13 + $0x1d0] sm:$0xff]
        %v3809 = vld [vmem:[#allocation13 + $0x1d8] sm:$0xff]
        %v3810 = vld [vmem:[#allocation13 + $0x1e0] sm:$0xff]
        %v3811 = vld [vmem:[#allocation13 + $0x1e8] sm:$0xff]
        %v3812 = vld [vmem:[#allocation13 + $0x1f0] sm:$0xff]
        %v3813 = vld [vmem:[#allocation13 + $0x1f8] sm:$0xff]
        %3814 = vmatprep.subr.mxu0 %v3751
        %3815 = vmatpush1.msra.mxu0 %v3750
        %3816 = vmatprep.subr.mxu0 %v3755
        %3817 = vmatpush1.msra.mxu0 %v3754
        %3818 = vmatprep.subr.mxu0 %v3759
        %3819 = vmatpush1.msra.mxu0 %v3758
        %3820 = vmatprep.subr.mxu0 %v3763
        %3821 = vmatpush1.msra.mxu0 %v3762
        %3822 = vmatprep.subr.mxu0 %v3767
        %3823 = vmatpush1.msra.mxu0 %v3766
        %3824 = vmatprep.subr.mxu0 %v3771
        %3825 = vmatpush1.msra.mxu0 %v3770
        %3826 = vmatprep.subr.mxu0 %v3775
        %3827 = vmatpush1.msra.mxu0 %v3774
        %3828 = vmatprep.subr.mxu0 %v3779
        %3829 = vmatpush1.msra.mxu0 %v3778
        %3830 = vmatprep.subr.mxu0 %v3783
        %3831 = vmatpush1.msra.mxu0 %v3782
        %3832 = vmatprep.subr.mxu0 %v3787
        %3833 = vmatpush1.msra.mxu0 %v3786
        %3834 = vmatprep.subr.mxu0 %v3791
        %3835 = vmatpush1.msra.mxu0 %v3790
        %3836 = vmatprep.subr.mxu0 %v3795
        %3837 = vmatpush1.msra.mxu0 %v3794
        %3838 = vmatprep.subr.mxu0 %v3799
        %3839 = vmatpush1.msra.mxu0 %v3798
        %3840 = vmatprep.subr.mxu0 %v3803
        %3841 = vmatpush1.msra.mxu0 %v3802
        %3842 = vmatprep.subr.mxu0 %v3807
        %3843 = vmatpush1.msra.mxu0 %v3806
        %3844 = vmatprep.subr.mxu0 %v3811
        %3845 = vmatpush1.msra.mxu0 %v3810
        %3846 = vmatprep.subr.mxu0 0.0
        %3847 = vmatpush1.msra.mxu0 0.0
        %3848 = vmatprep.subr.mxu0 0.0
        %3849 = vmatpush1.msra.mxu0 0.0
        %3850 = vmatprep.subr.mxu0 0.0
        %3851 = vmatpush1.msra.mxu0 0.0
        %3852 = vmatprep.subr.mxu0 0.0
        %3853 = vmatpush1.msra.mxu0 0.0
        %3854 = vmatprep.subr.mxu0 0.0
        %3855 = vmatpush1.msra.mxu0 0.0
        %3856 = vmatprep.subr.mxu0 0.0
        %3857 = vmatpush1.msra.mxu0 0.0
        %3858 = vmatprep.subr.mxu0 0.0
        %3859 = vmatpush1.msra.mxu0 0.0
        %3860 = vmatprep.subr.mxu0 0.0
        %3861 = vmatpush1.msra.mxu0 0.0
        %3862 = vmatprep.subr.mxu0 0.0
        %3863 = vmatpush1.msra.mxu0 0.0
        %3864 = vmatprep.subr.mxu0 0.0
        %3865 = vmatpush1.msra.mxu0 0.0
        %3866 = vmatprep.subr.mxu0 0.0
        %3867 = vmatpush1.msra.mxu0 0.0
        %3868 = vmatprep.subr.mxu0 0.0
        %3869 = vmatpush1.msra.mxu0 0.0
        %3870 = vmatprep.subr.mxu0 0.0
        %3871 = vmatpush1.msra.mxu0 0.0
        %3872 = vmatprep.subr.mxu0 0.0
        %3873 = vmatpush1.msra.mxu0 0.0
        %3874 = vmatprep.subr.mxu0 0.0
        %3875 = vmatpush1.msra.mxu0 0.0
        %3876 = vmatprep.subr.mxu0 0.0
        %3877 = vmatpush1.msra.mxu0 0.0
        %3878 = vmatprep.mubr.f32.mxu0 0.0
        %3879 = vmatmul.mubr.f32.gmra.mrb[0].mxu0 %v3749
        %v3880 = vpop.f32.mrb[0].mxu0
        %v3881 = vadd.f32 0.0, %v3880
        %v3882 = vpop.f32.mrb[0].mxu0
        %v3883 = vadd.f32 0.0, %v3882
        %3884 = vdwg.mxu0
        %3885 = vmatprep.subr.mxu0 %v3753
        %3886 = vmatpush1.msra.mxu0 %v3752
        %3887 = vmatprep.subr.mxu0 %v3757
        %3888 = vmatpush1.msra.mxu0 %v3756
        %3889 = vmatprep.subr.mxu0 %v3761
        %3890 = vmatpush1.msra.mxu0 %v3760
        %3891 = vmatprep.subr.mxu0 %v3765
        %3892 = vmatpush1.msra.mxu0 %v3764
        %3893 = vmatprep.subr.mxu0 %v3769
        %3894 = vmatpush1.msra.mxu0 %v3768
        %3895 = vmatprep.subr.mxu0 %v3773
        %3896 = vmatpush1.msra.mxu0 %v3772
        %3897 = vmatprep.subr.mxu0 %v3777
        %3898 = vmatpush1.msra.mxu0 %v3776
        %3899 = vmatprep.subr.mxu0 %v3781
        %3900 = vmatpush1.msra.mxu0 %v3780
        %3901 = vmatprep.subr.mxu0 %v3785
        %3902 = vmatpush1.msra.mxu0 %v3784
        %3903 = vmatprep.subr.mxu0 %v3789
        %3904 = vmatpush1.msra.mxu0 %v3788
        %3905 = vmatprep.subr.mxu0 %v3793
        %3906 = vmatpush1.msra.mxu0 %v3792
        %3907 = vmatprep.subr.mxu0 %v3797
        %3908 = vmatpush1.msra.mxu0 %v3796
        %3909 = vmatprep.subr.mxu0 %v3801
        %3910 = vmatpush1.msra.mxu0 %v3800
        %3911 = vmatprep.subr.mxu0 %v3805
        %3912 = vmatpush1.msra.mxu0 %v3804
        %3913 = vmatprep.subr.mxu0 %v3809
        %3914 = vmatpush1.msra.mxu0 %v3808
        %3915 = vmatprep.subr.mxu0 %v3813
        %3916 = vmatpush1.msra.mxu0 %v3812
        %3917 = vmatprep.subr.mxu0 0.0
        %3918 = vmatpush1.msra.mxu0 0.0
        %3919 = vmatprep.subr.mxu0 0.0
        %3920 = vmatpush1.msra.mxu0 0.0
        %3921 = vmatprep.subr.mxu0 0.0
        %3922 = vmatpush1.msra.mxu0 0.0
        %3923 = vmatprep.subr.mxu0 0.0
        %3924 = vmatpush1.msra.mxu0 0.0
        %3925 = vmatprep.subr.mxu0 0.0
        %3926 = vmatpush1.msra.mxu0 0.0
        %3927 = vmatprep.subr.mxu0 0.0
        %3928 = vmatpush1.msra.mxu0 0.0
        %3929 = vmatprep.subr.mxu0 0.0
        %3930 = vmatpush1.msra.mxu0 0.0
        %3931 = vmatprep.subr.mxu0 0.0
        %3932 = vmatpush1.msra.mxu0 0.0
        %3933 = vmatprep.subr.mxu0 0.0
        %3934 = vmatpush1.msra.mxu0 0.0
        %3935 = vmatprep.subr.mxu0 0.0
        %3936 = vmatpush1.msra.mxu0 0.0
        %3937 = vmatprep.subr.mxu0 0.0
        %3938 = vmatpush1.msra.mxu0 0.0
        %3939 = vmatprep.subr.mxu0 0.0
        %3940 = vmatpush1.msra.mxu0 0.0
        %3941 = vmatprep.subr.mxu0 0.0
        %3942 = vmatpush1.msra.mxu0 0.0
        %3943 = vmatprep.subr.mxu0 0.0
        %3944 = vmatpush1.msra.mxu0 0.0
        %3945 = vmatprep.subr.mxu0 0.0
        %3946 = vmatpush1.msra.mxu0 0.0
        %3947 = vmatprep.subr.mxu0 0.0
        %3948 = vmatpush1.msra.mxu0 0.0
        %3949 = vmatprep.mubr.f32.mxu0 0.0
        %3950 = vmatmul.mubr.f32.gmra.mrb[0].mxu0 %v3749
        %v3951 = vpop.f32.mrb[0].mxu0
        %v3952 = vadd.f32 0.0, %v3951
        %v3953 = vpop.f32.mrb[0].mxu0
        %v3954 = vadd.f32 0.0, %v3953
        %3955 = vdwg.mxu0
        %v3956 = vadd.f32 %v3745, %v3881
        %v3957 = vadd.f32 %v3746, %v3883
        %v3958 = vadd.f32 %v3747, %v3952
        %v3959 = vadd.f32 %v3748, %v3954
        %v3960 = vld [vmem:[#allocation5] sm:$0xff]
        %v3961 = vmul.f32 %v3739, 0.5
        %v3962 = vtanh.pop %v3961
        %v3963 = vmul.f32 %v3962, 0.5
        %v3964 = vadd.f32 %v3963, 0.5
        %v3965 = vmul.f32 %v3740, 0.5
        %v3966 = vtanh.pop %v3965
        %v3967 = vmul.f32 %v3966, 0.5
        %v3968 = vadd.f32 %v3967, 0.5
        %v3969 = vtanh.pop %v3741
        %v3970 = vmul.f32 %v3742, 0.5
        %v3971 = vtanh.pop %v3970
        %v3972 = vmul.f32 %v3971, 0.5
        %v3973 = vadd.f32 %v3972, 0.5
        %v3974 = vmul.f32 %v3968, %v3960
        %v3975 = vmul.f32 %v3964, %v3969
        %v3976 = vadd.f32 %v3974, %v3975
        %v3977 = vtanh.pop %v3976
        %v3978 = vmul.f32 %v3973, %v3977
        %v3979 = vld [vmem:[#allocation7] sm:$0xff]
        %v3980 = vmul.f32 %v3956, 0.5
        %v3981 = vtanh.pop %v3980
        %v3982 = vmul.f32 %v3981, 0.5
        %v3983 = vadd.f32 %v3982, 0.5
        %v3984 = vmul.f32 %v3957, 0.5
        %v3985 = vtanh.pop %v3984
        %v3986 = vmul.f32 %v3985, 0.5
        %v3987 = vadd.f32 %v3986, 0.5
        %v3988 = vtanh.pop %v3958
        %v3989 = vmul.f32 %v3959, 0.5
        %v3990 = vtanh.pop %v3989
        %v3991 = vmul.f32 %v3990, 0.5
        %v3992 = vadd.f32 %v3991, 0.5
        %v3993 = vmul.f32 %v3987, %v3979
        %v3994 = vmul.f32 %v3983, %v3988
        %v3995 = vadd.f32 %v3993, %v3994
        %v3996 = vtanh.pop %v3995
        %v3997 = vmul.f32 %v3992, %v3996
        %3998 = vst [vmem:[#allocation4] sm:$0xff] %v3978
        %3999 = vst [vmem:[#allocation5] sm:$0xff] %v3976
        %s4000 = scalar_lea.vmem %s397, 40 [#allocation14]
        %4001 = vst [vmem:[%s4000] sm:$0xff] %v3978
        %s4002 = scalar_lea.vmem %s404, 16 [#allocation15]
        %4003 = vst [vmem:[%s4002] sm:$0xff] %v3997
        %4004 = vst [vmem:[#allocation6] sm:$0xff] %v3997
        %4005 = vst [vmem:[#allocation7] sm:$0xff] %v3995
        %s4006 = smul.addr %s1818, 8
        %s4007 = scalar_lea.vmem [#allocation2], %s4006
        %v4008 = vld [vmem:[%s4007] sm:$0xff]
        %v4009 = vld [vmem:[%s4007 + $0x8] sm:$0xff]
        %v4010 = vld [vmem:[%s4007 + $0x10] sm:$0xff]
        %v4011 = vld [vmem:[%s4007 + $0x18] sm:$0xff]
        %v4012 = vld [vmem:[#allocation4] sm:$0xff]
        %v4013 = vld [vmem:[#allocation11] sm:$0xff]
        %v4014 = vld [vmem:[#allocation11 + $0x8] sm:$0xff]
        %v4015 = vld [vmem:[#allocation11 + $0x10] sm:$0xff]
        %v4016 = vld [vmem:[#allocation11 + $0x18] sm:$0xff]
        %v4017 = vld [vmem:[#allocation11 + $0x20] sm:$0xff]
        %v4018 = vld [vmem:[#allocation11 + $0x28] sm:$0xff]
        %v4019 = vld [vmem:[#allocation11 + $0x30] sm:$0xff]
        %v4020 = vld [vmem:[#allocation11 + $0x38] sm:$0xff]
        %v4021 = vld [vmem:[#allocation11 + $0x40] sm:$0xff]
        %v4022 = vld [vmem:[#allocation11 + $0x48] sm:$0xff]
        %v4023 = vld [vmem:[#allocation11 + $0x50] sm:$0xff]
        %v4024 = vld [vmem:[#allocation11 + $0x58] sm:$0xff]
        %v4025 = vld [vmem:[#allocation11 + $0x60] sm:$0xff]
        %v4026 = vld [vmem:[#allocation11 + $0x68] sm:$0xff]
        %v4027 = vld [vmem:[#allocation11 + $0x70] sm:$0xff]
        %v4028 = vld [vmem:[#allocation11 + $0x78] sm:$0xff]
        %v4029 = vld [vmem:[#allocation11 + $0x80] sm:$0xff]
        %v4030 = vld [vmem:[#allocation11 + $0x88] sm:$0xff]
        %v4031 = vld [vmem:[#allocation11 + $0x90] sm:$0xff]
        %v4032 = vld [vmem:[#allocation11 + $0x98] sm:$0xff]
        %v4033 = vld [vmem:[#allocation11 + $0xa0] sm:$0xff]
        %v4034 = vld [vmem:[#allocation11 + $0xa8] sm:$0xff]
        %v4035 = vld [vmem:[#allocation11 + $0xb0] sm:$0xff]
        %v4036 = vld [vmem:[#allocation11 + $0xb8] sm:$0xff]
        %v4037 = vld [vmem:[#allocation11 + $0xc0] sm:$0xff]
        %v4038 = vld [vmem:[#allocation11 + $0xc8] sm:$0xff]
        %v4039 = vld [vmem:[#allocation11 + $0xd0] sm:$0xff]
        %v4040 = vld [vmem:[#allocation11 + $0xd8] sm:$0xff]
        %v4041 = vld [vmem:[#allocation11 + $0xe0] sm:$0xff]
        %v4042 = vld [vmem:[#allocation11 + $0xe8] sm:$0xff]
        %v4043 = vld [vmem:[#allocation11 + $0xf0] sm:$0xff]
        %v4044 = vld [vmem:[#allocation11 + $0xf8] sm:$0xff]
        %v4045 = vld [vmem:[#allocation11 + $0x100] sm:$0xff]
        %v4046 = vld [vmem:[#allocation11 + $0x108] sm:$0xff]
        %v4047 = vld [vmem:[#allocation11 + $0x110] sm:$0xff]
        %v4048 = vld [vmem:[#allocation11 + $0x118] sm:$0xff]
        %v4049 = vld [vmem:[#allocation11 + $0x120] sm:$0xff]
        %v4050 = vld [vmem:[#allocation11 + $0x128] sm:$0xff]
        %v4051 = vld [vmem:[#allocation11 + $0x130] sm:$0xff]
        %v4052 = vld [vmem:[#allocation11 + $0x138] sm:$0xff]
        %v4053 = vld [vmem:[#allocation11 + $0x140] sm:$0xff]
        %v4054 = vld [vmem:[#allocation11 + $0x148] sm:$0xff]
        %v4055 = vld [vmem:[#allocation11 + $0x150] sm:$0xff]
        %v4056 = vld [vmem:[#allocation11 + $0x158] sm:$0xff]
        %v4057 = vld [vmem:[#allocation11 + $0x160] sm:$0xff]
        %v4058 = vld [vmem:[#allocation11 + $0x168] sm:$0xff]
        %v4059 = vld [vmem:[#allocation11 + $0x170] sm:$0xff]
        %v4060 = vld [vmem:[#allocation11 + $0x178] sm:$0xff]
        %v4061 = vld [vmem:[#allocation11 + $0x180] sm:$0xff]
        %v4062 = vld [vmem:[#allocation11 + $0x188] sm:$0xff]
        %v4063 = vld [vmem:[#allocation11 + $0x190] sm:$0xff]
        %v4064 = vld [vmem:[#allocation11 + $0x198] sm:$0xff]
        %v4065 = vld [vmem:[#allocation11 + $0x1a0] sm:$0xff]
        %v4066 = vld [vmem:[#allocation11 + $0x1a8] sm:$0xff]
        %v4067 = vld [vmem:[#allocation11 + $0x1b0] sm:$0xff]
        %v4068 = vld [vmem:[#allocation11 + $0x1b8] sm:$0xff]
        %v4069 = vld [vmem:[#allocation11 + $0x1c0] sm:$0xff]
        %v4070 = vld [vmem:[#allocation11 + $0x1c8] sm:$0xff]
        %v4071 = vld [vmem:[#allocation11 + $0x1d0] sm:$0xff]
        %v4072 = vld [vmem:[#allocation11 + $0x1d8] sm:$0xff]
        %v4073 = vld [vmem:[#allocation11 + $0x1e0] sm:$0xff]
        %v4074 = vld [vmem:[#allocation11 + $0x1e8] sm:$0xff]
        %v4075 = vld [vmem:[#allocation11 + $0x1f0] sm:$0xff]
        %v4076 = vld [vmem:[#allocation11 + $0x1f8] sm:$0xff]
        %4077 = vmatprep.subr.mxu0 %v4014
        %4078 = vmatpush1.msra.mxu0 %v4013
        %4079 = vmatprep.subr.mxu0 %v4018
        %4080 = vmatpush1.msra.mxu0 %v4017
        %4081 = vmatprep.subr.mxu0 %v4022
        %4082 = vmatpush1.msra.mxu0 %v4021
        %4083 = vmatprep.subr.mxu0 %v4026
        %4084 = vmatpush1.msra.mxu0 %v4025
        %4085 = vmatprep.subr.mxu0 %v4030
        %4086 = vmatpush1.msra.mxu0 %v4029
        %4087 = vmatprep.subr.mxu0 %v4034
        %4088 = vmatpush1.msra.mxu0 %v4033
        %4089 = vmatprep.subr.mxu0 %v4038
        %4090 = vmatpush1.msra.mxu0 %v4037
        %4091 = vmatprep.subr.mxu0 %v4042
        %4092 = vmatpush1.msra.mxu0 %v4041
        %4093 = vmatprep.subr.mxu0 %v4046
        %4094 = vmatpush1.msra.mxu0 %v4045
        %4095 = vmatprep.subr.mxu0 %v4050
        %4096 = vmatpush1.msra.mxu0 %v4049
        %4097 = vmatprep.subr.mxu0 %v4054
        %4098 = vmatpush1.msra.mxu0 %v4053
        %4099 = vmatprep.subr.mxu0 %v4058
        %4100 = vmatpush1.msra.mxu0 %v4057
        %4101 = vmatprep.subr.mxu0 %v4062
        %4102 = vmatpush1.msra.mxu0 %v4061
        %4103 = vmatprep.subr.mxu0 %v4066
        %4104 = vmatpush1.msra.mxu0 %v4065
        %4105 = vmatprep.subr.mxu0 %v4070
        %4106 = vmatpush1.msra.mxu0 %v4069
        %4107 = vmatprep.subr.mxu0 %v4074
        %4108 = vmatpush1.msra.mxu0 %v4073
        %4109 = vmatprep.subr.mxu0 0.0
        %4110 = vmatpush1.msra.mxu0 0.0
        %4111 = vmatprep.subr.mxu0 0.0
        %4112 = vmatpush1.msra.mxu0 0.0
        %4113 = vmatprep.subr.mxu0 0.0
        %4114 = vmatpush1.msra.mxu0 0.0
        %4115 = vmatprep.subr.mxu0 0.0
        %4116 = vmatpush1.msra.mxu0 0.0
        %4117 = vmatprep.subr.mxu0 0.0
        %4118 = vmatpush1.msra.mxu0 0.0
        %4119 = vmatprep.subr.mxu0 0.0
        %4120 = vmatpush1.msra.mxu0 0.0
        %4121 = vmatprep.subr.mxu0 0.0
        %4122 = vmatpush1.msra.mxu0 0.0
        %4123 = vmatprep.subr.mxu0 0.0
        %4124 = vmatpush1.msra.mxu0 0.0
        %4125 = vmatprep.subr.mxu0 0.0
        %4126 = vmatpush1.msra.mxu0 0.0
        %4127 = vmatprep.subr.mxu0 0.0
        %4128 = vmatpush1.msra.mxu0 0.0
        %4129 = vmatprep.subr.mxu0 0.0
        %4130 = vmatpush1.msra.mxu0 0.0
        %4131 = vmatprep.subr.mxu0 0.0
        %4132 = vmatpush1.msra.mxu0 0.0
        %4133 = vmatprep.subr.mxu0 0.0
        %4134 = vmatpush1.msra.mxu0 0.0
        %4135 = vmatprep.subr.mxu0 0.0
        %4136 = vmatpush1.msra.mxu0 0.0
        %4137 = vmatprep.subr.mxu0 0.0
        %4138 = vmatpush1.msra.mxu0 0.0
        %4139 = vmatprep.subr.mxu0 0.0
        %4140 = vmatpush1.msra.mxu0 0.0
        %4141 = vmatprep.mubr.f32.mxu0 0.0
        %4142 = vmatmul.mubr.f32.gmra.mrb[0].mxu0 %v4012
        %v4143 = vpop.f32.mrb[0].mxu0
        %v4144 = vadd.f32 0.0, %v4143
        %v4145 = vpop.f32.mrb[0].mxu0
        %v4146 = vadd.f32 0.0, %v4145
        %4147 = vdwg.mxu0
        %4148 = vmatprep.subr.mxu0 %v4016
        %4149 = vmatpush1.msra.mxu0 %v4015
        %4150 = vmatprep.subr.mxu0 %v4020
        %4151 = vmatpush1.msra.mxu0 %v4019
        %4152 = vmatprep.subr.mxu0 %v4024
        %4153 = vmatpush1.msra.mxu0 %v4023
        %4154 = vmatprep.subr.mxu0 %v4028
        %4155 = vmatpush1.msra.mxu0 %v4027
        %4156 = vmatprep.subr.mxu0 %v4032
        %4157 = vmatpush1.msra.mxu0 %v4031
        %4158 = vmatprep.subr.mxu0 %v4036
        %4159 = vmatpush1.msra.mxu0 %v4035
        %4160 = vmatprep.subr.mxu0 %v4040
        %4161 = vmatpush1.msra.mxu0 %v4039
        %4162 = vmatprep.subr.mxu0 %v4044
        %4163 = vmatpush1.msra.mxu0 %v4043
        %4164 = vmatprep.subr.mxu0 %v4048
        %4165 = vmatpush1.msra.mxu0 %v4047
        %4166 = vmatprep.subr.mxu0 %v4052
        %4167 = vmatpush1.msra.mxu0 %v4051
        %4168 = vmatprep.subr.mxu0 %v4056
        %4169 = vmatpush1.msra.mxu0 %v4055
        %4170 = vmatprep.subr.mxu0 %v4060
        %4171 = vmatpush1.msra.mxu0 %v4059
        %4172 = vmatprep.subr.mxu0 %v4064
        %4173 = vmatpush1.msra.mxu0 %v4063
        %4174 = vmatprep.subr.mxu0 %v4068
        %4175 = vmatpush1.msra.mxu0 %v4067
        %4176 = vmatprep.subr.mxu0 %v4072
        %4177 = vmatpush1.msra.mxu0 %v4071
        %4178 = vmatprep.subr.mxu0 %v4076
        %4179 = vmatpush1.msra.mxu0 %v4075
        %4180 = vmatprep.subr.mxu0 0.0
        %4181 = vmatpush1.msra.mxu0 0.0
        %4182 = vmatprep.subr.mxu0 0.0
        %4183 = vmatpush1.msra.mxu0 0.0
        %4184 = vmatprep.subr.mxu0 0.0
        %4185 = vmatpush1.msra.mxu0 0.0
        %4186 = vmatprep.subr.mxu0 0.0
        %4187 = vmatpush1.msra.mxu0 0.0
        %4188 = vmatprep.subr.mxu0 0.0
        %4189 = vmatpush1.msra.mxu0 0.0
        %4190 = vmatprep.subr.mxu0 0.0
        %4191 = vmatpush1.msra.mxu0 0.0
        %4192 = vmatprep.subr.mxu0 0.0
        %4193 = vmatpush1.msra.mxu0 0.0
        %4194 = vmatprep.subr.mxu0 0.0
        %4195 = vmatpush1.msra.mxu0 0.0
        %4196 = vmatprep.subr.mxu0 0.0
        %4197 = vmatpush1.msra.mxu0 0.0
        %4198 = vmatprep.subr.mxu0 0.0
        %4199 = vmatpush1.msra.mxu0 0.0
        %4200 = vmatprep.subr.mxu0 0.0
        %4201 = vmatpush1.msra.mxu0 0.0
        %4202 = vmatprep.subr.mxu0 0.0
        %4203 = vmatpush1.msra.mxu0 0.0
        %4204 = vmatprep.subr.mxu0 0.0
        %4205 = vmatpush1.msra.mxu0 0.0
        %4206 = vmatprep.subr.mxu0 0.0
        %4207 = vmatpush1.msra.mxu0 0.0
        %4208 = vmatprep.subr.mxu0 0.0
        %4209 = vmatpush1.msra.mxu0 0.0
        %4210 = vmatprep.subr.mxu0 0.0
        %4211 = vmatpush1.msra.mxu0 0.0
        %4212 = vmatprep.mubr.f32.mxu0 0.0
        %4213 = vmatmul.mubr.f32.gmra.mrb[0].mxu0 %v4012
        %v4214 = vpop.f32.mrb[0].mxu0
        %v4215 = vadd.f32 0.0, %v4214
        %v4216 = vpop.f32.mrb[0].mxu0
        %v4217 = vadd.f32 0.0, %v4216
        %4218 = vdwg.mxu0
        %v4219 = vadd.f32 %v4008, %v4144
        %v4220 = vadd.f32 %v4009, %v4146
        %v4221 = vadd.f32 %v4010, %v4215
        %v4222 = vadd.f32 %v4011, %v4217
        %s4223 = smul.addr %s1600, 8
        %s4224 = scalar_lea.vmem [#allocation3], %s4223
        %v4225 = vld [vmem:[%s4224] sm:$0xff]
        %v4226 = vld [vmem:[%s4224 + $0x8] sm:$0xff]
        %v4227 = vld [vmem:[%s4224 + $0x10] sm:$0xff]
        %v4228 = vld [vmem:[%s4224 + $0x18] sm:$0xff]
        %v4229 = vld [vmem:[#allocation6] sm:$0xff]
        %v4230 = vld [vmem:[#allocation13] sm:$0xff]
        %v4231 = vld [vmem:[#allocation13 + $0x8] sm:$0xff]
        %v4232 = vld [vmem:[#allocation13 + $0x10] sm:$0xff]
        %v4233 = vld [vmem:[#allocation13 + $0x18] sm:$0xff]
        %v4234 = vld [vmem:[#allocation13 + $0x20] sm:$0xff]
        %v4235 = vld [vmem:[#allocation13 + $0x28] sm:$0xff]
        %v4236 = vld [vmem:[#allocation13 + $0x30] sm:$0xff]
        %v4237 = vld [vmem:[#allocation13 + $0x38] sm:$0xff]
        %v4238 = vld [vmem:[#allocation13 + $0x40] sm:$0xff]
        %v4239 = vld [vmem:[#allocation13 + $0x48] sm:$0xff]
        %v4240 = vld [vmem:[#allocation13 + $0x50] sm:$0xff]
        %v4241 = vld [vmem:[#allocation13 + $0x58] sm:$0xff]
        %v4242 = vld [vmem:[#allocation13 + $0x60] sm:$0xff]
        %v4243 = vld [vmem:[#allocation13 + $0x68] sm:$0xff]
        %v4244 = vld [vmem:[#allocation13 + $0x70] sm:$0xff]
        %v4245 = vld [vmem:[#allocation13 + $0x78] sm:$0xff]
        %v4246 = vld [vmem:[#allocation13 + $0x80] sm:$0xff]
        %v4247 = vld [vmem:[#allocation13 + $0x88] sm:$0xff]
        %v4248 = vld [vmem:[#allocation13 + $0x90] sm:$0xff]
        %v4249 = vld [vmem:[#allocation13 + $0x98] sm:$0xff]
        %v4250 = vld [vmem:[#allocation13 + $0xa0] sm:$0xff]
        %v4251 = vld [vmem:[#allocation13 + $0xa8] sm:$0xff]
        %v4252 = vld [vmem:[#allocation13 + $0xb0] sm:$0xff]
        %v4253 = vld [vmem:[#allocation13 + $0xb8] sm:$0xff]
        %v4254 = vld [vmem:[#allocation13 + $0xc0] sm:$0xff]
        %v4255 = vld [vmem:[#allocation13 + $0xc8] sm:$0xff]
        %v4256 = vld [vmem:[#allocation13 + $0xd0] sm:$0xff]
        %v4257 = vld [vmem:[#allocation13 + $0xd8] sm:$0xff]
        %v4258 = vld [vmem:[#allocation13 + $0xe0] sm:$0xff]
        %v4259 = vld [vmem:[#allocation13 + $0xe8] sm:$0xff]
        %v4260 = vld [vmem:[#allocation13 + $0xf0] sm:$0xff]
        %v4261 = vld [vmem:[#allocation13 + $0xf8] sm:$0xff]
        %v4262 = vld [vmem:[#allocation13 + $0x100] sm:$0xff]
        %v4263 = vld [vmem:[#allocation13 + $0x108] sm:$0xff]
        %v4264 = vld [vmem:[#allocation13 + $0x110] sm:$0xff]
        %v4265 = vld [vmem:[#allocation13 + $0x118] sm:$0xff]
        %v4266 = vld [vmem:[#allocation13 + $0x120] sm:$0xff]
        %v4267 = vld [vmem:[#allocation13 + $0x128] sm:$0xff]
        %v4268 = vld [vmem:[#allocation13 + $0x130] sm:$0xff]
        %v4269 = vld [vmem:[#allocation13 + $0x138] sm:$0xff]
        %v4270 = vld [vmem:[#allocation13 + $0x140] sm:$0xff]
        %v4271 = vld [vmem:[#allocation13 + $0x148] sm:$0xff]
        %v4272 = vld [vmem:[#allocation13 + $0x150] sm:$0xff]
        %v4273 = vld [vmem:[#allocation13 + $0x158] sm:$0xff]
        %v4274 = vld [vmem:[#allocation13 + $0x160] sm:$0xff]
        %v4275 = vld [vmem:[#allocation13 + $0x168] sm:$0xff]
        %v4276 = vld [vmem:[#allocation13 + $0x170] sm:$0xff]
        %v4277 = vld [vmem:[#allocation13 + $0x178] sm:$0xff]
        %v4278 = vld [vmem:[#allocation13 + $0x180] sm:$0xff]
        %v4279 = vld [vmem:[#allocation13 + $0x188] sm:$0xff]
        %v4280 = vld [vmem:[#allocation13 + $0x190] sm:$0xff]
        %v4281 = vld [vmem:[#allocation13 + $0x198] sm:$0xff]
        %v4282 = vld [vmem:[#allocation13 + $0x1a0] sm:$0xff]
        %v4283 = vld [vmem:[#allocation13 + $0x1a8] sm:$0xff]
        %v4284 = vld [vmem:[#allocation13 + $0x1b0] sm:$0xff]
        %v4285 = vld [vmem:[#allocation13 + $0x1b8] sm:$0xff]
        %v4286 = vld [vmem:[#allocation13 + $0x1c0] sm:$0xff]
        %v4287 = vld [vmem:[#allocation13 + $0x1c8] sm:$0xff]
        %v4288 = vld [vmem:[#allocation13 + $0x1d0] sm:$0xff]
        %v4289 = vld [vmem:[#allocation13 + $0x1d8] sm:$0xff]
        %v4290 = vld [vmem:[#allocation13 + $0x1e0] sm:$0xff]
        %v4291 = vld [vmem:[#allocation13 + $0x1e8] sm:$0xff]
        %v4292 = vld [vmem:[#allocation13 + $0x1f0] sm:$0xff]
        %v4293 = vld [vmem:[#allocation13 + $0x1f8] sm:$0xff]
        %4294 = vmatprep.subr.mxu0 %v4231
        %4295 = vmatpush1.msra.mxu0 %v4230
        %4296 = vmatprep.subr.mxu0 %v4235
        %4297 = vmatpush1.msra.mxu0 %v4234
        %4298 = vmatprep.subr.mxu0 %v4239
        %4299 = vmatpush1.msra.mxu0 %v4238
        %4300 = vmatprep.subr.mxu0 %v4243
        %4301 = vmatpush1.msra.mxu0 %v4242
        %4302 = vmatprep.subr.mxu0 %v4247
        %4303 = vmatpush1.msra.mxu0 %v4246
        %4304 = vmatprep.subr.mxu0 %v4251
        %4305 = vmatpush1.msra.mxu0 %v4250
        %4306 = vmatprep.subr.mxu0 %v4255
        %4307 = vmatpush1.msra.mxu0 %v4254
        %4308 = vmatprep.subr.mxu0 %v4259
        %4309 = vmatpush1.msra.mxu0 %v4258
        %4310 = vmatprep.subr.mxu0 %v4263
        %4311 = vmatpush1.msra.mxu0 %v4262
        %4312 = vmatprep.subr.mxu0 %v4267
        %4313 = vmatpush1.msra.mxu0 %v4266
        %4314 = vmatprep.subr.mxu0 %v4271
        %4315 = vmatpush1.msra.mxu0 %v4270
        %4316 = vmatprep.subr.mxu0 %v4275
        %4317 = vmatpush1.msra.mxu0 %v4274
        %4318 = vmatprep.subr.mxu0 %v4279
        %4319 = vmatpush1.msra.mxu0 %v4278
        %4320 = vmatprep.subr.mxu0 %v4283
        %4321 = vmatpush1.msra.mxu0 %v4282
        %4322 = vmatprep.subr.mxu0 %v4287
        %4323 = vmatpush1.msra.mxu0 %v4286
        %4324 = vmatprep.subr.mxu0 %v4291
        %4325 = vmatpush1.msra.mxu0 %v4290
        %4326 = vmatprep.subr.mxu0 0.0
        %4327 = vmatpush1.msra.mxu0 0.0
        %4328 = vmatprep.subr.mxu0 0.0
        %4329 = vmatpush1.msra.mxu0 0.0
        %4330 = vmatprep.subr.mxu0 0.0
        %4331 = vmatpush1.msra.mxu0 0.0
        %4332 = vmatprep.subr.mxu0 0.0
        %4333 = vmatpush1.msra.mxu0 0.0
        %4334 = vmatprep.subr.mxu0 0.0
        %4335 = vmatpush1.msra.mxu0 0.0
        %4336 = vmatprep.subr.mxu0 0.0
        %4337 = vmatpush1.msra.mxu0 0.0
        %4338 = vmatprep.subr.mxu0 0.0
        %4339 = vmatpush1.msra.mxu0 0.0
        %4340 = vmatprep.subr.mxu0 0.0
        %4341 = vmatpush1.msra.mxu0 0.0
        %4342 = vmatprep.subr.mxu0 0.0
        %4343 = vmatpush1.msra.mxu0 0.0
        %4344 = vmatprep.subr.mxu0 0.0
        %4345 = vmatpush1.msra.mxu0 0.0
        %4346 = vmatprep.subr.mxu0 0.0
        %4347 = vmatpush1.msra.mxu0 0.0
        %4348 = vmatprep.subr.mxu0 0.0
        %4349 = vmatpush1.msra.mxu0 0.0
        %4350 = vmatprep.subr.mxu0 0.0
        %4351 = vmatpush1.msra.mxu0 0.0
        %4352 = vmatprep.subr.mxu0 0.0
        %4353 = vmatpush1.msra.mxu0 0.0
        %4354 = vmatprep.subr.mxu0 0.0
        %4355 = vmatpush1.msra.mxu0 0.0
        %4356 = vmatprep.subr.mxu0 0.0
        %4357 = vmatpush1.msra.mxu0 0.0
        %4358 = vmatprep.mubr.f32.mxu0 0.0
        %4359 = vmatmul.mubr.f32.gmra.mrb[0].mxu0 %v4229
        %v4360 = vpop.f32.mrb[0].mxu0
        %v4361 = vadd.f32 0.0, %v4360
        %v4362 = vpop.f32.mrb[0].mxu0
        %v4363 = vadd.f32 0.0, %v4362
        %4364 = vdwg.mxu0
        %4365 = vmatprep.subr.mxu0 %v4233
        %4366 = vmatpush1.msra.mxu0 %v4232
        %4367 = vmatprep.subr.mxu0 %v4237
        %4368 = vmatpush1.msra.mxu0 %v4236
        %4369 = vmatprep.subr.mxu0 %v4241
        %4370 = vmatpush1.msra.mxu0 %v4240
        %4371 = vmatprep.subr.mxu0 %v4245
        %4372 = vmatpush1.msra.mxu0 %v4244
        %4373 = vmatprep.subr.mxu0 %v4249
        %4374 = vmatpush1.msra.mxu0 %v4248
        %4375 = vmatprep.subr.mxu0 %v4253
        %4376 = vmatpush1.msra.mxu0 %v4252
        %4377 = vmatprep.subr.mxu0 %v4257
        %4378 = vmatpush1.msra.mxu0 %v4256
        %4379 = vmatprep.subr.mxu0 %v4261
        %4380 = vmatpush1.msra.mxu0 %v4260
        %4381 = vmatprep.subr.mxu0 %v4265
        %4382 = vmatpush1.msra.mxu0 %v4264
        %4383 = vmatprep.subr.mxu0 %v4269
        %4384 = vmatpush1.msra.mxu0 %v4268
        %4385 = vmatprep.subr.mxu0 %v4273
        %4386 = vmatpush1.msra.mxu0 %v4272
        %4387 = vmatprep.subr.mxu0 %v4277
        %4388 = vmatpush1.msra.mxu0 %v4276
        %4389 = vmatprep.subr.mxu0 %v4281
        %4390 = vmatpush1.msra.mxu0 %v4280
        %4391 = vmatprep.subr.mxu0 %v4285
        %4392 = vmatpush1.msra.mxu0 %v4284
        %4393 = vmatprep.subr.mxu0 %v4289
        %4394 = vmatpush1.msra.mxu0 %v4288
        %4395 = vmatprep.subr.mxu0 %v4293
        %4396 = vmatpush1.msra.mxu0 %v4292
        %4397 = vmatprep.subr.mxu0 0.0
        %4398 = vmatpush1.msra.mxu0 0.0
        %4399 = vmatprep.subr.mxu0 0.0
        %4400 = vmatpush1.msra.mxu0 0.0
        %4401 = vmatprep.subr.mxu0 0.0
        %4402 = vmatpush1.msra.mxu0 0.0
        %4403 = vmatprep.subr.mxu0 0.0
        %4404 = vmatpush1.msra.mxu0 0.0
        %4405 = vmatprep.subr.mxu0 0.0
        %4406 = vmatpush1.msra.mxu0 0.0
        %4407 = vmatprep.subr.mxu0 0.0
        %4408 = vmatpush1.msra.mxu0 0.0
        %4409 = vmatprep.subr.mxu0 0.0
        %4410 = vmatpush1.msra.mxu0 0.0
        %4411 = vmatprep.subr.mxu0 0.0
        %4412 = vmatpush1.msra.mxu0 0.0
        %4413 = vmatprep.subr.mxu0 0.0
        %4414 = vmatpush1.msra.mxu0 0.0
        %4415 = vmatprep.subr.mxu0 0.0
        %4416 = vmatpush1.msra.mxu0 0.0
        %4417 = vmatprep.subr.mxu0 0.0
        %4418 = vmatpush1.msra.mxu0 0.0
        %4419 = vmatprep.subr.mxu0 0.0
        %4420 = vmatpush1.msra.mxu0 0.0
        %4421 = vmatprep.subr.mxu0 0.0
        %4422 = vmatpush1.msra.mxu0 0.0
        %4423 = vmatprep.subr.mxu0 0.0
        %4424 = vmatpush1.msra.mxu0 0.0
        %4425 = vmatprep.subr.mxu0 0.0
        %4426 = vmatpush1.msra.mxu0 0.0
        %4427 = vmatprep.subr.mxu0 0.0
        %4428 = vmatpush1.msra.mxu0 0.0
        %4429 = vmatprep.mubr.f32.mxu0 0.0
        %4430 = vmatmul.mubr.f32.gmra.mrb[0].mxu0 %v4229
        %v4431 = vpop.f32.mrb[0].mxu0
        %v4432 = vadd.f32 0.0, %v4431
        %v4433 = vpop.f32.mrb[0].mxu0
        %v4434 = vadd.f32 0.0, %v4433
        %4435 = vdwg.mxu0
        %v4436 = vadd.f32 %v4225, %v4361
        %v4437 = vadd.f32 %v4226, %v4363
        %v4438 = vadd.f32 %v4227, %v4432
        %v4439 = vadd.f32 %v4228, %v4434
        %v4440 = vld [vmem:[#allocation5] sm:$0xff]
        %v4441 = vmul.f32 %v4219, 0.5
        %v4442 = vtanh.pop %v4441
        %v4443 = vmul.f32 %v4442, 0.5
        %v4444 = vadd.f32 %v4443, 0.5
        %v4445 = vmul.f32 %v4220, 0.5
        %v4446 = vtanh.pop %v4445
        %v4447 = vmul.f32 %v4446, 0.5
        %v4448 = vadd.f32 %v4447, 0.5
        %v4449 = vtanh.pop %v4221
        %v4450 = vmul.f32 %v4222, 0.5
        %v4451 = vtanh.pop %v4450
        %v4452 = vmul.f32 %v4451, 0.5
        %v4453 = vadd.f32 %v4452, 0.5
        %v4454 = vmul.f32 %v4448, %v4440
        %v4455 = vmul.f32 %v4444, %v4449
        %v4456 = vadd.f32 %v4454, %v4455
        %v4457 = vtanh.pop %v4456
        %v4458 = vmul.f32 %v4453, %v4457
        %v4459 = vld [vmem:[#allocation7] sm:$0xff]
        %v4460 = vmul.f32 %v4436, 0.5
        %v4461 = vtanh.pop %v4460
        %v4462 = vmul.f32 %v4461, 0.5
        %v4463 = vadd.f32 %v4462, 0.5
        %v4464 = vmul.f32 %v4437, 0.5
        %v4465 = vtanh.pop %v4464
        %v4466 = vmul.f32 %v4465, 0.5
        %v4467 = vadd.f32 %v4466, 0.5
        %v4468 = vtanh.pop %v4438
        %v4469 = vmul.f32 %v4439, 0.5
        %v4470 = vtanh.pop %v4469
        %v4471 = vmul.f32 %v4470, 0.5
        %v4472 = vadd.f32 %v4471, 0.5
        %v4473 = vmul.f32 %v4467, %v4459
        %v4474 = vmul.f32 %v4463, %v4468
        %v4475 = vadd.f32 %v4473, %v4474
        %v4476 = vtanh.pop %v4475
        %v4477 = vmul.f32 %v4472, %v4476
        %4478 = vst [vmem:[#allocation4] sm:$0xff] %v4458
        %4479 = vst [vmem:[#allocation5] sm:$0xff] %v4456
        %s4480 = scalar_lea.vmem %s397, 48 [#allocation14]
        %4481 = vst [vmem:[%s4480] sm:$0xff] %v4458
        %s4482 = scalar_lea.vmem %s404, 8 [#allocation15]
        %4483 = vst [vmem:[%s4482] sm:$0xff] %v4477
        %4484 = vst [vmem:[#allocation6] sm:$0xff] %v4477
        %4485 = vst [vmem:[#allocation7] sm:$0xff] %v4475
        %s4486 = smul.addr %s1337, 8
        %s4487 = scalar_lea.vmem [#allocation2], %s4486
        %v4488 = vld [vmem:[%s4487] sm:$0xff]
        %v4489 = vld [vmem:[%s4487 + $0x8] sm:$0xff]
        %v4490 = vld [vmem:[%s4487 + $0x10] sm:$0xff]
        %v4491 = vld [vmem:[%s4487 + $0x18] sm:$0xff]
        %v4492 = vld [vmem:[#allocation4] sm:$0xff]
        %v4493 = vld [vmem:[#allocation11] sm:$0xff]
        %v4494 = vld [vmem:[#allocation11 + $0x8] sm:$0xff]
        %v4495 = vld [vmem:[#allocation11 + $0x10] sm:$0xff]
        %v4496 = vld [vmem:[#allocation11 + $0x18] sm:$0xff]
        %v4497 = vld [vmem:[#allocation11 + $0x20] sm:$0xff]
        %v4498 = vld [vmem:[#allocation11 + $0x28] sm:$0xff]
        %v4499 = vld [vmem:[#allocation11 + $0x30] sm:$0xff]
        %v4500 = vld [vmem:[#allocation11 + $0x38] sm:$0xff]
        %v4501 = vld [vmem:[#allocation11 + $0x40] sm:$0xff]
        %v4502 = vld [vmem:[#allocation11 + $0x48] sm:$0xff]
        %v4503 = vld [vmem:[#allocation11 + $0x50] sm:$0xff]
        %v4504 = vld [vmem:[#allocation11 + $0x58] sm:$0xff]
        %v4505 = vld [vmem:[#allocation11 + $0x60] sm:$0xff]
        %v4506 = vld [vmem:[#allocation11 + $0x68] sm:$0xff]
        %v4507 = vld [vmem:[#allocation11 + $0x70] sm:$0xff]
        %v4508 = vld [vmem:[#allocation11 + $0x78] sm:$0xff]
        %v4509 = vld [vmem:[#allocation11 + $0x80] sm:$0xff]
        %v4510 = vld [vmem:[#allocation11 + $0x88] sm:$0xff]
        %v4511 = vld [vmem:[#allocation11 + $0x90] sm:$0xff]
        %v4512 = vld [vmem:[#allocation11 + $0x98] sm:$0xff]
        %v4513 = vld [vmem:[#allocation11 + $0xa0] sm:$0xff]
        %v4514 = vld [vmem:[#allocation11 + $0xa8] sm:$0xff]
        %v4515 = vld [vmem:[#allocation11 + $0xb0] sm:$0xff]
        %v4516 = vld [vmem:[#allocation11 + $0xb8] sm:$0xff]
        %v4517 = vld [vmem:[#allocation11 + $0xc0] sm:$0xff]
        %v4518 = vld [vmem:[#allocation11 + $0xc8] sm:$0xff]
        %v4519 = vld [vmem:[#allocation11 + $0xd0] sm:$0xff]
        %v4520 = vld [vmem:[#allocation11 + $0xd8] sm:$0xff]
        %v4521 = vld [vmem:[#allocation11 + $0xe0] sm:$0xff]
        %v4522 = vld [vmem:[#allocation11 + $0xe8] sm:$0xff]
        %v4523 = vld [vmem:[#allocation11 + $0xf0] sm:$0xff]
        %v4524 = vld [vmem:[#allocation11 + $0xf8] sm:$0xff]
        %v4525 = vld [vmem:[#allocation11 + $0x100] sm:$0xff]
        %v4526 = vld [vmem:[#allocation11 + $0x108] sm:$0xff]
        %v4527 = vld [vmem:[#allocation11 + $0x110] sm:$0xff]
        %v4528 = vld [vmem:[#allocation11 + $0x118] sm:$0xff]
        %v4529 = vld [vmem:[#allocation11 + $0x120] sm:$0xff]
        %v4530 = vld [vmem:[#allocation11 + $0x128] sm:$0xff]
        %v4531 = vld [vmem:[#allocation11 + $0x130] sm:$0xff]
        %v4532 = vld [vmem:[#allocation11 + $0x138] sm:$0xff]
        %v4533 = vld [vmem:[#allocation11 + $0x140] sm:$0xff]
        %v4534 = vld [vmem:[#allocation11 + $0x148] sm:$0xff]
        %v4535 = vld [vmem:[#allocation11 + $0x150] sm:$0xff]
        %v4536 = vld [vmem:[#allocation11 + $0x158] sm:$0xff]
        %v4537 = vld [vmem:[#allocation11 + $0x160] sm:$0xff]
        %v4538 = vld [vmem:[#allocation11 + $0x168] sm:$0xff]
        %v4539 = vld [vmem:[#allocation11 + $0x170] sm:$0xff]
        %v4540 = vld [vmem:[#allocation11 + $0x178] sm:$0xff]
        %v4541 = vld [vmem:[#allocation11 + $0x180] sm:$0xff]
        %v4542 = vld [vmem:[#allocation11 + $0x188] sm:$0xff]
        %v4543 = vld [vmem:[#allocation11 + $0x190] sm:$0xff]
        %v4544 = vld [vmem:[#allocation11 + $0x198] sm:$0xff]
        %v4545 = vld [vmem:[#allocation11 + $0x1a0] sm:$0xff]
        %v4546 = vld [vmem:[#allocation11 + $0x1a8] sm:$0xff]
        %v4547 = vld [vmem:[#allocation11 + $0x1b0] sm:$0xff]
        %v4548 = vld [vmem:[#allocation11 + $0x1b8] sm:$0xff]
        %v4549 = vld [vmem:[#allocation11 + $0x1c0] sm:$0xff]
        %v4550 = vld [vmem:[#allocation11 + $0x1c8] sm:$0xff]
        %v4551 = vld [vmem:[#allocation11 + $0x1d0] sm:$0xff]
        %v4552 = vld [vmem:[#allocation11 + $0x1d8] sm:$0xff]
        %v4553 = vld [vmem:[#allocation11 + $0x1e0] sm:$0xff]
        %v4554 = vld [vmem:[#allocation11 + $0x1e8] sm:$0xff]
        %v4555 = vld [vmem:[#allocation11 + $0x1f0] sm:$0xff]
        %v4556 = vld [vmem:[#allocation11 + $0x1f8] sm:$0xff]
        %4557 = vmatprep.subr.mxu0 %v4494
        %4558 = vmatpush1.msra.mxu0 %v4493
        %4559 = vmatprep.subr.mxu0 %v4498
        %4560 = vmatpush1.msra.mxu0 %v4497
        %4561 = vmatprep.subr.mxu0 %v4502
        %4562 = vmatpush1.msra.mxu0 %v4501
        %4563 = vmatprep.subr.mxu0 %v4506
        %4564 = vmatpush1.msra.mxu0 %v4505
        %4565 = vmatprep.subr.mxu0 %v4510
        %4566 = vmatpush1.msra.mxu0 %v4509
        %4567 = vmatprep.subr.mxu0 %v4514
        %4568 = vmatpush1.msra.mxu0 %v4513
        %4569 = vmatprep.subr.mxu0 %v4518
        %4570 = vmatpush1.msra.mxu0 %v4517
        %4571 = vmatprep.subr.mxu0 %v4522
        %4572 = vmatpush1.msra.mxu0 %v4521
        %4573 = vmatprep.subr.mxu0 %v4526
        %4574 = vmatpush1.msra.mxu0 %v4525
        %4575 = vmatprep.subr.mxu0 %v4530
        %4576 = vmatpush1.msra.mxu0 %v4529
        %4577 = vmatprep.subr.mxu0 %v4534
        %4578 = vmatpush1.msra.mxu0 %v4533
        %4579 = vmatprep.subr.mxu0 %v4538
        %4580 = vmatpush1.msra.mxu0 %v4537
        %4581 = vmatprep.subr.mxu0 %v4542
        %4582 = vmatpush1.msra.mxu0 %v4541
        %4583 = vmatprep.subr.mxu0 %v4546
        %4584 = vmatpush1.msra.mxu0 %v4545
        %4585 = vmatprep.subr.mxu0 %v4550
        %4586 = vmatpush1.msra.mxu0 %v4549
        %4587 = vmatprep.subr.mxu0 %v4554
        %4588 = vmatpush1.msra.mxu0 %v4553
        %4589 = vmatprep.subr.mxu0 0.0
        %4590 = vmatpush1.msra.mxu0 0.0
        %4591 = vmatprep.subr.mxu0 0.0
        %4592 = vmatpush1.msra.mxu0 0.0
        %4593 = vmatprep.subr.mxu0 0.0
        %4594 = vmatpush1.msra.mxu0 0.0
        %4595 = vmatprep.subr.mxu0 0.0
        %4596 = vmatpush1.msra.mxu0 0.0
        %4597 = vmatprep.subr.mxu0 0.0
        %4598 = vmatpush1.msra.mxu0 0.0
        %4599 = vmatprep.subr.mxu0 0.0
        %4600 = vmatpush1.msra.mxu0 0.0
        %4601 = vmatprep.subr.mxu0 0.0
        %4602 = vmatpush1.msra.mxu0 0.0
        %4603 = vmatprep.subr.mxu0 0.0
        %4604 = vmatpush1.msra.mxu0 0.0
        %4605 = vmatprep.subr.mxu0 0.0
        %4606 = vmatpush1.msra.mxu0 0.0
        %4607 = vmatprep.subr.mxu0 0.0
        %4608 = vmatpush1.msra.mxu0 0.0
        %4609 = vmatprep.subr.mxu0 0.0
        %4610 = vmatpush1.msra.mxu0 0.0
        %4611 = vmatprep.subr.mxu0 0.0
        %4612 = vmatpush1.msra.mxu0 0.0
        %4613 = vmatprep.subr.mxu0 0.0
        %4614 = vmatpush1.msra.mxu0 0.0
        %4615 = vmatprep.subr.mxu0 0.0
        %4616 = vmatpush1.msra.mxu0 0.0
        %4617 = vmatprep.subr.mxu0 0.0
        %4618 = vmatpush1.msra.mxu0 0.0
        %4619 = vmatprep.subr.mxu0 0.0
        %4620 = vmatpush1.msra.mxu0 0.0
        %4621 = vmatprep.mubr.f32.mxu0 0.0
        %4622 = vmatmul.mubr.f32.gmra.mrb[0].mxu0 %v4492
        %v4623 = vpop.f32.mrb[0].mxu0
        %v4624 = vadd.f32 0.0, %v4623
        %v4625 = vpop.f32.mrb[0].mxu0
        %v4626 = vadd.f32 0.0, %v4625
        %4627 = vdwg.mxu0
        %4628 = vmatprep.subr.mxu0 %v4496
        %4629 = vmatpush1.msra.mxu0 %v4495
        %4630 = vmatprep.subr.mxu0 %v4500
        %4631 = vmatpush1.msra.mxu0 %v4499
        %4632 = vmatprep.subr.mxu0 %v4504
        %4633 = vmatpush1.msra.mxu0 %v4503
        %4634 = vmatprep.subr.mxu0 %v4508
        %4635 = vmatpush1.msra.mxu0 %v4507
        %4636 = vmatprep.subr.mxu0 %v4512
        %4637 = vmatpush1.msra.mxu0 %v4511
        %4638 = vmatprep.subr.mxu0 %v4516
        %4639 = vmatpush1.msra.mxu0 %v4515
        %4640 = vmatprep.subr.mxu0 %v4520
        %4641 = vmatpush1.msra.mxu0 %v4519
        %4642 = vmatprep.subr.mxu0 %v4524
        %4643 = vmatpush1.msra.mxu0 %v4523
        %4644 = vmatprep.subr.mxu0 %v4528
        %4645 = vmatpush1.msra.mxu0 %v4527
        %4646 = vmatprep.subr.mxu0 %v4532
        %4647 = vmatpush1.msra.mxu0 %v4531
        %4648 = vmatprep.subr.mxu0 %v4536
        %4649 = vmatpush1.msra.mxu0 %v4535
        %4650 = vmatprep.subr.mxu0 %v4540
        %4651 = vmatpush1.msra.mxu0 %v4539
        %4652 = vmatprep.subr.mxu0 %v4544
        %4653 = vmatpush1.msra.mxu0 %v4543
        %4654 = vmatprep.subr.mxu0 %v4548
        %4655 = vmatpush1.msra.mxu0 %v4547
        %4656 = vmatprep.subr.mxu0 %v4552
        %4657 = vmatpush1.msra.mxu0 %v4551
        %4658 = vmatprep.subr.mxu0 %v4556
        %4659 = vmatpush1.msra.mxu0 %v4555
        %4660 = vmatprep.subr.mxu0 0.0
        %4661 = vmatpush1.msra.mxu0 0.0
        %4662 = vmatprep.subr.mxu0 0.0
        %4663 = vmatpush1.msra.mxu0 0.0
        %4664 = vmatprep.subr.mxu0 0.0
        %4665 = vmatpush1.msra.mxu0 0.0
        %4666 = vmatprep.subr.mxu0 0.0
        %4667 = vmatpush1.msra.mxu0 0.0
        %4668 = vmatprep.subr.mxu0 0.0
        %4669 = vmatpush1.msra.mxu0 0.0
        %4670 = vmatprep.subr.mxu0 0.0
        %4671 = vmatpush1.msra.mxu0 0.0
        %4672 = vmatprep.subr.mxu0 0.0
        %4673 = vmatpush1.msra.mxu0 0.0
        %4674 = vmatprep.subr.mxu0 0.0
        %4675 = vmatpush1.msra.mxu0 0.0
        %4676 = vmatprep.subr.mxu0 0.0
        %4677 = vmatpush1.msra.mxu0 0.0
        %4678 = vmatprep.subr.mxu0 0.0
        %4679 = vmatpush1.msra.mxu0 0.0
        %4680 = vmatprep.subr.mxu0 0.0
        %4681 = vmatpush1.msra.mxu0 0.0
        %4682 = vmatprep.subr.mxu0 0.0
        %4683 = vmatpush1.msra.mxu0 0.0
        %4684 = vmatprep.subr.mxu0 0.0
        %4685 = vmatpush1.msra.mxu0 0.0
        %4686 = vmatprep.subr.mxu0 0.0
        %4687 = vmatpush1.msra.mxu0 0.0
        %4688 = vmatprep.subr.mxu0 0.0
        %4689 = vmatpush1.msra.mxu0 0.0
        %4690 = vmatprep.subr.mxu0 0.0
        %4691 = vmatpush1.msra.mxu0 0.0
        %4692 = vmatprep.mubr.f32.mxu0 0.0
        %4693 = vmatmul.mubr.f32.gmra.mrb[0].mxu0 %v4492
        %v4694 = vpop.f32.mrb[0].mxu0
        %v4695 = vadd.f32 0.0, %v4694
        %v4696 = vpop.f32.mrb[0].mxu0
        %v4697 = vadd.f32 0.0, %v4696
        %4698 = vdwg.mxu0
        %v4699 = vadd.f32 %v4488, %v4624
        %v4700 = vadd.f32 %v4489, %v4626
        %v4701 = vadd.f32 %v4490, %v4695
        %v4702 = vadd.f32 %v4491, %v4697
        %s4703 = smul.addr %s1119, 8
        %s4704 = scalar_lea.vmem [#allocation3], %s4703
        %v4705 = vld [vmem:[%s4704] sm:$0xff]
        %v4706 = vld [vmem:[%s4704 + $0x8] sm:$0xff]
        %v4707 = vld [vmem:[%s4704 + $0x10] sm:$0xff]
        %v4708 = vld [vmem:[%s4704 + $0x18] sm:$0xff]
        %v4709 = vld [vmem:[#allocation6] sm:$0xff]
        %v4710 = vld [vmem:[#allocation13] sm:$0xff]
        %v4711 = vld [vmem:[#allocation13 + $0x8] sm:$0xff]
        %v4712 = vld [vmem:[#allocation13 + $0x10] sm:$0xff]
        %v4713 = vld [vmem:[#allocation13 + $0x18] sm:$0xff]
        %v4714 = vld [vmem:[#allocation13 + $0x20] sm:$0xff]
        %v4715 = vld [vmem:[#allocation13 + $0x28] sm:$0xff]
        %v4716 = vld [vmem:[#allocation13 + $0x30] sm:$0xff]
        %v4717 = vld [vmem:[#allocation13 + $0x38] sm:$0xff]
        %v4718 = vld [vmem:[#allocation13 + $0x40] sm:$0xff]
        %v4719 = vld [vmem:[#allocation13 + $0x48] sm:$0xff]
        %v4720 = vld [vmem:[#allocation13 + $0x50] sm:$0xff]
        %v4721 = vld [vmem:[#allocation13 + $0x58] sm:$0xff]
        %v4722 = vld [vmem:[#allocation13 + $0x60] sm:$0xff]
        %v4723 = vld [vmem:[#allocation13 + $0x68] sm:$0xff]
        %v4724 = vld [vmem:[#allocation13 + $0x70] sm:$0xff]
        %v4725 = vld [vmem:[#allocation13 + $0x78] sm:$0xff]
        %v4726 = vld [vmem:[#allocation13 + $0x80] sm:$0xff]
        %v4727 = vld [vmem:[#allocation13 + $0x88] sm:$0xff]
        %v4728 = vld [vmem:[#allocation13 + $0x90] sm:$0xff]
        %v4729 = vld [vmem:[#allocation13 + $0x98] sm:$0xff]
        %v4730 = vld [vmem:[#allocation13 + $0xa0] sm:$0xff]
        %v4731 = vld [vmem:[#allocation13 + $0xa8] sm:$0xff]
        %v4732 = vld [vmem:[#allocation13 + $0xb0] sm:$0xff]
        %v4733 = vld [vmem:[#allocation13 + $0xb8] sm:$0xff]
        %v4734 = vld [vmem:[#allocation13 + $0xc0] sm:$0xff]
        %v4735 = vld [vmem:[#allocation13 + $0xc8] sm:$0xff]
        %v4736 = vld [vmem:[#allocation13 + $0xd0] sm:$0xff]
        %v4737 = vld [vmem:[#allocation13 + $0xd8] sm:$0xff]
        %v4738 = vld [vmem:[#allocation13 + $0xe0] sm:$0xff]
        %v4739 = vld [vmem:[#allocation13 + $0xe8] sm:$0xff]
        %v4740 = vld [vmem:[#allocation13 + $0xf0] sm:$0xff]
        %v4741 = vld [vmem:[#allocation13 + $0xf8] sm:$0xff]
        %v4742 = vld [vmem:[#allocation13 + $0x100] sm:$0xff]
        %v4743 = vld [vmem:[#allocation13 + $0x108] sm:$0xff]
        %v4744 = vld [vmem:[#allocation13 + $0x110] sm:$0xff]
        %v4745 = vld [vmem:[#allocation13 + $0x118] sm:$0xff]
        %v4746 = vld [vmem:[#allocation13 + $0x120] sm:$0xff]
        %v4747 = vld [vmem:[#allocation13 + $0x128] sm:$0xff]
        %v4748 = vld [vmem:[#allocation13 + $0x130] sm:$0xff]
        %v4749 = vld [vmem:[#allocation13 + $0x138] sm:$0xff]
        %v4750 = vld [vmem:[#allocation13 + $0x140] sm:$0xff]
        %v4751 = vld [vmem:[#allocation13 + $0x148] sm:$0xff]
        %v4752 = vld [vmem:[#allocation13 + $0x150] sm:$0xff]
        %v4753 = vld [vmem:[#allocation13 + $0x158] sm:$0xff]
        %v4754 = vld [vmem:[#allocation13 + $0x160] sm:$0xff]
        %v4755 = vld [vmem:[#allocation13 + $0x168] sm:$0xff]
        %v4756 = vld [vmem:[#allocation13 + $0x170] sm:$0xff]
        %v4757 = vld [vmem:[#allocation13 + $0x178] sm:$0xff]
        %v4758 = vld [vmem:[#allocation13 + $0x180] sm:$0xff]
        %v4759 = vld [vmem:[#allocation13 + $0x188] sm:$0xff]
        %v4760 = vld [vmem:[#allocation13 + $0x190] sm:$0xff]
        %v4761 = vld [vmem:[#allocation13 + $0x198] sm:$0xff]
        %v4762 = vld [vmem:[#allocation13 + $0x1a0] sm:$0xff]
        %v4763 = vld [vmem:[#allocation13 + $0x1a8] sm:$0xff]
        %v4764 = vld [vmem:[#allocation13 + $0x1b0] sm:$0xff]
        %v4765 = vld [vmem:[#allocation13 + $0x1b8] sm:$0xff]
        %v4766 = vld [vmem:[#allocation13 + $0x1c0] sm:$0xff]
        %v4767 = vld [vmem:[#allocation13 + $0x1c8] sm:$0xff]
        %v4768 = vld [vmem:[#allocation13 + $0x1d0] sm:$0xff]
        %v4769 = vld [vmem:[#allocation13 + $0x1d8] sm:$0xff]
        %v4770 = vld [vmem:[#allocation13 + $0x1e0] sm:$0xff]
        %v4771 = vld [vmem:[#allocation13 + $0x1e8] sm:$0xff]
        %v4772 = vld [vmem:[#allocation13 + $0x1f0] sm:$0xff]
        %v4773 = vld [vmem:[#allocation13 + $0x1f8] sm:$0xff]
        %4774 = vmatprep.subr.mxu0 %v4711
        %4775 = vmatpush1.msra.mxu0 %v4710
        %4776 = vmatprep.subr.mxu0 %v4715
        %4777 = vmatpush1.msra.mxu0 %v4714
        %4778 = vmatprep.subr.mxu0 %v4719
        %4779 = vmatpush1.msra.mxu0 %v4718
        %4780 = vmatprep.subr.mxu0 %v4723
        %4781 = vmatpush1.msra.mxu0 %v4722
        %4782 = vmatprep.subr.mxu0 %v4727
        %4783 = vmatpush1.msra.mxu0 %v4726
        %4784 = vmatprep.subr.mxu0 %v4731
        %4785 = vmatpush1.msra.mxu0 %v4730
        %4786 = vmatprep.subr.mxu0 %v4735
        %4787 = vmatpush1.msra.mxu0 %v4734
        %4788 = vmatprep.subr.mxu0 %v4739
        %4789 = vmatpush1.msra.mxu0 %v4738
        %4790 = vmatprep.subr.mxu0 %v4743
        %4791 = vmatpush1.msra.mxu0 %v4742
        %4792 = vmatprep.subr.mxu0 %v4747
        %4793 = vmatpush1.msra.mxu0 %v4746
        %4794 = vmatprep.subr.mxu0 %v4751
        %4795 = vmatpush1.msra.mxu0 %v4750
        %4796 = vmatprep.subr.mxu0 %v4755
        %4797 = vmatpush1.msra.mxu0 %v4754
        %4798 = vmatprep.subr.mxu0 %v4759
        %4799 = vmatpush1.msra.mxu0 %v4758
        %4800 = vmatprep.subr.mxu0 %v4763
        %4801 = vmatpush1.msra.mxu0 %v4762
        %4802 = vmatprep.subr.mxu0 %v4767
        %4803 = vmatpush1.msra.mxu0 %v4766
        %4804 = vmatprep.subr.mxu0 %v4771
        %4805 = vmatpush1.msra.mxu0 %v4770
        %4806 = vmatprep.subr.mxu0 0.0
        %4807 = vmatpush1.msra.mxu0 0.0
        %4808 = vmatprep.subr.mxu0 0.0
        %4809 = vmatpush1.msra.mxu0 0.0
        %4810 = vmatprep.subr.mxu0 0.0
        %4811 = vmatpush1.msra.mxu0 0.0
        %4812 = vmatprep.subr.mxu0 0.0
        %4813 = vmatpush1.msra.mxu0 0.0
        %4814 = vmatprep.subr.mxu0 0.0
        %4815 = vmatpush1.msra.mxu0 0.0
        %4816 = vmatprep.subr.mxu0 0.0
        %4817 = vmatpush1.msra.mxu0 0.0
        %4818 = vmatprep.subr.mxu0 0.0
        %4819 = vmatpush1.msra.mxu0 0.0
        %4820 = vmatprep.subr.mxu0 0.0
        %4821 = vmatpush1.msra.mxu0 0.0
        %4822 = vmatprep.subr.mxu0 0.0
        %4823 = vmatpush1.msra.mxu0 0.0
        %4824 = vmatprep.subr.mxu0 0.0
        %4825 = vmatpush1.msra.mxu0 0.0
        %4826 = vmatprep.subr.mxu0 0.0
        %4827 = vmatpush1.msra.mxu0 0.0
        %4828 = vmatprep.subr.mxu0 0.0
        %4829 = vmatpush1.msra.mxu0 0.0
        %4830 = vmatprep.subr.mxu0 0.0
        %4831 = vmatpush1.msra.mxu0 0.0
        %4832 = vmatprep.subr.mxu0 0.0
        %4833 = vmatpush1.msra.mxu0 0.0
        %4834 = vmatprep.subr.mxu0 0.0
        %4835 = vmatpush1.msra.mxu0 0.0
        %4836 = vmatprep.subr.mxu0 0.0
        %4837 = vmatpush1.msra.mxu0 0.0
        %4838 = vmatprep.mubr.f32.mxu0 0.0
        %4839 = vmatmul.mubr.f32.gmra.mrb[0].mxu0 %v4709
        %v4840 = vpop.f32.mrb[0].mxu0
        %v4841 = vadd.f32 0.0, %v4840
        %v4842 = vpop.f32.mrb[0].mxu0
        %v4843 = vadd.f32 0.0, %v4842
        %4844 = vdwg.mxu0
        %4845 = vmatprep.subr.mxu0 %v4713
        %4846 = vmatpush1.msra.mxu0 %v4712
        %4847 = vmatprep.subr.mxu0 %v4717
        %4848 = vmatpush1.msra.mxu0 %v4716
        %4849 = vmatprep.subr.mxu0 %v4721
        %4850 = vmatpush1.msra.mxu0 %v4720
        %4851 = vmatprep.subr.mxu0 %v4725
        %4852 = vmatpush1.msra.mxu0 %v4724
        %4853 = vmatprep.subr.mxu0 %v4729
        %4854 = vmatpush1.msra.mxu0 %v4728
        %4855 = vmatprep.subr.mxu0 %v4733
        %4856 = vmatpush1.msra.mxu0 %v4732
        %4857 = vmatprep.subr.mxu0 %v4737
        %4858 = vmatpush1.msra.mxu0 %v4736
        %4859 = vmatprep.subr.mxu0 %v4741
        %4860 = vmatpush1.msra.mxu0 %v4740
        %4861 = vmatprep.subr.mxu0 %v4745
        %4862 = vmatpush1.msra.mxu0 %v4744
        %4863 = vmatprep.subr.mxu0 %v4749
        %4864 = vmatpush1.msra.mxu0 %v4748
        %4865 = vmatprep.subr.mxu0 %v4753
        %4866 = vmatpush1.msra.mxu0 %v4752
        %4867 = vmatprep.subr.mxu0 %v4757
        %4868 = vmatpush1.msra.mxu0 %v4756
        %4869 = vmatprep.subr.mxu0 %v4761
        %4870 = vmatpush1.msra.mxu0 %v4760
        %4871 = vmatprep.subr.mxu0 %v4765
        %4872 = vmatpush1.msra.mxu0 %v4764
        %4873 = vmatprep.subr.mxu0 %v4769
        %4874 = vmatpush1.msra.mxu0 %v4768
        %4875 = vmatprep.subr.mxu0 %v4773
        %4876 = vmatpush1.msra.mxu0 %v4772
        %4877 = vmatprep.subr.mxu0 0.0
        %4878 = vmatpush1.msra.mxu0 0.0
        %4879 = vmatprep.subr.mxu0 0.0
        %4880 = vmatpush1.msra.mxu0 0.0
        %4881 = vmatprep.subr.mxu0 0.0
        %4882 = vmatpush1.msra.mxu0 0.0
        %4883 = vmatprep.subr.mxu0 0.0
        %4884 = vmatpush1.msra.mxu0 0.0
        %4885 = vmatprep.subr.mxu0 0.0
        %4886 = vmatpush1.msra.mxu0 0.0
        %4887 = vmatprep.subr.mxu0 0.0
        %4888 = vmatpush1.msra.mxu0 0.0
        %4889 = vmatprep.subr.mxu0 0.0
        %4890 = vmatpush1.msra.mxu0 0.0
        %4891 = vmatprep.subr.mxu0 0.0
        %4892 = vmatpush1.msra.mxu0 0.0
        %4893 = vmatprep.subr.mxu0 0.0
        %4894 = vmatpush1.msra.mxu0 0.0
        %4895 = vmatprep.subr.mxu0 0.0
        %4896 = vmatpush1.msra.mxu0 0.0
        %4897 = vmatprep.subr.mxu0 0.0
        %4898 = vmatpush1.msra.mxu0 0.0
        %4899 = vmatprep.subr.mxu0 0.0
        %4900 = vmatpush1.msra.mxu0 0.0
        %4901 = vmatprep.subr.mxu0 0.0
        %4902 = vmatpush1.msra.mxu0 0.0
        %4903 = vmatprep.subr.mxu0 0.0
        %4904 = vmatpush1.msra.mxu0 0.0
        %4905 = vmatprep.subr.mxu0 0.0
        %4906 = vmatpush1.msra.mxu0 0.0
        %4907 = vmatprep.subr.mxu0 0.0
        %4908 = vmatpush1.msra.mxu0 0.0
        %4909 = vmatprep.mubr.f32.mxu0 0.0
        %4910 = vmatmul.mubr.f32.gmra.mrb[0].mxu0 %v4709
        %v4911 = vpop.f32.mrb[0].mxu0
        %v4912 = vadd.f32 0.0, %v4911
        %v4913 = vpop.f32.mrb[0].mxu0
        %v4914 = vadd.f32 0.0, %v4913
        %4915 = vdwg.mxu0
        %v4916 = vadd.f32 %v4705, %v4841
        %v4917 = vadd.f32 %v4706, %v4843
        %v4918 = vadd.f32 %v4707, %v4912
        %v4919 = vadd.f32 %v4708, %v4914
        %v4920 = vld [vmem:[#allocation5] sm:$0xff]
        %v4921 = vmul.f32 %v4699, 0.5
        %v4922 = vtanh.pop %v4921
        %v4923 = vmul.f32 %v4922, 0.5
        %v4924 = vadd.f32 %v4923, 0.5
        %v4925 = vmul.f32 %v4700, 0.5
        %v4926 = vtanh.pop %v4925
        %v4927 = vmul.f32 %v4926, 0.5
        %v4928 = vadd.f32 %v4927, 0.5
        %v4929 = vtanh.pop %v4701
        %v4930 = vmul.f32 %v4702, 0.5
        %v4931 = vtanh.pop %v4930
        %v4932 = vmul.f32 %v4931, 0.5
        %v4933 = vadd.f32 %v4932, 0.5
        %v4934 = vmul.f32 %v4928, %v4920
        %v4935 = vmul.f32 %v4924, %v4929
        %v4936 = vadd.f32 %v4934, %v4935
        %v4937 = vtanh.pop %v4936
        %v4938 = vmul.f32 %v4933, %v4937
        %v4939 = vld [vmem:[#allocation7] sm:$0xff]
        %v4940 = vmul.f32 %v4916, 0.5
        %v4941 = vtanh.pop %v4940
        %v4942 = vmul.f32 %v4941, 0.5
        %v4943 = vadd.f32 %v4942, 0.5
        %v4944 = vmul.f32 %v4917, 0.5
        %v4945 = vtanh.pop %v4944
        %v4946 = vmul.f32 %v4945, 0.5
        %v4947 = vadd.f32 %v4946, 0.5
        %v4948 = vtanh.pop %v4918
        %v4949 = vmul.f32 %v4919, 0.5
        %v4950 = vtanh.pop %v4949
        %v4951 = vmul.f32 %v4950, 0.5
        %v4952 = vadd.f32 %v4951, 0.5
        %v4953 = vmul.f32 %v4947, %v4939
        %v4954 = vmul.f32 %v4943, %v4948
        %v4955 = vadd.f32 %v4953, %v4954
        %v4956 = vtanh.pop %v4955
        %v4957 = vmul.f32 %v4952, %v4956
        %4958 = vst [vmem:[#allocation4] sm:$0xff] %v4938
        %4959 = vst [vmem:[#allocation5] sm:$0xff] %v4936
        %s4960 = scalar_lea.vmem %s397, 56 [#allocation14]
        %4961 = vst [vmem:[%s4960] sm:$0xff] %v4938
        %4962 = vst [vmem:[%s404] sm:$0xff] %v4957
        %4963 = vst [vmem:[#allocation6] sm:$0xff] %v4957
        %4964 = vst [vmem:[#allocation7] sm:$0xff] %v4955
        %s4965 = sand.u32 %s217, 1
        %s4966 = scalar_lea.sflag [#allocation10], %s4965
        %s4967 = sand.u32 %s217, 1
        %s4968 = smul.addr %s4967, 64
        %s4969 = scalar_lea.vmem [#allocation14], %s4968
        %s4970 = sand.u32 %s245, 1
        %s4971 = scalar_lea.sflag [#allocation16], %s4970
        %s4972 = sand.u32 %s245, 1
        %s4973 = smul.addr %s4972, 64
        %s4974 = scalar_lea.vmem [#allocation15], %s4973
        // Predicated region
        $region69: #{tpu_custom_call.1} parent=51 // pred_check
          %p4975 = pneg %p227
        $region70: #{tpu_custom_call.1} parent=51 // pred_check_branch
          %4977 = sbr.rel (%p4975) target = $region72
        $region71: #{tpu_custom_call.1} parent=51 // pred_region
          %s4978 = smul.u32 8, %s29
          %s4980 = ssub.s32 1024, 1024
          %4981 = vsyncadd %s4966, %s4980
          %s4982 = smul.addr %s4978, 128
          %s4983 = scalar_lea.hbm %s8, %s4982
          %s4984 = sshll.u32 %s4969, 4
          %s4985 = int_to_ptr.vmem [resolvable:$true] %s4984
          %4990 = dma.vmem_to_hbm [thread:$0]  %s4985, 1024, %s4983, %s4966, 128, 128, 8
        $region72: #{tpu_custom_call.1} parent=51 // pred_fallthru
          _
        // Predicated region
        $region73: #{tpu_custom_call.1} parent=51 // pred_check
          %p4991 = pneg %p255
        $region74: #{tpu_custom_call.1} parent=51 // pred_check_branch
          %4993 = sbr.rel (%p4991) target = $region76
        $region75: #{tpu_custom_call.1} parent=51 // pred_region
          %s4994 = ssub.s32 1, %s29
          %s4995 = smul.u32 8, %s4994
          %s4997 = ssub.s32 1024, 1024
          %4998 = vsyncadd %s4971, %s4997
          %s4999 = smul.addr %s4995, 128
          %s5000 = scalar_lea.hbm %s9, %s4999
          %s5001 = sshll.u32 %s4974, 4
          %s5002 = int_to_ptr.vmem [resolvable:$true] %s5001
          %5007 = dma.vmem_to_hbm [thread:$0]  %s5002, 1024, %s5000, %s4971, 128, 128, 8
        $region76: #{tpu_custom_call.1} parent=51 // pred_fallthru
          _
      $region52: #{tpu_custom_call.1} parent=5 // pred_fallthru
        _
      %p5008 = scmp.le.s32.totalorder 2, %s24
      // Predicated region
      $region77: #{tpu_custom_call.1} parent=5 // pred_check
        %p5009 = pneg %p5008
      $region78: #{tpu_custom_call.1} parent=5 // pred_check_branch
        %5011 = sbr.rel (%p5009) target = $region80
      $region79: #{tpu_custom_call.1} parent=5 // pred_region
        %s5012 = ssub.s32 %s24, 2
        // Predicated region
        $region81: #{tpu_custom_call.1} parent=79 // pred_check
          %p5013 = pneg %p233
        $region82: #{tpu_custom_call.1} parent=79 // pred_check_branch
          %5015 = sbr.rel (%p5013) target = $region84
        $region83: #{tpu_custom_call.1} parent=79 // pred_region
          %s5016 = sand.u32 %s218, 1
          %s5017 = scalar_lea.sflag [#allocation10], %s5016
          %s5018 = sand.u32 %s218, 1
          %s5019 = smul.addr %s5018, 64
          %s5020 = scalar_lea.vmem [#allocation14], %s5019
          %5021 = dma.done %s5017, 1024
        $region84: #{tpu_custom_call.1} parent=79 // pred_fallthru
          _
        // Predicated region
        $region85: #{tpu_custom_call.1} parent=79 // pred_check
          %p5022 = pneg %p261
        $region86: #{tpu_custom_call.1} parent=79 // pred_check_branch
          %5024 = sbr.rel (%p5022) target = $region88
        $region87: #{tpu_custom_call.1} parent=79 // pred_region
          %s5025 = sand.u32 %s246, 1
          %s5026 = scalar_lea.sflag [#allocation16], %s5025
          %s5027 = sand.u32 %s246, 1
          %s5028 = smul.addr %s5027, 64
          %s5029 = scalar_lea.vmem [#allocation15], %s5028
          %5030 = dma.done %s5026, 1024
        $region88: #{tpu_custom_call.1} parent=79 // pred_fallthru
          _
      $region80: #{tpu_custom_call.1} parent=5 // pred_fallthru
        _
    $region6: #{tpu_custom_call.1} parent=1 // loop_footer
      %s28 = sadd.s32 1, %s24
    $region7: #{tpu_custom_call.1} parent=1 // loop_footer_branch
      %23 = sbr.rel target = $region3
    $region8: #{tpu_custom_call.1} parent=1 // loop_exit
      _
    %5031 = vsyncpa [#allocation9], 1
    %s5032 = scalar_lea.sflag [#allocation9], 1
    %5033 = vsyncpa %s5032, 1
    %5034 = vsyncpa [#allocation12], 1
    %5035 = vsyncpa [#allocation10], 1
    %s5036 = scalar_lea.sflag [#allocation10], 1
    %5037 = vsyncpa %s5036, 1
    %5038 = vsyncpa [#allocation16], 1
    %s5039 = scalar_lea.sflag [#allocation16], 1
    %5040 = vsyncpa %s5039, 1

</llo_original>
